<compile_context>
chip_gen: v7x
topology: tpu7x:2x2x1
jax: 0.10.0
libtpu: 0.0.40
codegen_flags: <defaults>
</compile_context>

<pallas_src>
import functools

import jax
import jax.numpy as jnp
from jax.experimental import pallas as pl
from jax.experimental.pallas import tpu as pltpu

EPS = 1e-5

# GEMM tile sizes: ~1.5 MiB live VMEM with double buffering -> safe on
# v5e (128 MiB), v6e (128 MiB) and v7x (64 MiB).
_TM, _TK, _TN = 256, 512, 128


def _round_up(x, m):
    return (x + m - 1) // m * m


def _pick_tm(m):
    return _TM if m >= _TM else _round_up(m, 8)


def _pick_tk(kp):
    for t in (512, 384, 256, 128):
        if kp % t == 0:
            return t
    return 128


def _pick_tm_bn(mp):
    for t in (512, 256):
        if mp % t == 0:
            return t
    return mp


# ---------------------------------------------------------------------------
# Pallas kernels
# ---------------------------------------------------------------------------

def _gemm_stats_kernel(p_ref, w_ref, o_ref, s_ref, q_ref, acc_ref):
    """Tiled matmul (bf16 in, f32 acc) with fused per-channel sum / sum-of-sq
    epilogue for the following training-mode BatchNorm."""
    k = pl.program_id(2)

    @pl.when(k == 0)
    def _():
        acc_ref[...] = jnp.zeros_like(acc_ref)

    acc_ref[...] += jnp.dot(p_ref[...], w_ref[...],
                            preferred_element_type=jnp.float32)

    @pl.when(k == pl.num_programs(2) - 1)
    def _():
        acc = acc_ref[...]
        o_ref[...] = acc.astype(o_ref.dtype)
        s_ref[...] = jnp.sum(acc, axis=0)[None, None, :]
        q_ref[...] = jnp.sum(acc * acc, axis=0)[None, None, :]


def _bn_act_kernel(x_ref, sc_ref, sh_ref, o_ref, *, relu):
    y = x_ref[...].astype(jnp.float32) * sc_ref[...] + sh_ref[...]
    if relu:
        y = jnp.maximum(y, 0.0)
    o_ref[...] = y.astype(o_ref.dtype)


def _bn_res_kernel(x_ref, r_ref, sc_ref, sh_ref, o_ref):
    y = x_ref[...].astype(jnp.float32) * sc_ref[...] + sh_ref[...]
    o_ref[...] = (y + r_ref[...].astype(jnp.float32)).astype(o_ref.dtype)


# ---------------------------------------------------------------------------
# Kernel wrappers
# ---------------------------------------------------------------------------

def gemm_with_stats(patches, wmat):
    """patches: (M, K) bf16 (K may be un-padded); wmat: (Kp, Np) bf16 with
    Kp, Np multiples of 128.  Returns (y (Mp, Np) bf16, col_sum (Np,) f32,
    col_sumsq (Np,) f32, Mp).  Zero-padded rows/cols contribute 0 to stats."""
    M, K = patches.shape
    Kp, Np = wmat.shape
    tm = _pick_tm(M)
    tk = _pick_tk(Kp)
    tn = _TN
    Mp = _round_up(M, tm)
    if (Mp, Kp) != (M, K):
        patches = jnp.pad(patches, ((0, Mp - M), (0, Kp - K)))
    gm, gn, gk = Mp // tm, Np // tn, Kp // tk

    y, s, q = pl.pallas_call(
        _gemm_stats_kernel,
        grid=(gm, gn, gk),
        in_specs=[pl.BlockSpec((tm, tk), lambda m, n, k: (m, k)),
                  pl.BlockSpec((tk, tn), lambda m, n, k: (k, n))],
        out_specs=[pl.BlockSpec((tm, tn), lambda m, n, k: (m, n)),
                   pl.BlockSpec((1, 1, tn), lambda m, n, k: (m, 0, n)),
                   pl.BlockSpec((1, 1, tn), lambda m, n, k: (m, 0, n))],
        out_shape=[jax.ShapeDtypeStruct((Mp, Np), jnp.bfloat16),
                   jax.ShapeDtypeStruct((gm, 1, Np), jnp.float32),
                   jax.ShapeDtypeStruct((gm, 1, Np), jnp.float32)],
        scratch_shapes=[pltpu.VMEM((tm, tn), jnp.float32)],
        compiler_params=pltpu.CompilerParams(
            dimension_semantics=("parallel", "parallel", "arbitrary"),
            vmem_limit_bytes=32 * 1024 * 1024),
    )(patches, wmat)

    csum = jnp.sum(s[:, 0, :], axis=0)
    csq = jnp.sum(q[:, 0, :], axis=0)
    return y, csum, csq, Mp


def bn_act_2d(y2d, scale, shift, relu=True, residual=None):
    """Fused normalize (+ReLU or +residual) on a lane-dense (Mp, Np) slab."""
    Mp, Np = y2d.shape
    tm = _pick_tm_bn(Mp)
    tn = _TN
    grid = (Mp // tm, Np // tn)
    big = pl.BlockSpec((tm, tn), lambda m, n: (m, n))
    vec = pl.BlockSpec((1, tn), lambda m, n: (0, n))
    scale = scale.reshape(1, Np).astype(jnp.float32)
    shift = shift.reshape(1, Np).astype(jnp.float32)
    cp = pltpu.CompilerParams(dimension_semantics=("parallel", "parallel"))

    if residual is None:
        return pl.pallas_call(
            functools.partial(_bn_act_kernel, relu=relu),
            grid=grid,
            in_specs=[big, vec, vec],
            out_specs=big,
            out_shape=jax.ShapeDtypeStruct((Mp, Np), jnp.bfloat16),
            compiler_params=cp,
        )(y2d, scale, shift)

    return pl.pallas_call(
        _bn_res_kernel,
        grid=grid,
        in_specs=[big, big, vec, vec],
        out_specs=big,
        out_shape=jax.ShapeDtypeStruct((Mp, Np), jnp.bfloat16),
        compiler_params=cp,
    )(y2d, residual, scale, shift)


# ---------------------------------------------------------------------------
# im2col glue + layer functions
# ---------------------------------------------------------------------------
# TODO(synk): move the k*k tap iteration into the GEMM kernel via per-tap
# BlockSpec offsets so the im2col patch matrix is never materialized in HBM.

def _im2col(xp, k, s):
    N, Hp, Wp, C = xp.shape
    Ho = (Hp - k) // s + 1
    Wo = (Wp - k) // s + 1
    cols = []
    for ki in range(k):
        for kj in range(k):
            cols.append(xp[:, ki:ki + s * (Ho - 1) + 1:s,
                           kj:kj + s * (Wo - 1) + 1:s, :])
    patches = jnp.stack(cols, axis=3)                  # (N, Ho, Wo, k*k, C)
    return patches.reshape(N * Ho * Wo, k * k * C), N, Ho, Wo


def conv_bn_act(x, layer, relu=True, residual_nhwc=None):
    """Conv2d (no bias; it cancels in training-mode BN) + BatchNorm (+ReLU /
    +residual).  x: (N,H,W,Cin) bf16."""
    k, s, p, cout = layer['k'], layer['stride'], layer['pad'], layer['cout']
    xp = jnp.pad(x, ((0, 0), (p, p), (p, p), (0, 0)))
    patches, N, Ho, Wo = _im2col(xp, k, s)
    M = N * Ho * Wo

    y, csum, csq, Mp = gemm_with_stats(patches, layer['wm'])
    Np = layer['wm'].shape[1]

    mean = csum / M
    # TODO(synk): for very large M use a centered second pass (Welford) instead
    # of E[x^2]-E[x]^2 to avoid cancellation.
    var = jnp.maximum(csq / M - mean * mean, 0.0)
    scale = layer['gamma_p'] * jax.lax.rsqrt(var + EPS)
    shift = layer['beta_p'] - mean * scale

    res2d = None
    if residual_nhwc is not None:
        res2d = residual_nhwc.reshape(M, -1)
        if res2d.shape[1] != Np:
            res2d = jnp.pad(res2d, ((0, 0), (0, Np - res2d.shape[1])))
        if Mp != M:
            res2d = jnp.pad(res2d, ((0, Mp - M), (0, 0)))

    out2d = bn_act_2d(y, scale, shift, relu=relu, residual=res2d)
    return out2d[:M, :cout].reshape(N, Ho, Wo, cout)


def convT_bn_act(x, layer):
    """ConvTranspose2d(k=3, stride=2, pad=1, output_padding=1) + BN + ReLU via
    sub-pixel phase decomposition: 4 phase filters fused into one GEMM (no
    zero-stuffed upsampling, no wasted MACs on zeros)."""
    cin, cout = layer['cin'], layer['cout']
    N, H, W, _ = x.shape
    xp = jnp.pad(x, ((0, 0), (0, 1), (0, 1), (0, 0)))          # high-side pad
    taps = [xp[:, a:a + H, b:b + W, :] for a in (0, 1) for b in (0, 1)]
    patches = jnp.concatenate(taps, axis=-1).reshape(N * H * W, 4 * cin)
    M = N * H * W

    y, csum, csq, Mp = gemm_with_stats(patches, layer['wm'])   # (Mp, 4*cout)

    # Each output pixel belongs to exactly one phase -> fold phases for stats.
    cnt = 4 * M                                                # = N * 2H * 2W
    csum_c = csum.reshape(4, cout).sum(0)
    csq_c = csq.reshape(4, cout).sum(0)
    mean = csum_c / cnt
    var = jnp.maximum(csq_c / cnt - mean * mean, 0.0)
    scale_c = layer['gamma'] * jax.lax.rsqrt(var + EPS)
    shift_c = layer['beta'] - mean * scale_c
    scale = jnp.tile(scale_c, 4)
    shift = jnp.tile(shift_c, 4)

    out2d = bn_act_2d(y, scale, shift, relu=True)
    out = out2d[:M].reshape(N, H, W, 2, 2, cout)
    out = out.transpose(0, 1, 3, 2, 4, 5).reshape(N, 2 * H, 2 * W, cout)
    return out


# ---------------------------------------------------------------------------
# Weight preparation (hoisted: built once per forward call)
# ---------------------------------------------------------------------------

def _conv_wm(w):
    """PyTorch Conv2d weight (Cout,Cin,k,k) -> GEMM matrix (Kp, Np) bf16 with
    K = k*k*Cin and Cout both zero-padded to multiples of 128 (lane-dense)."""
    cout, cin, k, _ = w.shape
    wm = jnp.transpose(w, (2, 3, 1, 0)).reshape(k * k * cin, cout)
    kp = _round_up(k * k * cin, 128)
    np_ = _round_up(cout, 128)
    wm = jnp.pad(wm, ((0, kp - k * k * cin), (0, np_ - cout)))
    return wm.astype(jnp.bfloat16)


# (output parity, input tap) -> flipped-kernel index; missing -> zero block.
_PHASE_TAP_IDX = {(0, 0): 1, (1, 0): 0, (1, 1): 2}


def _convT_wm(w):
    """PyTorch ConvTranspose2d weight (Cin,Cout,3,3) (stride 2, pad 1,
    output_pad 1) -> fused 4-phase GEMM matrix (4*Cin, 4*Cout) bf16."""
    cin, cout = w.shape[0], w.shape[1]
    blocks = []
    for a_t in (0, 1):                      # input row tap
        for b_t in (0, 1):                  # input col tap
            row = []
            for ph in (0, 1):               # output row parity
                for pw in (0, 1):           # output col parity
                    A = _PHASE_TAP_IDX.get((ph, a_t))
                    B = _PHASE_TAP_IDX.get((pw, b_t))
                    if A is None or B is None:
                        row.append(jnp.zeros((cin, cout), w.dtype))
                    else:
                        row.append(w[:, :, 2 - A, 2 - B])
            blocks.append(jnp.concatenate(row, axis=1))        # (Cin, 4*Cout)
    return jnp.concatenate(blocks, axis=0).astype(jnp.bfloat16)


def _prep_conv(p, wkey, gkey, bkey, k, stride, pad):
    w = p[wkey]
    cout = w.shape[0]
    np_ = _round_up(cout, 128)
    return dict(
        wm=_conv_wm(w), k=k, stride=stride, pad=pad, cout=cout,
        gamma_p=jnp.pad(p[gkey], (0, np_ - cout), constant_values=1.0),
        beta_p=jnp.pad(p[bkey], (0, np_ - cout)))


def _prep_convT(p, wkey, gkey, bkey):
    w = p[wkey]
    return dict(wm=_convT_wm(w), cin=w.shape[0], cout=w.shape[1],
                gamma=p[gkey], beta=p[bkey])


# ---------------------------------------------------------------------------
# StyleTransferNet forward
# ---------------------------------------------------------------------------

def style_transfer_forward(x_nchw, params):
    x = jnp.transpose(x_nchw, (0, 2, 3, 1)).astype(jnp.bfloat16)  # NCHW->NHWC

    # GEMM-ready weights, built once and reused (incl. by the 5 shared blocks).
    c1 = _prep_conv(params, 'conv1_w', 'bn1_g', 'bn1_b', 9, 1, 4)
    c2 = _prep_conv(params, 'conv2_w', 'bn2_g', 'bn2_b', 3, 2, 1)
    c3 = _prep_conv(params, 'conv3_w', 'bn3_g', 'bn3_b', 3, 2, 1)
    r1 = _prep_conv(params['res'], 'c1_w', 'bn1_g', 'bn1_b', 3, 1, 1)
    r2 = _prep_conv(params['res'], 'c2_w', 'bn2_g', 'bn2_b', 3, 1, 1)
    t1 = _prep_convT(params, 'convT1_w', 'bnT1_g', 'bnT1_b')
    t2 = _prep_convT(params, 'convT2_w', 'bnT2_g', 'bnT2_b')
    c4 = _prep_conv(params, 'conv4_w', 'bn4_g', 'bn4_b', 9, 1, 4)

    x = conv_bn_act(x, c1)
    x = conv_bn_act(x, c2)
    x = conv_bn_act(x, c3)
    # PyTorch model applies the SAME ResidualBlock module 5 times (shared weights).
    for _ in range(5):
        y = conv_bn_act(x, r1)                                   # conv1+bn1+relu
        x = conv_bn_act(y, r2, relu=False, residual_nhwc=x)      # conv2+bn2 + skip
    x = convT_bn_act(x, t1)
    x = convT_bn_act(x, t2)
    x = conv_bn_act(x, c4)
    return jnp.transpose(x.astype(jnp.float32), (0, 3, 1, 2))    # NHWC->NCHW


# ---------------------------------------------------------------------------
# Deterministic parameter init (shapes from the PyTorch __init__)
# ---------------------------------------------------------------------------

def init_params(key):
    keys = iter(jax.random.split(key, 64))

    def conv_p(cout, cin, k):
        bound = 1.0 / jnp.sqrt(cin * k * k)
        w = jax.random.uniform(next(keys), (cout, cin, k, k), jnp.float32, -bound, bound)
        b = jax.random.uniform(next(keys), (cout,), jnp.float32, -bound, bound)
        return w, b   # biases kept for parity with PyTorch; they cancel in training-mode BN

    def convT_p(cin, cout, k):
        bound = 1.0 / jnp.sqrt(cout * k * k)
        w = jax.random.uniform(next(keys), (cin, cout, k, k), jnp.float32, -bound, bound)
        b = jax.random.uniform(next(keys), (cout,), jnp.float32, -bound, bound)
        return w, b

    def bn_p(c):
        return jnp.ones((c,), jnp.float32), jnp.zeros((c,), jnp.float32)

    p = {}
    p['conv1_w'], p['conv1_b'] = conv_p(32, 3, 9)
    p['bn1_g'], p['bn1_b'] = bn_p(32)
    p['conv2_w'], p['conv2_b'] = conv_p(64, 32, 3)
    p['bn2_g'], p['bn2_b'] = bn_p(64)
    p['conv3_w'], p['conv3_b'] = conv_p(128, 64, 3)
    p['bn3_g'], p['bn3_b'] = bn_p(128)

    res = {}
    res['c1_w'], res['c1_b'] = conv_p(128, 128, 3)
    res['bn1_g'], res['bn1_b'] = bn_p(128)
    res['c2_w'], res['c2_b'] = conv_p(128, 128, 3)
    res['bn2_g'], res['bn2_b'] = bn_p(128)
    p['res'] = res

    p['convT1_w'], p['convT1_b'] = convT_p(128, 64, 3)
    p['bnT1_g'], p['bnT1_b'] = bn_p(64)
    p['convT2_w'], p['convT2_b'] = convT_p(64, 32, 3)
    p['bnT2_g'], p['bnT2_b'] = bn_p(32)
    p['conv4_w'], p['conv4_b'] = conv_p(3, 32, 9)
    p['bn4_g'], p['bn4_b'] = bn_p(3)
    return p


if __name__ == "__main__":
    key = jax.random.PRNGKey(0)
    k_in, k_par = jax.random.split(key)
    x = jax.random.normal(k_in, (2, 3, 16, 16), jnp.float32)   # NCHW like PyTorch
    params = init_params(k_par)

    fwd = jax.jit(style_transfer_forward)
    out = jax.block_until_ready(fwd(x, params))

    assert out.shape == (2, 3, 16, 16), out.shape
    assert bool(jnp.all(jnp.isfinite(out)))
    print("KERNEL_OK")
</pallas_src>

<mosaic_0001>
module attributes {stable_mosaic.version = 11 : i64} {
  func.func @_gemm_stats_kernel(%arg0: i32, %arg1: i32, %arg2: i32, %arg3: memref<256x256xbf16, #tpu.memory_space<vmem>>, %arg4: memref<256x128xbf16, #tpu.memory_space<vmem>>, %arg5: memref<256x128xbf16, #tpu.memory_space<vmem>>, %arg6: memref<1x1x128xf32, #tpu.memory_space<vmem>>, %arg7: memref<1x1x128xf32, #tpu.memory_space<vmem>>, %arg8: memref<256x128xf32, #tpu.memory_space<vmem>>) attributes {dimension_semantics = [#tpu.dimension_semantics<parallel>, #tpu.dimension_semantics<parallel>, #tpu.dimension_semantics<arbitrary>], iteration_bounds = array<i64: 2, 1, 1>, scalar_prefetch = 0 : i64, scratch_operands = 1 : i64, tpu.core_type = #tpu.core_type<tc>, window_params = [{transform_indices = @transform_0, window_bounds = array<i64: 256, 256>}, {transform_indices = @transform_1, window_bounds = array<i64: 256, 128>}, {transform_indices = @transform_2, window_bounds = array<i64: 256, 128>}, {transform_indices = @transform_3, window_bounds = array<i64: 1, 1, 128>}, {transform_indices = @transform_4, window_bounds = array<i64: 1, 1, 128>}]} {
    %c0_i32 = arith.constant 0 : i32
    %0 = arith.cmpi eq, %arg2, %c0_i32 : i32
    %1 = arith.extui %0 : i1 to i32
    %c0_i32_0 = arith.constant 0 : i32
    %2 = arith.cmpi ne, %1, %c0_i32_0 : i32
    scf.if %2 {
      %cst_10 = arith.constant 0.000000e+00 : f32
      %12 = vector.broadcast %cst_10 : f32 to vector<256x128xf32>
      %c0_11 = arith.constant 0 : index
      %c0_12 = arith.constant 0 : index
      %13 = vector.load %arg8[%c0_11, %c0_12] : memref<256x128xf32, #tpu.memory_space<vmem>>, vector<256x128xf32>
      tpu.vector_store %arg8[%c0_11, %c0_12], %12 {strides = array<i32>} : memref<256x128xf32, #tpu.memory_space<vmem>>, vector<256x128xf32>,
    } else {
    }
    %c0 = arith.constant 0 : index
    %c0_1 = arith.constant 0 : index
    %3 = vector.load %arg8[%c0, %c0_1] : memref<256x128xf32, #tpu.memory_space<vmem>>, vector<256x128xf32>
    %c0_2 = arith.constant 0 : index
    %c0_3 = arith.constant 0 : index
    %4 = vector.load %arg3[%c0_2, %c0_3] : memref<256x256xbf16, #tpu.memory_space<vmem>>, vector<256x256xbf16>
    %c0_4 = arith.constant 0 : index
    %c0_5 = arith.constant 0 : index
    %5 = vector.load %arg4[%c0_4, %c0_5] : memref<256x128xbf16, #tpu.memory_space<vmem>>, vector<256x128xbf16>
    %cst = arith.constant dense<0.000000e+00> : vector<256x128xf32>
    %6 = tpu.matmul %4, %5, %cst {dimension_numbers = #tpu.dot_dimension_numbers<[1], [0], [0], [1], [0, 0, 1, 1], [], []>} : vector<256x256xbf16>, vector<256x128xbf16>, vector<256x128xf32> -> vector<256x128xf32>
    %7 = arith.addf %3, %6 : vector<256x128xf32>
    %c0_6 = arith.constant 0 : index
    %c0_7 = arith.constant 0 : index
    %8 = vector.load %arg8[%c0_6, %c0_7] : memref<256x128xf32, #tpu.memory_space<vmem>>, vector<256x128xf32>
    tpu.vector_store %arg8[%c0_6, %c0_7], %7 {strides = array<i32>} : memref<256x128xf32, #tpu.memory_space<vmem>>, vector<256x128xf32>,
    %c0_i32_8 = arith.constant 0 : i32
    %9 = arith.cmpi eq, %arg2, %c0_i32_8 : i32
    %10 = arith.extui %9 : i1 to i32
    %c0_i32_9 = arith.constant 0 : i32
    %11 = arith.cmpi ne, %10, %c0_i32_9 : i32
    scf.if %11 {
      %c0_10 = arith.constant 0 : index
      %c0_11 = arith.constant 0 : index
      %12 = vector.load %arg8[%c0_10, %c0_11] : memref<256x128xf32, #tpu.memory_space<vmem>>, vector<256x128xf32>
      %13 = arith.truncf %12 : vector<256x128xf32> to vector<256x128xbf16>
      %c0_12 = arith.constant 0 : index
      %c0_13 = arith.constant 0 : index
      %14 = vector.load %arg5[%c0_12, %c0_13] : memref<256x128xbf16, #tpu.memory_space<vmem>>, vector<256x128xbf16>
      tpu.vector_store %arg5[%c0_12, %c0_13], %13 {strides = array<i32>} : memref<256x128xbf16, #tpu.memory_space<vmem>>, vector<256x128xbf16>,
      %cst_14 = arith.constant dense<0.000000e+00> : vector<128xf32>
      %15 = vector.multi_reduction <add>, %12, %cst_14 [0] : vector<256x128xf32> to vector<128xf32>
      %16 = vector.shape_cast %15 : vector<128xf32> to vector<1x1x128xf32>
      %c0_15 = arith.constant 0 : index
      %c0_16 = arith.constant 0 : index
      %c0_17 = arith.constant 0 : index
      %17 = vector.load %arg6[%c0_15, %c0_16, %c0_17] : memref<1x1x128xf32, #tpu.memory_space<vmem>>, vector<1x1x128xf32>
      tpu.vector_store %arg6[%c0_15, %c0_16, %c0_17], %16 {strides = array<i32>} : memref<1x1x128xf32, #tpu.memory_space<vmem>>, vector<1x1x128xf32>,
      %18 = arith.mulf %12, %12 : vector<256x128xf32>
      %cst_18 = arith.constant dense<0.000000e+00> : vector<128xf32>
      %19 = vector.multi_reduction <add>, %18, %cst_18 [0] : vector<256x128xf32> to vector<128xf32>
      %20 = vector.shape_cast %19 : vector<128xf32> to vector<1x1x128xf32>
      %c0_19 = arith.constant 0 : index
      %c0_20 = arith.constant 0 : index
      %c0_21 = arith.constant 0 : index
      %21 = vector.load %arg7[%c0_19, %c0_20, %c0_21] : memref<1x1x128xf32, #tpu.memory_space<vmem>>, vector<1x1x128xf32>
      tpu.vector_store %arg7[%c0_19, %c0_20, %c0_21], %20 {strides = array<i32>} : memref<1x1x128xf32, #tpu.memory_space<vmem>>, vector<1x1x128xf32>,
    } else {
    }
    return
  }
  func.func @transform_0(%arg0: i32, %arg1: i32, %arg2: i32) -> (i32, i32) {
    %c0_i32 = arith.constant 0 : i32
    return %arg0, %arg2 : i32, i32
  }
  func.func @transform_1(%arg0: i32, %arg1: i32, %arg2: i32) -> (i32, i32) {
    %c0_i32 = arith.constant 0 : i32
    return %arg2, %arg1 : i32, i32
  }
  func.func @transform_2(%arg0: i32, %arg1: i32, %arg2: i32) -> (i32, i32) {
    %c0_i32 = arith.constant 0 : i32
    return %arg0, %arg1 : i32, i32
  }
  func.func @transform_3(%arg0: i32, %arg1: i32, %arg2: i32) -> (i32, i32, i32) {
    %c0_i32 = arith.constant 0 : i32
    %c0_i32_0 = arith.constant 0 : i32
    return %arg0, %c0_i32, %arg1 : i32, i32, i32
  }
  func.func @transform_4(%arg0: i32, %arg1: i32, %arg2: i32) -> (i32, i32, i32) {
    %c0_i32 = arith.constant 0 : i32
    %c0_i32_0 = arith.constant 0 : i32
    return %arg0, %c0_i32, %arg1 : i32, i32, i32
  }
}

module attributes {stable_mosaic.version = 11 : i64} {
  func.func @_bn_act_kernel(%arg0: i32, %arg1: i32, %arg2: memref<512x128xbf16, #tpu.memory_space<vmem>>, %arg3: memref<1x128xf32, #tpu.memory_space<vmem>>, %arg4: memref<1x128xf32, #tpu.memory_space<vmem>>, %arg5: memref<512x128xbf16, #tpu.memory_space<vmem>>) attributes {dimension_semantics = [#tpu.dimension_semantics<parallel>, #tpu.dimension_semantics<parallel>], iteration_bounds = array<i64: 1, 1>, scalar_prefetch = 0 : i64, scratch_operands = 0 : i64, tpu.core_type = #tpu.core_type<tc>, window_params = [{transform_indices = @transform_0, window_bounds = array<i64: 512, 128>}, {transform_indices = @transform_1, window_bounds = array<i64: 1, 128>}, {transform_indices = @transform_2, window_bounds = array<i64: 1, 128>}, {transform_indices = @transform_3, window_bounds = array<i64: 512, 128>}]} {
    %c0 = arith.constant 0 : index
    %c0_0 = arith.constant 0 : index
    %0 = vector.load %arg2[%c0, %c0_0] : memref<512x128xbf16, #tpu.memory_space<vmem>>, vector<512x128xbf16>
    %1 = arith.extf %0 : vector<512x128xbf16> to vector<512x128xf32>
    %c0_1 = arith.constant 0 : index
    %c0_2 = arith.constant 0 : index
    %2 = vector.load %arg3[%c0_1, %c0_2] : memref<1x128xf32, #tpu.memory_space<vmem>>, vector<1x128xf32>
    %3 = vector.broadcast %2 : vector<1x128xf32> to vector<512x128xf32>
    %4 = arith.mulf %1, %3 : vector<512x128xf32>
    %c0_3 = arith.constant 0 : index
    %c0_4 = arith.constant 0 : index
    %5 = vector.load %arg4[%c0_3, %c0_4] : memref<1x128xf32, #tpu.memory_space<vmem>>, vector<1x128xf32>
    %6 = vector.broadcast %5 : vector<1x128xf32> to vector<512x128xf32>
    %7 = arith.addf %4, %6 : vector<512x128xf32>
    %cst = arith.constant 0.000000e+00 : f32
    %8 = vector.broadcast %cst : f32 to vector<512x128xf32>
    %9 = arith.maximumf %7, %8 : vector<512x128xf32>
    %10 = arith.truncf %9 : vector<512x128xf32> to vector<512x128xbf16>
    %c0_5 = arith.constant 0 : index
    %c0_6 = arith.constant 0 : index
    %11 = vector.load %arg5[%c0_5, %c0_6] : memref<512x128xbf16, #tpu.memory_space<vmem>>, vector<512x128xbf16>
    tpu.vector_store %arg5[%c0_5, %c0_6], %10 {strides = array<i32>} : memref<512x128xbf16, #tpu.memory_space<vmem>>, vector<512x128xbf16>,
    return
  }
  func.func @transform_0(%arg0: i32, %arg1: i32) -> (i32, i32) {
    %c0_i32 = arith.constant 0 : i32
    return %arg0, %arg1 : i32, i32
  }
  func.func @transform_1(%arg0: i32, %arg1: i32) -> (i32, i32) {
    %c0_i32 = arith.constant 0 : i32
    %c0_i32_0 = arith.constant 0 : i32
    return %c0_i32, %arg1 : i32, i32
  }
  func.func @transform_2(%arg0: i32, %arg1: i32) -> (i32, i32) {
    %c0_i32 = arith.constant 0 : i32
    %c0_i32_0 = arith.constant 0 : i32
    return %c0_i32, %arg1 : i32, i32
  }
  func.func @transform_3(%arg0: i32, %arg1: i32) -> (i32, i32) {
    %c0_i32 = arith.constant 0 : i32
    return %arg0, %arg1 : i32, i32
  }
}

module attributes {stable_mosaic.version = 11 : i64} {
  func.func @_gemm_stats_kernel(%arg0: i32, %arg1: i32, %arg2: i32, %arg3: memref<128x384xbf16, #tpu.memory_space<vmem>>, %arg4: memref<384x128xbf16, #tpu.memory_space<vmem>>, %arg5: memref<128x128xbf16, #tpu.memory_space<vmem>>, %arg6: memref<1x1x128xf32, #tpu.memory_space<vmem>>, %arg7: memref<1x1x128xf32, #tpu.memory_space<vmem>>, %arg8: memref<128x128xf32, #tpu.memory_space<vmem>>) attributes {dimension_semantics = [#tpu.dimension_semantics<parallel>, #tpu.dimension_semantics<parallel>, #tpu.dimension_semantics<arbitrary>], iteration_bounds = array<i64: 1, 1, 1>, scalar_prefetch = 0 : i64, scratch_operands = 1 : i64, tpu.core_type = #tpu.core_type<tc>, window_params = [{transform_indices = @transform_0, window_bounds = array<i64: 128, 384>}, {transform_indices = @transform_1, window_bounds = array<i64: 384, 128>}, {transform_indices = @transform_2, window_bounds = array<i64: 128, 128>}, {transform_indices = @transform_3, window_bounds = array<i64: 1, 1, 128>}, {transform_indices = @transform_4, window_bounds = array<i64: 1, 1, 128>}]} {
    %c0_i32 = arith.constant 0 : i32
    %0 = arith.cmpi eq, %arg2, %c0_i32 : i32
    %1 = arith.extui %0 : i1 to i32
    %c0_i32_0 = arith.constant 0 : i32
    %2 = arith.cmpi ne, %1, %c0_i32_0 : i32
    scf.if %2 {
      %cst_10 = arith.constant 0.000000e+00 : f32
      %12 = vector.broadcast %cst_10 : f32 to vector<128x128xf32>
      %c0_11 = arith.constant 0 : index
      %c0_12 = arith.constant 0 : index
      %13 = vector.load %arg8[%c0_11, %c0_12] : memref<128x128xf32, #tpu.memory_space<vmem>>, vector<128x128xf32>
      tpu.vector_store %arg8[%c0_11, %c0_12], %12 {strides = array<i32>} : memref<128x128xf32, #tpu.memory_space<vmem>>, vector<128x128xf32>,
    } else {
    }
    %c0 = arith.constant 0 : index
    %c0_1 = arith.constant 0 : index
    %3 = vector.load %arg8[%c0, %c0_1] : memref<128x128xf32, #tpu.memory_space<vmem>>, vector<128x128xf32>
    %c0_2 = arith.constant 0 : index
    %c0_3 = arith.constant 0 : index
    %4 = vector.load %arg3[%c0_2, %c0_3] : memref<128x384xbf16, #tpu.memory_space<vmem>>, vector<128x384xbf16>
    %c0_4 = arith.constant 0 : index
    %c0_5 = arith.constant 0 : index
    %5 = vector.load %arg4[%c0_4, %c0_5] : memref<384x128xbf16, #tpu.memory_space<vmem>>, vector<384x128xbf16>
    %cst = arith.constant dense<0.000000e+00> : vector<128x128xf32>
    %6 = tpu.matmul %4, %5, %cst {dimension_numbers = #tpu.dot_dimension_numbers<[1], [0], [0], [1], [0, 0, 1, 1], [], []>} : vector<128x384xbf16>, vector<384x128xbf16>, vector<128x128xf32> -> vector<128x128xf32>
    %7 = arith.addf %3, %6 : vector<128x128xf32>
    %c0_6 = arith.constant 0 : index
    %c0_7 = arith.constant 0 : index
    %8 = vector.load %arg8[%c0_6, %c0_7] : memref<128x128xf32, #tpu.memory_space<vmem>>, vector<128x128xf32>
    tpu.vector_store %arg8[%c0_6, %c0_7], %7 {strides = array<i32>} : memref<128x128xf32, #tpu.memory_space<vmem>>, vector<128x128xf32>,
    %c0_i32_8 = arith.constant 0 : i32
    %9 = arith.cmpi eq, %arg2, %c0_i32_8 : i32
    %10 = arith.extui %9 : i1 to i32
    %c0_i32_9 = arith.constant 0 : i32
    %11 = arith.cmpi ne, %10, %c0_i32_9 : i32
    scf.if %11 {
      %c0_10 = arith.constant 0 : index
      %c0_11 = arith.constant 0 : index
      %12 = vector.load %arg8[%c0_10, %c0_11] : memref<128x128xf32, #tpu.memory_space<vmem>>, vector<128x128xf32>
      %13 = arith.truncf %12 : vector<128x128xf32> to vector<128x128xbf16>
      %c0_12 = arith.constant 0 : index
      %c0_13 = arith.constant 0 : index
      %14 = vector.load %arg5[%c0_12, %c0_13] : memref<128x128xbf16, #tpu.memory_space<vmem>>, vector<128x128xbf16>
      tpu.vector_store %arg5[%c0_12, %c0_13], %13 {strides = array<i32>} : memref<128x128xbf16, #tpu.memory_space<vmem>>, vector<128x128xbf16>,
      %cst_14 = arith.constant dense<0.000000e+00> : vector<128xf32>
      %15 = vector.multi_reduction <add>, %12, %cst_14 [0] : vector<128x128xf32> to vector<128xf32>
      %16 = vector.shape_cast %15 : vector<128xf32> to vector<1x1x128xf32>
      %c0_15 = arith.constant 0 : index
      %c0_16 = arith.constant 0 : index
      %c0_17 = arith.constant 0 : index
      %17 = vector.load %arg6[%c0_15, %c0_16, %c0_17] : memref<1x1x128xf32, #tpu.memory_space<vmem>>, vector<1x1x128xf32>
      tpu.vector_store %arg6[%c0_15, %c0_16, %c0_17], %16 {strides = array<i32>} : memref<1x1x128xf32, #tpu.memory_space<vmem>>, vector<1x1x128xf32>,
      %18 = arith.mulf %12, %12 : vector<128x128xf32>
      %cst_18 = arith.constant dense<0.000000e+00> : vector<128xf32>
      %19 = vector.multi_reduction <add>, %18, %cst_18 [0] : vector<128x128xf32> to vector<128xf32>
      %20 = vector.shape_cast %19 : vector<128xf32> to vector<1x1x128xf32>
      %c0_19 = arith.constant 0 : index
      %c0_20 = arith.constant 0 : index
      %c0_21 = arith.constant 0 : index
      %21 = vector.load %arg7[%c0_19, %c0_20, %c0_21] : memref<1x1x128xf32, #tpu.memory_space<vmem>>, vector<1x1x128xf32>
      tpu.vector_store %arg7[%c0_19, %c0_20, %c0_21], %20 {strides = array<i32>} : memref<1x1x128xf32, #tpu.memory_space<vmem>>, vector<1x1x128xf32>,
    } else {
    }
    return
  }
  func.func @transform_0(%arg0: i32, %arg1: i32, %arg2: i32) -> (i32, i32) {
    %c0_i32 = arith.constant 0 : i32
    return %arg0, %arg2 : i32, i32
  }
  func.func @transform_1(%arg0: i32, %arg1: i32, %arg2: i32) -> (i32, i32) {
    %c0_i32 = arith.constant 0 : i32
    return %arg2, %arg1 : i32, i32
  }
  func.func @transform_2(%arg0: i32, %arg1: i32, %arg2: i32) -> (i32, i32) {
    %c0_i32 = arith.constant 0 : i32
    return %arg0, %arg1 : i32, i32
  }
  func.func @transform_3(%arg0: i32, %arg1: i32, %arg2: i32) -> (i32, i32, i32) {
    %c0_i32 = arith.constant 0 : i32
    %c0_i32_0 = arith.constant 0 : i32
    return %arg0, %c0_i32, %arg1 : i32, i32, i32
  }
  func.func @transform_4(%arg0: i32, %arg1: i32, %arg2: i32) -> (i32, i32, i32) {
    %c0_i32 = arith.constant 0 : i32
    %c0_i32_0 = arith.constant 0 : i32
    return %arg0, %c0_i32, %arg1 : i32, i32, i32
  }
}

module attributes {stable_mosaic.version = 11 : i64} {
  func.func @_bn_act_kernel(%arg0: i32, %arg1: i32, %arg2: memref<128x128xbf16, #tpu.memory_space<vmem>>, %arg3: memref<1x128xf32, #tpu.memory_space<vmem>>, %arg4: memref<1x128xf32, #tpu.memory_space<vmem>>, %arg5: memref<128x128xbf16, #tpu.memory_space<vmem>>) attributes {dimension_semantics = [#tpu.dimension_semantics<parallel>, #tpu.dimension_semantics<parallel>], iteration_bounds = array<i64: 1, 1>, scalar_prefetch = 0 : i64, scratch_operands = 0 : i64, tpu.core_type = #tpu.core_type<tc>, window_params = [{transform_indices = @transform_0, window_bounds = array<i64: 128, 128>}, {transform_indices = @transform_1, window_bounds = array<i64: 1, 128>}, {transform_indices = @transform_2, window_bounds = array<i64: 1, 128>}, {transform_indices = @transform_3, window_bounds = array<i64: 128, 128>}]} {
    %c0 = arith.constant 0 : index
    %c0_0 = arith.constant 0 : index
    %0 = vector.load %arg2[%c0, %c0_0] : memref<128x128xbf16, #tpu.memory_space<vmem>>, vector<128x128xbf16>
    %1 = arith.extf %0 : vector<128x128xbf16> to vector<128x128xf32>
    %c0_1 = arith.constant 0 : index
    %c0_2 = arith.constant 0 : index
    %2 = vector.load %arg3[%c0_1, %c0_2] : memref<1x128xf32, #tpu.memory_space<vmem>>, vector<1x128xf32>
    %3 = vector.broadcast %2 : vector<1x128xf32> to vector<128x128xf32>
    %4 = arith.mulf %1, %3 : vector<128x128xf32>
    %c0_3 = arith.constant 0 : index
    %c0_4 = arith.constant 0 : index
    %5 = vector.load %arg4[%c0_3, %c0_4] : memref<1x128xf32, #tpu.memory_space<vmem>>, vector<1x128xf32>
    %6 = vector.broadcast %5 : vector<1x128xf32> to vector<128x128xf32>
    %7 = arith.addf %4, %6 : vector<128x128xf32>
    %cst = arith.constant 0.000000e+00 : f32
    %8 = vector.broadcast %cst : f32 to vector<128x128xf32>
    %9 = arith.maximumf %7, %8 : vector<128x128xf32>
    %10 = arith.truncf %9 : vector<128x128xf32> to vector<128x128xbf16>
    %c0_5 = arith.constant 0 : index
    %c0_6 = arith.constant 0 : index
    %11 = vector.load %arg5[%c0_5, %c0_6] : memref<128x128xbf16, #tpu.memory_space<vmem>>, vector<128x128xbf16>
    tpu.vector_store %arg5[%c0_5, %c0_6], %10 {strides = array<i32>} : memref<128x128xbf16, #tpu.memory_space<vmem>>, vector<128x128xbf16>,
    return
  }
  func.func @transform_0(%arg0: i32, %arg1: i32) -> (i32, i32) {
    %c0_i32 = arith.constant 0 : i32
    return %arg0, %arg1 : i32, i32
  }
  func.func @transform_1(%arg0: i32, %arg1: i32) -> (i32, i32) {
    %c0_i32 = arith.constant 0 : i32
    %c0_i32_0 = arith.constant 0 : i32
    return %c0_i32, %arg1 : i32, i32
  }
  func.func @transform_2(%arg0: i32, %arg1: i32) -> (i32, i32) {
    %c0_i32 = arith.constant 0 : i32
    %c0_i32_0 = arith.constant 0 : i32
    return %c0_i32, %arg1 : i32, i32
  }
  func.func @transform_3(%arg0: i32, %arg1: i32) -> (i32, i32) {
    %c0_i32 = arith.constant 0 : i32
    return %arg0, %arg1 : i32, i32
  }
}

module attributes {stable_mosaic.version = 11 : i64} {
  func.func @_bn_act_kernel(%arg0: i32, %arg1: i32, %arg2: memref<32x128xbf16, #tpu.memory_space<vmem>>, %arg3: memref<1x128xf32, #tpu.memory_space<vmem>>, %arg4: memref<1x128xf32, #tpu.memory_space<vmem>>, %arg5: memref<32x128xbf16, #tpu.memory_space<vmem>>) attributes {dimension_semantics = [#tpu.dimension_semantics<parallel>, #tpu.dimension_semantics<parallel>], iteration_bounds = array<i64: 1, 1>, scalar_prefetch = 0 : i64, scratch_operands = 0 : i64, tpu.core_type = #tpu.core_type<tc>, window_params = [{transform_indices = @transform_0, window_bounds = array<i64: 32, 128>}, {transform_indices = @transform_1, window_bounds = array<i64: 1, 128>}, {transform_indices = @transform_2, window_bounds = array<i64: 1, 128>}, {transform_indices = @transform_3, window_bounds = array<i64: 32, 128>}]} {
    %c0 = arith.constant 0 : index
    %c0_0 = arith.constant 0 : index
    %0 = vector.load %arg2[%c0, %c0_0] : memref<32x128xbf16, #tpu.memory_space<vmem>>, vector<32x128xbf16>
    %1 = arith.extf %0 : vector<32x128xbf16> to vector<32x128xf32>
    %c0_1 = arith.constant 0 : index
    %c0_2 = arith.constant 0 : index
    %2 = vector.load %arg3[%c0_1, %c0_2] : memref<1x128xf32, #tpu.memory_space<vmem>>, vector<1x128xf32>
    %3 = vector.broadcast %2 : vector<1x128xf32> to vector<32x128xf32>
    %4 = arith.mulf %1, %3 : vector<32x128xf32>
    %c0_3 = arith.constant 0 : index
    %c0_4 = arith.constant 0 : index
    %5 = vector.load %arg4[%c0_3, %c0_4] : memref<1x128xf32, #tpu.memory_space<vmem>>, vector<1x128xf32>
    %6 = vector.broadcast %5 : vector<1x128xf32> to vector<32x128xf32>
    %7 = arith.addf %4, %6 : vector<32x128xf32>
    %cst = arith.constant 0.000000e+00 : f32
    %8 = vector.broadcast %cst : f32 to vector<32x128xf32>
    %9 = arith.maximumf %7, %8 : vector<32x128xf32>
    %10 = arith.truncf %9 : vector<32x128xf32> to vector<32x128xbf16>
    %c0_5 = arith.constant 0 : index
    %c0_6 = arith.constant 0 : index
    %11 = vector.load %arg5[%c0_5, %c0_6] : memref<32x128xbf16, #tpu.memory_space<vmem>>, vector<32x128xbf16>
    tpu.vector_store %arg5[%c0_5, %c0_6], %10 {strides = array<i32>} : memref<32x128xbf16, #tpu.memory_space<vmem>>, vector<32x128xbf16>,
    return
  }
  func.func @transform_0(%arg0: i32, %arg1: i32) -> (i32, i32) {
    %c0_i32 = arith.constant 0 : i32
    return %arg0, %arg1 : i32, i32
  }
  func.func @transform_1(%arg0: i32, %arg1: i32) -> (i32, i32) {
    %c0_i32 = arith.constant 0 : i32
    %c0_i32_0 = arith.constant 0 : i32
    return %c0_i32, %arg1 : i32, i32
  }
  func.func @transform_2(%arg0: i32, %arg1: i32) -> (i32, i32) {
    %c0_i32 = arith.constant 0 : i32
    %c0_i32_0 = arith.constant 0 : i32
    return %c0_i32, %arg1 : i32, i32
  }
  func.func @transform_3(%arg0: i32, %arg1: i32) -> (i32, i32) {
    %c0_i32 = arith.constant 0 : i32
    return %arg0, %arg1 : i32, i32
  }
}

module attributes {stable_mosaic.version = 11 : i64} {
  func.func @_gemm_stats_kernel(%arg0: i32, %arg1: i32, %arg2: i32, %arg3: memref<32x128xbf16, #tpu.memory_space<vmem>>, %arg4: memref<128x128xbf16, #tpu.memory_space<vmem>>, %arg5: memref<32x128xbf16, #tpu.memory_space<vmem>>, %arg6: memref<1x1x128xf32, #tpu.memory_space<vmem>>, %arg7: memref<1x1x128xf32, #tpu.memory_space<vmem>>, %arg8: memref<32x128xf32, #tpu.memory_space<vmem>>) attributes {dimension_semantics = [#tpu.dimension_semantics<parallel>, #tpu.dimension_semantics<parallel>, #tpu.dimension_semantics<arbitrary>], iteration_bounds = array<i64: 1, 1, 5>, scalar_prefetch = 0 : i64, scratch_operands = 1 : i64, tpu.core_type = #tpu.core_type<tc>, window_params = [{transform_indices = @transform_0, window_bounds = array<i64: 32, 128>}, {transform_indices = @transform_1, window_bounds = array<i64: 128, 128>}, {transform_indices = @transform_2, window_bounds = array<i64: 32, 128>}, {transform_indices = @transform_3, window_bounds = array<i64: 1, 1, 128>}, {transform_indices = @transform_4, window_bounds = array<i64: 1, 1, 128>}]} {
    %c0_i32 = arith.constant 0 : i32
    %0 = arith.cmpi eq, %arg2, %c0_i32 : i32
    %1 = arith.extui %0 : i1 to i32
    %c0_i32_0 = arith.constant 0 : i32
    %2 = arith.cmpi ne, %1, %c0_i32_0 : i32
    scf.if %2 {
      %cst_9 = arith.constant 0.000000e+00 : f32
      %12 = vector.broadcast %cst_9 : f32 to vector<32x128xf32>
      %c0_10 = arith.constant 0 : index
      %c0_11 = arith.constant 0 : index
      %13 = vector.load %arg8[%c0_10, %c0_11] : memref<32x128xf32, #tpu.memory_space<vmem>>, vector<32x128xf32>
      tpu.vector_store %arg8[%c0_10, %c0_11], %12 {strides = array<i32>} : memref<32x128xf32, #tpu.memory_space<vmem>>, vector<32x128xf32>,
    } else {
    }
    %c0 = arith.constant 0 : index
    %c0_1 = arith.constant 0 : index
    %3 = vector.load %arg8[%c0, %c0_1] : memref<32x128xf32, #tpu.memory_space<vmem>>, vector<32x128xf32>
    %c0_2 = arith.constant 0 : index
    %c0_3 = arith.constant 0 : index
    %4 = vector.load %arg3[%c0_2, %c0_3] : memref<32x128xbf16, #tpu.memory_space<vmem>>, vector<32x128xbf16>
    %c0_4 = arith.constant 0 : index
    %c0_5 = arith.constant 0 : index
    %5 = vector.load %arg4[%c0_4, %c0_5] : memref<128x128xbf16, #tpu.memory_space<vmem>>, vector<128x128xbf16>
    %cst = arith.constant dense<0.000000e+00> : vector<32x128xf32>
    %6 = tpu.matmul %4, %5, %cst {dimension_numbers = #tpu.dot_dimension_numbers<[1], [0], [0], [1], [0, 0, 1, 1], [], []>} : vector<32x128xbf16>, vector<128x128xbf16>, vector<32x128xf32> -> vector<32x128xf32>
    %7 = arith.addf %3, %6 : vector<32x128xf32>
    %c0_6 = arith.constant 0 : index
    %c0_7 = arith.constant 0 : index
    %8 = vector.load %arg8[%c0_6, %c0_7] : memref<32x128xf32, #tpu.memory_space<vmem>>, vector<32x128xf32>
    tpu.vector_store %arg8[%c0_6, %c0_7], %7 {strides = array<i32>} : memref<32x128xf32, #tpu.memory_space<vmem>>, vector<32x128xf32>,
    %c4_i32 = arith.constant 4 : i32
    %9 = arith.cmpi eq, %arg2, %c4_i32 : i32
    %10 = arith.extui %9 : i1 to i32
    %c0_i32_8 = arith.constant 0 : i32
    %11 = arith.cmpi ne, %10, %c0_i32_8 : i32
    scf.if %11 {
      %c0_9 = arith.constant 0 : index
      %c0_10 = arith.constant 0 : index
      %12 = vector.load %arg8[%c0_9, %c0_10] : memref<32x128xf32, #tpu.memory_space<vmem>>, vector<32x128xf32>
      %13 = arith.truncf %12 : vector<32x128xf32> to vector<32x128xbf16>
      %c0_11 = arith.constant 0 : index
      %c0_12 = arith.constant 0 : index
      %14 = vector.load %arg5[%c0_11, %c0_12] : memref<32x128xbf16, #tpu.memory_space<vmem>>, vector<32x128xbf16>
      tpu.vector_store %arg5[%c0_11, %c0_12], %13 {strides = array<i32>} : memref<32x128xbf16, #tpu.memory_space<vmem>>, vector<32x128xbf16>,
      %cst_13 = arith.constant dense<0.000000e+00> : vector<128xf32>
      %15 = vector.multi_reduction <add>, %12, %cst_13 [0] : vector<32x128xf32> to vector<128xf32>
      %16 = vector.shape_cast %15 : vector<128xf32> to vector<1x1x128xf32>
      %c0_14 = arith.constant 0 : index
      %c0_15 = arith.constant 0 : index
      %c0_16 = arith.constant 0 : index
      %17 = vector.load %arg6[%c0_14, %c0_15, %c0_16] : memref<1x1x128xf32, #tpu.memory_space<vmem>>, vector<1x1x128xf32>
      tpu.vector_store %arg6[%c0_14, %c0_15, %c0_16], %16 {strides = array<i32>} : memref<1x1x128xf32, #tpu.memory_space<vmem>>, vector<1x1x128xf32>,
      %18 = arith.mulf %12, %12 : vector<32x128xf32>
      %cst_17 = arith.constant dense<0.000000e+00> : vector<128xf32>
      %19 = vector.multi_reduction <add>, %18, %cst_17 [0] : vector<32x128xf32> to vector<128xf32>
      %20 = vector.shape_cast %19 : vector<128xf32> to vector<1x1x128xf32>
      %c0_18 = arith.constant 0 : index
      %c0_19 = arith.constant 0 : index
      %c0_20 = arith.constant 0 : index
      %21 = vector.load %arg7[%c0_18, %c0_19, %c0_20] : memref<1x1x128xf32, #tpu.memory_space<vmem>>, vector<1x1x128xf32>
      tpu.vector_store %arg7[%c0_18, %c0_19, %c0_20], %20 {strides = array<i32>} : memref<1x1x128xf32, #tpu.memory_space<vmem>>, vector<1x1x128xf32>,
    } else {
    }
    return
  }
  func.func @transform_0(%arg0: i32, %arg1: i32, %arg2: i32) -> (i32, i32) {
    %c0_i32 = arith.constant 0 : i32
    return %arg0, %arg2 : i32, i32
  }
  func.func @transform_1(%arg0: i32, %arg1: i32, %arg2: i32) -> (i32, i32) {
    %c0_i32 = arith.constant 0 : i32
    return %arg2, %arg1 : i32, i32
  }
  func.func @transform_2(%arg0: i32, %arg1: i32, %arg2: i32) -> (i32, i32) {
    %c0_i32 = arith.constant 0 : i32
    return %arg0, %arg1 : i32, i32
  }
  func.func @transform_3(%arg0: i32, %arg1: i32, %arg2: i32) -> (i32, i32, i32) {
    %c0_i32 = arith.constant 0 : i32
    %c0_i32_0 = arith.constant 0 : i32
    return %arg0, %c0_i32, %arg1 : i32, i32, i32
  }
  func.func @transform_4(%arg0: i32, %arg1: i32, %arg2: i32) -> (i32, i32, i32) {
    %c0_i32 = arith.constant 0 : i32
    %c0_i32_0 = arith.constant 0 : i32
    return %arg0, %c0_i32, %arg1 : i32, i32, i32
  }
}

module attributes {stable_mosaic.version = 11 : i64} {
  func.func @_gemm_stats_kernel(%arg0: i32, %arg1: i32, %arg2: i32, %arg3: memref<32x384xbf16, #tpu.memory_space<vmem>>, %arg4: memref<384x128xbf16, #tpu.memory_space<vmem>>, %arg5: memref<32x128xbf16, #tpu.memory_space<vmem>>, %arg6: memref<1x1x128xf32, #tpu.memory_space<vmem>>, %arg7: memref<1x1x128xf32, #tpu.memory_space<vmem>>, %arg8: memref<32x128xf32, #tpu.memory_space<vmem>>) attributes {dimension_semantics = [#tpu.dimension_semantics<parallel>, #tpu.dimension_semantics<parallel>, #tpu.dimension_semantics<arbitrary>], iteration_bounds = array<i64: 1, 1, 3>, scalar_prefetch = 0 : i64, scratch_operands = 1 : i64, tpu.core_type = #tpu.core_type<tc>, window_params = [{transform_indices = @transform_0, window_bounds = array<i64: 32, 384>}, {transform_indices = @transform_1, window_bounds = array<i64: 384, 128>}, {transform_indices = @transform_2, window_bounds = array<i64: 32, 128>}, {transform_indices = @transform_3, window_bounds = array<i64: 1, 1, 128>}, {transform_indices = @transform_4, window_bounds = array<i64: 1, 1, 128>}]} {
    %c0_i32 = arith.constant 0 : i32
    %0 = arith.cmpi eq, %arg2, %c0_i32 : i32
    %1 = arith.extui %0 : i1 to i32
    %c0_i32_0 = arith.constant 0 : i32
    %2 = arith.cmpi ne, %1, %c0_i32_0 : i32
    scf.if %2 {
      %cst_9 = arith.constant 0.000000e+00 : f32
      %12 = vector.broadcast %cst_9 : f32 to vector<32x128xf32>
      %c0_10 = arith.constant 0 : index
      %c0_11 = arith.constant 0 : index
      %13 = vector.load %arg8[%c0_10, %c0_11] : memref<32x128xf32, #tpu.memory_space<vmem>>, vector<32x128xf32>
      tpu.vector_store %arg8[%c0_10, %c0_11], %12 {strides = array<i32>} : memref<32x128xf32, #tpu.memory_space<vmem>>, vector<32x128xf32>,
    } else {
    }
    %c0 = arith.constant 0 : index
    %c0_1 = arith.constant 0 : index
    %3 = vector.load %arg8[%c0, %c0_1] : memref<32x128xf32, #tpu.memory_space<vmem>>, vector<32x128xf32>
    %c0_2 = arith.constant 0 : index
    %c0_3 = arith.constant 0 : index
    %4 = vector.load %arg3[%c0_2, %c0_3] : memref<32x384xbf16, #tpu.memory_space<vmem>>, vector<32x384xbf16>
    %c0_4 = arith.constant 0 : index
    %c0_5 = arith.constant 0 : index
    %5 = vector.load %arg4[%c0_4, %c0_5] : memref<384x128xbf16, #tpu.memory_space<vmem>>, vector<384x128xbf16>
    %cst = arith.constant dense<0.000000e+00> : vector<32x128xf32>
    %6 = tpu.matmul %4, %5, %cst {dimension_numbers = #tpu.dot_dimension_numbers<[1], [0], [0], [1], [0, 0, 1, 1], [], []>} : vector<32x384xbf16>, vector<384x128xbf16>, vector<32x128xf32> -> vector<32x128xf32>
    %7 = arith.addf %3, %6 : vector<32x128xf32>
    %c0_6 = arith.constant 0 : index
    %c0_7 = arith.constant 0 : index
    %8 = vector.load %arg8[%c0_6, %c0_7] : memref<32x128xf32, #tpu.memory_space<vmem>>, vector<32x128xf32>
    tpu.vector_store %arg8[%c0_6, %c0_7], %7 {strides = array<i32>} : memref<32x128xf32, #tpu.memory_space<vmem>>, vector<32x128xf32>,
    %c2_i32 = arith.constant 2 : i32
    %9 = arith.cmpi eq, %arg2, %c2_i32 : i32
    %10 = arith.extui %9 : i1 to i32
    %c0_i32_8 = arith.constant 0 : i32
    %11 = arith.cmpi ne, %10, %c0_i32_8 : i32
    scf.if %11 {
      %c0_9 = arith.constant 0 : index
      %c0_10 = arith.constant 0 : index
      %12 = vector.load %arg8[%c0_9, %c0_10] : memref<32x128xf32, #tpu.memory_space<vmem>>, vector<32x128xf32>
      %13 = arith.truncf %12 : vector<32x128xf32> to vector<32x128xbf16>
      %c0_11 = arith.constant 0 : index
      %c0_12 = arith.constant 0 : index
      %14 = vector.load %arg5[%c0_11, %c0_12] : memref<32x128xbf16, #tpu.memory_space<vmem>>, vector<32x128xbf16>
      tpu.vector_store %arg5[%c0_11, %c0_12], %13 {strides = array<i32>} : memref<32x128xbf16, #tpu.memory_space<vmem>>, vector<32x128xbf16>,
      %cst_13 = arith.constant dense<0.000000e+00> : vector<128xf32>
      %15 = vector.multi_reduction <add>, %12, %cst_13 [0] : vector<32x128xf32> to vector<128xf32>
      %16 = vector.shape_cast %15 : vector<128xf32> to vector<1x1x128xf32>
      %c0_14 = arith.constant 0 : index
      %c0_15 = arith.constant 0 : index
      %c0_16 = arith.constant 0 : index
      %17 = vector.load %arg6[%c0_14, %c0_15, %c0_16] : memref<1x1x128xf32, #tpu.memory_space<vmem>>, vector<1x1x128xf32>
      tpu.vector_store %arg6[%c0_14, %c0_15, %c0_16], %16 {strides = array<i32>} : memref<1x1x128xf32, #tpu.memory_space<vmem>>, vector<1x1x128xf32>,
      %18 = arith.mulf %12, %12 : vector<32x128xf32>
      %cst_17 = arith.constant dense<0.000000e+00> : vector<128xf32>
      %19 = vector.multi_reduction <add>, %18, %cst_17 [0] : vector<32x128xf32> to vector<128xf32>
      %20 = vector.shape_cast %19 : vector<128xf32> to vector<1x1x128xf32>
      %c0_18 = arith.constant 0 : index
      %c0_19 = arith.constant 0 : index
      %c0_20 = arith.constant 0 : index
      %21 = vector.load %arg7[%c0_18, %c0_19, %c0_20] : memref<1x1x128xf32, #tpu.memory_space<vmem>>, vector<1x1x128xf32>
      tpu.vector_store %arg7[%c0_18, %c0_19, %c0_20], %20 {strides = array<i32>} : memref<1x1x128xf32, #tpu.memory_space<vmem>>, vector<1x1x128xf32>,
    } else {
    }
    return
  }
  func.func @transform_0(%arg0: i32, %arg1: i32, %arg2: i32) -> (i32, i32) {
    %c0_i32 = arith.constant 0 : i32
    return %arg0, %arg2 : i32, i32
  }
  func.func @transform_1(%arg0: i32, %arg1: i32, %arg2: i32) -> (i32, i32) {
    %c0_i32 = arith.constant 0 : i32
    return %arg2, %arg1 : i32, i32
  }
  func.func @transform_2(%arg0: i32, %arg1: i32, %arg2: i32) -> (i32, i32) {
    %c0_i32 = arith.constant 0 : i32
    return %arg0, %arg1 : i32, i32
  }
  func.func @transform_3(%arg0: i32, %arg1: i32, %arg2: i32) -> (i32, i32, i32) {
    %c0_i32 = arith.constant 0 : i32
    %c0_i32_0 = arith.constant 0 : i32
    return %arg0, %c0_i32, %arg1 : i32, i32, i32
  }
  func.func @transform_4(%arg0: i32, %arg1: i32, %arg2: i32) -> (i32, i32, i32) {
    %c0_i32 = arith.constant 0 : i32
    %c0_i32_0 = arith.constant 0 : i32
    return %arg0, %c0_i32, %arg1 : i32, i32, i32
  }
}

module attributes {stable_mosaic.version = 11 : i64} {
  func.func @_bn_res_kernel(%arg0: i32, %arg1: i32, %arg2: memref<32x128xbf16, #tpu.memory_space<vmem>>, %arg3: memref<32x128xbf16, #tpu.memory_space<vmem>>, %arg4: memref<1x128xf32, #tpu.memory_space<vmem>>, %arg5: memref<1x128xf32, #tpu.memory_space<vmem>>, %arg6: memref<32x128xbf16, #tpu.memory_space<vmem>>) attributes {dimension_semantics = [#tpu.dimension_semantics<parallel>, #tpu.dimension_semantics<parallel>], iteration_bounds = array<i64: 1, 1>, scalar_prefetch = 0 : i64, scratch_operands = 0 : i64, tpu.core_type = #tpu.core_type<tc>, window_params = [{transform_indices = @transform_0, window_bounds = array<i64: 32, 128>}, {transform_indices = @transform_1, window_bounds = array<i64: 32, 128>}, {transform_indices = @transform_2, window_bounds = array<i64: 1, 128>}, {transform_indices = @transform_3, window_bounds = array<i64: 1, 128>}, {transform_indices = @transform_4, window_bounds = array<i64: 32, 128>}]} {
    %c0 = arith.constant 0 : index
    %c0_0 = arith.constant 0 : index
    %0 = vector.load %arg2[%c0, %c0_0] : memref<32x128xbf16, #tpu.memory_space<vmem>>, vector<32x128xbf16>
    %1 = arith.extf %0 : vector<32x128xbf16> to vector<32x128xf32>
    %c0_1 = arith.constant 0 : index
    %c0_2 = arith.constant 0 : index
    %2 = vector.load %arg4[%c0_1, %c0_2] : memref<1x128xf32, #tpu.memory_space<vmem>>, vector<1x128xf32>
    %3 = vector.broadcast %2 : vector<1x128xf32> to vector<32x128xf32>
    %4 = arith.mulf %1, %3 : vector<32x128xf32>
    %c0_3 = arith.constant 0 : index
    %c0_4 = arith.constant 0 : index
    %5 = vector.load %arg5[%c0_3, %c0_4] : memref<1x128xf32, #tpu.memory_space<vmem>>, vector<1x128xf32>
    %6 = vector.broadcast %5 : vector<1x128xf32> to vector<32x128xf32>
    %7 = arith.addf %4, %6 : vector<32x128xf32>
    %c0_5 = arith.constant 0 : index
    %c0_6 = arith.constant 0 : index
    %8 = vector.load %arg3[%c0_5, %c0_6] : memref<32x128xbf16, #tpu.memory_space<vmem>>, vector<32x128xbf16>
    %9 = arith.extf %8 : vector<32x128xbf16> to vector<32x128xf32>
    %10 = arith.addf %7, %9 : vector<32x128xf32>
    %11 = arith.truncf %10 : vector<32x128xf32> to vector<32x128xbf16>
    %c0_7 = arith.constant 0 : index
    %c0_8 = arith.constant 0 : index
    %12 = vector.load %arg6[%c0_7, %c0_8] : memref<32x128xbf16, #tpu.memory_space<vmem>>, vector<32x128xbf16>
    tpu.vector_store %arg6[%c0_7, %c0_8], %11 {strides = array<i32>} : memref<32x128xbf16, #tpu.memory_space<vmem>>, vector<32x128xbf16>,
    return
  }
  func.func @transform_0(%arg0: i32, %arg1: i32) -> (i32, i32) {
    %c0_i32 = arith.constant 0 : i32
    return %arg0, %arg1 : i32, i32
  }
  func.func @transform_1(%arg0: i32, %arg1: i32) -> (i32, i32) {
    %c0_i32 = arith.constant 0 : i32
    return %arg0, %arg1 : i32, i32
  }
  func.func @transform_2(%arg0: i32, %arg1: i32) -> (i32, i32) {
    %c0_i32 = arith.constant 0 : i32
    %c0_i32_0 = arith.constant 0 : i32
    return %c0_i32, %arg1 : i32, i32
  }
  func.func @transform_3(%arg0: i32, %arg1: i32) -> (i32, i32) {
    %c0_i32 = arith.constant 0 : i32
    %c0_i32_0 = arith.constant 0 : i32
    return %c0_i32, %arg1 : i32, i32
  }
  func.func @transform_4(%arg0: i32, %arg1: i32) -> (i32, i32) {
    %c0_i32 = arith.constant 0 : i32
    return %arg0, %arg1 : i32, i32
  }
}

module attributes {stable_mosaic.version = 11 : i64} {
  func.func @_gemm_stats_kernel(%arg0: i32, %arg1: i32, %arg2: i32, %arg3: memref<32x512xbf16, #tpu.memory_space<vmem>>, %arg4: memref<512x128xbf16, #tpu.memory_space<vmem>>, %arg5: memref<32x128xbf16, #tpu.memory_space<vmem>>, %arg6: memref<1x1x128xf32, #tpu.memory_space<vmem>>, %arg7: memref<1x1x128xf32, #tpu.memory_space<vmem>>, %arg8: memref<32x128xf32, #tpu.memory_space<vmem>>) attributes {dimension_semantics = [#tpu.dimension_semantics<parallel>, #tpu.dimension_semantics<parallel>, #tpu.dimension_semantics<arbitrary>], iteration_bounds = array<i64: 1, 2, 1>, scalar_prefetch = 0 : i64, scratch_operands = 1 : i64, tpu.core_type = #tpu.core_type<tc>, window_params = [{transform_indices = @transform_0, window_bounds = array<i64: 32, 512>}, {transform_indices = @transform_1, window_bounds = array<i64: 512, 128>}, {transform_indices = @transform_2, window_bounds = array<i64: 32, 128>}, {transform_indices = @transform_3, window_bounds = array<i64: 1, 1, 128>}, {transform_indices = @transform_4, window_bounds = array<i64: 1, 1, 128>}]} {
    %c0_i32 = arith.constant 0 : i32
    %0 = arith.cmpi eq, %arg2, %c0_i32 : i32
    %1 = arith.extui %0 : i1 to i32
    %c0_i32_0 = arith.constant 0 : i32
    %2 = arith.cmpi ne, %1, %c0_i32_0 : i32
    scf.if %2 {
      %cst_10 = arith.constant 0.000000e+00 : f32
      %12 = vector.broadcast %cst_10 : f32 to vector<32x128xf32>
      %c0_11 = arith.constant 0 : index
      %c0_12 = arith.constant 0 : index
      %13 = vector.load %arg8[%c0_11, %c0_12] : memref<32x128xf32, #tpu.memory_space<vmem>>, vector<32x128xf32>
      tpu.vector_store %arg8[%c0_11, %c0_12], %12 {strides = array<i32>} : memref<32x128xf32, #tpu.memory_space<vmem>>, vector<32x128xf32>,
    } else {
    }
    %c0 = arith.constant 0 : index
    %c0_1 = arith.constant 0 : index
    %3 = vector.load %arg8[%c0, %c0_1] : memref<32x128xf32, #tpu.memory_space<vmem>>, vector<32x128xf32>
    %c0_2 = arith.constant 0 : index
    %c0_3 = arith.constant 0 : index
    %4 = vector.load %arg3[%c0_2, %c0_3] : memref<32x512xbf16, #tpu.memory_space<vmem>>, vector<32x512xbf16>
    %c0_4 = arith.constant 0 : index
    %c0_5 = arith.constant 0 : index
    %5 = vector.load %arg4[%c0_4, %c0_5] : memref<512x128xbf16, #tpu.memory_space<vmem>>, vector<512x128xbf16>
    %cst = arith.constant dense<0.000000e+00> : vector<32x128xf32>
    %6 = tpu.matmul %4, %5, %cst {dimension_numbers = #tpu.dot_dimension_numbers<[1], [0], [0], [1], [0, 0, 1, 1], [], []>} : vector<32x512xbf16>, vector<512x128xbf16>, vector<32x128xf32> -> vector<32x128xf32>
    %7 = arith.addf %3, %6 : vector<32x128xf32>
    %c0_6 = arith.constant 0 : index
    %c0_7 = arith.constant 0 : index
    %8 = vector.load %arg8[%c0_6, %c0_7] : memref<32x128xf32, #tpu.memory_space<vmem>>, vector<32x128xf32>
    tpu.vector_store %arg8[%c0_6, %c0_7], %7 {strides = array<i32>} : memref<32x128xf32, #tpu.memory_space<vmem>>, vector<32x128xf32>,
    %c0_i32_8 = arith.constant 0 : i32
    %9 = arith.cmpi eq, %arg2, %c0_i32_8 : i32
    %10 = arith.extui %9 : i1 to i32
    %c0_i32_9 = arith.constant 0 : i32
    %11 = arith.cmpi ne, %10, %c0_i32_9 : i32
    scf.if %11 {
      %c0_10 = arith.constant 0 : index
      %c0_11 = arith.constant 0 : index
      %12 = vector.load %arg8[%c0_10, %c0_11] : memref<32x128xf32, #tpu.memory_space<vmem>>, vector<32x128xf32>
      %13 = arith.truncf %12 : vector<32x128xf32> to vector<32x128xbf16>
      %c0_12 = arith.constant 0 : index
      %c0_13 = arith.constant 0 : index
      %14 = vector.load %arg5[%c0_12, %c0_13] : memref<32x128xbf16, #tpu.memory_space<vmem>>, vector<32x128xbf16>
      tpu.vector_store %arg5[%c0_12, %c0_13], %13 {strides = array<i32>} : memref<32x128xbf16, #tpu.memory_space<vmem>>, vector<32x128xbf16>,
      %cst_14 = arith.constant dense<0.000000e+00> : vector<128xf32>
      %15 = vector.multi_reduction <add>, %12, %cst_14 [0] : vector<32x128xf32> to vector<128xf32>
      %16 = vector.shape_cast %15 : vector<128xf32> to vector<1x1x128xf32>
      %c0_15 = arith.constant 0 : index
      %c0_16 = arith.constant 0 : index
      %c0_17 = arith.constant 0 : index
      %17 = vector.load %arg6[%c0_15, %c0_16, %c0_17] : memref<1x1x128xf32, #tpu.memory_space<vmem>>, vector<1x1x128xf32>
      tpu.vector_store %arg6[%c0_15, %c0_16, %c0_17], %16 {strides = array<i32>} : memref<1x1x128xf32, #tpu.memory_space<vmem>>, vector<1x1x128xf32>,
      %18 = arith.mulf %12, %12 : vector<32x128xf32>
      %cst_18 = arith.constant dense<0.000000e+00> : vector<128xf32>
      %19 = vector.multi_reduction <add>, %18, %cst_18 [0] : vector<32x128xf32> to vector<128xf32>
      %20 = vector.shape_cast %19 : vector<128xf32> to vector<1x1x128xf32>
      %c0_19 = arith.constant 0 : index
      %c0_20 = arith.constant 0 : index
      %c0_21 = arith.constant 0 : index
      %21 = vector.load %arg7[%c0_19, %c0_20, %c0_21] : memref<1x1x128xf32, #tpu.memory_space<vmem>>, vector<1x1x128xf32>
      tpu.vector_store %arg7[%c0_19, %c0_20, %c0_21], %20 {strides = array<i32>} : memref<1x1x128xf32, #tpu.memory_space<vmem>>, vector<1x1x128xf32>,
    } else {
    }
    return
  }
  func.func @transform_0(%arg0: i32, %arg1: i32, %arg2: i32) -> (i32, i32) {
    %c0_i32 = arith.constant 0 : i32
    return %arg0, %arg2 : i32, i32
  }
  func.func @transform_1(%arg0: i32, %arg1: i32, %arg2: i32) -> (i32, i32) {
    %c0_i32 = arith.constant 0 : i32
    return %arg2, %arg1 : i32, i32
  }
  func.func @transform_2(%arg0: i32, %arg1: i32, %arg2: i32) -> (i32, i32) {
    %c0_i32 = arith.constant 0 : i32
    return %arg0, %arg1 : i32, i32
  }
  func.func @transform_3(%arg0: i32, %arg1: i32, %arg2: i32) -> (i32, i32, i32) {
    %c0_i32 = arith.constant 0 : i32
    %c0_i32_0 = arith.constant 0 : i32
    return %arg0, %c0_i32, %arg1 : i32, i32, i32
  }
  func.func @transform_4(%arg0: i32, %arg1: i32, %arg2: i32) -> (i32, i32, i32) {
    %c0_i32 = arith.constant 0 : i32
    %c0_i32_0 = arith.constant 0 : i32
    return %arg0, %c0_i32, %arg1 : i32, i32, i32
  }
}

module attributes {stable_mosaic.version = 11 : i64} {
  func.func @_bn_act_kernel(%arg0: i32, %arg1: i32, %arg2: memref<32x128xbf16, #tpu.memory_space<vmem>>, %arg3: memref<1x128xf32, #tpu.memory_space<vmem>>, %arg4: memref<1x128xf32, #tpu.memory_space<vmem>>, %arg5: memref<32x128xbf16, #tpu.memory_space<vmem>>) attributes {dimension_semantics = [#tpu.dimension_semantics<parallel>, #tpu.dimension_semantics<parallel>], iteration_bounds = array<i64: 1, 2>, scalar_prefetch = 0 : i64, scratch_operands = 0 : i64, tpu.core_type = #tpu.core_type<tc>, window_params = [{transform_indices = @transform_0, window_bounds = array<i64: 32, 128>}, {transform_indices = @transform_1, window_bounds = array<i64: 1, 128>}, {transform_indices = @transform_2, window_bounds = array<i64: 1, 128>}, {transform_indices = @transform_3, window_bounds = array<i64: 32, 128>}]} {
    %c0 = arith.constant 0 : index
    %c0_0 = arith.constant 0 : index
    %0 = vector.load %arg2[%c0, %c0_0] : memref<32x128xbf16, #tpu.memory_space<vmem>>, vector<32x128xbf16>
    %1 = arith.extf %0 : vector<32x128xbf16> to vector<32x128xf32>
    %c0_1 = arith.constant 0 : index
    %c0_2 = arith.constant 0 : index
    %2 = vector.load %arg3[%c0_1, %c0_2] : memref<1x128xf32, #tpu.memory_space<vmem>>, vector<1x128xf32>
    %3 = vector.broadcast %2 : vector<1x128xf32> to vector<32x128xf32>
    %4 = arith.mulf %1, %3 : vector<32x128xf32>
    %c0_3 = arith.constant 0 : index
    %c0_4 = arith.constant 0 : index
    %5 = vector.load %arg4[%c0_3, %c0_4] : memref<1x128xf32, #tpu.memory_space<vmem>>, vector<1x128xf32>
    %6 = vector.broadcast %5 : vector<1x128xf32> to vector<32x128xf32>
    %7 = arith.addf %4, %6 : vector<32x128xf32>
    %cst = arith.constant 0.000000e+00 : f32
    %8 = vector.broadcast %cst : f32 to vector<32x128xf32>
    %9 = arith.maximumf %7, %8 : vector<32x128xf32>
    %10 = arith.truncf %9 : vector<32x128xf32> to vector<32x128xbf16>
    %c0_5 = arith.constant 0 : index
    %c0_6 = arith.constant 0 : index
    %11 = vector.load %arg5[%c0_5, %c0_6] : memref<32x128xbf16, #tpu.memory_space<vmem>>, vector<32x128xbf16>
    tpu.vector_store %arg5[%c0_5, %c0_6], %10 {strides = array<i32>} : memref<32x128xbf16, #tpu.memory_space<vmem>>, vector<32x128xbf16>,
    return
  }
  func.func @transform_0(%arg0: i32, %arg1: i32) -> (i32, i32) {
    %c0_i32 = arith.constant 0 : i32
    return %arg0, %arg1 : i32, i32
  }
  func.func @transform_1(%arg0: i32, %arg1: i32) -> (i32, i32) {
    %c0_i32 = arith.constant 0 : i32
    %c0_i32_0 = arith.constant 0 : i32
    return %c0_i32, %arg1 : i32, i32
  }
  func.func @transform_2(%arg0: i32, %arg1: i32) -> (i32, i32) {
    %c0_i32 = arith.constant 0 : i32
    %c0_i32_0 = arith.constant 0 : i32
    return %c0_i32, %arg1 : i32, i32
  }
  func.func @transform_3(%arg0: i32, %arg1: i32) -> (i32, i32) {
    %c0_i32 = arith.constant 0 : i32
    return %arg0, %arg1 : i32, i32
  }
}

module attributes {stable_mosaic.version = 11 : i64} {
  func.func @_gemm_stats_kernel(%arg0: i32, %arg1: i32, %arg2: i32, %arg3: memref<128x256xbf16, #tpu.memory_space<vmem>>, %arg4: memref<256x128xbf16, #tpu.memory_space<vmem>>, %arg5: memref<128x128xbf16, #tpu.memory_space<vmem>>, %arg6: memref<1x1x128xf32, #tpu.memory_space<vmem>>, %arg7: memref<1x1x128xf32, #tpu.memory_space<vmem>>, %arg8: memref<128x128xf32, #tpu.memory_space<vmem>>) attributes {dimension_semantics = [#tpu.dimension_semantics<parallel>, #tpu.dimension_semantics<parallel>, #tpu.dimension_semantics<arbitrary>], iteration_bounds = array<i64: 1, 1, 1>, scalar_prefetch = 0 : i64, scratch_operands = 1 : i64, tpu.core_type = #tpu.core_type<tc>, window_params = [{transform_indices = @transform_0, window_bounds = array<i64: 128, 256>}, {transform_indices = @transform_1, window_bounds = array<i64: 256, 128>}, {transform_indices = @transform_2, window_bounds = array<i64: 128, 128>}, {transform_indices = @transform_3, window_bounds = array<i64: 1, 1, 128>}, {transform_indices = @transform_4, window_bounds = array<i64: 1, 1, 128>}]} {
    %c0_i32 = arith.constant 0 : i32
    %0 = arith.cmpi eq, %arg2, %c0_i32 : i32
    %1 = arith.extui %0 : i1 to i32
    %c0_i32_0 = arith.constant 0 : i32
    %2 = arith.cmpi ne, %1, %c0_i32_0 : i32
    scf.if %2 {
      %cst_10 = arith.constant 0.000000e+00 : f32
      %12 = vector.broadcast %cst_10 : f32 to vector<128x128xf32>
      %c0_11 = arith.constant 0 : index
      %c0_12 = arith.constant 0 : index
      %13 = vector.load %arg8[%c0_11, %c0_12] : memref<128x128xf32, #tpu.memory_space<vmem>>, vector<128x128xf32>
      tpu.vector_store %arg8[%c0_11, %c0_12], %12 {strides = array<i32>} : memref<128x128xf32, #tpu.memory_space<vmem>>, vector<128x128xf32>,
    } else {
    }
    %c0 = arith.constant 0 : index
    %c0_1 = arith.constant 0 : index
    %3 = vector.load %arg8[%c0, %c0_1] : memref<128x128xf32, #tpu.memory_space<vmem>>, vector<128x128xf32>
    %c0_2 = arith.constant 0 : index
    %c0_3 = arith.constant 0 : index
    %4 = vector.load %arg3[%c0_2, %c0_3] : memref<128x256xbf16, #tpu.memory_space<vmem>>, vector<128x256xbf16>
    %c0_4 = arith.constant 0 : index
    %c0_5 = arith.constant 0 : index
    %5 = vector.load %arg4[%c0_4, %c0_5] : memref<256x128xbf16, #tpu.memory_space<vmem>>, vector<256x128xbf16>
    %cst = arith.constant dense<0.000000e+00> : vector<128x128xf32>
    %6 = tpu.matmul %4, %5, %cst {dimension_numbers = #tpu.dot_dimension_numbers<[1], [0], [0], [1], [0, 0, 1, 1], [], []>} : vector<128x256xbf16>, vector<256x128xbf16>, vector<128x128xf32> -> vector<128x128xf32>
    %7 = arith.addf %3, %6 : vector<128x128xf32>
    %c0_6 = arith.constant 0 : index
    %c0_7 = arith.constant 0 : index
    %8 = vector.load %arg8[%c0_6, %c0_7] : memref<128x128xf32, #tpu.memory_space<vmem>>, vector<128x128xf32>
    tpu.vector_store %arg8[%c0_6, %c0_7], %7 {strides = array<i32>} : memref<128x128xf32, #tpu.memory_space<vmem>>, vector<128x128xf32>,
    %c0_i32_8 = arith.constant 0 : i32
    %9 = arith.cmpi eq, %arg2, %c0_i32_8 : i32
    %10 = arith.extui %9 : i1 to i32
    %c0_i32_9 = arith.constant 0 : i32
    %11 = arith.cmpi ne, %10, %c0_i32_9 : i32
    scf.if %11 {
      %c0_10 = arith.constant 0 : index
      %c0_11 = arith.constant 0 : index
      %12 = vector.load %arg8[%c0_10, %c0_11] : memref<128x128xf32, #tpu.memory_space<vmem>>, vector<128x128xf32>
      %13 = arith.truncf %12 : vector<128x128xf32> to vector<128x128xbf16>
      %c0_12 = arith.constant 0 : index
      %c0_13 = arith.constant 0 : index
      %14 = vector.load %arg5[%c0_12, %c0_13] : memref<128x128xbf16, #tpu.memory_space<vmem>>, vector<128x128xbf16>
      tpu.vector_store %arg5[%c0_12, %c0_13], %13 {strides = array<i32>} : memref<128x128xbf16, #tpu.memory_space<vmem>>, vector<128x128xbf16>,
      %cst_14 = arith.constant dense<0.000000e+00> : vector<128xf32>
      %15 = vector.multi_reduction <add>, %12, %cst_14 [0] : vector<128x128xf32> to vector<128xf32>
      %16 = vector.shape_cast %15 : vector<128xf32> to vector<1x1x128xf32>
      %c0_15 = arith.constant 0 : index
      %c0_16 = arith.constant 0 : index
      %c0_17 = arith.constant 0 : index
      %17 = vector.load %arg6[%c0_15, %c0_16, %c0_17] : memref<1x1x128xf32, #tpu.memory_space<vmem>>, vector<1x1x128xf32>
      tpu.vector_store %arg6[%c0_15, %c0_16, %c0_17], %16 {strides = array<i32>} : memref<1x1x128xf32, #tpu.memory_space<vmem>>, vector<1x1x128xf32>,
      %18 = arith.mulf %12, %12 : vector<128x128xf32>
      %cst_18 = arith.constant dense<0.000000e+00> : vector<128xf32>
      %19 = vector.multi_reduction <add>, %18, %cst_18 [0] : vector<128x128xf32> to vector<128xf32>
      %20 = vector.shape_cast %19 : vector<128xf32> to vector<1x1x128xf32>
      %c0_19 = arith.constant 0 : index
      %c0_20 = arith.constant 0 : index
      %c0_21 = arith.constant 0 : index
      %21 = vector.load %arg7[%c0_19, %c0_20, %c0_21] : memref<1x1x128xf32, #tpu.memory_space<vmem>>, vector<1x1x128xf32>
      tpu.vector_store %arg7[%c0_19, %c0_20, %c0_21], %20 {strides = array<i32>} : memref<1x1x128xf32, #tpu.memory_space<vmem>>, vector<1x1x128xf32>,
    } else {
    }
    return
  }
  func.func @transform_0(%arg0: i32, %arg1: i32, %arg2: i32) -> (i32, i32) {
    %c0_i32 = arith.constant 0 : i32
    return %arg0, %arg2 : i32, i32
  }
  func.func @transform_1(%arg0: i32, %arg1: i32, %arg2: i32) -> (i32, i32) {
    %c0_i32 = arith.constant 0 : i32
    return %arg2, %arg1 : i32, i32
  }
  func.func @transform_2(%arg0: i32, %arg1: i32, %arg2: i32) -> (i32, i32) {
    %c0_i32 = arith.constant 0 : i32
    return %arg0, %arg1 : i32, i32
  }
  func.func @transform_3(%arg0: i32, %arg1: i32, %arg2: i32) -> (i32, i32, i32) {
    %c0_i32 = arith.constant 0 : i32
    %c0_i32_0 = arith.constant 0 : i32
    return %arg0, %c0_i32, %arg1 : i32, i32, i32
  }
  func.func @transform_4(%arg0: i32, %arg1: i32, %arg2: i32) -> (i32, i32, i32) {
    %c0_i32 = arith.constant 0 : i32
    %c0_i32_0 = arith.constant 0 : i32
    return %arg0, %c0_i32, %arg1 : i32, i32, i32
  }
}

module attributes {stable_mosaic.version = 11 : i64} {
  func.func @_gemm_stats_kernel(%arg0: i32, %arg1: i32, %arg2: i32, %arg3: memref<256x384xbf16, #tpu.memory_space<vmem>>, %arg4: memref<384x128xbf16, #tpu.memory_space<vmem>>, %arg5: memref<256x128xbf16, #tpu.memory_space<vmem>>, %arg6: memref<1x1x128xf32, #tpu.memory_space<vmem>>, %arg7: memref<1x1x128xf32, #tpu.memory_space<vmem>>, %arg8: memref<256x128xf32, #tpu.memory_space<vmem>>) attributes {dimension_semantics = [#tpu.dimension_semantics<parallel>, #tpu.dimension_semantics<parallel>, #tpu.dimension_semantics<arbitrary>], iteration_bounds = array<i64: 2, 1, 7>, scalar_prefetch = 0 : i64, scratch_operands = 1 : i64, tpu.core_type = #tpu.core_type<tc>, window_params = [{transform_indices = @transform_0, window_bounds = array<i64: 256, 384>}, {transform_indices = @transform_1, window_bounds = array<i64: 384, 128>}, {transform_indices = @transform_2, window_bounds = array<i64: 256, 128>}, {transform_indices = @transform_3, window_bounds = array<i64: 1, 1, 128>}, {transform_indices = @transform_4, window_bounds = array<i64: 1, 1, 128>}]} {
    %c0_i32 = arith.constant 0 : i32
    %0 = arith.cmpi eq, %arg2, %c0_i32 : i32
    %1 = arith.extui %0 : i1 to i32
    %c0_i32_0 = arith.constant 0 : i32
    %2 = arith.cmpi ne, %1, %c0_i32_0 : i32
    scf.if %2 {
      %cst_9 = arith.constant 0.000000e+00 : f32
      %12 = vector.broadcast %cst_9 : f32 to vector<256x128xf32>
      %c0_10 = arith.constant 0 : index
      %c0_11 = arith.constant 0 : index
      %13 = vector.load %arg8[%c0_10, %c0_11] : memref<256x128xf32, #tpu.memory_space<vmem>>, vector<256x128xf32>
      tpu.vector_store %arg8[%c0_10, %c0_11], %12 {strides = array<i32>} : memref<256x128xf32, #tpu.memory_space<vmem>>, vector<256x128xf32>,
    } else {
    }
    %c0 = arith.constant 0 : index
    %c0_1 = arith.constant 0 : index
    %3 = vector.load %arg8[%c0, %c0_1] : memref<256x128xf32, #tpu.memory_space<vmem>>, vector<256x128xf32>
    %c0_2 = arith.constant 0 : index
    %c0_3 = arith.constant 0 : index
    %4 = vector.load %arg3[%c0_2, %c0_3] : memref<256x384xbf16, #tpu.memory_space<vmem>>, vector<256x384xbf16>
    %c0_4 = arith.constant 0 : index
    %c0_5 = arith.constant 0 : index
    %5 = vector.load %arg4[%c0_4, %c0_5] : memref<384x128xbf16, #tpu.memory_space<vmem>>, vector<384x128xbf16>
    %cst = arith.constant dense<0.000000e+00> : vector<256x128xf32>
    %6 = tpu.matmul %4, %5, %cst {dimension_numbers = #tpu.dot_dimension_numbers<[1], [0], [0], [1], [0, 0, 1, 1], [], []>} : vector<256x384xbf16>, vector<384x128xbf16>, vector<256x128xf32> -> vector<256x128xf32>
    %7 = arith.addf %3, %6 : vector<256x128xf32>
    %c0_6 = arith.constant 0 : index
    %c0_7 = arith.constant 0 : index
    %8 = vector.load %arg8[%c0_6, %c0_7] : memref<256x128xf32, #tpu.memory_space<vmem>>, vector<256x128xf32>
    tpu.vector_store %arg8[%c0_6, %c0_7], %7 {strides = array<i32>} : memref<256x128xf32, #tpu.memory_space<vmem>>, vector<256x128xf32>,
    %c6_i32 = arith.constant 6 : i32
    %9 = arith.cmpi eq, %arg2, %c6_i32 : i32
    %10 = arith.extui %9 : i1 to i32
    %c0_i32_8 = arith.constant 0 : i32
    %11 = arith.cmpi ne, %10, %c0_i32_8 : i32
    scf.if %11 {
      %c0_9 = arith.constant 0 : index
      %c0_10 = arith.constant 0 : index
      %12 = vector.load %arg8[%c0_9, %c0_10] : memref<256x128xf32, #tpu.memory_space<vmem>>, vector<256x128xf32>
      %13 = arith.truncf %12 : vector<256x128xf32> to vector<256x128xbf16>
      %c0_11 = arith.constant 0 : index
      %c0_12 = arith.constant 0 : index
      %14 = vector.load %arg5[%c0_11, %c0_12] : memref<256x128xbf16, #tpu.memory_space<vmem>>, vector<256x128xbf16>
      tpu.vector_store %arg5[%c0_11, %c0_12], %13 {strides = array<i32>} : memref<256x128xbf16, #tpu.memory_space<vmem>>, vector<256x128xbf16>,
      %cst_13 = arith.constant dense<0.000000e+00> : vector<128xf32>
      %15 = vector.multi_reduction <add>, %12, %cst_13 [0] : vector<256x128xf32> to vector<128xf32>
      %16 = vector.shape_cast %15 : vector<128xf32> to vector<1x1x128xf32>
      %c0_14 = arith.constant 0 : index
      %c0_15 = arith.constant 0 : index
      %c0_16 = arith.constant 0 : index
      %17 = vector.load %arg6[%c0_14, %c0_15, %c0_16] : memref<1x1x128xf32, #tpu.memory_space<vmem>>, vector<1x1x128xf32>
      tpu.vector_store %arg6[%c0_14, %c0_15, %c0_16], %16 {strides = array<i32>} : memref<1x1x128xf32, #tpu.memory_space<vmem>>, vector<1x1x128xf32>,
      %18 = arith.mulf %12, %12 : vector<256x128xf32>
      %cst_17 = arith.constant dense<0.000000e+00> : vector<128xf32>
      %19 = vector.multi_reduction <add>, %18, %cst_17 [0] : vector<256x128xf32> to vector<128xf32>
      %20 = vector.shape_cast %19 : vector<128xf32> to vector<1x1x128xf32>
      %c0_18 = arith.constant 0 : index
      %c0_19 = arith.constant 0 : index
      %c0_20 = arith.constant 0 : index
      %21 = vector.load %arg7[%c0_18, %c0_19, %c0_20] : memref<1x1x128xf32, #tpu.memory_space<vmem>>, vector<1x1x128xf32>
      tpu.vector_store %arg7[%c0_18, %c0_19, %c0_20], %20 {strides = array<i32>} : memref<1x1x128xf32, #tpu.memory_space<vmem>>, vector<1x1x128xf32>,
    } else {
    }
    return
  }
  func.func @transform_0(%arg0: i32, %arg1: i32, %arg2: i32) -> (i32, i32) {
    %c0_i32 = arith.constant 0 : i32
    return %arg0, %arg2 : i32, i32
  }
  func.func @transform_1(%arg0: i32, %arg1: i32, %arg2: i32) -> (i32, i32) {
    %c0_i32 = arith.constant 0 : i32
    return %arg2, %arg1 : i32, i32
  }
  func.func @transform_2(%arg0: i32, %arg1: i32, %arg2: i32) -> (i32, i32) {
    %c0_i32 = arith.constant 0 : i32
    return %arg0, %arg1 : i32, i32
  }
  func.func @transform_3(%arg0: i32, %arg1: i32, %arg2: i32) -> (i32, i32, i32) {
    %c0_i32 = arith.constant 0 : i32
    %c0_i32_0 = arith.constant 0 : i32
    return %arg0, %c0_i32, %arg1 : i32, i32, i32
  }
  func.func @transform_4(%arg0: i32, %arg1: i32, %arg2: i32) -> (i32, i32, i32) {
    %c0_i32 = arith.constant 0 : i32
    %c0_i32_0 = arith.constant 0 : i32
    return %arg0, %c0_i32, %arg1 : i32, i32, i32
  }
}

</mosaic_0001>

<llo_original>
// kernel: style_transfer_forward.33
$region0: #{style_transfer_forward.33}
  #allocation0 [shape = 'u32[]', space=smem, size = 0x4, offset = 0x4, fixed_abs, tag = 'smem constant byte address 0x4 - core index']
  #allocation1 [shape = 'u32[144,128]{1,0:T(1,128)}', space=vmem, size = 0x12000, scoped, tag = 'internal scratch']
  %s0 = inlined_call_operand.vmem [shape: bf16[512,128], index: 0, kind: input, shape index: {}]
  %s1 = inlined_call_operand.vmem [shape: f32[1,128], index: 1, kind: input, shape index: {}]
  %s2 = inlined_call_operand.vmem [shape: f32[1,128], index: 2, kind: input, shape index: {}]
  %s3 = inlined_call_operand.vmem [shape: bf16[512,128], index: 3, kind: output, shape index: {}]
  %s4 = sld [smem:[#allocation0]]
  $region22: #{style_transfer_forward.33} parent=0
    _
  %s6 = ssub.s32 1, %s4
  %s7 = scalar_select 0, %s6, %s4
  // Predicated region
  $region2: #{style_transfer_forward.33} parent=0 // pred_check
    _
  $region3: #{style_transfer_forward.33} parent=0 // pred_check_branch
    %9 = sbr.rel (0) target = $region5
  $region4: #{style_transfer_forward.33} parent=0 // pred_region
    _
  $region5: #{style_transfer_forward.33} parent=0 // pred_fallthru
    _
  // Predicated region
  $region6: #{style_transfer_forward.33} parent=0 // pred_check
    _
  $region7: #{style_transfer_forward.33} parent=0 // pred_check_branch
    %11 = sbr.rel (0) target = $region9
  $region8: #{style_transfer_forward.33} parent=0 // pred_region
    _
  $region9: #{style_transfer_forward.33} parent=0 // pred_fallthru
    _
  // Predicated region
  $region10: #{style_transfer_forward.33} parent=0 // pred_check
    _
  $region11: #{style_transfer_forward.33} parent=0 // pred_check_branch
    %13 = sbr.rel (0) target = $region13
  $region12: #{style_transfer_forward.33} parent=0 // pred_region
    _
  $region13: #{style_transfer_forward.33} parent=0 // pred_fallthru
    _
  %v14 = vld [vmem:[%s0] sm:$0xf]
  %v15 = vld [vmem:[%s0 + $0x4] sm:$0xf]
  %v16 = vld [vmem:[%s0 + $0x8] sm:$0xf]
  %v17 = vld [vmem:[%s0 + $0xc] sm:$0xf]
  %v18 = vld [vmem:[%s0 + $0x10] sm:$0xf]
  %v19 = vld [vmem:[%s0 + $0x14] sm:$0xf]
  %v20 = vld [vmem:[%s0 + $0x18] sm:$0xf]
  %v21 = vld [vmem:[%s0 + $0x1c] sm:$0xf]
  %v22 = vld [vmem:[%s0 + $0x20] sm:$0xf]
  %v23 = vld [vmem:[%s0 + $0x24] sm:$0xf]
  %v24 = vld [vmem:[%s0 + $0x28] sm:$0xf]
  %v25 = vld [vmem:[%s0 + $0x2c] sm:$0xf]
  %v26 = vld [vmem:[%s0 + $0x30] sm:$0xf]
  %v27 = vld [vmem:[%s0 + $0x34] sm:$0xf]
  %v28 = vld [vmem:[%s0 + $0x38] sm:$0xf]
  %v29 = vld [vmem:[%s0 + $0x3c] sm:$0xf]
  %v30 = vld [vmem:[%s0 + $0x40] sm:$0xf]
  %v31 = vld [vmem:[%s0 + $0x44] sm:$0xf]
  %v32 = vld [vmem:[%s0 + $0x48] sm:$0xf]
  %v33 = vld [vmem:[%s0 + $0x4c] sm:$0xf]
  %v34 = vld [vmem:[%s0 + $0x50] sm:$0xf]
  %v35 = vld [vmem:[%s0 + $0x54] sm:$0xf]
  %v36 = vld [vmem:[%s0 + $0x58] sm:$0xf]
  %v37 = vld [vmem:[%s0 + $0x5c] sm:$0xf]
  %v38 = vld [vmem:[%s0 + $0x60] sm:$0xf]
  %v39 = vld [vmem:[%s0 + $0x64] sm:$0xf]
  %v40 = vld [vmem:[%s0 + $0x68] sm:$0xf]
  %v41 = vld [vmem:[%s0 + $0x6c] sm:$0xf]
  %v42 = vld [vmem:[%s0 + $0x70] sm:$0xf]
  %v43 = vld [vmem:[%s0 + $0x74] sm:$0xf]
  %v44 = vld [vmem:[%s0 + $0x78] sm:$0xf]
  %v45 = vld [vmem:[%s0 + $0x7c] sm:$0xf]
  %v46 = vld [vmem:[%s0 + $0x80] sm:$0xf]
  %v47 = vld [vmem:[%s0 + $0x84] sm:$0xf]
  %v48 = vld [vmem:[%s0 + $0x88] sm:$0xf]
  %v49 = vld [vmem:[%s0 + $0x8c] sm:$0xf]
  %v50 = vld [vmem:[%s0 + $0x90] sm:$0xf]
  %v51 = vld [vmem:[%s0 + $0x94] sm:$0xf]
  %v52 = vld [vmem:[%s0 + $0x98] sm:$0xf]
  %v53 = vld [vmem:[%s0 + $0x9c] sm:$0xf]
  %v54 = vld [vmem:[%s0 + $0xa0] sm:$0xf]
  %v55 = vld [vmem:[%s0 + $0xa4] sm:$0xf]
  %v56 = vld [vmem:[%s0 + $0xa8] sm:$0xf]
  %v57 = vld [vmem:[%s0 + $0xac] sm:$0xf]
  %v58 = vld [vmem:[%s0 + $0xb0] sm:$0xf]
  %v59 = vld [vmem:[%s0 + $0xb4] sm:$0xf]
  %v60 = vld [vmem:[%s0 + $0xb8] sm:$0xf]
  %v61 = vld [vmem:[%s0 + $0xbc] sm:$0xf]
  %v62 = vld [vmem:[%s0 + $0xc0] sm:$0xf]
  %v63 = vld [vmem:[%s0 + $0xc4] sm:$0xf]
  %v64 = vld [vmem:[%s0 + $0xc8] sm:$0xf]
  %v65 = vld [vmem:[%s0 + $0xcc] sm:$0xf]
  %v66 = vld [vmem:[%s0 + $0xd0] sm:$0xf]
  %v67 = vld [vmem:[%s0 + $0xd4] sm:$0xf]
  %v68 = vld [vmem:[%s0 + $0xd8] sm:$0xf]
  %v69 = vld [vmem:[%s0 + $0xdc] sm:$0xf]
  %v70 = vld [vmem:[%s0 + $0xe0] sm:$0xf]
  %v71 = vld [vmem:[%s0 + $0xe4] sm:$0xf]
  %v72 = vld [vmem:[%s0 + $0xe8] sm:$0xf]
  %v73 = vld [vmem:[%s0 + $0xec] sm:$0xf]
  %v74 = vld [vmem:[%s0 + $0xf0] sm:$0xf]
  %v75 = vld [vmem:[%s0 + $0xf4] sm:$0xf]
  %v76 = vld [vmem:[%s0 + $0xf8] sm:$0xf]
  %v77 = vld [vmem:[%s0 + $0xfc] sm:$0xf]
  %v78 = vunpack.c.l.bf16 %v14
  %v79 = vunpack.c.l.bf16 %v15
  %v80 = vunpack.c.l.bf16 %v16
  %v81 = vunpack.c.l.bf16 %v17
  %v82 = vunpack.c.l.bf16 %v18
  %v83 = vunpack.c.l.bf16 %v19
  %v84 = vunpack.c.l.bf16 %v20
  %v85 = vunpack.c.l.bf16 %v21
  %v86 = vunpack.c.l.bf16 %v22
  %v87 = vunpack.c.l.bf16 %v23
  %v88 = vunpack.c.l.bf16 %v24
  %v89 = vunpack.c.l.bf16 %v25
  %v90 = vunpack.c.l.bf16 %v26
  %v91 = vunpack.c.l.bf16 %v27
  %v92 = vunpack.c.l.bf16 %v28
  %v93 = vunpack.c.l.bf16 %v29
  %v94 = vunpack.c.l.bf16 %v30
  %v95 = vunpack.c.l.bf16 %v31
  %v96 = vunpack.c.l.bf16 %v32
  %v97 = vunpack.c.l.bf16 %v33
  %v98 = vunpack.c.l.bf16 %v34
  %v99 = vunpack.c.l.bf16 %v35
  %v100 = vunpack.c.l.bf16 %v36
  %v101 = vunpack.c.l.bf16 %v37
  %v102 = vunpack.c.l.bf16 %v38
  %v103 = vunpack.c.l.bf16 %v39
  %v104 = vunpack.c.l.bf16 %v40
  %v105 = vunpack.c.l.bf16 %v41
  %v106 = vunpack.c.l.bf16 %v42
  %v107 = vunpack.c.l.bf16 %v43
  %v108 = vunpack.c.l.bf16 %v44
  %v109 = vunpack.c.l.bf16 %v45
  %v110 = vunpack.c.l.bf16 %v46
  %v111 = vunpack.c.l.bf16 %v47
  %v112 = vunpack.c.l.bf16 %v48
  %v113 = vunpack.c.l.bf16 %v49
  %v114 = vunpack.c.l.bf16 %v50
  %v115 = vunpack.c.l.bf16 %v51
  %v116 = vunpack.c.l.bf16 %v52
  %v117 = vunpack.c.l.bf16 %v53
  %v118 = vunpack.c.l.bf16 %v54
  %v119 = vunpack.c.l.bf16 %v55
  %v120 = vunpack.c.l.bf16 %v56
  %v121 = vunpack.c.l.bf16 %v57
  %v122 = vunpack.c.l.bf16 %v58
  %v123 = vunpack.c.l.bf16 %v59
  %v124 = vunpack.c.l.bf16 %v60
  %v125 = vunpack.c.l.bf16 %v61
  %v126 = vunpack.c.l.bf16 %v62
  %v127 = vunpack.c.l.bf16 %v63
  %v128 = vunpack.c.l.bf16 %v64
  %v129 = vunpack.c.l.bf16 %v65
  %v130 = vunpack.c.l.bf16 %v66
  %v131 = vunpack.c.l.bf16 %v67
  %v132 = vunpack.c.l.bf16 %v68
  %v133 = vunpack.c.l.bf16 %v69
  %v134 = vunpack.c.l.bf16 %v70
  %v135 = vunpack.c.l.bf16 %v71
  %v136 = vunpack.c.l.bf16 %v72
  %v137 = vunpack.c.l.bf16 %v73
  %v138 = vunpack.c.l.bf16 %v74
  %v139 = vunpack.c.l.bf16 %v75
  %v140 = vunpack.c.l.bf16 %v76
  %v141 = vunpack.c.l.bf16 %v77
  %v142 = vld [vmem:[%s1] sm:$0x1]
  %v144 = vlaneseq
  %v145 = vshrl.u32 %v144, 7
  %v146 = vsub.s32 0, %v145
  %v147 = vrot.slane %v142, %v146
  %v149 = vmul.f32 %v78, %v147
  %v150 = vmul.f32 %v79, %v147
  %v151 = vmul.f32 %v80, %v147
  %v152 = vmul.f32 %v81, %v147
  %v153 = vmul.f32 %v82, %v147
  %v154 = vmul.f32 %v83, %v147
  %v155 = vmul.f32 %v84, %v147
  %v156 = vmul.f32 %v85, %v147
  %v157 = vmul.f32 %v86, %v147
  %v158 = vmul.f32 %v87, %v147
  %v159 = vmul.f32 %v88, %v147
  %v160 = vmul.f32 %v89, %v147
  %v161 = vmul.f32 %v90, %v147
  %v162 = vmul.f32 %v91, %v147
  %v163 = vmul.f32 %v92, %v147
  %v164 = vmul.f32 %v93, %v147
  %v165 = vmul.f32 %v94, %v147
  %v166 = vmul.f32 %v95, %v147
  %v167 = vmul.f32 %v96, %v147
  %v168 = vmul.f32 %v97, %v147
  %v169 = vmul.f32 %v98, %v147
  %v170 = vmul.f32 %v99, %v147
  %v171 = vmul.f32 %v100, %v147
  %v172 = vmul.f32 %v101, %v147
  %v173 = vmul.f32 %v102, %v147
  %v174 = vmul.f32 %v103, %v147
  %v175 = vmul.f32 %v104, %v147
  %v176 = vmul.f32 %v105, %v147
  %v177 = vmul.f32 %v106, %v147
  %v178 = vmul.f32 %v107, %v147
  %v179 = vmul.f32 %v108, %v147
  %v180 = vmul.f32 %v109, %v147
  %v181 = vmul.f32 %v110, %v147
  %v182 = vmul.f32 %v111, %v147
  %v183 = vmul.f32 %v112, %v147
  %v184 = vmul.f32 %v113, %v147
  %v185 = vmul.f32 %v114, %v147
  %v186 = vmul.f32 %v115, %v147
  %v187 = vmul.f32 %v116, %v147
  %v188 = vmul.f32 %v117, %v147
  %v189 = vmul.f32 %v118, %v147
  %v190 = vmul.f32 %v119, %v147
  %v191 = vmul.f32 %v120, %v147
  %v192 = vmul.f32 %v121, %v147
  %v193 = vmul.f32 %v122, %v147
  %v194 = vmul.f32 %v123, %v147
  %v195 = vmul.f32 %v124, %v147
  %v196 = vmul.f32 %v125, %v147
  %v197 = vmul.f32 %v126, %v147
  %v198 = vmul.f32 %v127, %v147
  %v199 = vmul.f32 %v128, %v147
  %v200 = vmul.f32 %v129, %v147
  %v201 = vmul.f32 %v130, %v147
  %v202 = vmul.f32 %v131, %v147
  %v203 = vmul.f32 %v132, %v147
  %v204 = vmul.f32 %v133, %v147
  %v205 = vmul.f32 %v134, %v147
  %v206 = vmul.f32 %v135, %v147
  %v207 = vmul.f32 %v136, %v147
  %v208 = vmul.f32 %v137, %v147
  %v209 = vmul.f32 %v138, %v147
  %v210 = vmul.f32 %v139, %v147
  %v211 = vmul.f32 %v140, %v147
  %v212 = vmul.f32 %v141, %v147
  %v213 = vld [vmem:[%s2] sm:$0x1]
  %v215 = vlaneseq
  %v216 = vshrl.u32 %v215, 7
  %v217 = vsub.s32 0, %v216
  %v218 = vrot.slane %v213, %v217
  %v220 = vadd.f32 %v149, %v218
  %v221 = vadd.f32 %v150, %v218
  %v222 = vadd.f32 %v151, %v218
  %v223 = vadd.f32 %v152, %v218
  %v224 = vadd.f32 %v153, %v218
  %v225 = vadd.f32 %v154, %v218
  %v226 = vadd.f32 %v155, %v218
  %v227 = vadd.f32 %v156, %v218
  %v228 = vadd.f32 %v157, %v218
  %v229 = vadd.f32 %v158, %v218
  %v230 = vadd.f32 %v159, %v218
  %v231 = vadd.f32 %v160, %v218
  %v232 = vadd.f32 %v161, %v218
  %v233 = vadd.f32 %v162, %v218
  %v234 = vadd.f32 %v163, %v218
  %v235 = vadd.f32 %v164, %v218
  %v236 = vadd.f32 %v165, %v218
  %v237 = vadd.f32 %v166, %v218
  %v238 = vadd.f32 %v167, %v218
  %v239 = vadd.f32 %v168, %v218
  %v240 = vadd.f32 %v169, %v218
  %v241 = vadd.f32 %v170, %v218
  %v242 = vadd.f32 %v171, %v218
  %v243 = vadd.f32 %v172, %v218
  %v244 = vadd.f32 %v173, %v218
  %v245 = vadd.f32 %v174, %v218
  %v246 = vadd.f32 %v175, %v218
  %v247 = vadd.f32 %v176, %v218
  %v248 = vadd.f32 %v177, %v218
  %v249 = vadd.f32 %v178, %v218
  %v250 = vadd.f32 %v179, %v218
  %v251 = vadd.f32 %v180, %v218
  %v252 = vadd.f32 %v181, %v218
  %v253 = vadd.f32 %v182, %v218
  %v254 = vadd.f32 %v183, %v218
  %v255 = vadd.f32 %v184, %v218
  %v256 = vadd.f32 %v185, %v218
  %v257 = vadd.f32 %v186, %v218
  %v258 = vadd.f32 %v187, %v218
  %v259 = vadd.f32 %v188, %v218
  %v260 = vadd.f32 %v189, %v218
  %v261 = vadd.f32 %v190, %v218
  %v262 = vadd.f32 %v191, %v218
  %v263 = vadd.f32 %v192, %v218
  %v264 = vadd.f32 %v193, %v218
  %v265 = vadd.f32 %v194, %v218
  %v266 = vadd.f32 %v195, %v218
  %v267 = vadd.f32 %v196, %v218
  %v268 = vadd.f32 %v197, %v218
  %v269 = vadd.f32 %v198, %v218
  %v270 = vadd.f32 %v199, %v218
  %v271 = vadd.f32 %v200, %v218
  %v272 = vadd.f32 %v201, %v218
  %v273 = vadd.f32 %v202, %v218
  %v274 = vadd.f32 %v203, %v218
  %v275 = vadd.f32 %v204, %v218
  %v276 = vadd.f32 %v205, %v218
  %v277 = vadd.f32 %v206, %v218
  %v278 = vadd.f32 %v207, %v218
  %v279 = vadd.f32 %v208, %v218
  %v280 = vadd.f32 %v209, %v218
  %v281 = vadd.f32 %v210, %v218
  %v282 = vadd.f32 %v211, %v218
  %v283 = vadd.f32 %v212, %v218
  %v284 = vmax.f32 %v220, 0.0
  %v285 = vmax.f32 %v221, 0.0
  %v286 = vmax.f32 %v222, 0.0
  %v287 = vmax.f32 %v223, 0.0
  %v288 = vmax.f32 %v224, 0.0
  %v289 = vmax.f32 %v225, 0.0
  %v290 = vmax.f32 %v226, 0.0
  %v291 = vmax.f32 %v227, 0.0
  %v292 = vmax.f32 %v228, 0.0
  %v293 = vmax.f32 %v229, 0.0
  %v294 = vmax.f32 %v230, 0.0
  %v295 = vmax.f32 %v231, 0.0
  %v296 = vmax.f32 %v232, 0.0
  %v297 = vmax.f32 %v233, 0.0
  %v298 = vmax.f32 %v234, 0.0
  %v299 = vmax.f32 %v235, 0.0
  %v300 = vmax.f32 %v236, 0.0
  %v301 = vmax.f32 %v237, 0.0
  %v302 = vmax.f32 %v238, 0.0
  %v303 = vmax.f32 %v239, 0.0
  %v304 = vmax.f32 %v240, 0.0
  %v305 = vmax.f32 %v241, 0.0
  %v306 = vmax.f32 %v242, 0.0
  %v307 = vmax.f32 %v243, 0.0
  %v308 = vmax.f32 %v244, 0.0
  %v309 = vmax.f32 %v245, 0.0
  %v310 = vmax.f32 %v246, 0.0
  %v311 = vmax.f32 %v247, 0.0
  %v312 = vmax.f32 %v248, 0.0
  %v313 = vmax.f32 %v249, 0.0
  %v314 = vmax.f32 %v250, 0.0
  %v315 = vmax.f32 %v251, 0.0
  %v316 = vmax.f32 %v252, 0.0
  %v317 = vmax.f32 %v253, 0.0
  %v318 = vmax.f32 %v254, 0.0
  %v319 = vmax.f32 %v255, 0.0
  %v320 = vmax.f32 %v256, 0.0
  %v321 = vmax.f32 %v257, 0.0
  %v322 = vmax.f32 %v258, 0.0
  %v323 = vmax.f32 %v259, 0.0
  %v324 = vmax.f32 %v260, 0.0
  %v325 = vmax.f32 %v261, 0.0
  %v326 = vmax.f32 %v262, 0.0
  %v327 = vmax.f32 %v263, 0.0
  %v328 = vmax.f32 %v264, 0.0
  %v329 = vmax.f32 %v265, 0.0
  %v330 = vmax.f32 %v266, 0.0
  %v331 = vmax.f32 %v267, 0.0
  %v332 = vmax.f32 %v268, 0.0
  %v333 = vmax.f32 %v269, 0.0
  %v334 = vmax.f32 %v270, 0.0
  %v335 = vmax.f32 %v271, 0.0
  %v336 = vmax.f32 %v272, 0.0
  %v337 = vmax.f32 %v273, 0.0
  %v338 = vmax.f32 %v274, 0.0
  %v339 = vmax.f32 %v275, 0.0
  %v340 = vmax.f32 %v276, 0.0
  %v341 = vmax.f32 %v277, 0.0
  %v342 = vmax.f32 %v278, 0.0
  %v343 = vmax.f32 %v279, 0.0
  %v344 = vmax.f32 %v280, 0.0
  %v345 = vmax.f32 %v281, 0.0
  %v346 = vmax.f32 %v282, 0.0
  %v347 = vmax.f32 %v283, 0.0
  %v348 = vpack.c.bf16 %v285, %v284
  %v349 = vpack.c.bf16 %v287, %v286
  %v350 = vpack.c.bf16 %v289, %v288
  %v351 = vpack.c.bf16 %v291, %v290
  %v352 = vpack.c.bf16 %v293, %v292
  %v353 = vpack.c.bf16 %v295, %v294
  %v354 = vpack.c.bf16 %v297, %v296
  %v355 = vpack.c.bf16 %v299, %v298
  %v356 = vpack.c.bf16 %v301, %v300
  %v357 = vpack.c.bf16 %v303, %v302
  %v358 = vpack.c.bf16 %v305, %v304
  %v359 = vpack.c.bf16 %v307, %v306
  %v360 = vpack.c.bf16 %v309, %v308
  %v361 = vpack.c.bf16 %v311, %v310
  %v362 = vpack.c.bf16 %v313, %v312
  %v363 = vpack.c.bf16 %v315, %v314
  %v364 = vpack.c.bf16 %v317, %v316
  %v365 = vpack.c.bf16 %v319, %v318
  %v366 = vpack.c.bf16 %v321, %v320
  %v367 = vpack.c.bf16 %v323, %v322
  %v368 = vpack.c.bf16 %v325, %v324
  %v369 = vpack.c.bf16 %v327, %v326
  %v370 = vpack.c.bf16 %v329, %v328
  %v371 = vpack.c.bf16 %v331, %v330
  %v372 = vpack.c.bf16 %v333, %v332
  %v373 = vpack.c.bf16 %v335, %v334
  %v374 = vpack.c.bf16 %v337, %v336
  %v375 = vpack.c.bf16 %v339, %v338
  %v376 = vpack.c.bf16 %v341, %v340
  %v377 = vpack.c.bf16 %v343, %v342
  %v378 = vpack.c.bf16 %v345, %v344
  %v379 = vpack.c.bf16 %v347, %v346
  %v412 = vunpack.c.l.b16 %v348
  %v413 = vunpack.c.h.b16 %v348
  %v414 = vunpack.c.l.b16 %v349
  %v415 = vunpack.c.h.b16 %v349
  %v416 = vunpack.c.l.b16 %v350
  %v417 = vunpack.c.h.b16 %v350
  %v418 = vunpack.c.l.b16 %v351
  %v419 = vunpack.c.h.b16 %v351
  %v420 = vunpack.c.l.b16 %v352
  %v421 = vunpack.c.h.b16 %v352
  %v422 = vunpack.c.l.b16 %v353
  %v423 = vunpack.c.h.b16 %v353
  %v424 = vunpack.c.l.b16 %v354
  %v425 = vunpack.c.h.b16 %v354
  %v426 = vunpack.c.l.b16 %v355
  %v427 = vunpack.c.h.b16 %v355
  %v428 = vunpack.c.l.b16 %v356
  %v429 = vunpack.c.h.b16 %v356
  %v430 = vunpack.c.l.b16 %v357
  %v431 = vunpack.c.h.b16 %v357
  %v432 = vunpack.c.l.b16 %v358
  %v433 = vunpack.c.h.b16 %v358
  %v434 = vunpack.c.l.b16 %v359
  %v435 = vunpack.c.h.b16 %v359
  %v436 = vunpack.c.l.b16 %v360
  %v437 = vunpack.c.h.b16 %v360
  %v438 = vunpack.c.l.b16 %v361
  %v439 = vunpack.c.h.b16 %v361
  %v440 = vunpack.c.l.b16 %v362
  %v441 = vunpack.c.h.b16 %v362
  %v442 = vunpack.c.l.b16 %v363
  %v443 = vunpack.c.h.b16 %v363
  %v444 = vunpack.c.l.b16 %v364
  %v445 = vunpack.c.h.b16 %v364
  %v446 = vunpack.c.l.b16 %v365
  %v447 = vunpack.c.h.b16 %v365
  %v448 = vunpack.c.l.b16 %v366
  %v449 = vunpack.c.h.b16 %v366
  %v450 = vunpack.c.l.b16 %v367
  %v451 = vunpack.c.h.b16 %v367
  %v452 = vunpack.c.l.b16 %v368
  %v453 = vunpack.c.h.b16 %v368
  %v454 = vunpack.c.l.b16 %v369
  %v455 = vunpack.c.h.b16 %v369
  %v456 = vunpack.c.l.b16 %v370
  %v457 = vunpack.c.h.b16 %v370
  %v458 = vunpack.c.l.b16 %v371
  %v459 = vunpack.c.h.b16 %v371
  %v460 = vunpack.c.l.b16 %v372
  %v461 = vunpack.c.h.b16 %v372
  %v462 = vunpack.c.l.b16 %v373
  %v463 = vunpack.c.h.b16 %v373
  %v464 = vunpack.c.l.b16 %v374
  %v465 = vunpack.c.h.b16 %v374
  %v466 = vunpack.c.l.b16 %v375
  %v467 = vunpack.c.h.b16 %v375
  %v468 = vunpack.c.l.b16 %v376
  %v469 = vunpack.c.h.b16 %v376
  %v470 = vunpack.c.l.b16 %v377
  %v471 = vunpack.c.h.b16 %v377
  %v472 = vunpack.c.l.b16 %v378
  %v473 = vunpack.c.h.b16 %v378
  %v474 = vunpack.c.l.b16 %v379
  %v475 = vunpack.c.h.b16 %v379
  %v476 = vpack.c.b16 %v412, %v412
  %v477 = vpack.c.b16 %v413, %v413
  %v478 = vpack.c.b16 %v414, %v414
  %v479 = vpack.c.b16 %v415, %v415
  %v480 = vpack.c.b16 %v416, %v416
  %v481 = vpack.c.b16 %v417, %v417
  %v482 = vpack.c.b16 %v418, %v418
  %v483 = vpack.c.b16 %v419, %v419
  %v484 = vpack.c.b16 %v420, %v420
  %v485 = vpack.c.b16 %v421, %v421
  %v486 = vpack.c.b16 %v422, %v422
  %v487 = vpack.c.b16 %v423, %v423
  %v488 = vpack.c.b16 %v424, %v424
  %v489 = vpack.c.b16 %v425, %v425
  %v490 = vpack.c.b16 %v426, %v426
  %v491 = vpack.c.b16 %v427, %v427
  %v492 = vpack.c.b16 %v428, %v428
  %v493 = vpack.c.b16 %v429, %v429
  %v494 = vpack.c.b16 %v430, %v430
  %v495 = vpack.c.b16 %v431, %v431
  %v496 = vpack.c.b16 %v432, %v432
  %v497 = vpack.c.b16 %v433, %v433
  %v498 = vpack.c.b16 %v434, %v434
  %v499 = vpack.c.b16 %v435, %v435
  %v500 = vpack.c.b16 %v436, %v436
  %v501 = vpack.c.b16 %v437, %v437
  %v502 = vpack.c.b16 %v438, %v438
  %v503 = vpack.c.b16 %v439, %v439
  %v504 = vpack.c.b16 %v440, %v440
  %v505 = vpack.c.b16 %v441, %v441
  %v506 = vpack.c.b16 %v442, %v442
  %v507 = vpack.c.b16 %v443, %v443
  %v508 = vpack.c.b16 %v444, %v444
  %v509 = vpack.c.b16 %v445, %v445
  %v510 = vpack.c.b16 %v446, %v446
  %v511 = vpack.c.b16 %v447, %v447
  %v512 = vpack.c.b16 %v448, %v448
  %v513 = vpack.c.b16 %v449, %v449
  %v514 = vpack.c.b16 %v450, %v450
  %v515 = vpack.c.b16 %v451, %v451
  %v516 = vpack.c.b16 %v452, %v452
  %v517 = vpack.c.b16 %v453, %v453
  %v518 = vpack.c.b16 %v454, %v454
  %v519 = vpack.c.b16 %v455, %v455
  %v520 = vpack.c.b16 %v456, %v456
  %v521 = vpack.c.b16 %v457, %v457
  %v522 = vpack.c.b16 %v458, %v458
  %v523 = vpack.c.b16 %v459, %v459
  %v524 = vpack.c.b16 %v460, %v460
  %v525 = vpack.c.b16 %v461, %v461
  %v526 = vpack.c.b16 %v462, %v462
  %v527 = vpack.c.b16 %v463, %v463
  %v528 = vpack.c.b16 %v464, %v464
  %v529 = vpack.c.b16 %v465, %v465
  %v530 = vpack.c.b16 %v466, %v466
  %v531 = vpack.c.b16 %v467, %v467
  %v532 = vpack.c.b16 %v468, %v468
  %v533 = vpack.c.b16 %v469, %v469
  %v534 = vpack.c.b16 %v470, %v470
  %v535 = vpack.c.b16 %v471, %v471
  %v536 = vpack.c.b16 %v472, %v472
  %v537 = vpack.c.b16 %v473, %v473
  %v538 = vpack.c.b16 %v474, %v474
  %v539 = vpack.c.b16 %v475, %v475
  %604 = vst [vmem:[%s3] sm:$0xf] %v476
  %605 = vst [vmem:[%s3 + $0x4] sm:$0xf] %v477
  %606 = vst [vmem:[%s3 + $0x8] sm:$0xf] %v478
  %607 = vst [vmem:[%s3 + $0xc] sm:$0xf] %v479
  %608 = vst [vmem:[%s3 + $0x10] sm:$0xf] %v480
  %609 = vst [vmem:[%s3 + $0x14] sm:$0xf] %v481
  %610 = vst [vmem:[%s3 + $0x18] sm:$0xf] %v482
  %611 = vst [vmem:[%s3 + $0x1c] sm:$0xf] %v483
  %612 = vst [vmem:[%s3 + $0x20] sm:$0xf] %v484
  %613 = vst [vmem:[%s3 + $0x24] sm:$0xf] %v485
  %614 = vst [vmem:[%s3 + $0x28] sm:$0xf] %v486
  %615 = vst [vmem:[%s3 + $0x2c] sm:$0xf] %v487
  %616 = vst [vmem:[%s3 + $0x30] sm:$0xf] %v488
  %617 = vst [vmem:[%s3 + $0x34] sm:$0xf] %v489
  %618 = vst [vmem:[%s3 + $0x38] sm:$0xf] %v490
  %619 = vst [vmem:[%s3 + $0x3c] sm:$0xf] %v491
  %620 = vst [vmem:[%s3 + $0x40] sm:$0xf] %v492
  %621 = vst [vmem:[%s3 + $0x44] sm:$0xf] %v493
  %622 = vst [vmem:[%s3 + $0x48] sm:$0xf] %v494
  %623 = vst [vmem:[%s3 + $0x4c] sm:$0xf] %v495
  %624 = vst [vmem:[%s3 + $0x50] sm:$0xf] %v496
  %625 = vst [vmem:[%s3 + $0x54] sm:$0xf] %v497
  %626 = vst [vmem:[%s3 + $0x58] sm:$0xf] %v498
  %627 = vst [vmem:[%s3 + $0x5c] sm:$0xf] %v499
  %628 = vst [vmem:[%s3 + $0x60] sm:$0xf] %v500
  %629 = vst [vmem:[%s3 + $0x64] sm:$0xf] %v501
  %630 = vst [vmem:[%s3 + $0x68] sm:$0xf] %v502
  %631 = vst [vmem:[%s3 + $0x6c] sm:$0xf] %v503
  %632 = vst [vmem:[%s3 + $0x70] sm:$0xf] %v504
  %633 = vst [vmem:[%s3 + $0x74] sm:$0xf] %v505
  %634 = vst [vmem:[%s3 + $0x78] sm:$0xf] %v506
  %635 = vst [vmem:[%s3 + $0x7c] sm:$0xf] %v507
  %636 = vst [vmem:[%s3 + $0x80] sm:$0xf] %v508
  %637 = vst [vmem:[%s3 + $0x84] sm:$0xf] %v509
  %638 = vst [vmem:[%s3 + $0x88] sm:$0xf] %v510
  %639 = vst [vmem:[%s3 + $0x8c] sm:$0xf] %v511
  %640 = vst [vmem:[%s3 + $0x90] sm:$0xf] %v512
  %641 = vst [vmem:[%s3 + $0x94] sm:$0xf] %v513
  %642 = vst [vmem:[%s3 + $0x98] sm:$0xf] %v514
  %643 = vst [vmem:[%s3 + $0x9c] sm:$0xf] %v515
  %644 = vst [vmem:[%s3 + $0xa0] sm:$0xf] %v516
  %645 = vst [vmem:[%s3 + $0xa4] sm:$0xf] %v517
  %646 = vst [vmem:[%s3 + $0xa8] sm:$0xf] %v518
  %647 = vst [vmem:[%s3 + $0xac] sm:$0xf] %v519
  %648 = vst [vmem:[%s3 + $0xb0] sm:$0xf] %v520
  %649 = vst [vmem:[%s3 + $0xb4] sm:$0xf] %v521
  %650 = vst [vmem:[%s3 + $0xb8] sm:$0xf] %v522
  %651 = vst [vmem:[%s3 + $0xbc] sm:$0xf] %v523
  %652 = vst [vmem:[%s3 + $0xc0] sm:$0xf] %v524
  %653 = vst [vmem:[%s3 + $0xc4] sm:$0xf] %v525
  %654 = vst [vmem:[%s3 + $0xc8] sm:$0xf] %v526
  %655 = vst [vmem:[%s3 + $0xcc] sm:$0xf] %v527
  %656 = vst [vmem:[%s3 + $0xd0] sm:$0xf] %v528
  %657 = vst [vmem:[%s3 + $0xd4] sm:$0xf] %v529
  %658 = vst [vmem:[%s3 + $0xd8] sm:$0xf] %v530
  %659 = vst [vmem:[%s3 + $0xdc] sm:$0xf] %v531
  %660 = vst [vmem:[%s3 + $0xe0] sm:$0xf] %v532
  %661 = vst [vmem:[%s3 + $0xe4] sm:$0xf] %v533
  %662 = vst [vmem:[%s3 + $0xe8] sm:$0xf] %v534
  %663 = vst [vmem:[%s3 + $0xec] sm:$0xf] %v535
  %664 = vst [vmem:[%s3 + $0xf0] sm:$0xf] %v536
  %665 = vst [vmem:[%s3 + $0xf4] sm:$0xf] %v537
  %666 = vst [vmem:[%s3 + $0xf8] sm:$0xf] %v538
  %667 = vst [vmem:[%s3 + $0xfc] sm:$0xf] %v539
  // Predicated region
  $region14: #{style_transfer_forward.33} parent=0 // pred_check
    _
  $region15: #{style_transfer_forward.33} parent=0 // pred_check_branch
    %669 = sbr.rel (0) target = $region17
  $region16: #{style_transfer_forward.33} parent=0 // pred_region
    _
  $region17: #{style_transfer_forward.33} parent=0 // pred_fallthru
    _
  // Predicated region
  $region18: #{style_transfer_forward.33} parent=0 // pred_check
    _
  $region19: #{style_transfer_forward.33} parent=0 // pred_check_branch
    %671 = sbr.rel (0) target = $region21
  $region20: #{style_transfer_forward.33} parent=0 // pred_region
    _
  $region21: #{style_transfer_forward.33} parent=0 // pred_fallthru
    _

// kernel: style_transfer_forward.32
$region0: #{style_transfer_forward.32}
  #allocation0 [shape = 'u32[]', space=smem, size = 0x4, offset = 0x4, fixed_abs, tag = 'smem constant byte address 0x4 - core index']
  #allocation1 [shape = 'u32[144,128]{1,0:T(1,128)}', space=vmem, size = 0x12000, scoped, tag = 'internal scratch']
  #allocation2 [shape = 'f32[256,128]{1,0:T(8,128)}', space=vmem, size = 0x20000, scoped, tag = 'scratch operand']
  %s0 = inlined_call_operand.vmem [shape: bf16[512,256], index: 0, kind: input, shape index: {}]
  %s1 = inlined_call_operand.vmem [shape: bf16[256,128], index: 1, kind: input, shape index: {}]
  %s2 = inlined_call_operand.vmem [shape: bf16[512,128], index: 2, kind: output, shape index: {0}]
  %s3 = inlined_call_operand.vmem [shape: f32[2,1,128], index: 3, kind: output, shape index: {1}]
  %s4 = inlined_call_operand.vmem [shape: f32[2,1,128], index: 4, kind: output, shape index: {2}]
  %5 = xla_tuple %s2, %s3, %s4
  %s6 = sld [smem:[#allocation0]]
  $region65: #{style_transfer_forward.32} parent=0
    _
  %s8 = ssub.s32 1, %s6
  %s9 = scalar_select 0, %s8, %s6
  loop: start=0, step=1, limit=4
  $region2: #{style_transfer_forward.32} parent=0 // loop_pre_header
    _
  $region3: #{style_transfer_forward.32} parent=0 // loop_header
    %s11 = sphi 0, %s15
    %p12 = scmp.ge.s32.totalorder %s11, 4
    %s18 = sphi 0, %s37
    %s19 = sphi 0, %s33
    %s20 = sphi 0, %s29
    %s21 = sphi 0, %s18
    %s22 = sphi 0, %s19
    %s23 = sphi 0, %s20
    %s24 = sphi 0, %s21
    %s25 = sphi 0, %s22
    %s26 = sphi 0, %s23
    %s42 = sphi 0, %s44
    %s45 = sphi 0, %s42
    %s46 = sphi 0, %s45
    %s62 = sphi 0, %s46
    %s70 = sphi 0, %s72
    %s73 = sphi 0, %s70
    %s74 = sphi 0, %s73
    %s90 = sphi 0, %s74
    %s98 = sphi 0, %s100
    %s101 = sphi 0, %s98
    %s102 = sphi 0, %s101
    %s118 = sphi 0, %s102
    %s126 = sphi 0, %s128
    %s129 = sphi 0, %s126
    %s130 = sphi 0, %s129
    %s146 = sphi 0, %s130
    %s154 = sphi 0, %s156
    %s157 = sphi 0, %s154
    %s158 = sphi 0, %s157
    %s174 = sphi 0, %s158
  $region4: #{style_transfer_forward.32} parent=0 // loop_header_branch
    %14 = sbr.rel (%p12) target = $region8
  $region5: #{style_transfer_forward.32} parent=0 // loop_body
    %s16 = ssub.s32 %s11, 1
    %s17 = ssub.s32 %s11, 2
    %s27 = sadd.s32 1, %s20
    %p28 = scmp.ge.s32.totalorder %s27, 1
    %s29 = scalar_select %p28, 0, %s27
    %s30 = sadd.s32 1, %s19
    %s31 = scalar_select %p28, %s30, %s19
    %p32 = scmp.ge.s32.totalorder %s31, 1
    %s33 = scalar_select %p32, 0, %s31
    %s34 = sadd.s32 1, %s18
    %s35 = scalar_select %p32, %s34, %s18
    %p36 = scmp.ge.s32.totalorder %s35, 2
    %s37 = scalar_select %p36, 0, %s35
    %s38 = ssub.s32 %s18, %s37
    %s39 = ssub.s32 %s20, %s29
    %s40 = sor.u32 %s38, %s39
    %p41 = scmp.eq.s32.totalorder %s40, 0
    %s43 = sadd.s32 %s42, 1
    %s44 = scalar_select %p41, %s42, %s43
    %p47 = pneg %p41
    %p48 = scmp.eq.s32.totalorder %s11, 1
    %p49 = por %p47, %p48
    %p50 = scmp.ne.s32.totalorder %s42, %s45
    %p51 = scmp.eq.s32.totalorder %s11, 0
    %p52 = por %p50, %p51
    %p53 = scmp.ne.s32.totalorder %s42, %s45
    %p54 = scmp.eq.s32.totalorder %s16, 1
    %p55 = por %p53, %p54
    %p56 = scmp.ne.s32.totalorder %s45, %s46
    %p57 = scmp.eq.s32.totalorder %s16, 0
    %p58 = por %p56, %p57
    %p59 = scmp.ne.s32.totalorder %s45, %s46
    %p60 = scmp.eq.s32.totalorder %s17, 1
    %p61 = por %p59, %p60
    %p63 = scmp.ne.s32.totalorder %s46, %s62
    %p64 = scmp.eq.s32.totalorder %s17, 0
    %p65 = por %p63, %p64
    %s66 = ssub.s32 %s20, %s29
    %s67 = ssub.s32 %s19, %s33
    %s68 = sor.u32 %s66, %s67
    %p69 = scmp.eq.s32.totalorder %s68, 0
    %s71 = sadd.s32 %s70, 1
    %s72 = scalar_select %p69, %s70, %s71
    %p75 = pneg %p69
    %p76 = scmp.eq.s32.totalorder %s11, 1
    %p77 = por %p75, %p76
    %p78 = scmp.ne.s32.totalorder %s70, %s73
    %p79 = scmp.eq.s32.totalorder %s11, 0
    %p80 = por %p78, %p79
    %p81 = scmp.ne.s32.totalorder %s70, %s73
    %p82 = scmp.eq.s32.totalorder %s16, 1
    %p83 = por %p81, %p82
    %p84 = scmp.ne.s32.totalorder %s73, %s74
    %p85 = scmp.eq.s32.totalorder %s16, 0
    %p86 = por %p84, %p85
    %p87 = scmp.ne.s32.totalorder %s73, %s74
    %p88 = scmp.eq.s32.totalorder %s17, 1
    %p89 = por %p87, %p88
    %p91 = scmp.ne.s32.totalorder %s74, %s90
    %p92 = scmp.eq.s32.totalorder %s17, 0
    %p93 = por %p91, %p92
    %s94 = ssub.s32 %s18, %s37
    %s95 = ssub.s32 %s19, %s33
    %s96 = sor.u32 %s94, %s95
    %p97 = scmp.eq.s32.totalorder %s96, 0
    %s99 = sadd.s32 %s98, 1
    %s100 = scalar_select %p97, %s98, %s99
    %p103 = pneg %p97
    %p104 = scmp.eq.s32.totalorder %s11, 1
    %p105 = por %p103, %p104
    %p106 = scmp.ne.s32.totalorder %s98, %s101
    %p107 = scmp.eq.s32.totalorder %s11, 0
    %p108 = por %p106, %p107
    %p109 = scmp.ne.s32.totalorder %s98, %s101
    %p110 = scmp.eq.s32.totalorder %s16, 1
    %p111 = por %p109, %p110
    %p112 = scmp.ne.s32.totalorder %s101, %s102
    %p113 = scmp.eq.s32.totalorder %s16, 0
    %p114 = por %p112, %p113
    %p115 = scmp.ne.s32.totalorder %s101, %s102
    %p116 = scmp.eq.s32.totalorder %s17, 1
    %p117 = por %p115, %p116
    %p119 = scmp.ne.s32.totalorder %s102, %s118
    %p120 = scmp.eq.s32.totalorder %s17, 0
    %p121 = por %p119, %p120
    %s122 = ssub.s32 %s18, %s37
    %s123 = ssub.s32 %s19, %s33
    %s124 = sor.u32 %s122, %s123
    %p125 = scmp.eq.s32.totalorder %s124, 0
    %s127 = sadd.s32 %s126, 1
    %s128 = scalar_select %p125, %s126, %s127
    %p131 = pneg %p125
    %p132 = scmp.eq.s32.totalorder %s11, 1
    %p133 = por %p131, %p132
    %p134 = scmp.ne.s32.totalorder %s126, %s129
    %p135 = scmp.eq.s32.totalorder %s11, 0
    %p136 = por %p134, %p135
    %p137 = scmp.ne.s32.totalorder %s126, %s129
    %p138 = scmp.eq.s32.totalorder %s16, 1
    %p139 = por %p137, %p138
    %p140 = scmp.ne.s32.totalorder %s129, %s130
    %p141 = scmp.eq.s32.totalorder %s16, 0
    %p142 = por %p140, %p141
    %p143 = scmp.ne.s32.totalorder %s129, %s130
    %p144 = scmp.eq.s32.totalorder %s17, 1
    %p145 = por %p143, %p144
    %p147 = scmp.ne.s32.totalorder %s130, %s146
    %p148 = scmp.eq.s32.totalorder %s17, 0
    %p149 = por %p147, %p148
    %s150 = ssub.s32 %s18, %s37
    %s151 = ssub.s32 %s19, %s33
    %s152 = sor.u32 %s150, %s151
    %p153 = scmp.eq.s32.totalorder %s152, 0
    %s155 = sadd.s32 %s154, 1
    %s156 = scalar_select %p153, %s154, %s155
    %p159 = pneg %p153
    %p160 = scmp.eq.s32.totalorder %s11, 1
    %p161 = por %p159, %p160
    %p162 = scmp.ne.s32.totalorder %s154, %s157
    %p163 = scmp.eq.s32.totalorder %s11, 0
    %p164 = por %p162, %p163
    %p165 = scmp.ne.s32.totalorder %s154, %s157
    %p166 = scmp.eq.s32.totalorder %s16, 1
    %p167 = por %p165, %p166
    %p168 = scmp.ne.s32.totalorder %s157, %s158
    %p169 = scmp.eq.s32.totalorder %s16, 0
    %p170 = por %p168, %p169
    %p171 = scmp.ne.s32.totalorder %s157, %s158
    %p172 = scmp.eq.s32.totalorder %s17, 1
    %p173 = por %p171, %p172
    %p175 = scmp.ne.s32.totalorder %s158, %s174
    %p176 = scmp.eq.s32.totalorder %s17, 0
    %p177 = por %p175, %p176
    %p178 = scmp.le.s32.totalorder 1, %s11
    %p179 = scmp.lt.s32.totalorder %s11, 3
    %p180 = pnand %p178, %p179
    %p181 = pneg %p180
    // Predicated region
    $region9: #{style_transfer_forward.32} parent=5 // pred_check
      _
    $region10: #{style_transfer_forward.32} parent=5 // pred_check_branch
      %183 = sbr.rel (%p180) target = $region12
    $region11: #{style_transfer_forward.32} parent=5 // pred_region
      %s184 = ssub.s32 %s11, 1
      // Predicated region
      $region13: #{style_transfer_forward.32} parent=11 // pred_check
        %p185 = pneg %p86
      $region14: #{style_transfer_forward.32} parent=11 // pred_check_branch
        %187 = sbr.rel (%p185) target = $region16
      $region15: #{style_transfer_forward.32} parent=11 // pred_region
        %s188 = smul.u32 32, %s23
        %p189 = scmp.lt.s32.totalorder %s188, 31
        %s190 = scalar_select %p189, %s188, 31
        %p191 = scmp.lt.s32.totalorder %s22, 0
        %s192 = scalar_select %p191, %s22, 0
        %s193 = sadd.s32 %s192, %s190
        %s194 = smul.addr %s193, 4
        %s195 = scalar_lea.vmem %s1, %s194
        %s196 = smul.u32 32, %s23
      $region16: #{style_transfer_forward.32} parent=11 // pred_fallthru
        _
    $region12: #{style_transfer_forward.32} parent=5 // pred_fallthru
      _
    %p197 = scmp.lt.s32.totalorder %s11, 2
    // Predicated region
    $region17: #{style_transfer_forward.32} parent=5 // pred_check
      %p198 = pneg %p197
    $region18: #{style_transfer_forward.32} parent=5 // pred_check_branch
      %200 = sbr.rel (%p198) target = $region20
    $region19: #{style_transfer_forward.32} parent=5 // pred_region
      // Predicated region
      $region21: #{style_transfer_forward.32} parent=19 // pred_check
        %p201 = pneg %p52
      $region22: #{style_transfer_forward.32} parent=19 // pred_check_branch
        %203 = sbr.rel (%p201) target = $region24
      $region23: #{style_transfer_forward.32} parent=19 // pred_region
        %s204 = smul.u32 32, %s18
        %s205 = smul.u32 2, %s20
        %p206 = scmp.lt.s32.totalorder %s204, 63
        %s207 = scalar_select %p206, %s204, 63
        %p208 = scmp.lt.s32.totalorder %s205, 1
        %s209 = scalar_select %p208, %s205, 1
        %s210 = smul.addr %s207, 2
        %s211 = sadd.s32 %s209, %s210
        %s212 = smul.addr %s211, 4
        %s213 = scalar_lea.vmem %s0, %s212
        %s214 = smul.u32 32, %s18
        %s215 = smul.u32 2, %s20
      $region24: #{style_transfer_forward.32} parent=19 // pred_fallthru
        _
    $region20: #{style_transfer_forward.32} parent=5 // pred_fallthru
      _
    %p216 = scmp.le.s32.totalorder 1, %s11
    %p217 = scmp.lt.s32.totalorder %s11, 3
    %p218 = pnand %p216, %p217
    %p219 = pneg %p218
    // Predicated region
    $region25: #{style_transfer_forward.32} parent=5 // pred_check
      _
    $region26: #{style_transfer_forward.32} parent=5 // pred_check_branch
      %221 = sbr.rel (%p218) target = $region28
    $region27: #{style_transfer_forward.32} parent=5 // pred_region
      %s222 = ssub.s32 %s11, 1
      %s223 = smul.u32 32, %s21
      %s224 = smul.u32 2, %s23
      %p225 = scmp.lt.s32.totalorder %s223, 63
      %s226 = scalar_select %p225, %s223, 63
      %p227 = scmp.lt.s32.totalorder %s224, 1
      %s228 = scalar_select %p227, %s224, 1
      %s229 = smul.addr %s226, 2
      %s230 = sadd.s32 %s228, %s229
      %s231 = smul.addr %s230, 4
      %s232 = scalar_lea.vmem %s0, %s231
      %p233 = pneg %p58
      %p234 = pneg %p55
      %s235 = smul.u32 32, %s23
      %p236 = scmp.lt.s32.totalorder %s235, 31
      %s237 = scalar_select %p236, %s235, 31
      %p238 = scmp.lt.s32.totalorder %s22, 0
      %s239 = scalar_select %p238, %s22, 0
      %s240 = sadd.s32 %s239, %s237
      %s241 = smul.addr %s240, 4
      %s242 = scalar_lea.vmem %s1, %s241
      %p243 = pneg %p86
      %p244 = pneg %p83
      %p245 = pneg %p114
      %p246 = pneg %p111
      %s247 = smul.u32 32, %s21
      %p248 = scmp.lt.s32.totalorder %s247, 63
      %s249 = scalar_select %p248, %s247, 63
      %p250 = scmp.lt.s32.totalorder %s22, 0
      %s251 = scalar_select %p250, %s22, 0
      %s252 = sadd.s32 %s251, %s249
      %s253 = smul.addr %s252, 4
      %s254 = scalar_lea.vmem %s2, %s253
      %p255 = pneg %p142
      %p256 = pneg %p139
      %p257 = scmp.lt.s32.totalorder %s21, 1
      %s258 = scalar_select %p257, %s21, 1
      %p259 = scmp.lt.s32.totalorder %s22, 0
      %s260 = scalar_select %p259, %s22, 0
      %s261 = sadd.s32 %s260, %s258
      %s262 = scalar_lea.vmem %s3, %s261
      %p263 = pneg %p170
      %p264 = pneg %p167
      %p265 = scmp.lt.s32.totalorder %s21, 1
      %s266 = scalar_select %p265, %s21, 1
      %p267 = scmp.lt.s32.totalorder %s22, 0
      %s268 = scalar_select %p267, %s22, 0
      %s269 = sadd.s32 %s268, %s266
      %s270 = scalar_lea.vmem %s4, %s269
      %s271 = smul.u32 32, %s21
      %s272 = smul.u32 2, %s23
      %p273 = scmp.lt.s32.totalorder %s271, 63
      %s274 = scalar_select %p273, %s271, 63
      %p275 = scmp.lt.s32.totalorder %s272, 1
      %s276 = scalar_select %p275, %s272, 1
      %s277 = smul.addr %s274, 2
      %s278 = sadd.s32 %s276, %s277
      %s279 = smul.addr %s278, 4
      %s280 = scalar_lea.vmem %s0, %s279
      %s281 = smul.u32 32, %s21
      %s282 = smul.u32 2, %s23
      %s283 = smul.u32 32, %s23
      %p284 = scmp.lt.s32.totalorder %s283, 31
      %s285 = scalar_select %p284, %s283, 31
      %p286 = scmp.lt.s32.totalorder %s22, 0
      %s287 = scalar_select %p286, %s22, 0
      %s288 = sadd.s32 %s287, %s285
      %s289 = smul.addr %s288, 4
      %s290 = scalar_lea.vmem %s1, %s289
      %s291 = smul.u32 32, %s23
      %s292 = smul.u32 32, %s21
      %p293 = scmp.lt.s32.totalorder %s292, 63
      %s294 = scalar_select %p293, %s292, 63
      %p295 = scmp.lt.s32.totalorder %s22, 0
      %s296 = scalar_select %p295, %s22, 0
      %s297 = sadd.s32 %s296, %s294
      %s298 = smul.addr %s297, 4
      %s299 = scalar_lea.vmem %s2, %s298
      %s300 = smul.u32 32, %s21
      %p301 = scmp.lt.s32.totalorder %s21, 1
      %s302 = scalar_select %p301, %s21, 1
      %p303 = scmp.lt.s32.totalorder %s22, 0
      %s304 = scalar_select %p303, %s22, 0
      %s305 = sadd.s32 %s304, %s302
      %s306 = scalar_lea.vmem %s3, %s305
      %p307 = scmp.lt.s32.totalorder %s21, 1
      %s308 = scalar_select %p307, %s21, 1
      %p309 = scmp.lt.s32.totalorder %s22, 0
      %s310 = scalar_select %p309, %s22, 0
      %s311 = sadd.s32 %s310, %s308
      %s312 = scalar_lea.vmem %s4, %s311
      %p314 = scmp.eq.s32.totalorder %s23, 0
      // Predicated region
      $region29: #{style_transfer_forward.32} parent=27 // pred_check
        %p315 = pneg %p314
      $region30: #{style_transfer_forward.32} parent=27 // pred_check_branch
        %317 = sbr.rel (%p315) target = $region32
      $region31: #{style_transfer_forward.32} parent=27 // pred_region
        %318 = vst [vmem:[#allocation2] sm:$0xff] 0.0
        %319 = vst [vmem:[#allocation2 + $0x8] sm:$0xff] 0.0
        %320 = vst [vmem:[#allocation2 + $0x10] sm:$0xff] 0.0
        %321 = vst [vmem:[#allocation2 + $0x18] sm:$0xff] 0.0
        %322 = vst [vmem:[#allocation2 + $0x20] sm:$0xff] 0.0
        %323 = vst [vmem:[#allocation2 + $0x28] sm:$0xff] 0.0
        %324 = vst [vmem:[#allocation2 + $0x30] sm:$0xff] 0.0
        %325 = vst [vmem:[#allocation2 + $0x38] sm:$0xff] 0.0
        %326 = vst [vmem:[#allocation2 + $0x40] sm:$0xff] 0.0
        %327 = vst [vmem:[#allocation2 + $0x48] sm:$0xff] 0.0
        %328 = vst [vmem:[#allocation2 + $0x50] sm:$0xff] 0.0
        %329 = vst [vmem:[#allocation2 + $0x58] sm:$0xff] 0.0
        %330 = vst [vmem:[#allocation2 + $0x60] sm:$0xff] 0.0
        %331 = vst [vmem:[#allocation2 + $0x68] sm:$0xff] 0.0
        %332 = vst [vmem:[#allocation2 + $0x70] sm:$0xff] 0.0
        %333 = vst [vmem:[#allocation2 + $0x78] sm:$0xff] 0.0
        %334 = vst [vmem:[#allocation2 + $0x80] sm:$0xff] 0.0
        %335 = vst [vmem:[#allocation2 + $0x88] sm:$0xff] 0.0
        %336 = vst [vmem:[#allocation2 + $0x90] sm:$0xff] 0.0
        %337 = vst [vmem:[#allocation2 + $0x98] sm:$0xff] 0.0
        %338 = vst [vmem:[#allocation2 + $0xa0] sm:$0xff] 0.0
        %339 = vst [vmem:[#allocation2 + $0xa8] sm:$0xff] 0.0
        %340 = vst [vmem:[#allocation2 + $0xb0] sm:$0xff] 0.0
        %341 = vst [vmem:[#allocation2 + $0xb8] sm:$0xff] 0.0
        %342 = vst [vmem:[#allocation2 + $0xc0] sm:$0xff] 0.0
        %343 = vst [vmem:[#allocation2 + $0xc8] sm:$0xff] 0.0
        %344 = vst [vmem:[#allocation2 + $0xd0] sm:$0xff] 0.0
        %345 = vst [vmem:[#allocation2 + $0xd8] sm:$0xff] 0.0
        %346 = vst [vmem:[#allocation2 + $0xe0] sm:$0xff] 0.0
        %347 = vst [vmem:[#allocation2 + $0xe8] sm:$0xff] 0.0
        %348 = vst [vmem:[#allocation2 + $0xf0] sm:$0xff] 0.0
        %349 = vst [vmem:[#allocation2 + $0xf8] sm:$0xff] 0.0
      $region32: #{style_transfer_forward.32} parent=27 // pred_fallthru
        _
      %v350 = vld [vmem:[#allocation2] sm:$0xff]
      %v351 = vld [vmem:[#allocation2 + $0x8] sm:$0xff]
      %v352 = vld [vmem:[#allocation2 + $0x10] sm:$0xff]
      %v353 = vld [vmem:[#allocation2 + $0x18] sm:$0xff]
      %v354 = vld [vmem:[#allocation2 + $0x20] sm:$0xff]
      %v355 = vld [vmem:[#allocation2 + $0x28] sm:$0xff]
      %v356 = vld [vmem:[#allocation2 + $0x30] sm:$0xff]
      %v357 = vld [vmem:[#allocation2 + $0x38] sm:$0xff]
      %v358 = vld [vmem:[#allocation2 + $0x40] sm:$0xff]
      %v359 = vld [vmem:[#allocation2 + $0x48] sm:$0xff]
      %v360 = vld [vmem:[#allocation2 + $0x50] sm:$0xff]
      %v361 = vld [vmem:[#allocation2 + $0x58] sm:$0xff]
      %v362 = vld [vmem:[#allocation2 + $0x60] sm:$0xff]
      %v363 = vld [vmem:[#allocation2 + $0x68] sm:$0xff]
      %v364 = vld [vmem:[#allocation2 + $0x70] sm:$0xff]
      %v365 = vld [vmem:[#allocation2 + $0x78] sm:$0xff]
      %v366 = vld [vmem:[#allocation2 + $0x80] sm:$0xff]
      %v367 = vld [vmem:[#allocation2 + $0x88] sm:$0xff]
      %v368 = vld [vmem:[#allocation2 + $0x90] sm:$0xff]
      %v369 = vld [vmem:[#allocation2 + $0x98] sm:$0xff]
      %v370 = vld [vmem:[#allocation2 + $0xa0] sm:$0xff]
      %v371 = vld [vmem:[#allocation2 + $0xa8] sm:$0xff]
      %v372 = vld [vmem:[#allocation2 + $0xb0] sm:$0xff]
      %v373 = vld [vmem:[#allocation2 + $0xb8] sm:$0xff]
      %v374 = vld [vmem:[#allocation2 + $0xc0] sm:$0xff]
      %v375 = vld [vmem:[#allocation2 + $0xc8] sm:$0xff]
      %v376 = vld [vmem:[#allocation2 + $0xd0] sm:$0xff]
      %v377 = vld [vmem:[#allocation2 + $0xd8] sm:$0xff]
      %v378 = vld [vmem:[#allocation2 + $0xe0] sm:$0xff]
      %v379 = vld [vmem:[#allocation2 + $0xe8] sm:$0xff]
      %v380 = vld [vmem:[#allocation2 + $0xf0] sm:$0xff]
      %v381 = vld [vmem:[#allocation2 + $0xf8] sm:$0xff]
      %v382 = vld [vmem:[%s280] sm:$0xff]
      %v383 = vld [vmem:[%s280 + $0x8] sm:$0xff]
      %v384 = vld [vmem:[%s280 + $0x10] sm:$0xff]
      %v385 = vld [vmem:[%s280 + $0x18] sm:$0xff]
      %v386 = vld [vmem:[%s280 + $0x20] sm:$0xff]
      %v387 = vld [vmem:[%s280 + $0x28] sm:$0xff]
      %v388 = vld [vmem:[%s280 + $0x30] sm:$0xff]
      %v389 = vld [vmem:[%s280 + $0x38] sm:$0xff]
      %v390 = vld [vmem:[%s280 + $0x40] sm:$0xff]
      %v391 = vld [vmem:[%s280 + $0x48] sm:$0xff]
      %v392 = vld [vmem:[%s280 + $0x50] sm:$0xff]
      %v393 = vld [vmem:[%s280 + $0x58] sm:$0xff]
      %v394 = vld [vmem:[%s280 + $0x60] sm:$0xff]
      %v395 = vld [vmem:[%s280 + $0x68] sm:$0xff]
      %v396 = vld [vmem:[%s280 + $0x70] sm:$0xff]
      %v397 = vld [vmem:[%s280 + $0x78] sm:$0xff]
      %v398 = vld [vmem:[%s280 + $0x80] sm:$0xff]
      %v399 = vld [vmem:[%s280 + $0x88] sm:$0xff]
      %v400 = vld [vmem:[%s280 + $0x90] sm:$0xff]
      %v401 = vld [vmem:[%s280 + $0x98] sm:$0xff]
      %v402 = vld [vmem:[%s280 + $0xa0] sm:$0xff]
      %v403 = vld [vmem:[%s280 + $0xa8] sm:$0xff]
      %v404 = vld [vmem:[%s280 + $0xb0] sm:$0xff]
      %v405 = vld [vmem:[%s280 + $0xb8] sm:$0xff]
      %v406 = vld [vmem:[%s280 + $0xc0] sm:$0xff]
      %v407 = vld [vmem:[%s280 + $0xc8] sm:$0xff]
      %v408 = vld [vmem:[%s280 + $0xd0] sm:$0xff]
      %v409 = vld [vmem:[%s280 + $0xd8] sm:$0xff]
      %v410 = vld [vmem:[%s280 + $0xe0] sm:$0xff]
      %v411 = vld [vmem:[%s280 + $0xe8] sm:$0xff]
      %v412 = vld [vmem:[%s280 + $0xf0] sm:$0xff]
      %v413 = vld [vmem:[%s280 + $0xf8] sm:$0xff]
      %v414 = vld [vmem:[%s290] sm:$0xf]
      %v415 = vld [vmem:[%s290 + $0x4] sm:$0xf]
      %v416 = vld [vmem:[%s290 + $0x8] sm:$0xf]
      %v417 = vld [vmem:[%s290 + $0xc] sm:$0xf]
      %v418 = vld [vmem:[%s290 + $0x10] sm:$0xf]
      %v419 = vld [vmem:[%s290 + $0x14] sm:$0xf]
      %v420 = vld [vmem:[%s290 + $0x18] sm:$0xf]
      %v421 = vld [vmem:[%s290 + $0x1c] sm:$0xf]
      %v422 = vld [vmem:[%s290 + $0x20] sm:$0xf]
      %v423 = vld [vmem:[%s290 + $0x24] sm:$0xf]
      %v424 = vld [vmem:[%s290 + $0x28] sm:$0xf]
      %v425 = vld [vmem:[%s290 + $0x2c] sm:$0xf]
      %v426 = vld [vmem:[%s290 + $0x30] sm:$0xf]
      %v427 = vld [vmem:[%s290 + $0x34] sm:$0xf]
      %v428 = vld [vmem:[%s290 + $0x38] sm:$0xf]
      %v429 = vld [vmem:[%s290 + $0x3c] sm:$0xf]
      %v430 = vld [vmem:[%s290 + $0x40] sm:$0xf]
      %v431 = vld [vmem:[%s290 + $0x44] sm:$0xf]
      %v432 = vld [vmem:[%s290 + $0x48] sm:$0xf]
      %v433 = vld [vmem:[%s290 + $0x4c] sm:$0xf]
      %v434 = vld [vmem:[%s290 + $0x50] sm:$0xf]
      %v435 = vld [vmem:[%s290 + $0x54] sm:$0xf]
      %v436 = vld [vmem:[%s290 + $0x58] sm:$0xf]
      %v437 = vld [vmem:[%s290 + $0x5c] sm:$0xf]
      %v438 = vld [vmem:[%s290 + $0x60] sm:$0xf]
      %v439 = vld [vmem:[%s290 + $0x64] sm:$0xf]
      %v440 = vld [vmem:[%s290 + $0x68] sm:$0xf]
      %v441 = vld [vmem:[%s290 + $0x6c] sm:$0xf]
      %v442 = vld [vmem:[%s290 + $0x70] sm:$0xf]
      %v443 = vld [vmem:[%s290 + $0x74] sm:$0xf]
      %v444 = vld [vmem:[%s290 + $0x78] sm:$0xf]
      %v445 = vld [vmem:[%s290 + $0x7c] sm:$0xf]
      %v478 = vunpack.c.l.b16 %v382
      %v479 = vunpack.c.h.b16 %v382
      %v480 = vunpack.c.l.b16 %v383
      %v481 = vunpack.c.h.b16 %v383
      %v482 = vunpack.c.l.b16 %v384
      %v483 = vunpack.c.h.b16 %v384
      %v484 = vunpack.c.l.b16 %v385
      %v485 = vunpack.c.h.b16 %v385
      %v486 = vunpack.c.l.b16 %v386
      %v487 = vunpack.c.h.b16 %v386
      %v488 = vunpack.c.l.b16 %v387
      %v489 = vunpack.c.h.b16 %v387
      %v490 = vunpack.c.l.b16 %v388
      %v491 = vunpack.c.h.b16 %v388
      %v492 = vunpack.c.l.b16 %v389
      %v493 = vunpack.c.h.b16 %v389
      %v494 = vunpack.c.l.b16 %v390
      %v495 = vunpack.c.h.b16 %v390
      %v496 = vunpack.c.l.b16 %v391
      %v497 = vunpack.c.h.b16 %v391
      %v498 = vunpack.c.l.b16 %v392
      %v499 = vunpack.c.h.b16 %v392
      %v500 = vunpack.c.l.b16 %v393
      %v501 = vunpack.c.h.b16 %v393
      %v502 = vunpack.c.l.b16 %v394
      %v503 = vunpack.c.h.b16 %v394
      %v504 = vunpack.c.l.b16 %v395
      %v505 = vunpack.c.h.b16 %v395
      %v506 = vunpack.c.l.b16 %v396
      %v507 = vunpack.c.h.b16 %v396
      %v508 = vunpack.c.l.b16 %v397
      %v509 = vunpack.c.h.b16 %v397
      %v510 = vunpack.c.l.b16 %v398
      %v511 = vunpack.c.h.b16 %v398
      %v512 = vunpack.c.l.b16 %v399
      %v513 = vunpack.c.h.b16 %v399
      %v514 = vunpack.c.l.b16 %v400
      %v515 = vunpack.c.h.b16 %v400
      %v516 = vunpack.c.l.b16 %v401
      %v517 = vunpack.c.h.b16 %v401
      %v518 = vunpack.c.l.b16 %v402
      %v519 = vunpack.c.h.b16 %v402
      %v520 = vunpack.c.l.b16 %v403
      %v521 = vunpack.c.h.b16 %v403
      %v522 = vunpack.c.l.b16 %v404
      %v523 = vunpack.c.h.b16 %v404
      %v524 = vunpack.c.l.b16 %v405
      %v525 = vunpack.c.h.b16 %v405
      %v526 = vunpack.c.l.b16 %v406
      %v527 = vunpack.c.h.b16 %v406
      %v528 = vunpack.c.l.b16 %v407
      %v529 = vunpack.c.h.b16 %v407
      %v530 = vunpack.c.l.b16 %v408
      %v531 = vunpack.c.h.b16 %v408
      %v532 = vunpack.c.l.b16 %v409
      %v533 = vunpack.c.h.b16 %v409
      %v534 = vunpack.c.l.b16 %v410
      %v535 = vunpack.c.h.b16 %v410
      %v536 = vunpack.c.l.b16 %v411
      %v537 = vunpack.c.h.b16 %v411
      %v538 = vunpack.c.l.b16 %v412
      %v539 = vunpack.c.h.b16 %v412
      %v540 = vunpack.c.l.b16 %v413
      %v541 = vunpack.c.h.b16 %v413
      %v542 = vpack.c.b16 %v480, %v478
      %v543 = vpack.c.b16 %v481, %v479
      %v544 = vpack.c.b16 %v484, %v482
      %v545 = vpack.c.b16 %v485, %v483
      %v546 = vpack.c.b16 %v488, %v486
      %v547 = vpack.c.b16 %v489, %v487
      %v548 = vpack.c.b16 %v492, %v490
      %v549 = vpack.c.b16 %v493, %v491
      %v550 = vpack.c.b16 %v496, %v494
      %v551 = vpack.c.b16 %v497, %v495
      %v552 = vpack.c.b16 %v500, %v498
      %v553 = vpack.c.b16 %v501, %v499
      %v554 = vpack.c.b16 %v504, %v502
      %v555 = vpack.c.b16 %v505, %v503
      %v556 = vpack.c.b16 %v508, %v506
      %v557 = vpack.c.b16 %v509, %v507
      %v558 = vpack.c.b16 %v512, %v510
      %v559 = vpack.c.b16 %v513, %v511
      %v560 = vpack.c.b16 %v516, %v514
      %v561 = vpack.c.b16 %v517, %v515
      %v562 = vpack.c.b16 %v520, %v518
      %v563 = vpack.c.b16 %v521, %v519
      %v564 = vpack.c.b16 %v524, %v522
      %v565 = vpack.c.b16 %v525, %v523
      %v566 = vpack.c.b16 %v528, %v526
      %v567 = vpack.c.b16 %v529, %v527
      %v568 = vpack.c.b16 %v532, %v530
      %v569 = vpack.c.b16 %v533, %v531
      %v570 = vpack.c.b16 %v536, %v534
      %v571 = vpack.c.b16 %v537, %v535
      %v572 = vpack.c.b16 %v540, %v538
      %v573 = vpack.c.b16 %v541, %v539
      %v638 = vunpack.c.l.b16 %v414
      %v639 = vunpack.c.l.b16 %v415
      %v640 = vunpack.c.l.b16 %v416
      %v641 = vunpack.c.l.b16 %v417
      %v642 = vunpack.c.l.b16 %v418
      %v643 = vunpack.c.l.b16 %v419
      %v644 = vunpack.c.l.b16 %v420
      %v645 = vunpack.c.l.b16 %v421
      %v646 = vunpack.c.l.b16 %v422
      %v647 = vunpack.c.l.b16 %v423
      %v648 = vunpack.c.l.b16 %v424
      %v649 = vunpack.c.l.b16 %v425
      %v650 = vunpack.c.l.b16 %v426
      %v651 = vunpack.c.l.b16 %v427
      %v652 = vunpack.c.l.b16 %v428
      %v653 = vunpack.c.l.b16 %v429
      %v654 = vunpack.c.l.b16 %v430
      %v655 = vunpack.c.l.b16 %v431
      %v656 = vunpack.c.l.b16 %v432
      %v657 = vunpack.c.l.b16 %v433
      %v658 = vunpack.c.l.b16 %v434
      %v659 = vunpack.c.l.b16 %v435
      %v660 = vunpack.c.l.b16 %v436
      %v661 = vunpack.c.l.b16 %v437
      %v662 = vunpack.c.l.b16 %v438
      %v663 = vunpack.c.l.b16 %v439
      %v664 = vunpack.c.l.b16 %v440
      %v665 = vunpack.c.l.b16 %v441
      %v666 = vunpack.c.l.b16 %v442
      %v667 = vunpack.c.l.b16 %v443
      %v668 = vunpack.c.l.b16 %v444
      %v669 = vunpack.c.l.b16 %v445
      %v670 = vpack.c.b16 %v639, %v638
      %v671 = vpack.c.b16 %v641, %v640
      %v672 = vpack.c.b16 %v643, %v642
      %v673 = vpack.c.b16 %v645, %v644
      %v674 = vpack.c.b16 %v647, %v646
      %v675 = vpack.c.b16 %v649, %v648
      %v676 = vpack.c.b16 %v651, %v650
      %v677 = vpack.c.b16 %v653, %v652
      %v678 = vpack.c.b16 %v655, %v654
      %v679 = vpack.c.b16 %v657, %v656
      %v680 = vpack.c.b16 %v659, %v658
      %v681 = vpack.c.b16 %v661, %v660
      %v682 = vpack.c.b16 %v663, %v662
      %v683 = vpack.c.b16 %v665, %v664
      %v684 = vpack.c.b16 %v667, %v666
      %v685 = vpack.c.b16 %v669, %v668
      %702 = vmatprep.subr.bf16.mxu0 0
      %703 = vmatpush1.bf16.msra.mxu0 %v670
      %704 = vmatprep.subr.bf16.mxu0 0
      %705 = vmatpush1.bf16.msra.mxu0 %v671
      %706 = vmatprep.subr.bf16.mxu0 0
      %707 = vmatpush1.bf16.msra.mxu0 %v672
      %708 = vmatprep.subr.bf16.mxu0 0
      %709 = vmatpush1.bf16.msra.mxu0 %v673
      %710 = vmatprep.subr.bf16.mxu0 0
      %711 = vmatpush1.bf16.msra.mxu0 %v674
      %712 = vmatprep.subr.bf16.mxu0 0
      %713 = vmatpush1.bf16.msra.mxu0 %v675
      %714 = vmatprep.subr.bf16.mxu0 0
      %715 = vmatpush1.bf16.msra.mxu0 %v676
      %716 = vmatprep.subr.bf16.mxu0 0
      %717 = vmatpush1.bf16.msra.mxu0 %v677
      %718 = vmatprep.subr.bf16.mxu0 0
      %719 = vmatpush1.bf16.msra.mxu0 %v678
      %720 = vmatprep.subr.bf16.mxu0 0
      %721 = vmatpush1.bf16.msra.mxu0 %v679
      %722 = vmatprep.subr.bf16.mxu0 0
      %723 = vmatpush1.bf16.msra.mxu0 %v680
      %724 = vmatprep.subr.bf16.mxu0 0
      %725 = vmatpush1.bf16.msra.mxu0 %v681
      %726 = vmatprep.subr.bf16.mxu0 0
      %727 = vmatpush1.bf16.msra.mxu0 %v682
      %728 = vmatprep.subr.bf16.mxu0 0
      %729 = vmatpush1.bf16.msra.mxu0 %v683
      %730 = vmatprep.subr.bf16.mxu0 0
      %731 = vmatpush1.bf16.msra.mxu0 %v684
      %732 = vmatprep.subr.bf16.mxu0 0
      %733 = vmatpush1.bf16.msra.mxu0 %v685
      %734 = vmatprep.mubr.bf16.mxu0 %v543
      %735 = vmatmul.mubr.bf16.gmra.mrb[0].mxu0 %v542
      %v736 = vpop.f32.mrb[0].mxu0
      %v737 = vadd.f32 0.0, %v736
      %v738 = vpop.f32.mrb[0].mxu0
      %v739 = vpop.f32.mrb[0].mxu0
      %v740 = vadd.f32 0.0, %v739
      %v741 = vpop.f32.mrb[0].mxu0
      %742 = vmatprep.mubr.bf16.mxu0 %v545
      %743 = vmatmul.mubr.bf16.gmra.mrb[0].mxu0 %v544
      %v744 = vpop.f32.mrb[0].mxu0
      %v745 = vadd.f32 0.0, %v744
      %v746 = vpop.f32.mrb[0].mxu0
      %v747 = vpop.f32.mrb[0].mxu0
      %v748 = vadd.f32 0.0, %v747
      %v749 = vpop.f32.mrb[0].mxu0
      %750 = vmatprep.mubr.bf16.mxu0 %v547
      %751 = vmatmul.mubr.bf16.gmra.mrb[0].mxu0 %v546
      %v752 = vpop.f32.mrb[0].mxu0
      %v753 = vadd.f32 0.0, %v752
      %v754 = vpop.f32.mrb[0].mxu0
      %v755 = vpop.f32.mrb[0].mxu0
      %v756 = vadd.f32 0.0, %v755
      %v757 = vpop.f32.mrb[0].mxu0
      %758 = vmatprep.mubr.bf16.mxu0 %v549
      %759 = vmatmul.mubr.bf16.gmra.mrb[0].mxu0 %v548
      %v760 = vpop.f32.mrb[0].mxu0
      %v761 = vadd.f32 0.0, %v760
      %v762 = vpop.f32.mrb[0].mxu0
      %v763 = vpop.f32.mrb[0].mxu0
      %v764 = vadd.f32 0.0, %v763
      %v765 = vpop.f32.mrb[0].mxu0
      %766 = vmatprep.mubr.bf16.mxu0 %v551
      %767 = vmatmul.mubr.bf16.gmra.mrb[0].mxu0 %v550
      %v768 = vpop.f32.mrb[0].mxu0
      %v769 = vadd.f32 0.0, %v768
      %v770 = vpop.f32.mrb[0].mxu0
      %v771 = vpop.f32.mrb[0].mxu0
      %v772 = vadd.f32 0.0, %v771
      %v773 = vpop.f32.mrb[0].mxu0
      %774 = vmatprep.mubr.bf16.mxu0 %v553
      %775 = vmatmul.mubr.bf16.gmra.mrb[0].mxu0 %v552
      %v776 = vpop.f32.mrb[0].mxu0
      %v777 = vadd.f32 0.0, %v776
      %v778 = vpop.f32.mrb[0].mxu0
      %v779 = vpop.f32.mrb[0].mxu0
      %v780 = vadd.f32 0.0, %v779
      %v781 = vpop.f32.mrb[0].mxu0
      %782 = vmatprep.mubr.bf16.mxu0 %v555
      %783 = vmatmul.mubr.bf16.gmra.mrb[0].mxu0 %v554
      %v784 = vpop.f32.mrb[0].mxu0
      %v785 = vadd.f32 0.0, %v784
      %v786 = vpop.f32.mrb[0].mxu0
      %v787 = vpop.f32.mrb[0].mxu0
      %v788 = vadd.f32 0.0, %v787
      %v789 = vpop.f32.mrb[0].mxu0
      %790 = vmatprep.mubr.bf16.mxu0 %v557
      %791 = vmatmul.mubr.bf16.gmra.mrb[0].mxu0 %v556
      %v792 = vpop.f32.mrb[0].mxu0
      %v793 = vadd.f32 0.0, %v792
      %v794 = vpop.f32.mrb[0].mxu0
      %v795 = vpop.f32.mrb[0].mxu0
      %v796 = vadd.f32 0.0, %v795
      %v797 = vpop.f32.mrb[0].mxu0
      %798 = vmatprep.mubr.bf16.mxu0 %v559
      %799 = vmatmul.mubr.bf16.gmra.mrb[0].mxu0 %v558
      %v800 = vpop.f32.mrb[0].mxu0
      %v801 = vadd.f32 0.0, %v800
      %v802 = vpop.f32.mrb[0].mxu0
      %v803 = vpop.f32.mrb[0].mxu0
      %v804 = vadd.f32 0.0, %v803
      %v805 = vpop.f32.mrb[0].mxu0
      %806 = vmatprep.mubr.bf16.mxu0 %v561
      %807 = vmatmul.mubr.bf16.gmra.mrb[0].mxu0 %v560
      %v808 = vpop.f32.mrb[0].mxu0
      %v809 = vadd.f32 0.0, %v808
      %v810 = vpop.f32.mrb[0].mxu0
      %v811 = vpop.f32.mrb[0].mxu0
      %v812 = vadd.f32 0.0, %v811
      %v813 = vpop.f32.mrb[0].mxu0
      %814 = vmatprep.mubr.bf16.mxu0 %v563
      %815 = vmatmul.mubr.bf16.gmra.mrb[0].mxu0 %v562
      %v816 = vpop.f32.mrb[0].mxu0
      %v817 = vadd.f32 0.0, %v816
      %v818 = vpop.f32.mrb[0].mxu0
      %v819 = vpop.f32.mrb[0].mxu0
      %v820 = vadd.f32 0.0, %v819
      %v821 = vpop.f32.mrb[0].mxu0
      %822 = vmatprep.mubr.bf16.mxu0 %v565
      %823 = vmatmul.mubr.bf16.gmra.mrb[0].mxu0 %v564
      %v824 = vpop.f32.mrb[0].mxu0
      %v825 = vadd.f32 0.0, %v824
      %v826 = vpop.f32.mrb[0].mxu0
      %v827 = vpop.f32.mrb[0].mxu0
      %v828 = vadd.f32 0.0, %v827
      %v829 = vpop.f32.mrb[0].mxu0
      %830 = vmatprep.mubr.bf16.mxu0 %v567
      %831 = vmatmul.mubr.bf16.gmra.mrb[0].mxu0 %v566
      %v832 = vpop.f32.mrb[0].mxu0
      %v833 = vadd.f32 0.0, %v832
      %v834 = vpop.f32.mrb[0].mxu0
      %v835 = vpop.f32.mrb[0].mxu0
      %v836 = vadd.f32 0.0, %v835
      %v837 = vpop.f32.mrb[0].mxu0
      %838 = vmatprep.mubr.bf16.mxu0 %v569
      %839 = vmatmul.mubr.bf16.gmra.mrb[0].mxu0 %v568
      %v840 = vpop.f32.mrb[0].mxu0
      %v841 = vadd.f32 0.0, %v840
      %v842 = vpop.f32.mrb[0].mxu0
      %v843 = vpop.f32.mrb[0].mxu0
      %v844 = vadd.f32 0.0, %v843
      %v845 = vpop.f32.mrb[0].mxu0
      %846 = vmatprep.mubr.bf16.mxu0 %v571
      %847 = vmatmul.mubr.bf16.gmra.mrb[0].mxu0 %v570
      %v848 = vpop.f32.mrb[0].mxu0
      %v849 = vadd.f32 0.0, %v848
      %v850 = vpop.f32.mrb[0].mxu0
      %v851 = vpop.f32.mrb[0].mxu0
      %v852 = vadd.f32 0.0, %v851
      %v853 = vpop.f32.mrb[0].mxu0
      %854 = vmatprep.mubr.bf16.mxu0 %v573
      %855 = vmatmul.mubr.bf16.gmra.mrb[0].mxu0 %v572
      %v856 = vpop.f32.mrb[0].mxu0
      %v857 = vadd.f32 0.0, %v856
      %v858 = vpop.f32.mrb[0].mxu0
      %v859 = vpop.f32.mrb[0].mxu0
      %v860 = vadd.f32 0.0, %v859
      %v861 = vpop.f32.mrb[0].mxu0
      %862 = vdwg.mxu0
      %v863 = vadd.f32 %v350, %v737
      %v864 = vadd.f32 %v351, %v740
      %v865 = vadd.f32 %v352, %v745
      %v866 = vadd.f32 %v353, %v748
      %v867 = vadd.f32 %v354, %v753
      %v868 = vadd.f32 %v355, %v756
      %v869 = vadd.f32 %v356, %v761
      %v870 = vadd.f32 %v357, %v764
      %v871 = vadd.f32 %v358, %v769
      %v872 = vadd.f32 %v359, %v772
      %v873 = vadd.f32 %v360, %v777
      %v874 = vadd.f32 %v361, %v780
      %v875 = vadd.f32 %v362, %v785
      %v876 = vadd.f32 %v363, %v788
      %v877 = vadd.f32 %v364, %v793
      %v878 = vadd.f32 %v365, %v796
      %v879 = vadd.f32 %v366, %v801
      %v880 = vadd.f32 %v367, %v804
      %v881 = vadd.f32 %v368, %v809
      %v882 = vadd.f32 %v369, %v812
      %v883 = vadd.f32 %v370, %v817
      %v884 = vadd.f32 %v371, %v820
      %v885 = vadd.f32 %v372, %v825
      %v886 = vadd.f32 %v373, %v828
      %v887 = vadd.f32 %v374, %v833
      %v888 = vadd.f32 %v375, %v836
      %v889 = vadd.f32 %v376, %v841
      %v890 = vadd.f32 %v377, %v844
      %v891 = vadd.f32 %v378, %v849
      %v892 = vadd.f32 %v379, %v852
      %v893 = vadd.f32 %v380, %v857
      %v894 = vadd.f32 %v381, %v860
      %895 = vst [vmem:[#allocation2] sm:$0xff] %v863
      %896 = vst [vmem:[#allocation2 + $0x8] sm:$0xff] %v864
      %897 = vst [vmem:[#allocation2 + $0x10] sm:$0xff] %v865
      %898 = vst [vmem:[#allocation2 + $0x18] sm:$0xff] %v866
      %899 = vst [vmem:[#allocation2 + $0x20] sm:$0xff] %v867
      %900 = vst [vmem:[#allocation2 + $0x28] sm:$0xff] %v868
      %901 = vst [vmem:[#allocation2 + $0x30] sm:$0xff] %v869
      %902 = vst [vmem:[#allocation2 + $0x38] sm:$0xff] %v870
      %903 = vst [vmem:[#allocation2 + $0x40] sm:$0xff] %v871
      %904 = vst [vmem:[#allocation2 + $0x48] sm:$0xff] %v872
      %905 = vst [vmem:[#allocation2 + $0x50] sm:$0xff] %v873
      %906 = vst [vmem:[#allocation2 + $0x58] sm:$0xff] %v874
      %907 = vst [vmem:[#allocation2 + $0x60] sm:$0xff] %v875
      %908 = vst [vmem:[#allocation2 + $0x68] sm:$0xff] %v876
      %909 = vst [vmem:[#allocation2 + $0x70] sm:$0xff] %v877
      %910 = vst [vmem:[#allocation2 + $0x78] sm:$0xff] %v878
      %911 = vst [vmem:[#allocation2 + $0x80] sm:$0xff] %v879
      %912 = vst [vmem:[#allocation2 + $0x88] sm:$0xff] %v880
      %913 = vst [vmem:[#allocation2 + $0x90] sm:$0xff] %v881
      %914 = vst [vmem:[#allocation2 + $0x98] sm:$0xff] %v882
      %915 = vst [vmem:[#allocation2 + $0xa0] sm:$0xff] %v883
      %916 = vst [vmem:[#allocation2 + $0xa8] sm:$0xff] %v884
      %917 = vst [vmem:[#allocation2 + $0xb0] sm:$0xff] %v885
      %918 = vst [vmem:[#allocation2 + $0xb8] sm:$0xff] %v886
      %919 = vst [vmem:[#allocation2 + $0xc0] sm:$0xff] %v887
      %920 = vst [vmem:[#allocation2 + $0xc8] sm:$0xff] %v888
      %921 = vst [vmem:[#allocation2 + $0xd0] sm:$0xff] %v889
      %922 = vst [vmem:[#allocation2 + $0xd8] sm:$0xff] %v890
      %923 = vst [vmem:[#allocation2 + $0xe0] sm:$0xff] %v891
      %924 = vst [vmem:[#allocation2 + $0xe8] sm:$0xff] %v892
      %925 = vst [vmem:[#allocation2 + $0xf0] sm:$0xff] %v893
      %926 = vst [vmem:[#allocation2 + $0xf8] sm:$0xff] %v894
      // Predicated region
      $region33: #{style_transfer_forward.32} parent=27 // pred_check
        %p927 = pneg %p314
      $region34: #{style_transfer_forward.32} parent=27 // pred_check_branch
        %929 = sbr.rel (%p927) target = $region36
      $region35: #{style_transfer_forward.32} parent=27 // pred_region
        %v930 = vld [vmem:[#allocation2] sm:$0xff]
        %v931 = vld [vmem:[#allocation2 + $0x8] sm:$0xff]
        %v932 = vld [vmem:[#allocation2 + $0x10] sm:$0xff]
        %v933 = vld [vmem:[#allocation2 + $0x18] sm:$0xff]
        %v934 = vld [vmem:[#allocation2 + $0x20] sm:$0xff]
        %v935 = vld [vmem:[#allocation2 + $0x28] sm:$0xff]
        %v936 = vld [vmem:[#allocation2 + $0x30] sm:$0xff]
        %v937 = vld [vmem:[#allocation2 + $0x38] sm:$0xff]
        %v938 = vld [vmem:[#allocation2 + $0x40] sm:$0xff]
        %v939 = vld [vmem:[#allocation2 + $0x48] sm:$0xff]
        %v940 = vld [vmem:[#allocation2 + $0x50] sm:$0xff]
        %v941 = vld [vmem:[#allocation2 + $0x58] sm:$0xff]
        %v942 = vld [vmem:[#allocation2 + $0x60] sm:$0xff]
        %v943 = vld [vmem:[#allocation2 + $0x68] sm:$0xff]
        %v944 = vld [vmem:[#allocation2 + $0x70] sm:$0xff]
        %v945 = vld [vmem:[#allocation2 + $0x78] sm:$0xff]
        %v946 = vld [vmem:[#allocation2 + $0x80] sm:$0xff]
        %v947 = vld [vmem:[#allocation2 + $0x88] sm:$0xff]
        %v948 = vld [vmem:[#allocation2 + $0x90] sm:$0xff]
        %v949 = vld [vmem:[#allocation2 + $0x98] sm:$0xff]
        %v950 = vld [vmem:[#allocation2 + $0xa0] sm:$0xff]
        %v951 = vld [vmem:[#allocation2 + $0xa8] sm:$0xff]
        %v952 = vld [vmem:[#allocation2 + $0xb0] sm:$0xff]
        %v953 = vld [vmem:[#allocation2 + $0xb8] sm:$0xff]
        %v954 = vld [vmem:[#allocation2 + $0xc0] sm:$0xff]
        %v955 = vld [vmem:[#allocation2 + $0xc8] sm:$0xff]
        %v956 = vld [vmem:[#allocation2 + $0xd0] sm:$0xff]
        %v957 = vld [vmem:[#allocation2 + $0xd8] sm:$0xff]
        %v958 = vld [vmem:[#allocation2 + $0xe0] sm:$0xff]
        %v959 = vld [vmem:[#allocation2 + $0xe8] sm:$0xff]
        %v960 = vld [vmem:[#allocation2 + $0xf0] sm:$0xff]
        %v961 = vld [vmem:[#allocation2 + $0xf8] sm:$0xff]
        %v962 = vpack.c.bf16 %v931, %v930
        %v963 = vpack.c.bf16 %v933, %v932
        %v964 = vpack.c.bf16 %v935, %v934
        %v965 = vpack.c.bf16 %v937, %v936
        %v966 = vpack.c.bf16 %v939, %v938
        %v967 = vpack.c.bf16 %v941, %v940
        %v968 = vpack.c.bf16 %v943, %v942
        %v969 = vpack.c.bf16 %v945, %v944
        %v970 = vpack.c.bf16 %v947, %v946
        %v971 = vpack.c.bf16 %v949, %v948
        %v972 = vpack.c.bf16 %v951, %v950
        %v973 = vpack.c.bf16 %v953, %v952
        %v974 = vpack.c.bf16 %v955, %v954
        %v975 = vpack.c.bf16 %v957, %v956
        %v976 = vpack.c.bf16 %v959, %v958
        %v977 = vpack.c.bf16 %v961, %v960
        %v994 = vunpack.c.l.b16 %v962
        %v995 = vunpack.c.h.b16 %v962
        %v996 = vunpack.c.l.b16 %v963
        %v997 = vunpack.c.h.b16 %v963
        %v998 = vunpack.c.l.b16 %v964
        %v999 = vunpack.c.h.b16 %v964
        %v1000 = vunpack.c.l.b16 %v965
        %v1001 = vunpack.c.h.b16 %v965
        %v1002 = vunpack.c.l.b16 %v966
        %v1003 = vunpack.c.h.b16 %v966
        %v1004 = vunpack.c.l.b16 %v967
        %v1005 = vunpack.c.h.b16 %v967
        %v1006 = vunpack.c.l.b16 %v968
        %v1007 = vunpack.c.h.b16 %v968
        %v1008 = vunpack.c.l.b16 %v969
        %v1009 = vunpack.c.h.b16 %v969
        %v1010 = vunpack.c.l.b16 %v970
        %v1011 = vunpack.c.h.b16 %v970
        %v1012 = vunpack.c.l.b16 %v971
        %v1013 = vunpack.c.h.b16 %v971
        %v1014 = vunpack.c.l.b16 %v972
        %v1015 = vunpack.c.h.b16 %v972
        %v1016 = vunpack.c.l.b16 %v973
        %v1017 = vunpack.c.h.b16 %v973
        %v1018 = vunpack.c.l.b16 %v974
        %v1019 = vunpack.c.h.b16 %v974
        %v1020 = vunpack.c.l.b16 %v975
        %v1021 = vunpack.c.h.b16 %v975
        %v1022 = vunpack.c.l.b16 %v976
        %v1023 = vunpack.c.h.b16 %v976
        %v1024 = vunpack.c.l.b16 %v977
        %v1025 = vunpack.c.h.b16 %v977
        %v1026 = vpack.c.b16 %v994, %v994
        %v1027 = vpack.c.b16 %v995, %v995
        %v1028 = vpack.c.b16 %v996, %v996
        %v1029 = vpack.c.b16 %v997, %v997
        %v1030 = vpack.c.b16 %v998, %v998
        %v1031 = vpack.c.b16 %v999, %v999
        %v1032 = vpack.c.b16 %v1000, %v1000
        %v1033 = vpack.c.b16 %v1001, %v1001
        %v1034 = vpack.c.b16 %v1002, %v1002
        %v1035 = vpack.c.b16 %v1003, %v1003
        %v1036 = vpack.c.b16 %v1004, %v1004
        %v1037 = vpack.c.b16 %v1005, %v1005
        %v1038 = vpack.c.b16 %v1006, %v1006
        %v1039 = vpack.c.b16 %v1007, %v1007
        %v1040 = vpack.c.b16 %v1008, %v1008
        %v1041 = vpack.c.b16 %v1009, %v1009
        %v1042 = vpack.c.b16 %v1010, %v1010
        %v1043 = vpack.c.b16 %v1011, %v1011
        %v1044 = vpack.c.b16 %v1012, %v1012
        %v1045 = vpack.c.b16 %v1013, %v1013
        %v1046 = vpack.c.b16 %v1014, %v1014
        %v1047 = vpack.c.b16 %v1015, %v1015
        %v1048 = vpack.c.b16 %v1016, %v1016
        %v1049 = vpack.c.b16 %v1017, %v1017
        %v1050 = vpack.c.b16 %v1018, %v1018
        %v1051 = vpack.c.b16 %v1019, %v1019
        %v1052 = vpack.c.b16 %v1020, %v1020
        %v1053 = vpack.c.b16 %v1021, %v1021
        %v1054 = vpack.c.b16 %v1022, %v1022
        %v1055 = vpack.c.b16 %v1023, %v1023
        %v1056 = vpack.c.b16 %v1024, %v1024
        %v1057 = vpack.c.b16 %v1025, %v1025
        %1090 = vst [vmem:[%s299] sm:$0xf] %v1026
        %1091 = vst [vmem:[%s299 + $0x4] sm:$0xf] %v1027
        %1092 = vst [vmem:[%s299 + $0x8] sm:$0xf] %v1028
        %1093 = vst [vmem:[%s299 + $0xc] sm:$0xf] %v1029
        %1094 = vst [vmem:[%s299 + $0x10] sm:$0xf] %v1030
        %1095 = vst [vmem:[%s299 + $0x14] sm:$0xf] %v1031
        %1096 = vst [vmem:[%s299 + $0x18] sm:$0xf] %v1032
        %1097 = vst [vmem:[%s299 + $0x1c] sm:$0xf] %v1033
        %1098 = vst [vmem:[%s299 + $0x20] sm:$0xf] %v1034
        %1099 = vst [vmem:[%s299 + $0x24] sm:$0xf] %v1035
        %1100 = vst [vmem:[%s299 + $0x28] sm:$0xf] %v1036
        %1101 = vst [vmem:[%s299 + $0x2c] sm:$0xf] %v1037
        %1102 = vst [vmem:[%s299 + $0x30] sm:$0xf] %v1038
        %1103 = vst [vmem:[%s299 + $0x34] sm:$0xf] %v1039
        %1104 = vst [vmem:[%s299 + $0x38] sm:$0xf] %v1040
        %1105 = vst [vmem:[%s299 + $0x3c] sm:$0xf] %v1041
        %1106 = vst [vmem:[%s299 + $0x40] sm:$0xf] %v1042
        %1107 = vst [vmem:[%s299 + $0x44] sm:$0xf] %v1043
        %1108 = vst [vmem:[%s299 + $0x48] sm:$0xf] %v1044
        %1109 = vst [vmem:[%s299 + $0x4c] sm:$0xf] %v1045
        %1110 = vst [vmem:[%s299 + $0x50] sm:$0xf] %v1046
        %1111 = vst [vmem:[%s299 + $0x54] sm:$0xf] %v1047
        %1112 = vst [vmem:[%s299 + $0x58] sm:$0xf] %v1048
        %1113 = vst [vmem:[%s299 + $0x5c] sm:$0xf] %v1049
        %1114 = vst [vmem:[%s299 + $0x60] sm:$0xf] %v1050
        %1115 = vst [vmem:[%s299 + $0x64] sm:$0xf] %v1051
        %1116 = vst [vmem:[%s299 + $0x68] sm:$0xf] %v1052
        %1117 = vst [vmem:[%s299 + $0x6c] sm:$0xf] %v1053
        %1118 = vst [vmem:[%s299 + $0x70] sm:$0xf] %v1054
        %1119 = vst [vmem:[%s299 + $0x74] sm:$0xf] %v1055
        %1120 = vst [vmem:[%s299 + $0x78] sm:$0xf] %v1056
        %1121 = vst [vmem:[%s299 + $0x7c] sm:$0xf] %v1057
        %v1122 = vadd.f32 %v930, %v931
        %v1123 = vadd.f32 %v1122, %v932
        %v1124 = vadd.f32 %v1123, %v933
        %v1125 = vadd.f32 %v1124, %v934
        %v1126 = vadd.f32 %v1125, %v935
        %v1127 = vadd.f32 %v1126, %v936
        %v1128 = vadd.f32 %v1127, %v937
        %v1129 = vadd.f32 %v1128, %v938
        %v1130 = vadd.f32 %v1129, %v939
        %v1131 = vadd.f32 %v1130, %v940
        %v1132 = vadd.f32 %v1131, %v941
        %v1133 = vadd.f32 %v1132, %v942
        %v1134 = vadd.f32 %v1133, %v943
        %v1135 = vadd.f32 %v1134, %v944
        %v1136 = vadd.f32 %v1135, %v945
        %v1137 = vadd.f32 %v1136, %v946
        %v1138 = vadd.f32 %v1137, %v947
        %v1139 = vadd.f32 %v1138, %v948
        %v1140 = vadd.f32 %v1139, %v949
        %v1141 = vadd.f32 %v1140, %v950
        %v1142 = vadd.f32 %v1141, %v951
        %v1143 = vadd.f32 %v1142, %v952
        %v1144 = vadd.f32 %v1143, %v953
        %v1145 = vadd.f32 %v1144, %v954
        %v1146 = vadd.f32 %v1145, %v955
        %v1147 = vadd.f32 %v1146, %v956
        %v1148 = vadd.f32 %v1147, %v957
        %v1149 = vadd.f32 %v1148, %v958
        %v1150 = vadd.f32 %v1149, %v959
        %v1151 = vadd.f32 %v1150, %v960
        %v1152 = vadd.f32 %v1151, %v961
        %v1153 = vrot.slane %v1152, 4
        %v1154 = vadd.f32 %v1152, %v1153
        %v1155 = vrot.slane %v1154, 2
        %v1156 = vadd.f32 %v1154, %v1155
        %v1157 = vrot.slane %v1156, 1
        %v1158 = vadd.f32 %v1156, %v1157
        %1159 = vst [vmem:[%s306] sm:$0x1] %v1158
        %v1160 = vmul.f32 %v930, %v930
        %v1161 = vmul.f32 %v931, %v931
        %v1162 = vmul.f32 %v932, %v932
        %v1163 = vmul.f32 %v933, %v933
        %v1164 = vmul.f32 %v934, %v934
        %v1165 = vmul.f32 %v935, %v935
        %v1166 = vmul.f32 %v936, %v936
        %v1167 = vmul.f32 %v937, %v937
        %v1168 = vmul.f32 %v938, %v938
        %v1169 = vmul.f32 %v939, %v939
        %v1170 = vmul.f32 %v940, %v940
        %v1171 = vmul.f32 %v941, %v941
        %v1172 = vmul.f32 %v942, %v942
        %v1173 = vmul.f32 %v943, %v943
        %v1174 = vmul.f32 %v944, %v944
        %v1175 = vmul.f32 %v945, %v945
        %v1176 = vmul.f32 %v946, %v946
        %v1177 = vmul.f32 %v947, %v947
        %v1178 = vmul.f32 %v948, %v948
        %v1179 = vmul.f32 %v949, %v949
        %v1180 = vmul.f32 %v950, %v950
        %v1181 = vmul.f32 %v951, %v951
        %v1182 = vmul.f32 %v952, %v952
        %v1183 = vmul.f32 %v953, %v953
        %v1184 = vmul.f32 %v954, %v954
        %v1185 = vmul.f32 %v955, %v955
        %v1186 = vmul.f32 %v956, %v956
        %v1187 = vmul.f32 %v957, %v957
        %v1188 = vmul.f32 %v958, %v958
        %v1189 = vmul.f32 %v959, %v959
        %v1190 = vmul.f32 %v960, %v960
        %v1191 = vmul.f32 %v961, %v961
        %v1192 = vadd.f32 %v1160, %v1161
        %v1193 = vadd.f32 %v1192, %v1162
        %v1194 = vadd.f32 %v1193, %v1163
        %v1195 = vadd.f32 %v1194, %v1164
        %v1196 = vadd.f32 %v1195, %v1165
        %v1197 = vadd.f32 %v1196, %v1166
        %v1198 = vadd.f32 %v1197, %v1167
        %v1199 = vadd.f32 %v1198, %v1168
        %v1200 = vadd.f32 %v1199, %v1169
        %v1201 = vadd.f32 %v1200, %v1170
        %v1202 = vadd.f32 %v1201, %v1171
        %v1203 = vadd.f32 %v1202, %v1172
        %v1204 = vadd.f32 %v1203, %v1173
        %v1205 = vadd.f32 %v1204, %v1174
        %v1206 = vadd.f32 %v1205, %v1175
        %v1207 = vadd.f32 %v1206, %v1176
        %v1208 = vadd.f32 %v1207, %v1177
        %v1209 = vadd.f32 %v1208, %v1178
        %v1210 = vadd.f32 %v1209, %v1179
        %v1211 = vadd.f32 %v1210, %v1180
        %v1212 = vadd.f32 %v1211, %v1181
        %v1213 = vadd.f32 %v1212, %v1182
        %v1214 = vadd.f32 %v1213, %v1183
        %v1215 = vadd.f32 %v1214, %v1184
        %v1216 = vadd.f32 %v1215, %v1185
        %v1217 = vadd.f32 %v1216, %v1186
        %v1218 = vadd.f32 %v1217, %v1187
        %v1219 = vadd.f32 %v1218, %v1188
        %v1220 = vadd.f32 %v1219, %v1189
        %v1221 = vadd.f32 %v1220, %v1190
        %v1222 = vadd.f32 %v1221, %v1191
        %v1223 = vrot.slane %v1222, 4
        %v1224 = vadd.f32 %v1222, %v1223
        %v1225 = vrot.slane %v1224, 2
        %v1226 = vadd.f32 %v1224, %v1225
        %v1227 = vrot.slane %v1226, 1
        %v1228 = vadd.f32 %v1226, %v1227
        %1229 = vst [vmem:[%s312] sm:$0x1] %v1228
      $region36: #{style_transfer_forward.32} parent=27 // pred_fallthru
        _
      %s1230 = smul.u32 32, %s21
      %p1231 = scmp.lt.s32.totalorder %s1230, 63
      %s1232 = scalar_select %p1231, %s1230, 63
      %p1233 = scmp.lt.s32.totalorder %s22, 0
      %s1234 = scalar_select %p1233, %s22, 0
      %s1235 = sadd.s32 %s1234, %s1232
      %s1236 = smul.addr %s1235, 4
      %s1237 = scalar_lea.vmem %s2, %s1236
      %p1238 = scmp.lt.s32.totalorder %s21, 1
      %s1239 = scalar_select %p1238, %s21, 1
      %p1240 = scmp.lt.s32.totalorder %s22, 0
      %s1241 = scalar_select %p1240, %s22, 0
      %s1242 = sadd.s32 %s1241, %s1239
      %s1243 = scalar_lea.vmem %s3, %s1242
      %p1244 = scmp.lt.s32.totalorder %s21, 1
      %s1245 = scalar_select %p1244, %s21, 1
      %p1246 = scmp.lt.s32.totalorder %s22, 0
      %s1247 = scalar_select %p1246, %s22, 0
      %s1248 = sadd.s32 %s1247, %s1245
      %s1249 = scalar_lea.vmem %s4, %s1248
      // Predicated region
      $region37: #{style_transfer_forward.32} parent=27 // pred_check
        %p1250 = pneg %p111
      $region38: #{style_transfer_forward.32} parent=27 // pred_check_branch
        %1252 = sbr.rel (%p1250) target = $region40
      $region39: #{style_transfer_forward.32} parent=27 // pred_region
        %s1253 = smul.u32 32, %s21
      $region40: #{style_transfer_forward.32} parent=27 // pred_fallthru
        _
      // Predicated region
      $region41: #{style_transfer_forward.32} parent=27 // pred_check
        %p1254 = pneg %p139
      $region42: #{style_transfer_forward.32} parent=27 // pred_check_branch
        %1256 = sbr.rel (%p1254) target = $region44
      $region43: #{style_transfer_forward.32} parent=27 // pred_region
        _
      $region44: #{style_transfer_forward.32} parent=27 // pred_fallthru
        _
      // Predicated region
      $region45: #{style_transfer_forward.32} parent=27 // pred_check
        %p1257 = pneg %p167
      $region46: #{style_transfer_forward.32} parent=27 // pred_check_branch
        %1259 = sbr.rel (%p1257) target = $region48
      $region47: #{style_transfer_forward.32} parent=27 // pred_region
        _
      $region48: #{style_transfer_forward.32} parent=27 // pred_fallthru
        _
    $region28: #{style_transfer_forward.32} parent=5 // pred_fallthru
      _
    %p1260 = scmp.le.s32.totalorder 2, %s11
    // Predicated region
    $region49: #{style_transfer_forward.32} parent=5 // pred_check
      %p1261 = pneg %p1260
    $region50: #{style_transfer_forward.32} parent=5 // pred_check_branch
      %1263 = sbr.rel (%p1261) target = $region52
    $region51: #{style_transfer_forward.32} parent=5 // pred_region
      %s1264 = ssub.s32 %s11, 2
      // Predicated region
      $region53: #{style_transfer_forward.32} parent=51 // pred_check
        %p1265 = pneg %p117
      $region54: #{style_transfer_forward.32} parent=51 // pred_check_branch
        %1267 = sbr.rel (%p1265) target = $region56
      $region55: #{style_transfer_forward.32} parent=51 // pred_region
        %s1268 = smul.u32 32, %s24
        %p1269 = scmp.lt.s32.totalorder %s1268, 63
        %s1270 = scalar_select %p1269, %s1268, 63
        %p1271 = scmp.lt.s32.totalorder %s25, 0
        %s1272 = scalar_select %p1271, %s25, 0
        %s1273 = sadd.s32 %s1272, %s1270
        %s1274 = smul.addr %s1273, 4
        %s1275 = scalar_lea.vmem %s2, %s1274
      $region56: #{style_transfer_forward.32} parent=51 // pred_fallthru
        _
      // Predicated region
      $region57: #{style_transfer_forward.32} parent=51 // pred_check
        %p1276 = pneg %p145
      $region58: #{style_transfer_forward.32} parent=51 // pred_check_branch
        %1278 = sbr.rel (%p1276) target = $region60
      $region59: #{style_transfer_forward.32} parent=51 // pred_region
        %p1279 = scmp.lt.s32.totalorder %s24, 1
        %s1280 = scalar_select %p1279, %s24, 1
        %p1281 = scmp.lt.s32.totalorder %s25, 0
        %s1282 = scalar_select %p1281, %s25, 0
        %s1283 = sadd.s32 %s1282, %s1280
        %s1284 = scalar_lea.vmem %s3, %s1283
      $region60: #{style_transfer_forward.32} parent=51 // pred_fallthru
        _
      // Predicated region
      $region61: #{style_transfer_forward.32} parent=51 // pred_check
        %p1285 = pneg %p173
      $region62: #{style_transfer_forward.32} parent=51 // pred_check_branch
        %1287 = sbr.rel (%p1285) target = $region64
      $region63: #{style_transfer_forward.32} parent=51 // pred_region
        %p1288 = scmp.lt.s32.totalorder %s24, 1
        %s1289 = scalar_select %p1288, %s24, 1
        %p1290 = scmp.lt.s32.totalorder %s25, 0
        %s1291 = scalar_select %p1290, %s25, 0
        %s1292 = sadd.s32 %s1291, %s1289
        %s1293 = scalar_lea.vmem %s4, %s1292
      $region64: #{style_transfer_forward.32} parent=51 // pred_fallthru
        _
    $region52: #{style_transfer_forward.32} parent=5 // pred_fallthru
      _
  $region6: #{style_transfer_forward.32} parent=0 // loop_footer
    %s15 = sadd.s32 1, %s11
  $region7: #{style_transfer_forward.32} parent=0 // loop_footer_branch
    %10 = sbr.rel target = $region3
  $region8: #{style_transfer_forward.32} parent=0 // loop_exit
    _

// kernel: style_transfer_forward.34
$region0: #{style_transfer_forward.34}
  #allocation0 [shape = 'u32[]', space=smem, size = 0x4, offset = 0x4, fixed_abs, tag = 'smem constant byte address 0x4 - core index']
  #allocation1 [shape = 'u32[144,128]{1,0:T(1,128)}', space=vmem, size = 0x12000, scoped, tag = 'internal scratch']
  #allocation2 [shape = 'f32[128,128]{1,0:T(8,128)}', space=vmem, size = 0x10000, scoped, tag = 'scratch operand']
  %s0 = inlined_call_operand.vmem [shape: bf16[128,384], index: 0, kind: input, shape index: {}]
  %s1 = inlined_call_operand.vmem [shape: bf16[384,128], index: 1, kind: input, shape index: {}]
  %s2 = inlined_call_operand.vmem [shape: bf16[128,128], index: 2, kind: output, shape index: {0}]
  %s3 = inlined_call_operand.vmem [shape: f32[1,1,128], index: 3, kind: output, shape index: {1}]
  %s4 = inlined_call_operand.vmem [shape: f32[1,1,128], index: 4, kind: output, shape index: {2}]
  %5 = xla_tuple %s2, %s3, %s4
  %s6 = sld [smem:[#allocation0]]
  $region42: #{style_transfer_forward.34} parent=0
    _
  %s8 = ssub.s32 1, %s6
  %s9 = scalar_select 0, %s8, %s6
  // Predicated region
  $region2: #{style_transfer_forward.34} parent=0 // pred_check
    _
  $region3: #{style_transfer_forward.34} parent=0 // pred_check_branch
    %11 = sbr.rel (0) target = $region5
  $region4: #{style_transfer_forward.34} parent=0 // pred_region
    _
  $region5: #{style_transfer_forward.34} parent=0 // pred_fallthru
    _
  // Predicated region
  $region6: #{style_transfer_forward.34} parent=0 // pred_check
    _
  $region7: #{style_transfer_forward.34} parent=0 // pred_check_branch
    %13 = sbr.rel (0) target = $region9
  $region8: #{style_transfer_forward.34} parent=0 // pred_region
    _
  $region9: #{style_transfer_forward.34} parent=0 // pred_fallthru
    _
  %p15 = scmp.eq.s32.totalorder 0, 0
  // Predicated region
  $region10: #{style_transfer_forward.34} parent=0 // pred_check
    %p16 = pneg %p15
  $region11: #{style_transfer_forward.34} parent=0 // pred_check_branch
    %18 = sbr.rel (%p16) target = $region13
  $region12: #{style_transfer_forward.34} parent=0 // pred_region
    %19 = vst [vmem:[#allocation2] sm:$0xff] 0.0
    %20 = vst [vmem:[#allocation2 + $0x8] sm:$0xff] 0.0
    %21 = vst [vmem:[#allocation2 + $0x10] sm:$0xff] 0.0
    %22 = vst [vmem:[#allocation2 + $0x18] sm:$0xff] 0.0
    %23 = vst [vmem:[#allocation2 + $0x20] sm:$0xff] 0.0
    %24 = vst [vmem:[#allocation2 + $0x28] sm:$0xff] 0.0
    %25 = vst [vmem:[#allocation2 + $0x30] sm:$0xff] 0.0
    %26 = vst [vmem:[#allocation2 + $0x38] sm:$0xff] 0.0
    %27 = vst [vmem:[#allocation2 + $0x40] sm:$0xff] 0.0
    %28 = vst [vmem:[#allocation2 + $0x48] sm:$0xff] 0.0
    %29 = vst [vmem:[#allocation2 + $0x50] sm:$0xff] 0.0
    %30 = vst [vmem:[#allocation2 + $0x58] sm:$0xff] 0.0
    %31 = vst [vmem:[#allocation2 + $0x60] sm:$0xff] 0.0
    %32 = vst [vmem:[#allocation2 + $0x68] sm:$0xff] 0.0
    %33 = vst [vmem:[#allocation2 + $0x70] sm:$0xff] 0.0
    %34 = vst [vmem:[#allocation2 + $0x78] sm:$0xff] 0.0
  $region13: #{style_transfer_forward.34} parent=0 // pred_fallthru
    _
  %v35 = vld [vmem:[#allocation2] sm:$0xff]
  %v36 = vld [vmem:[#allocation2 + $0x8] sm:$0xff]
  %v37 = vld [vmem:[#allocation2 + $0x10] sm:$0xff]
  %v38 = vld [vmem:[#allocation2 + $0x18] sm:$0xff]
  %v39 = vld [vmem:[#allocation2 + $0x20] sm:$0xff]
  %v40 = vld [vmem:[#allocation2 + $0x28] sm:$0xff]
  %v41 = vld [vmem:[#allocation2 + $0x30] sm:$0xff]
  %v42 = vld [vmem:[#allocation2 + $0x38] sm:$0xff]
  %v43 = vld [vmem:[#allocation2 + $0x40] sm:$0xff]
  %v44 = vld [vmem:[#allocation2 + $0x48] sm:$0xff]
  %v45 = vld [vmem:[#allocation2 + $0x50] sm:$0xff]
  %v46 = vld [vmem:[#allocation2 + $0x58] sm:$0xff]
  %v47 = vld [vmem:[#allocation2 + $0x60] sm:$0xff]
  %v48 = vld [vmem:[#allocation2 + $0x68] sm:$0xff]
  %v49 = vld [vmem:[#allocation2 + $0x70] sm:$0xff]
  %v50 = vld [vmem:[#allocation2 + $0x78] sm:$0xff]
  %v51 = vld [vmem:[%s0] sm:$0xff]
  %v52 = vld [vmem:[%s0 + $0x8] sm:$0xf]
  %v53 = vld [vmem:[%s0 + $0xc] sm:$0xff]
  %v54 = vld [vmem:[%s0 + $0x14] sm:$0xf]
  %v55 = vld [vmem:[%s0 + $0x18] sm:$0xff]
  %v56 = vld [vmem:[%s0 + $0x20] sm:$0xf]
  %v57 = vld [vmem:[%s0 + $0x24] sm:$0xff]
  %v58 = vld [vmem:[%s0 + $0x2c] sm:$0xf]
  %v59 = vld [vmem:[%s0 + $0x30] sm:$0xff]
  %v60 = vld [vmem:[%s0 + $0x38] sm:$0xf]
  %v61 = vld [vmem:[%s0 + $0x3c] sm:$0xff]
  %v62 = vld [vmem:[%s0 + $0x44] sm:$0xf]
  %v63 = vld [vmem:[%s0 + $0x48] sm:$0xff]
  %v64 = vld [vmem:[%s0 + $0x50] sm:$0xf]
  %v65 = vld [vmem:[%s0 + $0x54] sm:$0xff]
  %v66 = vld [vmem:[%s0 + $0x5c] sm:$0xf]
  %v67 = vld [vmem:[%s0 + $0x60] sm:$0xff]
  %v68 = vld [vmem:[%s0 + $0x68] sm:$0xf]
  %v69 = vld [vmem:[%s0 + $0x6c] sm:$0xff]
  %v70 = vld [vmem:[%s0 + $0x74] sm:$0xf]
  %v71 = vld [vmem:[%s0 + $0x78] sm:$0xff]
  %v72 = vld [vmem:[%s0 + $0x80] sm:$0xf]
  %v73 = vld [vmem:[%s0 + $0x84] sm:$0xff]
  %v74 = vld [vmem:[%s0 + $0x8c] sm:$0xf]
  %v75 = vld [vmem:[%s0 + $0x90] sm:$0xff]
  %v76 = vld [vmem:[%s0 + $0x98] sm:$0xf]
  %v77 = vld [vmem:[%s0 + $0x9c] sm:$0xff]
  %v78 = vld [vmem:[%s0 + $0xa4] sm:$0xf]
  %v79 = vld [vmem:[%s0 + $0xa8] sm:$0xff]
  %v80 = vld [vmem:[%s0 + $0xb0] sm:$0xf]
  %v81 = vld [vmem:[%s0 + $0xb4] sm:$0xff]
  %v82 = vld [vmem:[%s0 + $0xbc] sm:$0xf]
  %v83 = vld [vmem:[%s1] sm:$0xf]
  %v84 = vld [vmem:[%s1 + $0x4] sm:$0xf]
  %v85 = vld [vmem:[%s1 + $0x8] sm:$0xf]
  %v86 = vld [vmem:[%s1 + $0xc] sm:$0xf]
  %v87 = vld [vmem:[%s1 + $0x10] sm:$0xf]
  %v88 = vld [vmem:[%s1 + $0x14] sm:$0xf]
  %v89 = vld [vmem:[%s1 + $0x18] sm:$0xf]
  %v90 = vld [vmem:[%s1 + $0x1c] sm:$0xf]
  %v91 = vld [vmem:[%s1 + $0x20] sm:$0xf]
  %v92 = vld [vmem:[%s1 + $0x24] sm:$0xf]
  %v93 = vld [vmem:[%s1 + $0x28] sm:$0xf]
  %v94 = vld [vmem:[%s1 + $0x2c] sm:$0xf]
  %v95 = vld [vmem:[%s1 + $0x30] sm:$0xf]
  %v96 = vld [vmem:[%s1 + $0x34] sm:$0xf]
  %v97 = vld [vmem:[%s1 + $0x38] sm:$0xf]
  %v98 = vld [vmem:[%s1 + $0x3c] sm:$0xf]
  %v99 = vld [vmem:[%s1 + $0x40] sm:$0xf]
  %v100 = vld [vmem:[%s1 + $0x44] sm:$0xf]
  %v101 = vld [vmem:[%s1 + $0x48] sm:$0xf]
  %v102 = vld [vmem:[%s1 + $0x4c] sm:$0xf]
  %v103 = vld [vmem:[%s1 + $0x50] sm:$0xf]
  %v104 = vld [vmem:[%s1 + $0x54] sm:$0xf]
  %v105 = vld [vmem:[%s1 + $0x58] sm:$0xf]
  %v106 = vld [vmem:[%s1 + $0x5c] sm:$0xf]
  %v107 = vld [vmem:[%s1 + $0x60] sm:$0xf]
  %v108 = vld [vmem:[%s1 + $0x64] sm:$0xf]
  %v109 = vld [vmem:[%s1 + $0x68] sm:$0xf]
  %v110 = vld [vmem:[%s1 + $0x6c] sm:$0xf]
  %v111 = vld [vmem:[%s1 + $0x70] sm:$0xf]
  %v112 = vld [vmem:[%s1 + $0x74] sm:$0xf]
  %v113 = vld [vmem:[%s1 + $0x78] sm:$0xf]
  %v114 = vld [vmem:[%s1 + $0x7c] sm:$0xf]
  %v115 = vld [vmem:[%s1 + $0x80] sm:$0xf]
  %v116 = vld [vmem:[%s1 + $0x84] sm:$0xf]
  %v117 = vld [vmem:[%s1 + $0x88] sm:$0xf]
  %v118 = vld [vmem:[%s1 + $0x8c] sm:$0xf]
  %v119 = vld [vmem:[%s1 + $0x90] sm:$0xf]
  %v120 = vld [vmem:[%s1 + $0x94] sm:$0xf]
  %v121 = vld [vmem:[%s1 + $0x98] sm:$0xf]
  %v122 = vld [vmem:[%s1 + $0x9c] sm:$0xf]
  %v123 = vld [vmem:[%s1 + $0xa0] sm:$0xf]
  %v124 = vld [vmem:[%s1 + $0xa4] sm:$0xf]
  %v125 = vld [vmem:[%s1 + $0xa8] sm:$0xf]
  %v126 = vld [vmem:[%s1 + $0xac] sm:$0xf]
  %v127 = vld [vmem:[%s1 + $0xb0] sm:$0xf]
  %v128 = vld [vmem:[%s1 + $0xb4] sm:$0xf]
  %v129 = vld [vmem:[%s1 + $0xb8] sm:$0xf]
  %v130 = vld [vmem:[%s1 + $0xbc] sm:$0xf]
  %v163 = vunpack.c.l.b16 %v51
  %v164 = vunpack.c.h.b16 %v51
  %v165 = vunpack.c.l.b16 %v52
  %v166 = vunpack.c.l.b16 %v53
  %v167 = vunpack.c.h.b16 %v53
  %v168 = vunpack.c.l.b16 %v54
  %v169 = vunpack.c.l.b16 %v55
  %v170 = vunpack.c.h.b16 %v55
  %v171 = vunpack.c.l.b16 %v56
  %v172 = vunpack.c.l.b16 %v57
  %v173 = vunpack.c.h.b16 %v57
  %v174 = vunpack.c.l.b16 %v58
  %v175 = vunpack.c.l.b16 %v59
  %v176 = vunpack.c.h.b16 %v59
  %v177 = vunpack.c.l.b16 %v60
  %v178 = vunpack.c.l.b16 %v61
  %v179 = vunpack.c.h.b16 %v61
  %v180 = vunpack.c.l.b16 %v62
  %v181 = vunpack.c.l.b16 %v63
  %v182 = vunpack.c.h.b16 %v63
  %v183 = vunpack.c.l.b16 %v64
  %v184 = vunpack.c.l.b16 %v65
  %v185 = vunpack.c.h.b16 %v65
  %v186 = vunpack.c.l.b16 %v66
  %v187 = vunpack.c.l.b16 %v67
  %v188 = vunpack.c.h.b16 %v67
  %v189 = vunpack.c.l.b16 %v68
  %v190 = vunpack.c.l.b16 %v69
  %v191 = vunpack.c.h.b16 %v69
  %v192 = vunpack.c.l.b16 %v70
  %v193 = vunpack.c.l.b16 %v71
  %v194 = vunpack.c.h.b16 %v71
  %v195 = vunpack.c.l.b16 %v72
  %v196 = vunpack.c.l.b16 %v73
  %v197 = vunpack.c.h.b16 %v73
  %v198 = vunpack.c.l.b16 %v74
  %v199 = vunpack.c.l.b16 %v75
  %v200 = vunpack.c.h.b16 %v75
  %v201 = vunpack.c.l.b16 %v76
  %v202 = vunpack.c.l.b16 %v77
  %v203 = vunpack.c.h.b16 %v77
  %v204 = vunpack.c.l.b16 %v78
  %v205 = vunpack.c.l.b16 %v79
  %v206 = vunpack.c.h.b16 %v79
  %v207 = vunpack.c.l.b16 %v80
  %v208 = vunpack.c.l.b16 %v81
  %v209 = vunpack.c.h.b16 %v81
  %v210 = vunpack.c.l.b16 %v82
  %v211 = vpack.c.b16 %v166, %v163
  %v212 = vpack.c.b16 %v167, %v164
  %v213 = vpack.c.b16 %v168, %v165
  %v214 = vpack.c.b16 %v172, %v169
  %v215 = vpack.c.b16 %v173, %v170
  %v216 = vpack.c.b16 %v174, %v171
  %v217 = vpack.c.b16 %v178, %v175
  %v218 = vpack.c.b16 %v179, %v176
  %v219 = vpack.c.b16 %v180, %v177
  %v220 = vpack.c.b16 %v184, %v181
  %v221 = vpack.c.b16 %v185, %v182
  %v222 = vpack.c.b16 %v186, %v183
  %v223 = vpack.c.b16 %v190, %v187
  %v224 = vpack.c.b16 %v191, %v188
  %v225 = vpack.c.b16 %v192, %v189
  %v226 = vpack.c.b16 %v196, %v193
  %v227 = vpack.c.b16 %v197, %v194
  %v228 = vpack.c.b16 %v198, %v195
  %v229 = vpack.c.b16 %v202, %v199
  %v230 = vpack.c.b16 %v203, %v200
  %v231 = vpack.c.b16 %v204, %v201
  %v232 = vpack.c.b16 %v208, %v205
  %v233 = vpack.c.b16 %v209, %v206
  %v234 = vpack.c.b16 %v210, %v207
  %v307 = vunpack.c.l.b16 %v83
  %v308 = vunpack.c.l.b16 %v84
  %v309 = vunpack.c.l.b16 %v85
  %v310 = vunpack.c.l.b16 %v86
  %v311 = vunpack.c.l.b16 %v87
  %v312 = vunpack.c.l.b16 %v88
  %v313 = vunpack.c.l.b16 %v89
  %v314 = vunpack.c.l.b16 %v90
  %v315 = vunpack.c.l.b16 %v91
  %v316 = vunpack.c.l.b16 %v92
  %v317 = vunpack.c.l.b16 %v93
  %v318 = vunpack.c.l.b16 %v94
  %v319 = vunpack.c.l.b16 %v95
  %v320 = vunpack.c.l.b16 %v96
  %v321 = vunpack.c.l.b16 %v97
  %v322 = vunpack.c.l.b16 %v98
  %v323 = vunpack.c.l.b16 %v99
  %v324 = vunpack.c.l.b16 %v100
  %v325 = vunpack.c.l.b16 %v101
  %v326 = vunpack.c.l.b16 %v102
  %v327 = vunpack.c.l.b16 %v103
  %v328 = vunpack.c.l.b16 %v104
  %v329 = vunpack.c.l.b16 %v105
  %v330 = vunpack.c.l.b16 %v106
  %v331 = vunpack.c.l.b16 %v107
  %v332 = vunpack.c.l.b16 %v108
  %v333 = vunpack.c.l.b16 %v109
  %v334 = vunpack.c.l.b16 %v110
  %v335 = vunpack.c.l.b16 %v111
  %v336 = vunpack.c.l.b16 %v112
  %v337 = vunpack.c.l.b16 %v113
  %v338 = vunpack.c.l.b16 %v114
  %v339 = vunpack.c.l.b16 %v115
  %v340 = vunpack.c.l.b16 %v116
  %v341 = vunpack.c.l.b16 %v117
  %v342 = vunpack.c.l.b16 %v118
  %v343 = vunpack.c.l.b16 %v119
  %v344 = vunpack.c.l.b16 %v120
  %v345 = vunpack.c.l.b16 %v121
  %v346 = vunpack.c.l.b16 %v122
  %v347 = vunpack.c.l.b16 %v123
  %v348 = vunpack.c.l.b16 %v124
  %v349 = vunpack.c.l.b16 %v125
  %v350 = vunpack.c.l.b16 %v126
  %v351 = vunpack.c.l.b16 %v127
  %v352 = vunpack.c.l.b16 %v128
  %v353 = vunpack.c.l.b16 %v129
  %v354 = vunpack.c.l.b16 %v130
  %v355 = vpack.c.b16 %v308, %v307
  %v356 = vpack.c.b16 %v310, %v309
  %v357 = vpack.c.b16 %v312, %v311
  %v358 = vpack.c.b16 %v314, %v313
  %v359 = vpack.c.b16 %v316, %v315
  %v360 = vpack.c.b16 %v318, %v317
  %v361 = vpack.c.b16 %v320, %v319
  %v362 = vpack.c.b16 %v322, %v321
  %v363 = vpack.c.b16 %v324, %v323
  %v364 = vpack.c.b16 %v326, %v325
  %v365 = vpack.c.b16 %v328, %v327
  %v366 = vpack.c.b16 %v330, %v329
  %v367 = vpack.c.b16 %v332, %v331
  %v368 = vpack.c.b16 %v334, %v333
  %v369 = vpack.c.b16 %v336, %v335
  %v370 = vpack.c.b16 %v338, %v337
  %v371 = vpack.c.b16 %v340, %v339
  %v372 = vpack.c.b16 %v342, %v341
  %v373 = vpack.c.b16 %v344, %v343
  %v374 = vpack.c.b16 %v346, %v345
  %v375 = vpack.c.b16 %v348, %v347
  %v376 = vpack.c.b16 %v350, %v349
  %v377 = vpack.c.b16 %v352, %v351
  %v378 = vpack.c.b16 %v354, %v353
  %403 = vmatprep.subr.bf16.mxu0 0
  %404 = vmatpush1.bf16.msra.mxu0 %v355
  %405 = vmatprep.subr.bf16.mxu0 0
  %406 = vmatpush1.bf16.msra.mxu0 %v356
  %407 = vmatprep.subr.bf16.mxu0 0
  %408 = vmatpush1.bf16.msra.mxu0 %v357
  %409 = vmatprep.subr.bf16.mxu0 0
  %410 = vmatpush1.bf16.msra.mxu0 %v358
  %411 = vmatprep.subr.bf16.mxu0 0
  %412 = vmatpush1.bf16.msra.mxu0 %v359
  %413 = vmatprep.subr.bf16.mxu0 0
  %414 = vmatpush1.bf16.msra.mxu0 %v360
  %415 = vmatprep.subr.bf16.mxu0 0
  %416 = vmatpush1.bf16.msra.mxu0 %v361
  %417 = vmatprep.subr.bf16.mxu0 0
  %418 = vmatpush1.bf16.msra.mxu0 %v362
  %419 = vmatprep.subr.bf16.mxu0 0
  %420 = vmatpush1.bf16.msra.mxu0 %v363
  %421 = vmatprep.subr.bf16.mxu0 0
  %422 = vmatpush1.bf16.msra.mxu0 %v364
  %423 = vmatprep.subr.bf16.mxu0 0
  %424 = vmatpush1.bf16.msra.mxu0 %v365
  %425 = vmatprep.subr.bf16.mxu0 0
  %426 = vmatpush1.bf16.msra.mxu0 %v366
  %427 = vmatprep.subr.bf16.mxu0 0
  %428 = vmatpush1.bf16.msra.mxu0 %v367
  %429 = vmatprep.subr.bf16.mxu0 0
  %430 = vmatpush1.bf16.msra.mxu0 %v368
  %431 = vmatprep.subr.bf16.mxu0 0
  %432 = vmatpush1.bf16.msra.mxu0 %v369
  %433 = vmatprep.subr.bf16.mxu0 0
  %434 = vmatpush1.bf16.msra.mxu0 %v370
  %435 = vmatprep.mubr.bf16.mxu0 %v212
  %436 = vmatmul.mubr.bf16.gmra.mrb[0].mxu0 %v211
  %v437 = vpop.f32.mrb[0].mxu0
  %v438 = vadd.f32 0.0, %v437
  %v439 = vpop.f32.mrb[0].mxu0
  %v440 = vpop.f32.mrb[0].mxu0
  %v441 = vadd.f32 0.0, %v440
  %v442 = vpop.f32.mrb[0].mxu0
  %443 = vmatprep.mubr.bf16.mxu0 %v215
  %444 = vmatmul.mubr.bf16.gmra.mrb[0].mxu0 %v214
  %v445 = vpop.f32.mrb[0].mxu0
  %v446 = vadd.f32 0.0, %v445
  %v447 = vpop.f32.mrb[0].mxu0
  %v448 = vpop.f32.mrb[0].mxu0
  %v449 = vadd.f32 0.0, %v448
  %v450 = vpop.f32.mrb[0].mxu0
  %451 = vmatprep.mubr.bf16.mxu0 %v218
  %452 = vmatmul.mubr.bf16.gmra.mrb[0].mxu0 %v217
  %v453 = vpop.f32.mrb[0].mxu0
  %v454 = vadd.f32 0.0, %v453
  %v455 = vpop.f32.mrb[0].mxu0
  %v456 = vpop.f32.mrb[0].mxu0
  %v457 = vadd.f32 0.0, %v456
  %v458 = vpop.f32.mrb[0].mxu0
  %459 = vmatprep.mubr.bf16.mxu0 %v221
  %460 = vmatmul.mubr.bf16.gmra.mrb[0].mxu0 %v220
  %v461 = vpop.f32.mrb[0].mxu0
  %v462 = vadd.f32 0.0, %v461
  %v463 = vpop.f32.mrb[0].mxu0
  %v464 = vpop.f32.mrb[0].mxu0
  %v465 = vadd.f32 0.0, %v464
  %v466 = vpop.f32.mrb[0].mxu0
  %467 = vmatprep.mubr.bf16.mxu0 %v224
  %468 = vmatmul.mubr.bf16.gmra.mrb[0].mxu0 %v223
  %v469 = vpop.f32.mrb[0].mxu0
  %v470 = vadd.f32 0.0, %v469
  %v471 = vpop.f32.mrb[0].mxu0
  %v472 = vpop.f32.mrb[0].mxu0
  %v473 = vadd.f32 0.0, %v472
  %v474 = vpop.f32.mrb[0].mxu0
  %475 = vmatprep.mubr.bf16.mxu0 %v227
  %476 = vmatmul.mubr.bf16.gmra.mrb[0].mxu0 %v226
  %v477 = vpop.f32.mrb[0].mxu0
  %v478 = vadd.f32 0.0, %v477
  %v479 = vpop.f32.mrb[0].mxu0
  %v480 = vpop.f32.mrb[0].mxu0
  %v481 = vadd.f32 0.0, %v480
  %v482 = vpop.f32.mrb[0].mxu0
  %483 = vmatprep.mubr.bf16.mxu0 %v230
  %484 = vmatmul.mubr.bf16.gmra.mrb[0].mxu0 %v229
  %v485 = vpop.f32.mrb[0].mxu0
  %v486 = vadd.f32 0.0, %v485
  %v487 = vpop.f32.mrb[0].mxu0
  %v488 = vpop.f32.mrb[0].mxu0
  %v489 = vadd.f32 0.0, %v488
  %v490 = vpop.f32.mrb[0].mxu0
  %491 = vmatprep.mubr.bf16.mxu0 %v233
  %492 = vmatmul.mubr.bf16.gmra.mrb[0].mxu0 %v232
  %v493 = vpop.f32.mrb[0].mxu0
  %v494 = vadd.f32 0.0, %v493
  %v495 = vpop.f32.mrb[0].mxu0
  %v496 = vpop.f32.mrb[0].mxu0
  %v497 = vadd.f32 0.0, %v496
  %v498 = vpop.f32.mrb[0].mxu0
  %499 = vdwg.mxu0
  %500 = vmatprep.subr.bf16.mxu0 0
  %501 = vmatpush1.bf16.msra.mxu0 %v371
  %502 = vmatprep.subr.bf16.mxu0 0
  %503 = vmatpush1.bf16.msra.mxu0 %v372
  %504 = vmatprep.subr.bf16.mxu0 0
  %505 = vmatpush1.bf16.msra.mxu0 %v373
  %506 = vmatprep.subr.bf16.mxu0 0
  %507 = vmatpush1.bf16.msra.mxu0 %v374
  %508 = vmatprep.subr.bf16.mxu0 0
  %509 = vmatpush1.bf16.msra.mxu0 %v375
  %510 = vmatprep.subr.bf16.mxu0 0
  %511 = vmatpush1.bf16.msra.mxu0 %v376
  %512 = vmatprep.subr.bf16.mxu0 0
  %513 = vmatpush1.bf16.msra.mxu0 %v377
  %514 = vmatprep.subr.bf16.mxu0 0
  %515 = vmatpush1.bf16.msra.mxu0 %v378
  %516 = vmatprep.subr.bf16.mxu0 0
  %517 = vmatpush1.bf16.msra.mxu0 0
  %518 = vmatprep.subr.bf16.mxu0 0
  %519 = vmatpush1.bf16.msra.mxu0 0
  %520 = vmatprep.subr.bf16.mxu0 0
  %521 = vmatpush1.bf16.msra.mxu0 0
  %522 = vmatprep.subr.bf16.mxu0 0
  %523 = vmatpush1.bf16.msra.mxu0 0
  %524 = vmatprep.subr.bf16.mxu0 0
  %525 = vmatpush1.bf16.msra.mxu0 0
  %526 = vmatprep.subr.bf16.mxu0 0
  %527 = vmatpush1.bf16.msra.mxu0 0
  %528 = vmatprep.subr.bf16.mxu0 0
  %529 = vmatpush1.bf16.msra.mxu0 0
  %530 = vmatprep.subr.bf16.mxu0 0
  %531 = vmatpush1.bf16.msra.mxu0 0
  %532 = vmatprep.mubr.bf16.mxu0 0
  %533 = vmatmul.mubr.bf16.gmra.mrb[0].mxu0 %v213
  %v534 = vpop.f32.mrb[0].mxu0
  %v535 = vadd.f32 %v438, %v534
  %v536 = vpop.f32.mrb[0].mxu0
  %v537 = vpop.f32.mrb[0].mxu0
  %v538 = vadd.f32 %v441, %v537
  %v539 = vpop.f32.mrb[0].mxu0
  %540 = vmatprep.mubr.bf16.mxu0 0
  %541 = vmatmul.mubr.bf16.gmra.mrb[0].mxu0 %v216
  %v542 = vpop.f32.mrb[0].mxu0
  %v543 = vadd.f32 %v446, %v542
  %v544 = vpop.f32.mrb[0].mxu0
  %v545 = vpop.f32.mrb[0].mxu0
  %v546 = vadd.f32 %v449, %v545
  %v547 = vpop.f32.mrb[0].mxu0
  %548 = vmatprep.mubr.bf16.mxu0 0
  %549 = vmatmul.mubr.bf16.gmra.mrb[0].mxu0 %v219
  %v550 = vpop.f32.mrb[0].mxu0
  %v551 = vadd.f32 %v454, %v550
  %v552 = vpop.f32.mrb[0].mxu0
  %v553 = vpop.f32.mrb[0].mxu0
  %v554 = vadd.f32 %v457, %v553
  %v555 = vpop.f32.mrb[0].mxu0
  %556 = vmatprep.mubr.bf16.mxu0 0
  %557 = vmatmul.mubr.bf16.gmra.mrb[0].mxu0 %v222
  %v558 = vpop.f32.mrb[0].mxu0
  %v559 = vadd.f32 %v462, %v558
  %v560 = vpop.f32.mrb[0].mxu0
  %v561 = vpop.f32.mrb[0].mxu0
  %v562 = vadd.f32 %v465, %v561
  %v563 = vpop.f32.mrb[0].mxu0
  %564 = vmatprep.mubr.bf16.mxu0 0
  %565 = vmatmul.mubr.bf16.gmra.mrb[0].mxu0 %v225
  %v566 = vpop.f32.mrb[0].mxu0
  %v567 = vadd.f32 %v470, %v566
  %v568 = vpop.f32.mrb[0].mxu0
  %v569 = vpop.f32.mrb[0].mxu0
  %v570 = vadd.f32 %v473, %v569
  %v571 = vpop.f32.mrb[0].mxu0
  %572 = vmatprep.mubr.bf16.mxu0 0
  %573 = vmatmul.mubr.bf16.gmra.mrb[0].mxu0 %v228
  %v574 = vpop.f32.mrb[0].mxu0
  %v575 = vadd.f32 %v478, %v574
  %v576 = vpop.f32.mrb[0].mxu0
  %v577 = vpop.f32.mrb[0].mxu0
  %v578 = vadd.f32 %v481, %v577
  %v579 = vpop.f32.mrb[0].mxu0
  %580 = vmatprep.mubr.bf16.mxu0 0
  %581 = vmatmul.mubr.bf16.gmra.mrb[0].mxu0 %v231
  %v582 = vpop.f32.mrb[0].mxu0
  %v583 = vadd.f32 %v486, %v582
  %v584 = vpop.f32.mrb[0].mxu0
  %v585 = vpop.f32.mrb[0].mxu0
  %v586 = vadd.f32 %v489, %v585
  %v587 = vpop.f32.mrb[0].mxu0
  %588 = vmatprep.mubr.bf16.mxu0 0
  %589 = vmatmul.mubr.bf16.gmra.mrb[0].mxu0 %v234
  %v590 = vpop.f32.mrb[0].mxu0
  %v591 = vadd.f32 %v494, %v590
  %v592 = vpop.f32.mrb[0].mxu0
  %v593 = vpop.f32.mrb[0].mxu0
  %v594 = vadd.f32 %v497, %v593
  %v595 = vpop.f32.mrb[0].mxu0
  %596 = vdwg.mxu0
  %v597 = vadd.f32 %v35, %v535
  %v598 = vadd.f32 %v36, %v538
  %v599 = vadd.f32 %v37, %v543
  %v600 = vadd.f32 %v38, %v546
  %v601 = vadd.f32 %v39, %v551
  %v602 = vadd.f32 %v40, %v554
  %v603 = vadd.f32 %v41, %v559
  %v604 = vadd.f32 %v42, %v562
  %v605 = vadd.f32 %v43, %v567
  %v606 = vadd.f32 %v44, %v570
  %v607 = vadd.f32 %v45, %v575
  %v608 = vadd.f32 %v46, %v578
  %v609 = vadd.f32 %v47, %v583
  %v610 = vadd.f32 %v48, %v586
  %v611 = vadd.f32 %v49, %v591
  %v612 = vadd.f32 %v50, %v594
  %613 = vst [vmem:[#allocation2] sm:$0xff] %v597
  %614 = vst [vmem:[#allocation2 + $0x8] sm:$0xff] %v598
  %615 = vst [vmem:[#allocation2 + $0x10] sm:$0xff] %v599
  %616 = vst [vmem:[#allocation2 + $0x18] sm:$0xff] %v600
  %617 = vst [vmem:[#allocation2 + $0x20] sm:$0xff] %v601
  %618 = vst [vmem:[#allocation2 + $0x28] sm:$0xff] %v602
  %619 = vst [vmem:[#allocation2 + $0x30] sm:$0xff] %v603
  %620 = vst [vmem:[#allocation2 + $0x38] sm:$0xff] %v604
  %621 = vst [vmem:[#allocation2 + $0x40] sm:$0xff] %v605
  %622 = vst [vmem:[#allocation2 + $0x48] sm:$0xff] %v606
  %623 = vst [vmem:[#allocation2 + $0x50] sm:$0xff] %v607
  %624 = vst [vmem:[#allocation2 + $0x58] sm:$0xff] %v608
  %625 = vst [vmem:[#allocation2 + $0x60] sm:$0xff] %v609
  %626 = vst [vmem:[#allocation2 + $0x68] sm:$0xff] %v610
  %627 = vst [vmem:[#allocation2 + $0x70] sm:$0xff] %v611
  %628 = vst [vmem:[#allocation2 + $0x78] sm:$0xff] %v612
  // Predicated region
  $region14: #{style_transfer_forward.34} parent=0 // pred_check
    %p629 = pneg %p15
  $region15: #{style_transfer_forward.34} parent=0 // pred_check_branch
    %631 = sbr.rel (%p629) target = $region17
  $region16: #{style_transfer_forward.34} parent=0 // pred_region
    %v632 = vld [vmem:[#allocation2] sm:$0xff]
    %v633 = vld [vmem:[#allocation2 + $0x8] sm:$0xff]
    %v634 = vld [vmem:[#allocation2 + $0x10] sm:$0xff]
    %v635 = vld [vmem:[#allocation2 + $0x18] sm:$0xff]
    %v636 = vld [vmem:[#allocation2 + $0x20] sm:$0xff]
    %v637 = vld [vmem:[#allocation2 + $0x28] sm:$0xff]
    %v638 = vld [vmem:[#allocation2 + $0x30] sm:$0xff]
    %v639 = vld [vmem:[#allocation2 + $0x38] sm:$0xff]
    %v640 = vld [vmem:[#allocation2 + $0x40] sm:$0xff]
    %v641 = vld [vmem:[#allocation2 + $0x48] sm:$0xff]
    %v642 = vld [vmem:[#allocation2 + $0x50] sm:$0xff]
    %v643 = vld [vmem:[#allocation2 + $0x58] sm:$0xff]
    %v644 = vld [vmem:[#allocation2 + $0x60] sm:$0xff]
    %v645 = vld [vmem:[#allocation2 + $0x68] sm:$0xff]
    %v646 = vld [vmem:[#allocation2 + $0x70] sm:$0xff]
    %v647 = vld [vmem:[#allocation2 + $0x78] sm:$0xff]
    %v648 = vpack.c.bf16 %v633, %v632
    %v649 = vpack.c.bf16 %v635, %v634
    %v650 = vpack.c.bf16 %v637, %v636
    %v651 = vpack.c.bf16 %v639, %v638
    %v652 = vpack.c.bf16 %v641, %v640
    %v653 = vpack.c.bf16 %v643, %v642
    %v654 = vpack.c.bf16 %v645, %v644
    %v655 = vpack.c.bf16 %v647, %v646
    %v664 = vunpack.c.l.b16 %v648
    %v665 = vunpack.c.h.b16 %v648
    %v666 = vunpack.c.l.b16 %v649
    %v667 = vunpack.c.h.b16 %v649
    %v668 = vunpack.c.l.b16 %v650
    %v669 = vunpack.c.h.b16 %v650
    %v670 = vunpack.c.l.b16 %v651
    %v671 = vunpack.c.h.b16 %v651
    %v672 = vunpack.c.l.b16 %v652
    %v673 = vunpack.c.h.b16 %v652
    %v674 = vunpack.c.l.b16 %v653
    %v675 = vunpack.c.h.b16 %v653
    %v676 = vunpack.c.l.b16 %v654
    %v677 = vunpack.c.h.b16 %v654
    %v678 = vunpack.c.l.b16 %v655
    %v679 = vunpack.c.h.b16 %v655
    %v680 = vpack.c.b16 %v664, %v664
    %v681 = vpack.c.b16 %v665, %v665
    %v682 = vpack.c.b16 %v666, %v666
    %v683 = vpack.c.b16 %v667, %v667
    %v684 = vpack.c.b16 %v668, %v668
    %v685 = vpack.c.b16 %v669, %v669
    %v686 = vpack.c.b16 %v670, %v670
    %v687 = vpack.c.b16 %v671, %v671
    %v688 = vpack.c.b16 %v672, %v672
    %v689 = vpack.c.b16 %v673, %v673
    %v690 = vpack.c.b16 %v674, %v674
    %v691 = vpack.c.b16 %v675, %v675
    %v692 = vpack.c.b16 %v676, %v676
    %v693 = vpack.c.b16 %v677, %v677
    %v694 = vpack.c.b16 %v678, %v678
    %v695 = vpack.c.b16 %v679, %v679
    %712 = vst [vmem:[%s2] sm:$0xf] %v680
    %713 = vst [vmem:[%s2 + $0x4] sm:$0xf] %v681
    %714 = vst [vmem:[%s2 + $0x8] sm:$0xf] %v682
    %715 = vst [vmem:[%s2 + $0xc] sm:$0xf] %v683
    %716 = vst [vmem:[%s2 + $0x10] sm:$0xf] %v684
    %717 = vst [vmem:[%s2 + $0x14] sm:$0xf] %v685
    %718 = vst [vmem:[%s2 + $0x18] sm:$0xf] %v686
    %719 = vst [vmem:[%s2 + $0x1c] sm:$0xf] %v687
    %720 = vst [vmem:[%s2 + $0x20] sm:$0xf] %v688
    %721 = vst [vmem:[%s2 + $0x24] sm:$0xf] %v689
    %722 = vst [vmem:[%s2 + $0x28] sm:$0xf] %v690
    %723 = vst [vmem:[%s2 + $0x2c] sm:$0xf] %v691
    %724 = vst [vmem:[%s2 + $0x30] sm:$0xf] %v692
    %725 = vst [vmem:[%s2 + $0x34] sm:$0xf] %v693
    %726 = vst [vmem:[%s2 + $0x38] sm:$0xf] %v694
    %727 = vst [vmem:[%s2 + $0x3c] sm:$0xf] %v695
    %v728 = vadd.f32 %v632, %v633
    %v729 = vadd.f32 %v728, %v634
    %v730 = vadd.f32 %v729, %v635
    %v731 = vadd.f32 %v730, %v636
    %v732 = vadd.f32 %v731, %v637
    %v733 = vadd.f32 %v732, %v638
    %v734 = vadd.f32 %v733, %v639
    %v735 = vadd.f32 %v734, %v640
    %v736 = vadd.f32 %v735, %v641
    %v737 = vadd.f32 %v736, %v642
    %v738 = vadd.f32 %v737, %v643
    %v739 = vadd.f32 %v738, %v644
    %v740 = vadd.f32 %v739, %v645
    %v741 = vadd.f32 %v740, %v646
    %v742 = vadd.f32 %v741, %v647
    %v743 = vrot.slane %v742, 4
    %v744 = vadd.f32 %v742, %v743
    %v745 = vrot.slane %v744, 2
    %v746 = vadd.f32 %v744, %v745
    %v747 = vrot.slane %v746, 1
    %v748 = vadd.f32 %v746, %v747
    %749 = vst [vmem:[%s3] sm:$0x1] %v748
    %v750 = vmul.f32 %v632, %v632
    %v751 = vmul.f32 %v633, %v633
    %v752 = vmul.f32 %v634, %v634
    %v753 = vmul.f32 %v635, %v635
    %v754 = vmul.f32 %v636, %v636
    %v755 = vmul.f32 %v637, %v637
    %v756 = vmul.f32 %v638, %v638
    %v757 = vmul.f32 %v639, %v639
    %v758 = vmul.f32 %v640, %v640
    %v759 = vmul.f32 %v641, %v641
    %v760 = vmul.f32 %v642, %v642
    %v761 = vmul.f32 %v643, %v643
    %v762 = vmul.f32 %v644, %v644
    %v763 = vmul.f32 %v645, %v645
    %v764 = vmul.f32 %v646, %v646
    %v765 = vmul.f32 %v647, %v647
    %v766 = vadd.f32 %v750, %v751
    %v767 = vadd.f32 %v766, %v752
    %v768 = vadd.f32 %v767, %v753
    %v769 = vadd.f32 %v768, %v754
    %v770 = vadd.f32 %v769, %v755
    %v771 = vadd.f32 %v770, %v756
    %v772 = vadd.f32 %v771, %v757
    %v773 = vadd.f32 %v772, %v758
    %v774 = vadd.f32 %v773, %v759
    %v775 = vadd.f32 %v774, %v760
    %v776 = vadd.f32 %v775, %v761
    %v777 = vadd.f32 %v776, %v762
    %v778 = vadd.f32 %v777, %v763
    %v779 = vadd.f32 %v778, %v764
    %v780 = vadd.f32 %v779, %v765
    %v781 = vrot.slane %v780, 4
    %v782 = vadd.f32 %v780, %v781
    %v783 = vrot.slane %v782, 2
    %v784 = vadd.f32 %v782, %v783
    %v785 = vrot.slane %v784, 1
    %v786 = vadd.f32 %v784, %v785
    %787 = vst [vmem:[%s4] sm:$0x1] %v786
  $region17: #{style_transfer_forward.34} parent=0 // pred_fallthru
    _
  // Predicated region
  $region18: #{style_transfer_forward.34} parent=0 // pred_check
    _
  $region19: #{style_transfer_forward.34} parent=0 // pred_check_branch
    %789 = sbr.rel (0) target = $region21
  $region20: #{style_transfer_forward.34} parent=0 // pred_region
    _
  $region21: #{style_transfer_forward.34} parent=0 // pred_fallthru
    _
  // Predicated region
  $region22: #{style_transfer_forward.34} parent=0 // pred_check
    _
  $region23: #{style_transfer_forward.34} parent=0 // pred_check_branch
    %791 = sbr.rel (0) target = $region25
  $region24: #{style_transfer_forward.34} parent=0 // pred_region
    _
  $region25: #{style_transfer_forward.34} parent=0 // pred_fallthru
    _
  // Predicated region
  $region26: #{style_transfer_forward.34} parent=0 // pred_check
    _
  $region27: #{style_transfer_forward.34} parent=0 // pred_check_branch
    %793 = sbr.rel (0) target = $region29
  $region28: #{style_transfer_forward.34} parent=0 // pred_region
    _
  $region29: #{style_transfer_forward.34} parent=0 // pred_fallthru
    _
  // Predicated region
  $region30: #{style_transfer_forward.34} parent=0 // pred_check
    _
  $region31: #{style_transfer_forward.34} parent=0 // pred_check_branch
    %795 = sbr.rel (0) target = $region33
  $region32: #{style_transfer_forward.34} parent=0 // pred_region
    _
  $region33: #{style_transfer_forward.34} parent=0 // pred_fallthru
    _
  // Predicated region
  $region34: #{style_transfer_forward.34} parent=0 // pred_check
    _
  $region35: #{style_transfer_forward.34} parent=0 // pred_check_branch
    %797 = sbr.rel (0) target = $region37
  $region36: #{style_transfer_forward.34} parent=0 // pred_region
    _
  $region37: #{style_transfer_forward.34} parent=0 // pred_fallthru
    _
  // Predicated region
  $region38: #{style_transfer_forward.34} parent=0 // pred_check
    _
  $region39: #{style_transfer_forward.34} parent=0 // pred_check_branch
    %799 = sbr.rel (0) target = $region41
  $region40: #{style_transfer_forward.34} parent=0 // pred_region
    _
  $region41: #{style_transfer_forward.34} parent=0 // pred_fallthru
    _

// kernel: style_transfer_forward.35
$region0: #{style_transfer_forward.35}
  #allocation0 [shape = 'u32[]', space=smem, size = 0x4, offset = 0x4, fixed_abs, tag = 'smem constant byte address 0x4 - core index']
  #allocation1 [shape = 'u32[144,128]{1,0:T(1,128)}', space=vmem, size = 0x12000, scoped, tag = 'internal scratch']
  %s0 = inlined_call_operand.vmem [shape: bf16[128,128], index: 0, kind: input, shape index: {}]
  %s1 = inlined_call_operand.vmem [shape: f32[1,128], index: 1, kind: input, shape index: {}]
  %s2 = inlined_call_operand.vmem [shape: f32[1,128], index: 2, kind: input, shape index: {}]
  %s3 = inlined_call_operand.vmem [shape: bf16[128,128], index: 3, kind: output, shape index: {}]
  %s4 = sld [smem:[#allocation0]]
  $region22: #{style_transfer_forward.35} parent=0
    _
  %s6 = ssub.s32 1, %s4
  %s7 = scalar_select 0, %s6, %s4
  // Predicated region
  $region2: #{style_transfer_forward.35} parent=0 // pred_check
    _
  $region3: #{style_transfer_forward.35} parent=0 // pred_check_branch
    %9 = sbr.rel (0) target = $region5
  $region4: #{style_transfer_forward.35} parent=0 // pred_region
    _
  $region5: #{style_transfer_forward.35} parent=0 // pred_fallthru
    _
  // Predicated region
  $region6: #{style_transfer_forward.35} parent=0 // pred_check
    _
  $region7: #{style_transfer_forward.35} parent=0 // pred_check_branch
    %11 = sbr.rel (0) target = $region9
  $region8: #{style_transfer_forward.35} parent=0 // pred_region
    _
  $region9: #{style_transfer_forward.35} parent=0 // pred_fallthru
    _
  // Predicated region
  $region10: #{style_transfer_forward.35} parent=0 // pred_check
    _
  $region11: #{style_transfer_forward.35} parent=0 // pred_check_branch
    %13 = sbr.rel (0) target = $region13
  $region12: #{style_transfer_forward.35} parent=0 // pred_region
    _
  $region13: #{style_transfer_forward.35} parent=0 // pred_fallthru
    _
  %v14 = vld [vmem:[%s0] sm:$0xf]
  %v15 = vld [vmem:[%s0 + $0x4] sm:$0xf]
  %v16 = vld [vmem:[%s0 + $0x8] sm:$0xf]
  %v17 = vld [vmem:[%s0 + $0xc] sm:$0xf]
  %v18 = vld [vmem:[%s0 + $0x10] sm:$0xf]
  %v19 = vld [vmem:[%s0 + $0x14] sm:$0xf]
  %v20 = vld [vmem:[%s0 + $0x18] sm:$0xf]
  %v21 = vld [vmem:[%s0 + $0x1c] sm:$0xf]
  %v22 = vld [vmem:[%s0 + $0x20] sm:$0xf]
  %v23 = vld [vmem:[%s0 + $0x24] sm:$0xf]
  %v24 = vld [vmem:[%s0 + $0x28] sm:$0xf]
  %v25 = vld [vmem:[%s0 + $0x2c] sm:$0xf]
  %v26 = vld [vmem:[%s0 + $0x30] sm:$0xf]
  %v27 = vld [vmem:[%s0 + $0x34] sm:$0xf]
  %v28 = vld [vmem:[%s0 + $0x38] sm:$0xf]
  %v29 = vld [vmem:[%s0 + $0x3c] sm:$0xf]
  %v30 = vunpack.c.l.bf16 %v14
  %v31 = vunpack.c.l.bf16 %v15
  %v32 = vunpack.c.l.bf16 %v16
  %v33 = vunpack.c.l.bf16 %v17
  %v34 = vunpack.c.l.bf16 %v18
  %v35 = vunpack.c.l.bf16 %v19
  %v36 = vunpack.c.l.bf16 %v20
  %v37 = vunpack.c.l.bf16 %v21
  %v38 = vunpack.c.l.bf16 %v22
  %v39 = vunpack.c.l.bf16 %v23
  %v40 = vunpack.c.l.bf16 %v24
  %v41 = vunpack.c.l.bf16 %v25
  %v42 = vunpack.c.l.bf16 %v26
  %v43 = vunpack.c.l.bf16 %v27
  %v44 = vunpack.c.l.bf16 %v28
  %v45 = vunpack.c.l.bf16 %v29
  %v46 = vld [vmem:[%s1] sm:$0x1]
  %v48 = vlaneseq
  %v49 = vshrl.u32 %v48, 7
  %v50 = vsub.s32 0, %v49
  %v51 = vrot.slane %v46, %v50
  %v53 = vmul.f32 %v30, %v51
  %v54 = vmul.f32 %v31, %v51
  %v55 = vmul.f32 %v32, %v51
  %v56 = vmul.f32 %v33, %v51
  %v57 = vmul.f32 %v34, %v51
  %v58 = vmul.f32 %v35, %v51
  %v59 = vmul.f32 %v36, %v51
  %v60 = vmul.f32 %v37, %v51
  %v61 = vmul.f32 %v38, %v51
  %v62 = vmul.f32 %v39, %v51
  %v63 = vmul.f32 %v40, %v51
  %v64 = vmul.f32 %v41, %v51
  %v65 = vmul.f32 %v42, %v51
  %v66 = vmul.f32 %v43, %v51
  %v67 = vmul.f32 %v44, %v51
  %v68 = vmul.f32 %v45, %v51
  %v69 = vld [vmem:[%s2] sm:$0x1]
  %v71 = vlaneseq
  %v72 = vshrl.u32 %v71, 7
  %v73 = vsub.s32 0, %v72
  %v74 = vrot.slane %v69, %v73
  %v76 = vadd.f32 %v53, %v74
  %v77 = vadd.f32 %v54, %v74
  %v78 = vadd.f32 %v55, %v74
  %v79 = vadd.f32 %v56, %v74
  %v80 = vadd.f32 %v57, %v74
  %v81 = vadd.f32 %v58, %v74
  %v82 = vadd.f32 %v59, %v74
  %v83 = vadd.f32 %v60, %v74
  %v84 = vadd.f32 %v61, %v74
  %v85 = vadd.f32 %v62, %v74
  %v86 = vadd.f32 %v63, %v74
  %v87 = vadd.f32 %v64, %v74
  %v88 = vadd.f32 %v65, %v74
  %v89 = vadd.f32 %v66, %v74
  %v90 = vadd.f32 %v67, %v74
  %v91 = vadd.f32 %v68, %v74
  %v92 = vmax.f32 %v76, 0.0
  %v93 = vmax.f32 %v77, 0.0
  %v94 = vmax.f32 %v78, 0.0
  %v95 = vmax.f32 %v79, 0.0
  %v96 = vmax.f32 %v80, 0.0
  %v97 = vmax.f32 %v81, 0.0
  %v98 = vmax.f32 %v82, 0.0
  %v99 = vmax.f32 %v83, 0.0
  %v100 = vmax.f32 %v84, 0.0
  %v101 = vmax.f32 %v85, 0.0
  %v102 = vmax.f32 %v86, 0.0
  %v103 = vmax.f32 %v87, 0.0
  %v104 = vmax.f32 %v88, 0.0
  %v105 = vmax.f32 %v89, 0.0
  %v106 = vmax.f32 %v90, 0.0
  %v107 = vmax.f32 %v91, 0.0
  %v108 = vpack.c.bf16 %v93, %v92
  %v109 = vpack.c.bf16 %v95, %v94
  %v110 = vpack.c.bf16 %v97, %v96
  %v111 = vpack.c.bf16 %v99, %v98
  %v112 = vpack.c.bf16 %v101, %v100
  %v113 = vpack.c.bf16 %v103, %v102
  %v114 = vpack.c.bf16 %v105, %v104
  %v115 = vpack.c.bf16 %v107, %v106
  %v124 = vunpack.c.l.b16 %v108
  %v125 = vunpack.c.h.b16 %v108
  %v126 = vunpack.c.l.b16 %v109
  %v127 = vunpack.c.h.b16 %v109
  %v128 = vunpack.c.l.b16 %v110
  %v129 = vunpack.c.h.b16 %v110
  %v130 = vunpack.c.l.b16 %v111
  %v131 = vunpack.c.h.b16 %v111
  %v132 = vunpack.c.l.b16 %v112
  %v133 = vunpack.c.h.b16 %v112
  %v134 = vunpack.c.l.b16 %v113
  %v135 = vunpack.c.h.b16 %v113
  %v136 = vunpack.c.l.b16 %v114
  %v137 = vunpack.c.h.b16 %v114
  %v138 = vunpack.c.l.b16 %v115
  %v139 = vunpack.c.h.b16 %v115
  %v140 = vpack.c.b16 %v124, %v124
  %v141 = vpack.c.b16 %v125, %v125
  %v142 = vpack.c.b16 %v126, %v126
  %v143 = vpack.c.b16 %v127, %v127
  %v144 = vpack.c.b16 %v128, %v128
  %v145 = vpack.c.b16 %v129, %v129
  %v146 = vpack.c.b16 %v130, %v130
  %v147 = vpack.c.b16 %v131, %v131
  %v148 = vpack.c.b16 %v132, %v132
  %v149 = vpack.c.b16 %v133, %v133
  %v150 = vpack.c.b16 %v134, %v134
  %v151 = vpack.c.b16 %v135, %v135
  %v152 = vpack.c.b16 %v136, %v136
  %v153 = vpack.c.b16 %v137, %v137
  %v154 = vpack.c.b16 %v138, %v138
  %v155 = vpack.c.b16 %v139, %v139
  %172 = vst [vmem:[%s3] sm:$0xf] %v140
  %173 = vst [vmem:[%s3 + $0x4] sm:$0xf] %v141
  %174 = vst [vmem:[%s3 + $0x8] sm:$0xf] %v142
  %175 = vst [vmem:[%s3 + $0xc] sm:$0xf] %v143
  %176 = vst [vmem:[%s3 + $0x10] sm:$0xf] %v144
  %177 = vst [vmem:[%s3 + $0x14] sm:$0xf] %v145
  %178 = vst [vmem:[%s3 + $0x18] sm:$0xf] %v146
  %179 = vst [vmem:[%s3 + $0x1c] sm:$0xf] %v147
  %180 = vst [vmem:[%s3 + $0x20] sm:$0xf] %v148
  %181 = vst [vmem:[%s3 + $0x24] sm:$0xf] %v149
  %182 = vst [vmem:[%s3 + $0x28] sm:$0xf] %v150
  %183 = vst [vmem:[%s3 + $0x2c] sm:$0xf] %v151
  %184 = vst [vmem:[%s3 + $0x30] sm:$0xf] %v152
  %185 = vst [vmem:[%s3 + $0x34] sm:$0xf] %v153
  %186 = vst [vmem:[%s3 + $0x38] sm:$0xf] %v154
  %187 = vst [vmem:[%s3 + $0x3c] sm:$0xf] %v155
  // Predicated region
  $region14: #{style_transfer_forward.35} parent=0 // pred_check
    _
  $region15: #{style_transfer_forward.35} parent=0 // pred_check_branch
    %189 = sbr.rel (0) target = $region17
  $region16: #{style_transfer_forward.35} parent=0 // pred_region
    _
  $region17: #{style_transfer_forward.35} parent=0 // pred_fallthru
    _
  // Predicated region
  $region18: #{style_transfer_forward.35} parent=0 // pred_check
    _
  $region19: #{style_transfer_forward.35} parent=0 // pred_check_branch
    %191 = sbr.rel (0) target = $region21
  $region20: #{style_transfer_forward.35} parent=0 // pred_region
    _
  $region21: #{style_transfer_forward.35} parent=0 // pred_fallthru
    _

// kernel: style_transfer_forward.37
$region0: #{style_transfer_forward.37}
  #allocation0 [shape = 'u32[]', space=smem, size = 0x4, offset = 0x4, fixed_abs, tag = 'smem constant byte address 0x4 - core index']
  #allocation1 [shape = 'u32[144,128]{1,0:T(1,128)}', space=vmem, size = 0x12000, scoped, tag = 'internal scratch']
  %s0 = inlined_call_operand.vmem [shape: bf16[32,128], index: 0, kind: input, shape index: {}]
  %s1 = inlined_call_operand.vmem [shape: f32[1,128], index: 1, kind: input, shape index: {}]
  %s2 = inlined_call_operand.vmem [shape: f32[1,128], index: 2, kind: input, shape index: {}]
  %s3 = inlined_call_operand.vmem [shape: bf16[32,128], index: 3, kind: output, shape index: {}]
  %s4 = sld [smem:[#allocation0]]
  $region22: #{style_transfer_forward.37} parent=0
    _
  %s6 = ssub.s32 1, %s4
  %s7 = scalar_select 0, %s6, %s4
  // Predicated region
  $region2: #{style_transfer_forward.37} parent=0 // pred_check
    _
  $region3: #{style_transfer_forward.37} parent=0 // pred_check_branch
    %9 = sbr.rel (0) target = $region5
  $region4: #{style_transfer_forward.37} parent=0 // pred_region
    _
  $region5: #{style_transfer_forward.37} parent=0 // pred_fallthru
    _
  // Predicated region
  $region6: #{style_transfer_forward.37} parent=0 // pred_check
    _
  $region7: #{style_transfer_forward.37} parent=0 // pred_check_branch
    %11 = sbr.rel (0) target = $region9
  $region8: #{style_transfer_forward.37} parent=0 // pred_region
    _
  $region9: #{style_transfer_forward.37} parent=0 // pred_fallthru
    _
  // Predicated region
  $region10: #{style_transfer_forward.37} parent=0 // pred_check
    _
  $region11: #{style_transfer_forward.37} parent=0 // pred_check_branch
    %13 = sbr.rel (0) target = $region13
  $region12: #{style_transfer_forward.37} parent=0 // pred_region
    _
  $region13: #{style_transfer_forward.37} parent=0 // pred_fallthru
    _
  %v14 = vld [vmem:[%s0] sm:$0xf]
  %v15 = vld [vmem:[%s0 + $0x4] sm:$0xf]
  %v16 = vld [vmem:[%s0 + $0x8] sm:$0xf]
  %v17 = vld [vmem:[%s0 + $0xc] sm:$0xf]
  %v18 = vunpack.c.l.bf16 %v14
  %v19 = vunpack.c.l.bf16 %v15
  %v20 = vunpack.c.l.bf16 %v16
  %v21 = vunpack.c.l.bf16 %v17
  %v22 = vld [vmem:[%s1] sm:$0x1]
  %v24 = vlaneseq
  %v25 = vshrl.u32 %v24, 7
  %v26 = vsub.s32 0, %v25
  %v27 = vrot.slane %v22, %v26
  %v29 = vmul.f32 %v18, %v27
  %v30 = vmul.f32 %v19, %v27
  %v31 = vmul.f32 %v20, %v27
  %v32 = vmul.f32 %v21, %v27
  %v33 = vld [vmem:[%s2] sm:$0x1]
  %v35 = vlaneseq
  %v36 = vshrl.u32 %v35, 7
  %v37 = vsub.s32 0, %v36
  %v38 = vrot.slane %v33, %v37
  %v40 = vadd.f32 %v29, %v38
  %v41 = vadd.f32 %v30, %v38
  %v42 = vadd.f32 %v31, %v38
  %v43 = vadd.f32 %v32, %v38
  %v44 = vmax.f32 %v40, 0.0
  %v45 = vmax.f32 %v41, 0.0
  %v46 = vmax.f32 %v42, 0.0
  %v47 = vmax.f32 %v43, 0.0
  %v48 = vpack.c.bf16 %v45, %v44
  %v49 = vpack.c.bf16 %v47, %v46
  %v52 = vunpack.c.l.b16 %v48
  %v53 = vunpack.c.h.b16 %v48
  %v54 = vunpack.c.l.b16 %v49
  %v55 = vunpack.c.h.b16 %v49
  %v56 = vpack.c.b16 %v52, %v52
  %v57 = vpack.c.b16 %v53, %v53
  %v58 = vpack.c.b16 %v54, %v54
  %v59 = vpack.c.b16 %v55, %v55
  %64 = vst [vmem:[%s3] sm:$0xf] %v56
  %65 = vst [vmem:[%s3 + $0x4] sm:$0xf] %v57
  %66 = vst [vmem:[%s3 + $0x8] sm:$0xf] %v58
  %67 = vst [vmem:[%s3 + $0xc] sm:$0xf] %v59
  // Predicated region
  $region14: #{style_transfer_forward.37} parent=0 // pred_check
    _
  $region15: #{style_transfer_forward.37} parent=0 // pred_check_branch
    %69 = sbr.rel (0) target = $region17
  $region16: #{style_transfer_forward.37} parent=0 // pred_region
    _
  $region17: #{style_transfer_forward.37} parent=0 // pred_fallthru
    _
  // Predicated region
  $region18: #{style_transfer_forward.37} parent=0 // pred_check
    _
  $region19: #{style_transfer_forward.37} parent=0 // pred_check_branch
    %71 = sbr.rel (0) target = $region21
  $region20: #{style_transfer_forward.37} parent=0 // pred_region
    _
  $region21: #{style_transfer_forward.37} parent=0 // pred_fallthru
    _

// kernel: style_transfer_forward.36
$region0: #{style_transfer_forward.36}
  #allocation0 [shape = 'u32[]', space=smem, size = 0x4, offset = 0x4, fixed_abs, tag = 'smem constant byte address 0x4 - core index']
  #allocation1 [shape = 'u32[144,128]{1,0:T(1,128)}', space=vmem, size = 0x12000, scoped, tag = 'internal scratch']
  #allocation2 [shape = 'f32[32,128]{1,0:T(8,128)}', space=vmem, size = 0x4000, scoped, tag = 'scratch operand']
  %s0 = inlined_call_operand.vmem [shape: bf16[32,640], index: 0, kind: input, shape index: {}]
  %s1 = inlined_call_operand.vmem [shape: bf16[640,128], index: 1, kind: input, shape index: {}]
  %s2 = inlined_call_operand.vmem [shape: bf16[32,128], index: 2, kind: output, shape index: {0}]
  %s3 = inlined_call_operand.vmem [shape: f32[1,1,128], index: 3, kind: output, shape index: {1}]
  %s4 = inlined_call_operand.vmem [shape: f32[1,1,128], index: 4, kind: output, shape index: {2}]
  %5 = xla_tuple %s2, %s3, %s4
  %s6 = sld [smem:[#allocation0]]
  $region106: #{style_transfer_forward.36} parent=0
    _
  %s8 = ssub.s32 1, %s6
  %s9 = scalar_select 0, %s8, %s6
  $region1: #{style_transfer_forward.36} parent=0
    #allocation3 [shape = 'u8[16384]{0}', space=vmem, size = 0x4000, scoped, tag = 'input window, operand 0']
    loop: start=0, step=1, limit=7
    $region2: #{style_transfer_forward.36} parent=1 // loop_pre_header
      _
    $region3: #{style_transfer_forward.36} parent=1 // loop_header
      %s11 = sphi 0, %s15
      %p12 = scmp.ge.s32.totalorder %s11, 7
      %s18 = sphi 0, %s37
      %s19 = sphi 0, %s33
      %s20 = sphi 0, %s29
      %s21 = sphi 0, %s18
      %s22 = sphi 0, %s19
      %s23 = sphi 0, %s20
      %s24 = sphi 0, %s21
      %s25 = sphi 0, %s22
      %s26 = sphi 0, %s23
      %s42 = sphi 0, %s44
      %s45 = sphi 0, %s42
      %s46 = sphi 0, %s45
      %s62 = sphi 0, %s46
      %s70 = sphi 0, %s72
      %s73 = sphi 0, %s70
      %s74 = sphi 0, %s73
      %s90 = sphi 0, %s74
      %s98 = sphi 0, %s100
      %s101 = sphi 0, %s98
      %s102 = sphi 0, %s101
      %s118 = sphi 0, %s102
      %s126 = sphi 0, %s128
      %s129 = sphi 0, %s126
      %s130 = sphi 0, %s129
      %s146 = sphi 0, %s130
      %s154 = sphi 0, %s156
      %s157 = sphi 0, %s154
      %s158 = sphi 0, %s157
      %s174 = sphi 0, %s158
    $region4: #{style_transfer_forward.36} parent=1 // loop_header_branch
      %14 = sbr.rel (%p12) target = $region8
    $region5: #{style_transfer_forward.36} parent=1 // loop_body
      %s16 = ssub.s32 %s11, 1
      %s17 = ssub.s32 %s11, 2
      %s27 = sadd.s32 1, %s20
      %p28 = scmp.ge.s32.totalorder %s27, 5
      %s29 = scalar_select %p28, 0, %s27
      %s30 = sadd.s32 1, %s19
      %s31 = scalar_select %p28, %s30, %s19
      %p32 = scmp.ge.s32.totalorder %s31, 1
      %s33 = scalar_select %p32, 0, %s31
      %s34 = sadd.s32 1, %s18
      %s35 = scalar_select %p32, %s34, %s18
      %p36 = scmp.ge.s32.totalorder %s35, 1
      %s37 = scalar_select %p36, 0, %s35
      %s38 = ssub.s32 %s18, %s37
      %s39 = ssub.s32 %s20, %s29
      %s40 = sor.u32 %s38, %s39
      %p41 = scmp.eq.s32.totalorder %s40, 0
      %s43 = sadd.s32 %s42, 1
      %s44 = scalar_select %p41, %s42, %s43
      %p47 = pneg %p41
      %p48 = scmp.eq.s32.totalorder %s11, 4
      %p49 = por %p47, %p48
      %p50 = scmp.ne.s32.totalorder %s42, %s45
      %p51 = scmp.eq.s32.totalorder %s11, 0
      %p52 = por %p50, %p51
      %p53 = scmp.ne.s32.totalorder %s42, %s45
      %p54 = scmp.eq.s32.totalorder %s16, 4
      %p55 = por %p53, %p54
      %p56 = scmp.ne.s32.totalorder %s45, %s46
      %p57 = scmp.eq.s32.totalorder %s16, 0
      %p58 = por %p56, %p57
      %p59 = scmp.ne.s32.totalorder %s45, %s46
      %p60 = scmp.eq.s32.totalorder %s17, 4
      %p61 = por %p59, %p60
      %p63 = scmp.ne.s32.totalorder %s46, %s62
      %p64 = scmp.eq.s32.totalorder %s17, 0
      %p65 = por %p63, %p64
      %s66 = ssub.s32 %s20, %s29
      %s67 = ssub.s32 %s19, %s33
      %s68 = sor.u32 %s66, %s67
      %p69 = scmp.eq.s32.totalorder %s68, 0
      %s71 = sadd.s32 %s70, 1
      %s72 = scalar_select %p69, %s70, %s71
      %p75 = pneg %p69
      %p76 = scmp.eq.s32.totalorder %s11, 4
      %p77 = por %p75, %p76
      %p78 = scmp.ne.s32.totalorder %s70, %s73
      %p79 = scmp.eq.s32.totalorder %s11, 0
      %p80 = por %p78, %p79
      %p81 = scmp.ne.s32.totalorder %s70, %s73
      %p82 = scmp.eq.s32.totalorder %s16, 4
      %p83 = por %p81, %p82
      %p84 = scmp.ne.s32.totalorder %s73, %s74
      %p85 = scmp.eq.s32.totalorder %s16, 0
      %p86 = por %p84, %p85
      %p87 = scmp.ne.s32.totalorder %s73, %s74
      %p88 = scmp.eq.s32.totalorder %s17, 4
      %p89 = por %p87, %p88
      %p91 = scmp.ne.s32.totalorder %s74, %s90
      %p92 = scmp.eq.s32.totalorder %s17, 0
      %p93 = por %p91, %p92
      %s94 = ssub.s32 %s18, %s37
      %s95 = ssub.s32 %s19, %s33
      %s96 = sor.u32 %s94, %s95
      %p97 = scmp.eq.s32.totalorder %s96, 0
      %s99 = sadd.s32 %s98, 1
      %s100 = scalar_select %p97, %s98, %s99
      %p103 = pneg %p97
      %p104 = scmp.eq.s32.totalorder %s11, 4
      %p105 = por %p103, %p104
      %p106 = scmp.ne.s32.totalorder %s98, %s101
      %p107 = scmp.eq.s32.totalorder %s11, 0
      %p108 = por %p106, %p107
      %p109 = scmp.ne.s32.totalorder %s98, %s101
      %p110 = scmp.eq.s32.totalorder %s16, 4
      %p111 = por %p109, %p110
      %p112 = scmp.ne.s32.totalorder %s101, %s102
      %p113 = scmp.eq.s32.totalorder %s16, 0
      %p114 = por %p112, %p113
      %p115 = scmp.ne.s32.totalorder %s101, %s102
      %p116 = scmp.eq.s32.totalorder %s17, 4
      %p117 = por %p115, %p116
      %p119 = scmp.ne.s32.totalorder %s102, %s118
      %p120 = scmp.eq.s32.totalorder %s17, 0
      %p121 = por %p119, %p120
      %s122 = ssub.s32 %s18, %s37
      %s123 = ssub.s32 %s19, %s33
      %s124 = sor.u32 %s122, %s123
      %p125 = scmp.eq.s32.totalorder %s124, 0
      %s127 = sadd.s32 %s126, 1
      %s128 = scalar_select %p125, %s126, %s127
      %p131 = pneg %p125
      %p132 = scmp.eq.s32.totalorder %s11, 4
      %p133 = por %p131, %p132
      %p134 = scmp.ne.s32.totalorder %s126, %s129
      %p135 = scmp.eq.s32.totalorder %s11, 0
      %p136 = por %p134, %p135
      %p137 = scmp.ne.s32.totalorder %s126, %s129
      %p138 = scmp.eq.s32.totalorder %s16, 4
      %p139 = por %p137, %p138
      %p140 = scmp.ne.s32.totalorder %s129, %s130
      %p141 = scmp.eq.s32.totalorder %s16, 0
      %p142 = por %p140, %p141
      %p143 = scmp.ne.s32.totalorder %s129, %s130
      %p144 = scmp.eq.s32.totalorder %s17, 4
      %p145 = por %p143, %p144
      %p147 = scmp.ne.s32.totalorder %s130, %s146
      %p148 = scmp.eq.s32.totalorder %s17, 0
      %p149 = por %p147, %p148
      %s150 = ssub.s32 %s18, %s37
      %s151 = ssub.s32 %s19, %s33
      %s152 = sor.u32 %s150, %s151
      %p153 = scmp.eq.s32.totalorder %s152, 0
      %s155 = sadd.s32 %s154, 1
      %s156 = scalar_select %p153, %s154, %s155
      %p159 = pneg %p153
      %p160 = scmp.eq.s32.totalorder %s11, 4
      %p161 = por %p159, %p160
      %p162 = scmp.ne.s32.totalorder %s154, %s157
      %p163 = scmp.eq.s32.totalorder %s11, 0
      %p164 = por %p162, %p163
      %p165 = scmp.ne.s32.totalorder %s154, %s157
      %p166 = scmp.eq.s32.totalorder %s16, 4
      %p167 = por %p165, %p166
      %p168 = scmp.ne.s32.totalorder %s157, %s158
      %p169 = scmp.eq.s32.totalorder %s16, 0
      %p170 = por %p168, %p169
      %p171 = scmp.ne.s32.totalorder %s157, %s158
      %p172 = scmp.eq.s32.totalorder %s17, 4
      %p173 = por %p171, %p172
      %p175 = scmp.ne.s32.totalorder %s158, %s174
      %p176 = scmp.eq.s32.totalorder %s17, 0
      %p177 = por %p175, %p176
      %p178 = scmp.le.s32.totalorder 1, %s11
      %p179 = scmp.lt.s32.totalorder %s11, 6
      %p180 = pnand %p178, %p179
      %p181 = pneg %p180
      // Predicated region
      $region9: #{style_transfer_forward.36} parent=5 // pred_check
        _
      $region10: #{style_transfer_forward.36} parent=5 // pred_check_branch
        %183 = sbr.rel (%p180) target = $region12
      $region11: #{style_transfer_forward.36} parent=5 // pred_region
        %s184 = ssub.s32 %s11, 1
      $region12: #{style_transfer_forward.36} parent=5 // pred_fallthru
        _
      %p185 = scmp.lt.s32.totalorder %s11, 5
      // Predicated region
      $region13: #{style_transfer_forward.36} parent=5 // pred_check
        %p186 = pneg %p185
      $region14: #{style_transfer_forward.36} parent=5 // pred_check_branch
        %188 = sbr.rel (%p186) target = $region16
      $region15: #{style_transfer_forward.36} parent=5 // pred_region
        // Predicated region
        $region17: #{style_transfer_forward.36} parent=15 // pred_check
          %p189 = pneg %p52
        $region18: #{style_transfer_forward.36} parent=15 // pred_check_branch
          %191 = sbr.rel (%p189) target = $region20
        $region19: #{style_transfer_forward.36} parent=15 // pred_region
          %s192 = sand.u32 %s42, 1
          %s193 = sand.u32 %s42, 1
          %s194 = smul.addr %s193, 16
          %s195 = scalar_lea.vmem [#allocation3], %s194
          %s196 = smul.u32 4, %s18
          %s197 = smul.addr %s196, 5
          %s198 = sadd.s32 %s20, %s197
          %s199 = smul.addr %s198, 4
          %s200 = scalar_lea.vmem %s0, %s199
          // Predicated region
          $region21: #{style_transfer_forward.36} parent=19 // pred_check
            _
          $region22: #{style_transfer_forward.36} parent=19 // pred_check_branch
            %202 = sbr.rel (0) target = $region24
          $region23: #{style_transfer_forward.36} parent=19 // pred_region
            // Predicated region
            $region25: #{style_transfer_forward.36} parent=23 // pred_check
              _
            $region26: #{style_transfer_forward.36} parent=23 // pred_check_branch
              %204 = sbr.rel target = $region28
            $region27: #{style_transfer_forward.36} parent=23 // pred_region
              // Predicated region
              $region40: #{style_transfer_forward.36} parent=27 // pred_check
                _
              $region41: #{style_transfer_forward.36} parent=27 // pred_check_branch
                %225 = sbr.rel (0) target = $region43
              $region42: #{style_transfer_forward.36} parent=27 // pred_region
                loop: start=0, step=1, limit=1
                $region44: #{style_transfer_forward.36} parent=42 // loop_pre_header
                  _
                $region45: #{style_transfer_forward.36} parent=42 // loop_header
                  %s227 = sphi 0, %s231
                  %p228 = scmp.ge.s32.totalorder %s227, 1
                  %s232 = sphi %s200, %s200
                  %s233 = sphi %s195, %s195
                $region46: #{style_transfer_forward.36} parent=42 // loop_header_branch
                  %230 = sbr.rel (%p228) target = $region50
                $region47: #{style_transfer_forward.36} parent=42 // loop_body
                  _
                $region48: #{style_transfer_forward.36} parent=42 // loop_footer
                  %s231 = sadd.s32 1, %s227
                $region49: #{style_transfer_forward.36} parent=42 // loop_footer_branch
                  %226 = sbr.rel target = $region45
                $region50: #{style_transfer_forward.36} parent=42 // loop_exit
                  _
                loop: start=0, step=1, limit=1
                $region51: #{style_transfer_forward.36} parent=42 // loop_pre_header
                  _
                $region52: #{style_transfer_forward.36} parent=42 // loop_header
                  %s236 = sphi 0, %s240
                  %p237 = scmp.ge.s32.totalorder %s236, 1
                  %s241 = sphi %s200, %s200
                  %s242 = sphi %s195, %s195
                $region53: #{style_transfer_forward.36} parent=42 // loop_header_branch
                  %239 = sbr.rel (%p237) target = $region57
                $region54: #{style_transfer_forward.36} parent=42 // loop_body
                  %v243 = vld [vmem:[%s241] sm:$0xf]
                  %244 = vst [vmem:[%s242] sm:$0xf] %v243
                  %v245 = vld [vmem:[%s241 + $0x14] sm:$0xf]
                  %246 = vst [vmem:[%s242 + $0x4] sm:$0xf] %v245
                  %v247 = vld [vmem:[%s241 + $0x28] sm:$0xf]
                  %248 = vst [vmem:[%s242 + $0x8] sm:$0xf] %v247
                  %v249 = vld [vmem:[%s241 + $0x3c] sm:$0xf]
                  %250 = vst [vmem:[%s242 + $0xc] sm:$0xf] %v249
                $region55: #{style_transfer_forward.36} parent=42 // loop_footer
                  %s240 = sadd.s32 1, %s236
                $region56: #{style_transfer_forward.36} parent=42 // loop_footer_branch
                  %235 = sbr.rel target = $region52
                $region57: #{style_transfer_forward.36} parent=42 // loop_exit
                  _
              $region43: #{style_transfer_forward.36} parent=27 // pred_fallthru
                _
            $region28: #{style_transfer_forward.36} parent=23 // pred_fallthru
              _
            // Predicated region
            $region29: #{style_transfer_forward.36} parent=23 // pred_check
              _
            $region30: #{style_transfer_forward.36} parent=23 // pred_check_branch
              %206 = sbr.rel (0) target = $region32
            $region31: #{style_transfer_forward.36} parent=23 // pred_region
              loop: start=0, step=1, limit=1
              $region33: #{style_transfer_forward.36} parent=31 // loop_pre_header
                _
              $region34: #{style_transfer_forward.36} parent=31 // loop_header
                %s209 = sphi 0, %s213
                %p210 = scmp.ge.s32.totalorder %s209, 1
                %s214 = sphi %s200, %s200
                %s215 = sphi %s195, %s195
              $region35: #{style_transfer_forward.36} parent=31 // loop_header_branch
                %212 = sbr.rel (%p210) target = $region39
              $region36: #{style_transfer_forward.36} parent=31 // loop_body
                %v216 = vld [vmem:[%s214] sm:$0xf]
                %217 = vst [vmem:[%s215] sm:$0xf] %v216
                %v218 = vld [vmem:[%s214 + $0x14] sm:$0xf]
                %219 = vst [vmem:[%s215 + $0x4] sm:$0xf] %v218
                %v220 = vld [vmem:[%s214 + $0x28] sm:$0xf]
                %221 = vst [vmem:[%s215 + $0x8] sm:$0xf] %v220
                %v222 = vld [vmem:[%s214 + $0x3c] sm:$0xf]
                %223 = vst [vmem:[%s215 + $0xc] sm:$0xf] %v222
              $region37: #{style_transfer_forward.36} parent=31 // loop_footer
                %s213 = sadd.s32 1, %s209
              $region38: #{style_transfer_forward.36} parent=31 // loop_footer_branch
                %208 = sbr.rel target = $region34
              $region39: #{style_transfer_forward.36} parent=31 // loop_exit
                _
            $region32: #{style_transfer_forward.36} parent=23 // pred_fallthru
              _
          $region24: #{style_transfer_forward.36} parent=19 // pred_fallthru
            _
          %251 = vnop
        $region20: #{style_transfer_forward.36} parent=15 // pred_fallthru
          _
        // Predicated region
        $region58: #{style_transfer_forward.36} parent=15 // pred_check
          %p252 = pneg %p80
        $region59: #{style_transfer_forward.36} parent=15 // pred_check_branch
          %254 = sbr.rel (%p252) target = $region61
        $region60: #{style_transfer_forward.36} parent=15 // pred_region
          %s255 = smul.u32 16, %s20
          %p256 = scmp.lt.s32.totalorder %s255, 79
          %s257 = scalar_select %p256, %s255, 79
          %p258 = scmp.lt.s32.totalorder %s19, 0
          %s259 = scalar_select %p258, %s19, 0
          %s260 = sadd.s32 %s259, %s257
          %s261 = smul.addr %s260, 4
          %s262 = scalar_lea.vmem %s1, %s261
          %s263 = smul.u32 16, %s20
        $region61: #{style_transfer_forward.36} parent=15 // pred_fallthru
          _
      $region16: #{style_transfer_forward.36} parent=5 // pred_fallthru
        _
      %p264 = scmp.le.s32.totalorder 1, %s11
      %p265 = scmp.lt.s32.totalorder %s11, 6
      %p266 = pnand %p264, %p265
      %p267 = pneg %p266
      // Predicated region
      $region62: #{style_transfer_forward.36} parent=5 // pred_check
        _
      $region63: #{style_transfer_forward.36} parent=5 // pred_check_branch
        %269 = sbr.rel (%p266) target = $region65
      $region64: #{style_transfer_forward.36} parent=5 // pred_region
        %s270 = ssub.s32 %s11, 1
        %s271 = sand.u32 %s45, 1
        %s272 = sand.u32 %s45, 1
        %s273 = smul.addr %s272, 16
        %s274 = scalar_lea.vmem [#allocation3], %s273
        // Predicated region
        $region66: #{style_transfer_forward.36} parent=64 // pred_check
          %p275 = pneg %p58
        $region67: #{style_transfer_forward.36} parent=64 // pred_check_branch
          %277 = sbr.rel (%p275) target = $region69
        $region68: #{style_transfer_forward.36} parent=64 // pred_region
          _
        $region69: #{style_transfer_forward.36} parent=64 // pred_fallthru
          _
        %s278 = sand.u32 %s45, 1
        %s279 = sand.u32 %s45, 1
        %s280 = smul.addr %s279, 16
        %s281 = scalar_lea.vmem [#allocation3], %s280
        %p282 = pneg %p58
        %p283 = pneg %p55
        %s284 = smul.u32 16, %s23
        %p285 = scmp.lt.s32.totalorder %s284, 79
        %s286 = scalar_select %p285, %s284, 79
        %p287 = scmp.lt.s32.totalorder %s22, 0
        %s288 = scalar_select %p287, %s22, 0
        %s289 = sadd.s32 %s288, %s286
        %s290 = smul.addr %s289, 4
        %s291 = scalar_lea.vmem %s1, %s290
        %p292 = pneg %p86
        %p293 = pneg %p83
        %p294 = pneg %p114
        %p295 = pneg %p111
        %s296 = smul.u32 4, %s21
        %p297 = scmp.lt.s32.totalorder %s296, 3
        %s298 = scalar_select %p297, %s296, 3
        %p299 = scmp.lt.s32.totalorder %s22, 0
        %s300 = scalar_select %p299, %s22, 0
        %s301 = sadd.s32 %s300, %s298
        %s302 = smul.addr %s301, 4
        %s303 = scalar_lea.vmem %s2, %s302
        %p304 = pneg %p142
        %p305 = pneg %p139
        %p306 = scmp.lt.s32.totalorder %s21, 0
        %s307 = scalar_select %p306, %s21, 0
        %p308 = scmp.lt.s32.totalorder %s22, 0
        %s309 = scalar_select %p308, %s22, 0
        %s310 = sadd.s32 %s309, %s307
        %s311 = scalar_lea.vmem %s3, %s310
        %p312 = pneg %p170
        %p313 = pneg %p167
        %p314 = scmp.lt.s32.totalorder %s21, 0
        %s315 = scalar_select %p314, %s21, 0
        %p316 = scmp.lt.s32.totalorder %s22, 0
        %s317 = scalar_select %p316, %s22, 0
        %s318 = sadd.s32 %s317, %s315
        %s319 = scalar_lea.vmem %s4, %s318
        %s320 = smul.u32 4, %s21
        %s321 = smul.u32 16, %s23
        %p322 = scmp.lt.s32.totalorder %s321, 79
        %s323 = scalar_select %p322, %s321, 79
        %p324 = scmp.lt.s32.totalorder %s22, 0
        %s325 = scalar_select %p324, %s22, 0
        %s326 = sadd.s32 %s325, %s323
        %s327 = smul.addr %s326, 4
        %s328 = scalar_lea.vmem %s1, %s327
        %s329 = smul.u32 16, %s23
        %s330 = smul.u32 4, %s21
        %p331 = scmp.lt.s32.totalorder %s330, 3
        %s332 = scalar_select %p331, %s330, 3
        %p333 = scmp.lt.s32.totalorder %s22, 0
        %s334 = scalar_select %p333, %s22, 0
        %s335 = sadd.s32 %s334, %s332
        %s336 = smul.addr %s335, 4
        %s337 = scalar_lea.vmem %s2, %s336
        %s338 = smul.u32 4, %s21
        %p339 = scmp.lt.s32.totalorder %s21, 0
        %s340 = scalar_select %p339, %s21, 0
        %p341 = scmp.lt.s32.totalorder %s22, 0
        %s342 = scalar_select %p341, %s22, 0
        %s343 = sadd.s32 %s342, %s340
        %s344 = scalar_lea.vmem %s3, %s343
        %p345 = scmp.lt.s32.totalorder %s21, 0
        %s346 = scalar_select %p345, %s21, 0
        %p347 = scmp.lt.s32.totalorder %s22, 0
        %s348 = scalar_select %p347, %s22, 0
        %s349 = sadd.s32 %s348, %s346
        %s350 = scalar_lea.vmem %s4, %s349
        %p352 = scmp.eq.s32.totalorder %s23, 0
        // Predicated region
        $region70: #{style_transfer_forward.36} parent=64 // pred_check
          %p353 = pneg %p352
        $region71: #{style_transfer_forward.36} parent=64 // pred_check_branch
          %355 = sbr.rel (%p353) target = $region73
        $region72: #{style_transfer_forward.36} parent=64 // pred_region
          %356 = vst [vmem:[#allocation2] sm:$0xff] 0.0
          %357 = vst [vmem:[#allocation2 + $0x8] sm:$0xff] 0.0
          %358 = vst [vmem:[#allocation2 + $0x10] sm:$0xff] 0.0
          %359 = vst [vmem:[#allocation2 + $0x18] sm:$0xff] 0.0
        $region73: #{style_transfer_forward.36} parent=64 // pred_fallthru
          _
        %v360 = vld [vmem:[#allocation2] sm:$0xff]
        %v361 = vld [vmem:[#allocation2 + $0x8] sm:$0xff]
        %v362 = vld [vmem:[#allocation2 + $0x10] sm:$0xff]
        %v363 = vld [vmem:[#allocation2 + $0x18] sm:$0xff]
        %v364 = vld [vmem:[%s274] sm:$0xf]
        %v365 = vld [vmem:[%s274 + $0x4] sm:$0xf]
        %v366 = vld [vmem:[%s274 + $0x8] sm:$0xf]
        %v367 = vld [vmem:[%s274 + $0xc] sm:$0xf]
        %v368 = vld [vmem:[%s328] sm:$0xf]
        %v369 = vld [vmem:[%s328 + $0x4] sm:$0xf]
        %v370 = vld [vmem:[%s328 + $0x8] sm:$0xf]
        %v371 = vld [vmem:[%s328 + $0xc] sm:$0xf]
        %v372 = vld [vmem:[%s328 + $0x10] sm:$0xf]
        %v373 = vld [vmem:[%s328 + $0x14] sm:$0xf]
        %v374 = vld [vmem:[%s328 + $0x18] sm:$0xf]
        %v375 = vld [vmem:[%s328 + $0x1c] sm:$0xf]
        %v376 = vld [vmem:[%s328 + $0x20] sm:$0xf]
        %v377 = vld [vmem:[%s328 + $0x24] sm:$0xf]
        %v378 = vld [vmem:[%s328 + $0x28] sm:$0xf]
        %v379 = vld [vmem:[%s328 + $0x2c] sm:$0xf]
        %v380 = vld [vmem:[%s328 + $0x30] sm:$0xf]
        %v381 = vld [vmem:[%s328 + $0x34] sm:$0xf]
        %v382 = vld [vmem:[%s328 + $0x38] sm:$0xf]
        %v383 = vld [vmem:[%s328 + $0x3c] sm:$0xf]
        %v388 = vunpack.c.l.b16 %v364
        %v389 = vunpack.c.l.b16 %v365
        %v390 = vunpack.c.l.b16 %v366
        %v391 = vunpack.c.l.b16 %v367
        %v392 = vpack.c.b16 %v389, %v388
        %v393 = vpack.c.b16 %v391, %v390
        %v412 = vunpack.c.l.b16 %v368
        %v413 = vunpack.c.l.b16 %v369
        %v414 = vunpack.c.l.b16 %v370
        %v415 = vunpack.c.l.b16 %v371
        %v416 = vunpack.c.l.b16 %v372
        %v417 = vunpack.c.l.b16 %v373
        %v418 = vunpack.c.l.b16 %v374
        %v419 = vunpack.c.l.b16 %v375
        %v420 = vunpack.c.l.b16 %v376
        %v421 = vunpack.c.l.b16 %v377
        %v422 = vunpack.c.l.b16 %v378
        %v423 = vunpack.c.l.b16 %v379
        %v424 = vunpack.c.l.b16 %v380
        %v425 = vunpack.c.l.b16 %v381
        %v426 = vunpack.c.l.b16 %v382
        %v427 = vunpack.c.l.b16 %v383
        %v428 = vpack.c.b16 %v413, %v412
        %v429 = vpack.c.b16 %v415, %v414
        %v430 = vpack.c.b16 %v417, %v416
        %v431 = vpack.c.b16 %v419, %v418
        %v432 = vpack.c.b16 %v421, %v420
        %v433 = vpack.c.b16 %v423, %v422
        %v434 = vpack.c.b16 %v425, %v424
        %v435 = vpack.c.b16 %v427, %v426
        %444 = vmatprep.subr.bf16.mxu0 0
        %445 = vmatpush1.bf16.msra.mxu0 %v428
        %446 = vmatprep.subr.bf16.mxu0 0
        %447 = vmatpush1.bf16.msra.mxu0 %v429
        %448 = vmatprep.subr.bf16.mxu0 0
        %449 = vmatpush1.bf16.msra.mxu0 %v430
        %450 = vmatprep.subr.bf16.mxu0 0
        %451 = vmatpush1.bf16.msra.mxu0 %v431
        %452 = vmatprep.subr.bf16.mxu0 0
        %453 = vmatpush1.bf16.msra.mxu0 %v432
        %454 = vmatprep.subr.bf16.mxu0 0
        %455 = vmatpush1.bf16.msra.mxu0 %v433
        %456 = vmatprep.subr.bf16.mxu0 0
        %457 = vmatpush1.bf16.msra.mxu0 %v434
        %458 = vmatprep.subr.bf16.mxu0 0
        %459 = vmatpush1.bf16.msra.mxu0 %v435
        %460 = vmatprep.subr.bf16.mxu0 0
        %461 = vmatpush1.bf16.msra.mxu0 0
        %462 = vmatprep.subr.bf16.mxu0 0
        %463 = vmatpush1.bf16.msra.mxu0 0
        %464 = vmatprep.subr.bf16.mxu0 0
        %465 = vmatpush1.bf16.msra.mxu0 0
        %466 = vmatprep.subr.bf16.mxu0 0
        %467 = vmatpush1.bf16.msra.mxu0 0
        %468 = vmatprep.subr.bf16.mxu0 0
        %469 = vmatpush1.bf16.msra.mxu0 0
        %470 = vmatprep.subr.bf16.mxu0 0
        %471 = vmatpush1.bf16.msra.mxu0 0
        %472 = vmatprep.subr.bf16.mxu0 0
        %473 = vmatpush1.bf16.msra.mxu0 0
        %474 = vmatprep.subr.bf16.mxu0 0
        %475 = vmatpush1.bf16.msra.mxu0 0
        %476 = vmatprep.mubr.bf16.mxu0 0
        %477 = vmatmul.mubr.bf16.gmra.mrb[0].mxu0 %v392
        %v478 = vpop.f32.mrb[0].mxu0
        %v479 = vadd.f32 0.0, %v478
        %v480 = vpop.f32.mrb[0].mxu0
        %v481 = vpop.f32.mrb[0].mxu0
        %v482 = vadd.f32 0.0, %v481
        %v483 = vpop.f32.mrb[0].mxu0
        %484 = vmatprep.mubr.bf16.mxu0 0
        %485 = vmatmul.mubr.bf16.gmra.mrb[0].mxu0 %v393
        %v486 = vpop.f32.mrb[0].mxu0
        %v487 = vadd.f32 0.0, %v486
        %v488 = vpop.f32.mrb[0].mxu0
        %v489 = vpop.f32.mrb[0].mxu0
        %v490 = vadd.f32 0.0, %v489
        %v491 = vpop.f32.mrb[0].mxu0
        %492 = vdwg.mxu0
        %v493 = vadd.f32 %v360, %v479
        %v494 = vadd.f32 %v361, %v482
        %v495 = vadd.f32 %v362, %v487
        %v496 = vadd.f32 %v363, %v490
        %497 = vst [vmem:[#allocation2] sm:$0xff] %v493
        %498 = vst [vmem:[#allocation2 + $0x8] sm:$0xff] %v494
        %499 = vst [vmem:[#allocation2 + $0x10] sm:$0xff] %v495
        %500 = vst [vmem:[#allocation2 + $0x18] sm:$0xff] %v496
        %p501 = scmp.eq.s32.totalorder %s23, 4
        // Predicated region
        $region74: #{style_transfer_forward.36} parent=64 // pred_check
          %p502 = pneg %p501
        $region75: #{style_transfer_forward.36} parent=64 // pred_check_branch
          %504 = sbr.rel (%p502) target = $region77
        $region76: #{style_transfer_forward.36} parent=64 // pred_region
          %v505 = vld [vmem:[#allocation2] sm:$0xff]
          %v506 = vld [vmem:[#allocation2 + $0x8] sm:$0xff]
          %v507 = vld [vmem:[#allocation2 + $0x10] sm:$0xff]
          %v508 = vld [vmem:[#allocation2 + $0x18] sm:$0xff]
          %v509 = vpack.c.bf16 %v506, %v505
          %v510 = vpack.c.bf16 %v508, %v507
          %v513 = vunpack.c.l.b16 %v509
          %v514 = vunpack.c.h.b16 %v509
          %v515 = vunpack.c.l.b16 %v510
          %v516 = vunpack.c.h.b16 %v510
          %v517 = vpack.c.b16 %v513, %v513
          %v518 = vpack.c.b16 %v514, %v514
          %v519 = vpack.c.b16 %v515, %v515
          %v520 = vpack.c.b16 %v516, %v516
          %525 = vst [vmem:[%s337] sm:$0xf] %v517
          %526 = vst [vmem:[%s337 + $0x4] sm:$0xf] %v518
          %527 = vst [vmem:[%s337 + $0x8] sm:$0xf] %v519
          %528 = vst [vmem:[%s337 + $0xc] sm:$0xf] %v520
          %v529 = vadd.f32 %v505, %v506
          %v530 = vadd.f32 %v529, %v507
          %v531 = vadd.f32 %v530, %v508
          %v532 = vrot.slane %v531, 4
          %v533 = vadd.f32 %v531, %v532
          %v534 = vrot.slane %v533, 2
          %v535 = vadd.f32 %v533, %v534
          %v536 = vrot.slane %v535, 1
          %v537 = vadd.f32 %v535, %v536
          %538 = vst [vmem:[%s344] sm:$0x1] %v537
          %v539 = vmul.f32 %v505, %v505
          %v540 = vmul.f32 %v506, %v506
          %v541 = vmul.f32 %v507, %v507
          %v542 = vmul.f32 %v508, %v508
          %v543 = vadd.f32 %v539, %v540
          %v544 = vadd.f32 %v543, %v541
          %v545 = vadd.f32 %v544, %v542
          %v546 = vrot.slane %v545, 4
          %v547 = vadd.f32 %v545, %v546
          %v548 = vrot.slane %v547, 2
          %v549 = vadd.f32 %v547, %v548
          %v550 = vrot.slane %v549, 1
          %v551 = vadd.f32 %v549, %v550
          %552 = vst [vmem:[%s350] sm:$0x1] %v551
        $region77: #{style_transfer_forward.36} parent=64 // pred_fallthru
          _
        %s553 = smul.u32 4, %s21
        %p554 = scmp.lt.s32.totalorder %s553, 3
        %s555 = scalar_select %p554, %s553, 3
        %p556 = scmp.lt.s32.totalorder %s22, 0
        %s557 = scalar_select %p556, %s22, 0
        %s558 = sadd.s32 %s557, %s555
        %s559 = smul.addr %s558, 4
        %s560 = scalar_lea.vmem %s2, %s559
        %p561 = scmp.lt.s32.totalorder %s21, 0
        %s562 = scalar_select %p561, %s21, 0
        %p563 = scmp.lt.s32.totalorder %s22, 0
        %s564 = scalar_select %p563, %s22, 0
        %s565 = sadd.s32 %s564, %s562
        %s566 = scalar_lea.vmem %s3, %s565
        %p567 = scmp.lt.s32.totalorder %s21, 0
        %s568 = scalar_select %p567, %s21, 0
        %p569 = scmp.lt.s32.totalorder %s22, 0
        %s570 = scalar_select %p569, %s22, 0
        %s571 = sadd.s32 %s570, %s568
        %s572 = scalar_lea.vmem %s4, %s571
        // Predicated region
        $region78: #{style_transfer_forward.36} parent=64 // pred_check
          %p573 = pneg %p111
        $region79: #{style_transfer_forward.36} parent=64 // pred_check_branch
          %575 = sbr.rel (%p573) target = $region81
        $region80: #{style_transfer_forward.36} parent=64 // pred_region
          %s576 = smul.u32 4, %s21
        $region81: #{style_transfer_forward.36} parent=64 // pred_fallthru
          _
        // Predicated region
        $region82: #{style_transfer_forward.36} parent=64 // pred_check
          %p577 = pneg %p139
        $region83: #{style_transfer_forward.36} parent=64 // pred_check_branch
          %579 = sbr.rel (%p577) target = $region85
        $region84: #{style_transfer_forward.36} parent=64 // pred_region
          _
        $region85: #{style_transfer_forward.36} parent=64 // pred_fallthru
          _
        // Predicated region
        $region86: #{style_transfer_forward.36} parent=64 // pred_check
          %p580 = pneg %p167
        $region87: #{style_transfer_forward.36} parent=64 // pred_check_branch
          %582 = sbr.rel (%p580) target = $region89
        $region88: #{style_transfer_forward.36} parent=64 // pred_region
          _
        $region89: #{style_transfer_forward.36} parent=64 // pred_fallthru
          _
        // Predicated region
        $region90: #{style_transfer_forward.36} parent=64 // pred_check
          %p583 = pneg %p111
        $region91: #{style_transfer_forward.36} parent=64 // pred_check_branch
          %585 = sbr.rel (%p583) target = $region93
        $region92: #{style_transfer_forward.36} parent=64 // pred_region
          %s586 = smul.u32 4, %s21
          %p587 = scmp.lt.s32.totalorder %s586, 3
          %s588 = scalar_select %p587, %s586, 3
          %p589 = scmp.lt.s32.totalorder %s22, 0
          %s590 = scalar_select %p589, %s22, 0
          %s591 = sadd.s32 %s590, %s588
          %s592 = smul.addr %s591, 4
          %s593 = scalar_lea.vmem %s2, %s592
        $region93: #{style_transfer_forward.36} parent=64 // pred_fallthru
          _
        // Predicated region
        $region94: #{style_transfer_forward.36} parent=64 // pred_check
          %p594 = pneg %p139
        $region95: #{style_transfer_forward.36} parent=64 // pred_check_branch
          %596 = sbr.rel (%p594) target = $region97
        $region96: #{style_transfer_forward.36} parent=64 // pred_region
          %p597 = scmp.lt.s32.totalorder %s21, 0
          %s598 = scalar_select %p597, %s21, 0
          %p599 = scmp.lt.s32.totalorder %s22, 0
          %s600 = scalar_select %p599, %s22, 0
          %s601 = sadd.s32 %s600, %s598
          %s602 = scalar_lea.vmem %s3, %s601
        $region97: #{style_transfer_forward.36} parent=64 // pred_fallthru
          _
        // Predicated region
        $region98: #{style_transfer_forward.36} parent=64 // pred_check
          %p603 = pneg %p167
        $region99: #{style_transfer_forward.36} parent=64 // pred_check_branch
          %605 = sbr.rel (%p603) target = $region101
        $region100: #{style_transfer_forward.36} parent=64 // pred_region
          %p606 = scmp.lt.s32.totalorder %s21, 0
          %s607 = scalar_select %p606, %s21, 0
          %p608 = scmp.lt.s32.totalorder %s22, 0
          %s609 = scalar_select %p608, %s22, 0
          %s610 = sadd.s32 %s609, %s607
          %s611 = scalar_lea.vmem %s4, %s610
        $region101: #{style_transfer_forward.36} parent=64 // pred_fallthru
          _
      $region65: #{style_transfer_forward.36} parent=5 // pred_fallthru
        _
      %p612 = scmp.le.s32.totalorder 2, %s11
      // Predicated region
      $region102: #{style_transfer_forward.36} parent=5 // pred_check
        %p613 = pneg %p612
      $region103: #{style_transfer_forward.36} parent=5 // pred_check_branch
        %615 = sbr.rel (%p613) target = $region105
      $region104: #{style_transfer_forward.36} parent=5 // pred_region
        %s616 = ssub.s32 %s11, 2
      $region105: #{style_transfer_forward.36} parent=5 // pred_fallthru
        _
    $region6: #{style_transfer_forward.36} parent=1 // loop_footer
      %s15 = sadd.s32 1, %s11
    $region7: #{style_transfer_forward.36} parent=1 // loop_footer_branch
      %10 = sbr.rel target = $region3
    $region8: #{style_transfer_forward.36} parent=1 // loop_exit
      _

// kernel: style_transfer_forward.41
$region0: #{style_transfer_forward.41}
  #allocation0 [shape = 'u32[]', space=smem, size = 0x4, offset = 0x4, fixed_abs, tag = 'smem constant byte address 0x4 - core index']
  #allocation1 [shape = 'u32[144,128]{1,0:T(1,128)}', space=vmem, size = 0x12000, scoped, tag = 'internal scratch']
  %s0 = inlined_call_operand.vmem [shape: bf16[32,128], index: 0, kind: input, shape index: {}]
  %s1 = inlined_call_operand.vmem [shape: bf16[32,128], index: 1, kind: input, shape index: {}]
  %s2 = inlined_call_operand.vmem [shape: f32[1,128], index: 2, kind: input, shape index: {}]
  %s3 = inlined_call_operand.vmem [shape: f32[1,128], index: 3, kind: input, shape index: {}]
  %s4 = inlined_call_operand.vmem [shape: bf16[32,128], index: 4, kind: output, shape index: {}]
  %s5 = sld [smem:[#allocation0]]
  $region26: #{style_transfer_forward.41} parent=0
    _
  %s7 = ssub.s32 1, %s5
  %s8 = scalar_select 0, %s7, %s5
  // Predicated region
  $region2: #{style_transfer_forward.41} parent=0 // pred_check
    _
  $region3: #{style_transfer_forward.41} parent=0 // pred_check_branch
    %10 = sbr.rel (0) target = $region5
  $region4: #{style_transfer_forward.41} parent=0 // pred_region
    _
  $region5: #{style_transfer_forward.41} parent=0 // pred_fallthru
    _
  // Predicated region
  $region6: #{style_transfer_forward.41} parent=0 // pred_check
    _
  $region7: #{style_transfer_forward.41} parent=0 // pred_check_branch
    %12 = sbr.rel (0) target = $region9
  $region8: #{style_transfer_forward.41} parent=0 // pred_region
    _
  $region9: #{style_transfer_forward.41} parent=0 // pred_fallthru
    _
  // Predicated region
  $region10: #{style_transfer_forward.41} parent=0 // pred_check
    _
  $region11: #{style_transfer_forward.41} parent=0 // pred_check_branch
    %14 = sbr.rel (0) target = $region13
  $region12: #{style_transfer_forward.41} parent=0 // pred_region
    _
  $region13: #{style_transfer_forward.41} parent=0 // pred_fallthru
    _
  // Predicated region
  $region14: #{style_transfer_forward.41} parent=0 // pred_check
    _
  $region15: #{style_transfer_forward.41} parent=0 // pred_check_branch
    %16 = sbr.rel (0) target = $region17
  $region16: #{style_transfer_forward.41} parent=0 // pred_region
    _
  $region17: #{style_transfer_forward.41} parent=0 // pred_fallthru
    _
  %v17 = vld [vmem:[%s0] sm:$0xf]
  %v18 = vld [vmem:[%s0 + $0x4] sm:$0xf]
  %v19 = vld [vmem:[%s0 + $0x8] sm:$0xf]
  %v20 = vld [vmem:[%s0 + $0xc] sm:$0xf]
  %v21 = vunpack.c.l.bf16 %v17
  %v22 = vunpack.c.l.bf16 %v18
  %v23 = vunpack.c.l.bf16 %v19
  %v24 = vunpack.c.l.bf16 %v20
  %v25 = vld [vmem:[%s2] sm:$0x1]
  %v27 = vlaneseq
  %v28 = vshrl.u32 %v27, 7
  %v29 = vsub.s32 0, %v28
  %v30 = vrot.slane %v25, %v29
  %v32 = vmul.f32 %v21, %v30
  %v33 = vmul.f32 %v22, %v30
  %v34 = vmul.f32 %v23, %v30
  %v35 = vmul.f32 %v24, %v30
  %v36 = vld [vmem:[%s3] sm:$0x1]
  %v38 = vlaneseq
  %v39 = vshrl.u32 %v38, 7
  %v40 = vsub.s32 0, %v39
  %v41 = vrot.slane %v36, %v40
  %v43 = vadd.f32 %v32, %v41
  %v44 = vadd.f32 %v33, %v41
  %v45 = vadd.f32 %v34, %v41
  %v46 = vadd.f32 %v35, %v41
  %v47 = vld [vmem:[%s1] sm:$0xf]
  %v48 = vld [vmem:[%s1 + $0x4] sm:$0xf]
  %v49 = vld [vmem:[%s1 + $0x8] sm:$0xf]
  %v50 = vld [vmem:[%s1 + $0xc] sm:$0xf]
  %v51 = vunpack.c.l.bf16 %v47
  %v52 = vunpack.c.l.bf16 %v48
  %v53 = vunpack.c.l.bf16 %v49
  %v54 = vunpack.c.l.bf16 %v50
  %v55 = vadd.f32 %v43, %v51
  %v56 = vadd.f32 %v44, %v52
  %v57 = vadd.f32 %v45, %v53
  %v58 = vadd.f32 %v46, %v54
  %v59 = vpack.c.bf16 %v56, %v55
  %v60 = vpack.c.bf16 %v58, %v57
  %v63 = vunpack.c.l.b16 %v59
  %v64 = vunpack.c.h.b16 %v59
  %v65 = vunpack.c.l.b16 %v60
  %v66 = vunpack.c.h.b16 %v60
  %v67 = vpack.c.b16 %v63, %v63
  %v68 = vpack.c.b16 %v64, %v64
  %v69 = vpack.c.b16 %v65, %v65
  %v70 = vpack.c.b16 %v66, %v66
  %75 = vst [vmem:[%s4] sm:$0xf] %v67
  %76 = vst [vmem:[%s4 + $0x4] sm:$0xf] %v68
  %77 = vst [vmem:[%s4 + $0x8] sm:$0xf] %v69
  %78 = vst [vmem:[%s4 + $0xc] sm:$0xf] %v70
  // Predicated region
  $region18: #{style_transfer_forward.41} parent=0 // pred_check
    _
  $region19: #{style_transfer_forward.41} parent=0 // pred_check_branch
    %80 = sbr.rel (0) target = $region21
  $region20: #{style_transfer_forward.41} parent=0 // pred_region
    _
  $region21: #{style_transfer_forward.41} parent=0 // pred_fallthru
    _
  // Predicated region
  $region22: #{style_transfer_forward.41} parent=0 // pred_check
    _
  $region23: #{style_transfer_forward.41} parent=0 // pred_check_branch
    %82 = sbr.rel (0) target = $region25
  $region24: #{style_transfer_forward.41} parent=0 // pred_region
    _
  $region25: #{style_transfer_forward.41} parent=0 // pred_fallthru
    _

// kernel: style_transfer_forward.38
$region0: #{style_transfer_forward.38}
  #allocation0 [shape = 'u32[]', space=smem, size = 0x4, offset = 0x4, fixed_abs, tag = 'smem constant byte address 0x4 - core index']
  #allocation1 [shape = 'u32[144,128]{1,0:T(1,128)}', space=vmem, size = 0x12000, scoped, tag = 'internal scratch']
  #allocation2 [shape = 'f32[32,128]{1,0:T(8,128)}', space=vmem, size = 0x4000, scoped, tag = 'scratch operand']
  %s0 = inlined_call_operand.vmem [shape: bf16[32,1152], index: 0, kind: input, shape index: {}]
  %s1 = inlined_call_operand.vmem [shape: bf16[1152,128], index: 1, kind: input, shape index: {}]
  %s2 = inlined_call_operand.vmem [shape: bf16[32,128], index: 2, kind: output, shape index: {0}]
  %s3 = inlined_call_operand.vmem [shape: f32[1,1,128], index: 3, kind: output, shape index: {1}]
  %s4 = inlined_call_operand.vmem [shape: f32[1,1,128], index: 4, kind: output, shape index: {2}]
  %5 = xla_tuple %s2, %s3, %s4
  %s6 = sld [smem:[#allocation0]]
  $region91: #{style_transfer_forward.38} parent=0
    _
  %s8 = ssub.s32 1, %s6
  %s9 = scalar_select 0, %s8, %s6
  $region1: #{style_transfer_forward.38} parent=0
    #allocation3 [shape = 'u8[49152]{0}', space=vmem, size = 0xc000, scoped, tag = 'input window, operand 0']
    loop: start=0, step=1, limit=5
    $region2: #{style_transfer_forward.38} parent=1 // loop_pre_header
      _
    $region3: #{style_transfer_forward.38} parent=1 // loop_header
      %s11 = sphi 0, %s15
      %p12 = scmp.ge.s32.totalorder %s11, 5
      %s18 = sphi 0, %s37
      %s19 = sphi 0, %s33
      %s20 = sphi 0, %s29
      %s21 = sphi 0, %s18
      %s22 = sphi 0, %s19
      %s23 = sphi 0, %s20
      %s24 = sphi 0, %s21
      %s25 = sphi 0, %s22
      %s26 = sphi 0, %s23
      %s42 = sphi 0, %s44
      %s45 = sphi 0, %s42
      %s46 = sphi 0, %s45
      %s62 = sphi 0, %s46
      %s70 = sphi 0, %s72
      %s73 = sphi 0, %s70
      %s74 = sphi 0, %s73
      %s90 = sphi 0, %s74
      %s98 = sphi 0, %s100
      %s101 = sphi 0, %s98
      %s102 = sphi 0, %s101
      %s118 = sphi 0, %s102
      %s126 = sphi 0, %s128
      %s129 = sphi 0, %s126
      %s130 = sphi 0, %s129
      %s146 = sphi 0, %s130
      %s154 = sphi 0, %s156
      %s157 = sphi 0, %s154
      %s158 = sphi 0, %s157
      %s174 = sphi 0, %s158
    $region4: #{style_transfer_forward.38} parent=1 // loop_header_branch
      %14 = sbr.rel (%p12) target = $region8
    $region5: #{style_transfer_forward.38} parent=1 // loop_body
      %s16 = ssub.s32 %s11, 1
      %s17 = ssub.s32 %s11, 2
      %s27 = sadd.s32 1, %s20
      %p28 = scmp.ge.s32.totalorder %s27, 3
      %s29 = scalar_select %p28, 0, %s27
      %s30 = sadd.s32 1, %s19
      %s31 = scalar_select %p28, %s30, %s19
      %p32 = scmp.ge.s32.totalorder %s31, 1
      %s33 = scalar_select %p32, 0, %s31
      %s34 = sadd.s32 1, %s18
      %s35 = scalar_select %p32, %s34, %s18
      %p36 = scmp.ge.s32.totalorder %s35, 1
      %s37 = scalar_select %p36, 0, %s35
      %s38 = ssub.s32 %s18, %s37
      %s39 = ssub.s32 %s20, %s29
      %s40 = sor.u32 %s38, %s39
      %p41 = scmp.eq.s32.totalorder %s40, 0
      %s43 = sadd.s32 %s42, 1
      %s44 = scalar_select %p41, %s42, %s43
      %p47 = pneg %p41
      %p48 = scmp.eq.s32.totalorder %s11, 2
      %p49 = por %p47, %p48
      %p50 = scmp.ne.s32.totalorder %s42, %s45
      %p51 = scmp.eq.s32.totalorder %s11, 0
      %p52 = por %p50, %p51
      %p53 = scmp.ne.s32.totalorder %s42, %s45
      %p54 = scmp.eq.s32.totalorder %s16, 2
      %p55 = por %p53, %p54
      %p56 = scmp.ne.s32.totalorder %s45, %s46
      %p57 = scmp.eq.s32.totalorder %s16, 0
      %p58 = por %p56, %p57
      %p59 = scmp.ne.s32.totalorder %s45, %s46
      %p60 = scmp.eq.s32.totalorder %s17, 2
      %p61 = por %p59, %p60
      %p63 = scmp.ne.s32.totalorder %s46, %s62
      %p64 = scmp.eq.s32.totalorder %s17, 0
      %p65 = por %p63, %p64
      %s66 = ssub.s32 %s20, %s29
      %s67 = ssub.s32 %s19, %s33
      %s68 = sor.u32 %s66, %s67
      %p69 = scmp.eq.s32.totalorder %s68, 0
      %s71 = sadd.s32 %s70, 1
      %s72 = scalar_select %p69, %s70, %s71
      %p75 = pneg %p69
      %p76 = scmp.eq.s32.totalorder %s11, 2
      %p77 = por %p75, %p76
      %p78 = scmp.ne.s32.totalorder %s70, %s73
      %p79 = scmp.eq.s32.totalorder %s11, 0
      %p80 = por %p78, %p79
      %p81 = scmp.ne.s32.totalorder %s70, %s73
      %p82 = scmp.eq.s32.totalorder %s16, 2
      %p83 = por %p81, %p82
      %p84 = scmp.ne.s32.totalorder %s73, %s74
      %p85 = scmp.eq.s32.totalorder %s16, 0
      %p86 = por %p84, %p85
      %p87 = scmp.ne.s32.totalorder %s73, %s74
      %p88 = scmp.eq.s32.totalorder %s17, 2
      %p89 = por %p87, %p88
      %p91 = scmp.ne.s32.totalorder %s74, %s90
      %p92 = scmp.eq.s32.totalorder %s17, 0
      %p93 = por %p91, %p92
      %s94 = ssub.s32 %s18, %s37
      %s95 = ssub.s32 %s19, %s33
      %s96 = sor.u32 %s94, %s95
      %p97 = scmp.eq.s32.totalorder %s96, 0
      %s99 = sadd.s32 %s98, 1
      %s100 = scalar_select %p97, %s98, %s99
      %p103 = pneg %p97
      %p104 = scmp.eq.s32.totalorder %s11, 2
      %p105 = por %p103, %p104
      %p106 = scmp.ne.s32.totalorder %s98, %s101
      %p107 = scmp.eq.s32.totalorder %s11, 0
      %p108 = por %p106, %p107
      %p109 = scmp.ne.s32.totalorder %s98, %s101
      %p110 = scmp.eq.s32.totalorder %s16, 2
      %p111 = por %p109, %p110
      %p112 = scmp.ne.s32.totalorder %s101, %s102
      %p113 = scmp.eq.s32.totalorder %s16, 0
      %p114 = por %p112, %p113
      %p115 = scmp.ne.s32.totalorder %s101, %s102
      %p116 = scmp.eq.s32.totalorder %s17, 2
      %p117 = por %p115, %p116
      %p119 = scmp.ne.s32.totalorder %s102, %s118
      %p120 = scmp.eq.s32.totalorder %s17, 0
      %p121 = por %p119, %p120
      %s122 = ssub.s32 %s18, %s37
      %s123 = ssub.s32 %s19, %s33
      %s124 = sor.u32 %s122, %s123
      %p125 = scmp.eq.s32.totalorder %s124, 0
      %s127 = sadd.s32 %s126, 1
      %s128 = scalar_select %p125, %s126, %s127
      %p131 = pneg %p125
      %p132 = scmp.eq.s32.totalorder %s11, 2
      %p133 = por %p131, %p132
      %p134 = scmp.ne.s32.totalorder %s126, %s129
      %p135 = scmp.eq.s32.totalorder %s11, 0
      %p136 = por %p134, %p135
      %p137 = scmp.ne.s32.totalorder %s126, %s129
      %p138 = scmp.eq.s32.totalorder %s16, 2
      %p139 = por %p137, %p138
      %p140 = scmp.ne.s32.totalorder %s129, %s130
      %p141 = scmp.eq.s32.totalorder %s16, 0
      %p142 = por %p140, %p141
      %p143 = scmp.ne.s32.totalorder %s129, %s130
      %p144 = scmp.eq.s32.totalorder %s17, 2
      %p145 = por %p143, %p144
      %p147 = scmp.ne.s32.totalorder %s130, %s146
      %p148 = scmp.eq.s32.totalorder %s17, 0
      %p149 = por %p147, %p148
      %s150 = ssub.s32 %s18, %s37
      %s151 = ssub.s32 %s19, %s33
      %s152 = sor.u32 %s150, %s151
      %p153 = scmp.eq.s32.totalorder %s152, 0
      %s155 = sadd.s32 %s154, 1
      %s156 = scalar_select %p153, %s154, %s155
      %p159 = pneg %p153
      %p160 = scmp.eq.s32.totalorder %s11, 2
      %p161 = por %p159, %p160
      %p162 = scmp.ne.s32.totalorder %s154, %s157
      %p163 = scmp.eq.s32.totalorder %s11, 0
      %p164 = por %p162, %p163
      %p165 = scmp.ne.s32.totalorder %s154, %s157
      %p166 = scmp.eq.s32.totalorder %s16, 2
      %p167 = por %p165, %p166
      %p168 = scmp.ne.s32.totalorder %s157, %s158
      %p169 = scmp.eq.s32.totalorder %s16, 0
      %p170 = por %p168, %p169
      %p171 = scmp.ne.s32.totalorder %s157, %s158
      %p172 = scmp.eq.s32.totalorder %s17, 2
      %p173 = por %p171, %p172
      %p175 = scmp.ne.s32.totalorder %s158, %s174
      %p176 = scmp.eq.s32.totalorder %s17, 0
      %p177 = por %p175, %p176
      %p178 = scmp.le.s32.totalorder 1, %s11
      %p179 = scmp.lt.s32.totalorder %s11, 4
      %p180 = pnand %p178, %p179
      %p181 = pneg %p180
      // Predicated region
      $region9: #{style_transfer_forward.38} parent=5 // pred_check
        _
      $region10: #{style_transfer_forward.38} parent=5 // pred_check_branch
        %183 = sbr.rel (%p180) target = $region12
      $region11: #{style_transfer_forward.38} parent=5 // pred_region
        %s184 = ssub.s32 %s11, 1
      $region12: #{style_transfer_forward.38} parent=5 // pred_fallthru
        _
      %p185 = scmp.lt.s32.totalorder %s11, 3
      // Predicated region
      $region13: #{style_transfer_forward.38} parent=5 // pred_check
        %p186 = pneg %p185
      $region14: #{style_transfer_forward.38} parent=5 // pred_check_branch
        %188 = sbr.rel (%p186) target = $region16
      $region15: #{style_transfer_forward.38} parent=5 // pred_region
        // Predicated region
        $region17: #{style_transfer_forward.38} parent=15 // pred_check
          %p189 = pneg %p52
        $region18: #{style_transfer_forward.38} parent=15 // pred_check_branch
          %191 = sbr.rel (%p189) target = $region20
        $region19: #{style_transfer_forward.38} parent=15 // pred_region
          %s192 = sand.u32 %s42, 1
          %s193 = sand.u32 %s42, 1
          %s194 = smul.addr %s193, 48
          %s195 = scalar_lea.vmem [#allocation3], %s194
          %s196 = smul.u32 4, %s18
          %s197 = smul.u32 3, %s20
          %s198 = smul.addr %s196, 9
          %s199 = sadd.s32 %s197, %s198
          %s200 = smul.addr %s199, 4
          %s201 = scalar_lea.vmem %s0, %s200
          // Predicated region
          $region21: #{style_transfer_forward.38} parent=19 // pred_check
            _
          $region22: #{style_transfer_forward.38} parent=19 // pred_check_branch
            %203 = sbr.rel (0) target = $region24
          $region23: #{style_transfer_forward.38} parent=19 // pred_region
            // Predicated region
            $region25: #{style_transfer_forward.38} parent=23 // pred_check
              _
            $region26: #{style_transfer_forward.38} parent=23 // pred_check_branch
              %205 = sbr.rel (0) target = $region28
            $region27: #{style_transfer_forward.38} parent=23 // pred_region
              %s206 = scalar_lea.vmem %s201, 8
              %s207 = scalar_lea.vmem %s195, 8 [#allocation3]
              loop: start=0, step=1, limit=1
              $region29: #{style_transfer_forward.38} parent=27 // loop_pre_header
                _
              $region30: #{style_transfer_forward.38} parent=27 // loop_header
                %s209 = sphi 0, %s213
                %p210 = scmp.ge.s32.totalorder %s209, 1
                %s214 = sphi %s201, %s201
                %s215 = sphi %s195, %s195
              $region31: #{style_transfer_forward.38} parent=27 // loop_header_branch
                %212 = sbr.rel (%p210) target = $region35
              $region32: #{style_transfer_forward.38} parent=27 // loop_body
                %v216 = vld [vmem:[%s214] sm:$0xff]
                %217 = vst [vmem:[%s215] sm:$0xff] %v216
                %v218 = vld [vmem:[%s214 + $0x24] sm:$0xff]
                %219 = vst [vmem:[%s215 + $0xc] sm:$0xff] %v218
                %v220 = vld [vmem:[%s214 + $0x48] sm:$0xff]
                %221 = vst [vmem:[%s215 + $0x18] sm:$0xff] %v220
                %v222 = vld [vmem:[%s214 + $0x6c] sm:$0xff]
                %223 = vst [vmem:[%s215 + $0x24] sm:$0xff] %v222
              $region33: #{style_transfer_forward.38} parent=27 // loop_footer
                %s213 = sadd.s32 1, %s209
              $region34: #{style_transfer_forward.38} parent=27 // loop_footer_branch
                %208 = sbr.rel target = $region30
              $region35: #{style_transfer_forward.38} parent=27 // loop_exit
                _
              loop: start=0, step=1, limit=1
              $region36: #{style_transfer_forward.38} parent=27 // loop_pre_header
                _
              $region37: #{style_transfer_forward.38} parent=27 // loop_header
                %s226 = sphi 0, %s230
                %p227 = scmp.ge.s32.totalorder %s226, 1
                %s231 = sphi %s206, %s206
                %s232 = sphi %s207, %s207
              $region38: #{style_transfer_forward.38} parent=27 // loop_header_branch
                %229 = sbr.rel (%p227) target = $region42
              $region39: #{style_transfer_forward.38} parent=27 // loop_body
                %v233 = vld [vmem:[%s231] sm:$0xf]
                %234 = vst [vmem:[%s232] sm:$0xf] %v233
                %v235 = vld [vmem:[%s231 + $0x24] sm:$0xf]
                %236 = vst [vmem:[%s232 + $0xc] sm:$0xf] %v235
                %v237 = vld [vmem:[%s231 + $0x48] sm:$0xf]
                %238 = vst [vmem:[%s232 + $0x18] sm:$0xf] %v237
                %v239 = vld [vmem:[%s231 + $0x6c] sm:$0xf]
                %240 = vst [vmem:[%s232 + $0x24] sm:$0xf] %v239
              $region40: #{style_transfer_forward.38} parent=27 // loop_footer
                %s230 = sadd.s32 1, %s226
              $region41: #{style_transfer_forward.38} parent=27 // loop_footer_branch
                %225 = sbr.rel target = $region37
              $region42: #{style_transfer_forward.38} parent=27 // loop_exit
                _
            $region28: #{style_transfer_forward.38} parent=23 // pred_fallthru
              _
          $region24: #{style_transfer_forward.38} parent=19 // pred_fallthru
            _
          %241 = vnop
        $region20: #{style_transfer_forward.38} parent=15 // pred_fallthru
          _
        // Predicated region
        $region43: #{style_transfer_forward.38} parent=15 // pred_check
          %p242 = pneg %p80
        $region44: #{style_transfer_forward.38} parent=15 // pred_check_branch
          %244 = sbr.rel (%p242) target = $region46
        $region45: #{style_transfer_forward.38} parent=15 // pred_region
          %s245 = smul.u32 48, %s20
          %p246 = scmp.lt.s32.totalorder %s245, 143
          %s247 = scalar_select %p246, %s245, 143
          %p248 = scmp.lt.s32.totalorder %s19, 0
          %s249 = scalar_select %p248, %s19, 0
          %s250 = sadd.s32 %s249, %s247
          %s251 = smul.addr %s250, 4
          %s252 = scalar_lea.vmem %s1, %s251
          %s253 = smul.u32 48, %s20
        $region46: #{style_transfer_forward.38} parent=15 // pred_fallthru
          _
      $region16: #{style_transfer_forward.38} parent=5 // pred_fallthru
        _
      %p254 = scmp.le.s32.totalorder 1, %s11
      %p255 = scmp.lt.s32.totalorder %s11, 4
      %p256 = pnand %p254, %p255
      %p257 = pneg %p256
      // Predicated region
      $region47: #{style_transfer_forward.38} parent=5 // pred_check
        _
      $region48: #{style_transfer_forward.38} parent=5 // pred_check_branch
        %259 = sbr.rel (%p256) target = $region50
      $region49: #{style_transfer_forward.38} parent=5 // pred_region
        %s260 = ssub.s32 %s11, 1
        %s261 = sand.u32 %s45, 1
        %s262 = sand.u32 %s45, 1
        %s263 = smul.addr %s262, 48
        %s264 = scalar_lea.vmem [#allocation3], %s263
        // Predicated region
        $region51: #{style_transfer_forward.38} parent=49 // pred_check
          %p265 = pneg %p58
        $region52: #{style_transfer_forward.38} parent=49 // pred_check_branch
          %267 = sbr.rel (%p265) target = $region54
        $region53: #{style_transfer_forward.38} parent=49 // pred_region
          _
        $region54: #{style_transfer_forward.38} parent=49 // pred_fallthru
          _
        %s268 = sand.u32 %s45, 1
        %s269 = sand.u32 %s45, 1
        %s270 = smul.addr %s269, 48
        %s271 = scalar_lea.vmem [#allocation3], %s270
        %p272 = pneg %p58
        %p273 = pneg %p55
        %s274 = smul.u32 48, %s23
        %p275 = scmp.lt.s32.totalorder %s274, 143
        %s276 = scalar_select %p275, %s274, 143
        %p277 = scmp.lt.s32.totalorder %s22, 0
        %s278 = scalar_select %p277, %s22, 0
        %s279 = sadd.s32 %s278, %s276
        %s280 = smul.addr %s279, 4
        %s281 = scalar_lea.vmem %s1, %s280
        %p282 = pneg %p86
        %p283 = pneg %p83
        %p284 = pneg %p114
        %p285 = pneg %p111
        %s286 = smul.u32 4, %s21
        %p287 = scmp.lt.s32.totalorder %s286, 3
        %s288 = scalar_select %p287, %s286, 3
        %p289 = scmp.lt.s32.totalorder %s22, 0
        %s290 = scalar_select %p289, %s22, 0
        %s291 = sadd.s32 %s290, %s288
        %s292 = smul.addr %s291, 4
        %s293 = scalar_lea.vmem %s2, %s292
        %p294 = pneg %p142
        %p295 = pneg %p139
        %p296 = scmp.lt.s32.totalorder %s21, 0
        %s297 = scalar_select %p296, %s21, 0
        %p298 = scmp.lt.s32.totalorder %s22, 0
        %s299 = scalar_select %p298, %s22, 0
        %s300 = sadd.s32 %s299, %s297
        %s301 = scalar_lea.vmem %s3, %s300
        %p302 = pneg %p170
        %p303 = pneg %p167
        %p304 = scmp.lt.s32.totalorder %s21, 0
        %s305 = scalar_select %p304, %s21, 0
        %p306 = scmp.lt.s32.totalorder %s22, 0
        %s307 = scalar_select %p306, %s22, 0
        %s308 = sadd.s32 %s307, %s305
        %s309 = scalar_lea.vmem %s4, %s308
        %s310 = smul.u32 4, %s21
        %s311 = smul.u32 3, %s23
        %s312 = smul.u32 48, %s23
        %p313 = scmp.lt.s32.totalorder %s312, 143
        %s314 = scalar_select %p313, %s312, 143
        %p315 = scmp.lt.s32.totalorder %s22, 0
        %s316 = scalar_select %p315, %s22, 0
        %s317 = sadd.s32 %s316, %s314
        %s318 = smul.addr %s317, 4
        %s319 = scalar_lea.vmem %s1, %s318
        %s320 = smul.u32 48, %s23
        %s321 = smul.u32 4, %s21
        %p322 = scmp.lt.s32.totalorder %s321, 3
        %s323 = scalar_select %p322, %s321, 3
        %p324 = scmp.lt.s32.totalorder %s22, 0
        %s325 = scalar_select %p324, %s22, 0
        %s326 = sadd.s32 %s325, %s323
        %s327 = smul.addr %s326, 4
        %s328 = scalar_lea.vmem %s2, %s327
        %s329 = smul.u32 4, %s21
        %p330 = scmp.lt.s32.totalorder %s21, 0
        %s331 = scalar_select %p330, %s21, 0
        %p332 = scmp.lt.s32.totalorder %s22, 0
        %s333 = scalar_select %p332, %s22, 0
        %s334 = sadd.s32 %s333, %s331
        %s335 = scalar_lea.vmem %s3, %s334
        %p336 = scmp.lt.s32.totalorder %s21, 0
        %s337 = scalar_select %p336, %s21, 0
        %p338 = scmp.lt.s32.totalorder %s22, 0
        %s339 = scalar_select %p338, %s22, 0
        %s340 = sadd.s32 %s339, %s337
        %s341 = scalar_lea.vmem %s4, %s340
        %p343 = scmp.eq.s32.totalorder %s23, 0
        // Predicated region
        $region55: #{style_transfer_forward.38} parent=49 // pred_check
          %p344 = pneg %p343
        $region56: #{style_transfer_forward.38} parent=49 // pred_check_branch
          %346 = sbr.rel (%p344) target = $region58
        $region57: #{style_transfer_forward.38} parent=49 // pred_region
          %347 = vst [vmem:[#allocation2] sm:$0xff] 0.0
          %348 = vst [vmem:[#allocation2 + $0x8] sm:$0xff] 0.0
          %349 = vst [vmem:[#allocation2 + $0x10] sm:$0xff] 0.0
          %350 = vst [vmem:[#allocation2 + $0x18] sm:$0xff] 0.0
        $region58: #{style_transfer_forward.38} parent=49 // pred_fallthru
          _
        %v351 = vld [vmem:[#allocation2] sm:$0xff]
        %v352 = vld [vmem:[#allocation2 + $0x8] sm:$0xff]
        %v353 = vld [vmem:[#allocation2 + $0x10] sm:$0xff]
        %v354 = vld [vmem:[#allocation2 + $0x18] sm:$0xff]
        %v355 = vld [vmem:[%s264] sm:$0xff]
        %v356 = vld [vmem:[%s264 + $0x8] sm:$0xf]
        %v357 = vld [vmem:[%s264 + $0xc] sm:$0xff]
        %v358 = vld [vmem:[%s264 + $0x14] sm:$0xf]
        %v359 = vld [vmem:[%s264 + $0x18] sm:$0xff]
        %v360 = vld [vmem:[%s264 + $0x20] sm:$0xf]
        %v361 = vld [vmem:[%s264 + $0x24] sm:$0xff]
        %v362 = vld [vmem:[%s264 + $0x2c] sm:$0xf]
        %v363 = vld [vmem:[%s319] sm:$0xf]
        %v364 = vld [vmem:[%s319 + $0x4] sm:$0xf]
        %v365 = vld [vmem:[%s319 + $0x8] sm:$0xf]
        %v366 = vld [vmem:[%s319 + $0xc] sm:$0xf]
        %v367 = vld [vmem:[%s319 + $0x10] sm:$0xf]
        %v368 = vld [vmem:[%s319 + $0x14] sm:$0xf]
        %v369 = vld [vmem:[%s319 + $0x18] sm:$0xf]
        %v370 = vld [vmem:[%s319 + $0x1c] sm:$0xf]
        %v371 = vld [vmem:[%s319 + $0x20] sm:$0xf]
        %v372 = vld [vmem:[%s319 + $0x24] sm:$0xf]
        %v373 = vld [vmem:[%s319 + $0x28] sm:$0xf]
        %v374 = vld [vmem:[%s319 + $0x2c] sm:$0xf]
        %v375 = vld [vmem:[%s319 + $0x30] sm:$0xf]
        %v376 = vld [vmem:[%s319 + $0x34] sm:$0xf]
        %v377 = vld [vmem:[%s319 + $0x38] sm:$0xf]
        %v378 = vld [vmem:[%s319 + $0x3c] sm:$0xf]
        %v379 = vld [vmem:[%s319 + $0x40] sm:$0xf]
        %v380 = vld [vmem:[%s319 + $0x44] sm:$0xf]
        %v381 = vld [vmem:[%s319 + $0x48] sm:$0xf]
        %v382 = vld [vmem:[%s319 + $0x4c] sm:$0xf]
        %v383 = vld [vmem:[%s319 + $0x50] sm:$0xf]
        %v384 = vld [vmem:[%s319 + $0x54] sm:$0xf]
        %v385 = vld [vmem:[%s319 + $0x58] sm:$0xf]
        %v386 = vld [vmem:[%s319 + $0x5c] sm:$0xf]
        %v387 = vld [vmem:[%s319 + $0x60] sm:$0xf]
        %v388 = vld [vmem:[%s319 + $0x64] sm:$0xf]
        %v389 = vld [vmem:[%s319 + $0x68] sm:$0xf]
        %v390 = vld [vmem:[%s319 + $0x6c] sm:$0xf]
        %v391 = vld [vmem:[%s319 + $0x70] sm:$0xf]
        %v392 = vld [vmem:[%s319 + $0x74] sm:$0xf]
        %v393 = vld [vmem:[%s319 + $0x78] sm:$0xf]
        %v394 = vld [vmem:[%s319 + $0x7c] sm:$0xf]
        %v395 = vld [vmem:[%s319 + $0x80] sm:$0xf]
        %v396 = vld [vmem:[%s319 + $0x84] sm:$0xf]
        %v397 = vld [vmem:[%s319 + $0x88] sm:$0xf]
        %v398 = vld [vmem:[%s319 + $0x8c] sm:$0xf]
        %v399 = vld [vmem:[%s319 + $0x90] sm:$0xf]
        %v400 = vld [vmem:[%s319 + $0x94] sm:$0xf]
        %v401 = vld [vmem:[%s319 + $0x98] sm:$0xf]
        %v402 = vld [vmem:[%s319 + $0x9c] sm:$0xf]
        %v403 = vld [vmem:[%s319 + $0xa0] sm:$0xf]
        %v404 = vld [vmem:[%s319 + $0xa4] sm:$0xf]
        %v405 = vld [vmem:[%s319 + $0xa8] sm:$0xf]
        %v406 = vld [vmem:[%s319 + $0xac] sm:$0xf]
        %v407 = vld [vmem:[%s319 + $0xb0] sm:$0xf]
        %v408 = vld [vmem:[%s319 + $0xb4] sm:$0xf]
        %v409 = vld [vmem:[%s319 + $0xb8] sm:$0xf]
        %v410 = vld [vmem:[%s319 + $0xbc] sm:$0xf]
        %v419 = vunpack.c.l.b16 %v355
        %v420 = vunpack.c.h.b16 %v355
        %v421 = vunpack.c.l.b16 %v356
        %v422 = vunpack.c.l.b16 %v357
        %v423 = vunpack.c.h.b16 %v357
        %v424 = vunpack.c.l.b16 %v358
        %v425 = vunpack.c.l.b16 %v359
        %v426 = vunpack.c.h.b16 %v359
        %v427 = vunpack.c.l.b16 %v360
        %v428 = vunpack.c.l.b16 %v361
        %v429 = vunpack.c.h.b16 %v361
        %v430 = vunpack.c.l.b16 %v362
        %v431 = vpack.c.b16 %v422, %v419
        %v432 = vpack.c.b16 %v423, %v420
        %v433 = vpack.c.b16 %v424, %v421
        %v434 = vpack.c.b16 %v428, %v425
        %v435 = vpack.c.b16 %v429, %v426
        %v436 = vpack.c.b16 %v430, %v427
        %v491 = vunpack.c.l.b16 %v363
        %v492 = vunpack.c.l.b16 %v364
        %v493 = vunpack.c.l.b16 %v365
        %v494 = vunpack.c.l.b16 %v366
        %v495 = vunpack.c.l.b16 %v367
        %v496 = vunpack.c.l.b16 %v368
        %v497 = vunpack.c.l.b16 %v369
        %v498 = vunpack.c.l.b16 %v370
        %v499 = vunpack.c.l.b16 %v371
        %v500 = vunpack.c.l.b16 %v372
        %v501 = vunpack.c.l.b16 %v373
        %v502 = vunpack.c.l.b16 %v374
        %v503 = vunpack.c.l.b16 %v375
        %v504 = vunpack.c.l.b16 %v376
        %v505 = vunpack.c.l.b16 %v377
        %v506 = vunpack.c.l.b16 %v378
        %v507 = vunpack.c.l.b16 %v379
        %v508 = vunpack.c.l.b16 %v380
        %v509 = vunpack.c.l.b16 %v381
        %v510 = vunpack.c.l.b16 %v382
        %v511 = vunpack.c.l.b16 %v383
        %v512 = vunpack.c.l.b16 %v384
        %v513 = vunpack.c.l.b16 %v385
        %v514 = vunpack.c.l.b16 %v386
        %v515 = vunpack.c.l.b16 %v387
        %v516 = vunpack.c.l.b16 %v388
        %v517 = vunpack.c.l.b16 %v389
        %v518 = vunpack.c.l.b16 %v390
        %v519 = vunpack.c.l.b16 %v391
        %v520 = vunpack.c.l.b16 %v392
        %v521 = vunpack.c.l.b16 %v393
        %v522 = vunpack.c.l.b16 %v394
        %v523 = vunpack.c.l.b16 %v395
        %v524 = vunpack.c.l.b16 %v396
        %v525 = vunpack.c.l.b16 %v397
        %v526 = vunpack.c.l.b16 %v398
        %v527 = vunpack.c.l.b16 %v399
        %v528 = vunpack.c.l.b16 %v400
        %v529 = vunpack.c.l.b16 %v401
        %v530 = vunpack.c.l.b16 %v402
        %v531 = vunpack.c.l.b16 %v403
        %v532 = vunpack.c.l.b16 %v404
        %v533 = vunpack.c.l.b16 %v405
        %v534 = vunpack.c.l.b16 %v406
        %v535 = vunpack.c.l.b16 %v407
        %v536 = vunpack.c.l.b16 %v408
        %v537 = vunpack.c.l.b16 %v409
        %v538 = vunpack.c.l.b16 %v410
        %v539 = vpack.c.b16 %v492, %v491
        %v540 = vpack.c.b16 %v494, %v493
        %v541 = vpack.c.b16 %v496, %v495
        %v542 = vpack.c.b16 %v498, %v497
        %v543 = vpack.c.b16 %v500, %v499
        %v544 = vpack.c.b16 %v502, %v501
        %v545 = vpack.c.b16 %v504, %v503
        %v546 = vpack.c.b16 %v506, %v505
        %v547 = vpack.c.b16 %v508, %v507
        %v548 = vpack.c.b16 %v510, %v509
        %v549 = vpack.c.b16 %v512, %v511
        %v550 = vpack.c.b16 %v514, %v513
        %v551 = vpack.c.b16 %v516, %v515
        %v552 = vpack.c.b16 %v518, %v517
        %v553 = vpack.c.b16 %v520, %v519
        %v554 = vpack.c.b16 %v522, %v521
        %v555 = vpack.c.b16 %v524, %v523
        %v556 = vpack.c.b16 %v526, %v525
        %v557 = vpack.c.b16 %v528, %v527
        %v558 = vpack.c.b16 %v530, %v529
        %v559 = vpack.c.b16 %v532, %v531
        %v560 = vpack.c.b16 %v534, %v533
        %v561 = vpack.c.b16 %v536, %v535
        %v562 = vpack.c.b16 %v538, %v537
        %587 = vmatprep.subr.bf16.mxu0 0
        %588 = vmatpush1.bf16.msra.mxu0 %v539
        %589 = vmatprep.subr.bf16.mxu0 0
        %590 = vmatpush1.bf16.msra.mxu0 %v540
        %591 = vmatprep.subr.bf16.mxu0 0
        %592 = vmatpush1.bf16.msra.mxu0 %v541
        %593 = vmatprep.subr.bf16.mxu0 0
        %594 = vmatpush1.bf16.msra.mxu0 %v542
        %595 = vmatprep.subr.bf16.mxu0 0
        %596 = vmatpush1.bf16.msra.mxu0 %v543
        %597 = vmatprep.subr.bf16.mxu0 0
        %598 = vmatpush1.bf16.msra.mxu0 %v544
        %599 = vmatprep.subr.bf16.mxu0 0
        %600 = vmatpush1.bf16.msra.mxu0 %v545
        %601 = vmatprep.subr.bf16.mxu0 0
        %602 = vmatpush1.bf16.msra.mxu0 %v546
        %603 = vmatprep.subr.bf16.mxu0 0
        %604 = vmatpush1.bf16.msra.mxu0 %v547
        %605 = vmatprep.subr.bf16.mxu0 0
        %606 = vmatpush1.bf16.msra.mxu0 %v548
        %607 = vmatprep.subr.bf16.mxu0 0
        %608 = vmatpush1.bf16.msra.mxu0 %v549
        %609 = vmatprep.subr.bf16.mxu0 0
        %610 = vmatpush1.bf16.msra.mxu0 %v550
        %611 = vmatprep.subr.bf16.mxu0 0
        %612 = vmatpush1.bf16.msra.mxu0 %v551
        %613 = vmatprep.subr.bf16.mxu0 0
        %614 = vmatpush1.bf16.msra.mxu0 %v552
        %615 = vmatprep.subr.bf16.mxu0 0
        %616 = vmatpush1.bf16.msra.mxu0 %v553
        %617 = vmatprep.subr.bf16.mxu0 0
        %618 = vmatpush1.bf16.msra.mxu0 %v554
        %619 = vmatprep.mubr.bf16.mxu0 %v432
        %620 = vmatmul.mubr.bf16.gmra.mrb[0].mxu0 %v431
        %v621 = vpop.f32.mrb[0].mxu0
        %v622 = vadd.f32 0.0, %v621
        %v623 = vpop.f32.mrb[0].mxu0
        %v624 = vpop.f32.mrb[0].mxu0
        %v625 = vadd.f32 0.0, %v624
        %v626 = vpop.f32.mrb[0].mxu0
        %627 = vmatprep.mubr.bf16.mxu0 %v435
        %628 = vmatmul.mubr.bf16.gmra.mrb[0].mxu0 %v434
        %v629 = vpop.f32.mrb[0].mxu0
        %v630 = vadd.f32 0.0, %v629
        %v631 = vpop.f32.mrb[0].mxu0
        %v632 = vpop.f32.mrb[0].mxu0
        %v633 = vadd.f32 0.0, %v632
        %v634 = vpop.f32.mrb[0].mxu0
        %635 = vdwg.mxu0
        %636 = vmatprep.subr.bf16.mxu0 0
        %637 = vmatpush1.bf16.msra.mxu0 %v555
        %638 = vmatprep.subr.bf16.mxu0 0
        %639 = vmatpush1.bf16.msra.mxu0 %v556
        %640 = vmatprep.subr.bf16.mxu0 0
        %641 = vmatpush1.bf16.msra.mxu0 %v557
        %642 = vmatprep.subr.bf16.mxu0 0
        %643 = vmatpush1.bf16.msra.mxu0 %v558
        %644 = vmatprep.subr.bf16.mxu0 0
        %645 = vmatpush1.bf16.msra.mxu0 %v559
        %646 = vmatprep.subr.bf16.mxu0 0
        %647 = vmatpush1.bf16.msra.mxu0 %v560
        %648 = vmatprep.subr.bf16.mxu0 0
        %649 = vmatpush1.bf16.msra.mxu0 %v561
        %650 = vmatprep.subr.bf16.mxu0 0
        %651 = vmatpush1.bf16.msra.mxu0 %v562
        %652 = vmatprep.subr.bf16.mxu0 0
        %653 = vmatpush1.bf16.msra.mxu0 0
        %654 = vmatprep.subr.bf16.mxu0 0
        %655 = vmatpush1.bf16.msra.mxu0 0
        %656 = vmatprep.subr.bf16.mxu0 0
        %657 = vmatpush1.bf16.msra.mxu0 0
        %658 = vmatprep.subr.bf16.mxu0 0
        %659 = vmatpush1.bf16.msra.mxu0 0
        %660 = vmatprep.subr.bf16.mxu0 0
        %661 = vmatpush1.bf16.msra.mxu0 0
        %662 = vmatprep.subr.bf16.mxu0 0
        %663 = vmatpush1.bf16.msra.mxu0 0
        %664 = vmatprep.subr.bf16.mxu0 0
        %665 = vmatpush1.bf16.msra.mxu0 0
        %666 = vmatprep.subr.bf16.mxu0 0
        %667 = vmatpush1.bf16.msra.mxu0 0
        %668 = vmatprep.mubr.bf16.mxu0 0
        %669 = vmatmul.mubr.bf16.gmra.mrb[0].mxu0 %v433
        %v670 = vpop.f32.mrb[0].mxu0
        %v671 = vadd.f32 %v622, %v670
        %v672 = vpop.f32.mrb[0].mxu0
        %v673 = vpop.f32.mrb[0].mxu0
        %v674 = vadd.f32 %v625, %v673
        %v675 = vpop.f32.mrb[0].mxu0
        %676 = vmatprep.mubr.bf16.mxu0 0
        %677 = vmatmul.mubr.bf16.gmra.mrb[0].mxu0 %v436
        %v678 = vpop.f32.mrb[0].mxu0
        %v679 = vadd.f32 %v630, %v678
        %v680 = vpop.f32.mrb[0].mxu0
        %v681 = vpop.f32.mrb[0].mxu0
        %v682 = vadd.f32 %v633, %v681
        %v683 = vpop.f32.mrb[0].mxu0
        %684 = vdwg.mxu0
        %v685 = vadd.f32 %v351, %v671
        %v686 = vadd.f32 %v352, %v674
        %v687 = vadd.f32 %v353, %v679
        %v688 = vadd.f32 %v354, %v682
        %689 = vst [vmem:[#allocation2] sm:$0xff] %v685
        %690 = vst [vmem:[#allocation2 + $0x8] sm:$0xff] %v686
        %691 = vst [vmem:[#allocation2 + $0x10] sm:$0xff] %v687
        %692 = vst [vmem:[#allocation2 + $0x18] sm:$0xff] %v688
        %p693 = scmp.eq.s32.totalorder %s23, 2
        // Predicated region
        $region59: #{style_transfer_forward.38} parent=49 // pred_check
          %p694 = pneg %p693
        $region60: #{style_transfer_forward.38} parent=49 // pred_check_branch
          %696 = sbr.rel (%p694) target = $region62
        $region61: #{style_transfer_forward.38} parent=49 // pred_region
          %v697 = vld [vmem:[#allocation2] sm:$0xff]
          %v698 = vld [vmem:[#allocation2 + $0x8] sm:$0xff]
          %v699 = vld [vmem:[#allocation2 + $0x10] sm:$0xff]
          %v700 = vld [vmem:[#allocation2 + $0x18] sm:$0xff]
          %v701 = vpack.c.bf16 %v698, %v697
          %v702 = vpack.c.bf16 %v700, %v699
          %v705 = vunpack.c.l.b16 %v701
          %v706 = vunpack.c.h.b16 %v701
          %v707 = vunpack.c.l.b16 %v702
          %v708 = vunpack.c.h.b16 %v702
          %v709 = vpack.c.b16 %v705, %v705
          %v710 = vpack.c.b16 %v706, %v706
          %v711 = vpack.c.b16 %v707, %v707
          %v712 = vpack.c.b16 %v708, %v708
          %717 = vst [vmem:[%s328] sm:$0xf] %v709
          %718 = vst [vmem:[%s328 + $0x4] sm:$0xf] %v710
          %719 = vst [vmem:[%s328 + $0x8] sm:$0xf] %v711
          %720 = vst [vmem:[%s328 + $0xc] sm:$0xf] %v712
          %v721 = vadd.f32 %v697, %v698
          %v722 = vadd.f32 %v721, %v699
          %v723 = vadd.f32 %v722, %v700
          %v724 = vrot.slane %v723, 4
          %v725 = vadd.f32 %v723, %v724
          %v726 = vrot.slane %v725, 2
          %v727 = vadd.f32 %v725, %v726
          %v728 = vrot.slane %v727, 1
          %v729 = vadd.f32 %v727, %v728
          %730 = vst [vmem:[%s335] sm:$0x1] %v729
          %v731 = vmul.f32 %v697, %v697
          %v732 = vmul.f32 %v698, %v698
          %v733 = vmul.f32 %v699, %v699
          %v734 = vmul.f32 %v700, %v700
          %v735 = vadd.f32 %v731, %v732
          %v736 = vadd.f32 %v735, %v733
          %v737 = vadd.f32 %v736, %v734
          %v738 = vrot.slane %v737, 4
          %v739 = vadd.f32 %v737, %v738
          %v740 = vrot.slane %v739, 2
          %v741 = vadd.f32 %v739, %v740
          %v742 = vrot.slane %v741, 1
          %v743 = vadd.f32 %v741, %v742
          %744 = vst [vmem:[%s341] sm:$0x1] %v743
        $region62: #{style_transfer_forward.38} parent=49 // pred_fallthru
          _
        %s745 = smul.u32 4, %s21
        %p746 = scmp.lt.s32.totalorder %s745, 3
        %s747 = scalar_select %p746, %s745, 3
        %p748 = scmp.lt.s32.totalorder %s22, 0
        %s749 = scalar_select %p748, %s22, 0
        %s750 = sadd.s32 %s749, %s747
        %s751 = smul.addr %s750, 4
        %s752 = scalar_lea.vmem %s2, %s751
        %p753 = scmp.lt.s32.totalorder %s21, 0
        %s754 = scalar_select %p753, %s21, 0
        %p755 = scmp.lt.s32.totalorder %s22, 0
        %s756 = scalar_select %p755, %s22, 0
        %s757 = sadd.s32 %s756, %s754
        %s758 = scalar_lea.vmem %s3, %s757
        %p759 = scmp.lt.s32.totalorder %s21, 0
        %s760 = scalar_select %p759, %s21, 0
        %p761 = scmp.lt.s32.totalorder %s22, 0
        %s762 = scalar_select %p761, %s22, 0
        %s763 = sadd.s32 %s762, %s760
        %s764 = scalar_lea.vmem %s4, %s763
        // Predicated region
        $region63: #{style_transfer_forward.38} parent=49 // pred_check
          %p765 = pneg %p111
        $region64: #{style_transfer_forward.38} parent=49 // pred_check_branch
          %767 = sbr.rel (%p765) target = $region66
        $region65: #{style_transfer_forward.38} parent=49 // pred_region
          %s768 = smul.u32 4, %s21
        $region66: #{style_transfer_forward.38} parent=49 // pred_fallthru
          _
        // Predicated region
        $region67: #{style_transfer_forward.38} parent=49 // pred_check
          %p769 = pneg %p139
        $region68: #{style_transfer_forward.38} parent=49 // pred_check_branch
          %771 = sbr.rel (%p769) target = $region70
        $region69: #{style_transfer_forward.38} parent=49 // pred_region
          _
        $region70: #{style_transfer_forward.38} parent=49 // pred_fallthru
          _
        // Predicated region
        $region71: #{style_transfer_forward.38} parent=49 // pred_check
          %p772 = pneg %p167
        $region72: #{style_transfer_forward.38} parent=49 // pred_check_branch
          %774 = sbr.rel (%p772) target = $region74
        $region73: #{style_transfer_forward.38} parent=49 // pred_region
          _
        $region74: #{style_transfer_forward.38} parent=49 // pred_fallthru
          _
        // Predicated region
        $region75: #{style_transfer_forward.38} parent=49 // pred_check
          %p775 = pneg %p111
        $region76: #{style_transfer_forward.38} parent=49 // pred_check_branch
          %777 = sbr.rel (%p775) target = $region78
        $region77: #{style_transfer_forward.38} parent=49 // pred_region
          %s778 = smul.u32 4, %s21
          %p779 = scmp.lt.s32.totalorder %s778, 3
          %s780 = scalar_select %p779, %s778, 3
          %p781 = scmp.lt.s32.totalorder %s22, 0
          %s782 = scalar_select %p781, %s22, 0
          %s783 = sadd.s32 %s782, %s780
          %s784 = smul.addr %s783, 4
          %s785 = scalar_lea.vmem %s2, %s784
        $region78: #{style_transfer_forward.38} parent=49 // pred_fallthru
          _
        // Predicated region
        $region79: #{style_transfer_forward.38} parent=49 // pred_check
          %p786 = pneg %p139
        $region80: #{style_transfer_forward.38} parent=49 // pred_check_branch
          %788 = sbr.rel (%p786) target = $region82
        $region81: #{style_transfer_forward.38} parent=49 // pred_region
          %p789 = scmp.lt.s32.totalorder %s21, 0
          %s790 = scalar_select %p789, %s21, 0
          %p791 = scmp.lt.s32.totalorder %s22, 0
          %s792 = scalar_select %p791, %s22, 0
          %s793 = sadd.s32 %s792, %s790
          %s794 = scalar_lea.vmem %s3, %s793
        $region82: #{style_transfer_forward.38} parent=49 // pred_fallthru
          _
        // Predicated region
        $region83: #{style_transfer_forward.38} parent=49 // pred_check
          %p795 = pneg %p167
        $region84: #{style_transfer_forward.38} parent=49 // pred_check_branch
          %797 = sbr.rel (%p795) target = $region86
        $region85: #{style_transfer_forward.38} parent=49 // pred_region
          %p798 = scmp.lt.s32.totalorder %s21, 0
          %s799 = scalar_select %p798, %s21, 0
          %p800 = scmp.lt.s32.totalorder %s22, 0
          %s801 = scalar_select %p800, %s22, 0
          %s802 = sadd.s32 %s801, %s799
          %s803 = scalar_lea.vmem %s4, %s802
        $region86: #{style_transfer_forward.38} parent=49 // pred_fallthru
          _
      $region50: #{style_transfer_forward.38} parent=5 // pred_fallthru
        _
      %p804 = scmp.le.s32.totalorder 2, %s11
      // Predicated region
      $region87: #{style_transfer_forward.38} parent=5 // pred_check
        %p805 = pneg %p804
      $region88: #{style_transfer_forward.38} parent=5 // pred_check_branch
        %807 = sbr.rel (%p805) target = $region90
      $region89: #{style_transfer_forward.38} parent=5 // pred_region
        %s808 = ssub.s32 %s11, 2
      $region90: #{style_transfer_forward.38} parent=5 // pred_fallthru
        _
    $region6: #{style_transfer_forward.38} parent=1 // loop_footer
      %s15 = sadd.s32 1, %s11
    $region7: #{style_transfer_forward.38} parent=1 // loop_footer_branch
      %10 = sbr.rel target = $region3
    $region8: #{style_transfer_forward.38} parent=1 // loop_exit
      _

// kernel: tile.23
$region0: #{tile.23}
  #allocation0 [shape = 's32[1]{0}', space=sflag, size = 0x4, scoped, tag = 'scoped memory for tile.23']
  %s0 = inlined_call_operand.vmem [shape: f32[64], index: 0, kind: input, shape index: {}]
  %s1 = inlined_call_operand.vmem [shape: f32[4,64], index: 1, kind: output, shape index: {}]
  // Predicated region
  $region2: #{tile.23} parent=0 // pred_check
    _
  $region3: #{tile.23} parent=0 // pred_check_branch
    %3 = sbr.rel (0) target = $region5
  $region4: #{tile.23} parent=0 // pred_region
    _
  $region5: #{tile.23} parent=0 // pred_fallthru
    _
  %v4 = vld [vmem:[%s0] ss:$0 sm:$0xff]
  %5 = vst [vmem:[%s1] sm:$0xf] %v4

// kernel: tile.28
$region0: #{tile.28}
  %s0 = inlined_call_operand.vmem [shape: f32[4,64], index: 0, kind: input, shape index: {}]
  %s1 = inlined_call_operand.vmem [shape: f32[1,256], index: 1, kind: output, shape index: {}]
  $region1: #{tile.28} parent=0
    #allocation0 [shape = 'u8[8192]{0}', space=vmem, size = 0x2000, scoped, tag = 'scoped mem for output reshape']
    #allocation1 [shape = 'u8[4096]{0}', space=vmem, size = 0x1000, scoped, tag = 'scoped mem for input reshape']
    %s3 = sshllo.u32 0, 4
    %v4 = vld [vmem:[%s0] sm:%s3]
    %5 = vst [vmem:[#allocation1] sm:%s3] %v4
    %s6 = smov 3
    %v7 = vld [vmem:[#allocation1] ss:$2 sm:%s6]
    %vm8 = vcmask 523264
    %9 = vst.msk [vmem:[#allocation0] ss:$8 sm:$0x3] %vm8, %v7
    %s10 = scalar_lea.vmem [#allocation1], 1
    %s11 = smov 3
    %v12 = vld [vmem:[%s10] ss:$2 sm:%s11]
    %13 = vrot.lane.b32.xlu0 %v12, 64
    %v14 = vpop.permute.xlu0 %13
    %vm15 = vcmask 1048064
    %16 = vst.msk [vmem:[#allocation0] ss:$8 sm:$0x3] %vm15, %v14
    %s18 = sshllo.u32 0, 1
    %v20 = vld [vmem:[#allocation0] sm:%s18]
    %s21 = sshllo.u32 0, 1
    %22 = vst [vmem:[%s1] sm:%s21] %v20
    %s23 = scalar_lea.vmem [#allocation0], 8
    %v24 = vld [vmem:[%s23] sm:%s18]
    %s25 = sshllo.u32 0, 1
    %s26 = scalar_lea.vmem %s1, 1
    %27 = vst [vmem:[%s26] sm:%s25] %v24

// kernel: style_transfer_forward.58
$region0: #{style_transfer_forward.58}
  #allocation0 [shape = 'u32[]', space=smem, size = 0x4, offset = 0x4, fixed_abs, tag = 'smem constant byte address 0x4 - core index']
  #allocation1 [shape = 'u32[144,128]{1,0:T(1,128)}', space=vmem, size = 0x12000, scoped, tag = 'internal scratch']
  #allocation2 [shape = 'f32[32,128]{1,0:T(8,128)}', space=vmem, size = 0x4000, scoped, tag = 'scratch operand']
  %s0 = inlined_call_operand.vmem [shape: bf16[32,512], index: 0, kind: input, shape index: {}]
  %s1 = inlined_call_operand.vmem [shape: bf16[512,256], index: 1, kind: input, shape index: {}]
  %s2 = inlined_call_operand.vmem [shape: bf16[32,256], index: 2, kind: output, shape index: {0}]
  %s3 = inlined_call_operand.vmem [shape: f32[1,1,256], index: 3, kind: output, shape index: {1}]
  %s4 = inlined_call_operand.vmem [shape: f32[1,1,256], index: 4, kind: output, shape index: {2}]
  %5 = xla_tuple %s2, %s3, %s4
  %s6 = sld [smem:[#allocation0]]
  $region143: #{style_transfer_forward.58} parent=0
    _
  %s8 = ssub.s32 1, %s6
  %s9 = scalar_select 0, %s8, %s6
  $region1: #{style_transfer_forward.58} parent=0
    #allocation3 [shape = 'u8[262144]{0}', space=vmem, size = 0x40000, scoped, tag = 'input window, operand 1']
    #allocation4 [shape = 'u8[16384]{0}', space=vmem, size = 0x4000, scoped, tag = 'output window, operand 0']
    loop: start=0, step=1, limit=4
    $region2: #{style_transfer_forward.58} parent=1 // loop_pre_header
      _
    $region3: #{style_transfer_forward.58} parent=1 // loop_header
      %s11 = sphi 0, %s15
      %p12 = scmp.ge.s32.totalorder %s11, 4
      %s18 = sphi 0, %s37
      %s19 = sphi 0, %s33
      %s20 = sphi 0, %s29
      %s21 = sphi 0, %s18
      %s22 = sphi 0, %s19
      %s23 = sphi 0, %s20
      %s24 = sphi 0, %s21
      %s25 = sphi 0, %s22
      %s26 = sphi 0, %s23
      %s42 = sphi 0, %s44
      %s45 = sphi 0, %s42
      %s46 = sphi 0, %s45
      %s62 = sphi 0, %s46
      %s70 = sphi 0, %s72
      %s73 = sphi 0, %s70
      %s74 = sphi 0, %s73
      %s90 = sphi 0, %s74
      %s98 = sphi 0, %s100
      %s101 = sphi 0, %s98
      %s102 = sphi 0, %s101
      %s118 = sphi 0, %s102
      %s126 = sphi 0, %s128
      %s129 = sphi 0, %s126
      %s130 = sphi 0, %s129
      %s146 = sphi 0, %s130
      %s154 = sphi 0, %s156
      %s157 = sphi 0, %s154
      %s158 = sphi 0, %s157
      %s174 = sphi 0, %s158
    $region4: #{style_transfer_forward.58} parent=1 // loop_header_branch
      %14 = sbr.rel (%p12) target = $region8
    $region5: #{style_transfer_forward.58} parent=1 // loop_body
      %s16 = ssub.s32 %s11, 1
      %s17 = ssub.s32 %s11, 2
      %s27 = sadd.s32 1, %s20
      %p28 = scmp.ge.s32.totalorder %s27, 1
      %s29 = scalar_select %p28, 0, %s27
      %s30 = sadd.s32 1, %s19
      %s31 = scalar_select %p28, %s30, %s19
      %p32 = scmp.ge.s32.totalorder %s31, 2
      %s33 = scalar_select %p32, 0, %s31
      %s34 = sadd.s32 1, %s18
      %s35 = scalar_select %p32, %s34, %s18
      %p36 = scmp.ge.s32.totalorder %s35, 1
      %s37 = scalar_select %p36, 0, %s35
      %s38 = ssub.s32 %s18, %s37
      %s39 = ssub.s32 %s20, %s29
      %s40 = sor.u32 %s38, %s39
      %p41 = scmp.eq.s32.totalorder %s40, 0
      %s43 = sadd.s32 %s42, 1
      %s44 = scalar_select %p41, %s42, %s43
      %p47 = pneg %p41
      %p48 = scmp.eq.s32.totalorder %s11, 1
      %p49 = por %p47, %p48
      %p50 = scmp.ne.s32.totalorder %s42, %s45
      %p51 = scmp.eq.s32.totalorder %s11, 0
      %p52 = por %p50, %p51
      %p53 = scmp.ne.s32.totalorder %s42, %s45
      %p54 = scmp.eq.s32.totalorder %s16, 1
      %p55 = por %p53, %p54
      %p56 = scmp.ne.s32.totalorder %s45, %s46
      %p57 = scmp.eq.s32.totalorder %s16, 0
      %p58 = por %p56, %p57
      %p59 = scmp.ne.s32.totalorder %s45, %s46
      %p60 = scmp.eq.s32.totalorder %s17, 1
      %p61 = por %p59, %p60
      %p63 = scmp.ne.s32.totalorder %s46, %s62
      %p64 = scmp.eq.s32.totalorder %s17, 0
      %p65 = por %p63, %p64
      %s66 = ssub.s32 %s20, %s29
      %s67 = ssub.s32 %s19, %s33
      %s68 = sor.u32 %s66, %s67
      %p69 = scmp.eq.s32.totalorder %s68, 0
      %s71 = sadd.s32 %s70, 1
      %s72 = scalar_select %p69, %s70, %s71
      %p75 = pneg %p69
      %p76 = scmp.eq.s32.totalorder %s11, 1
      %p77 = por %p75, %p76
      %p78 = scmp.ne.s32.totalorder %s70, %s73
      %p79 = scmp.eq.s32.totalorder %s11, 0
      %p80 = por %p78, %p79
      %p81 = scmp.ne.s32.totalorder %s70, %s73
      %p82 = scmp.eq.s32.totalorder %s16, 1
      %p83 = por %p81, %p82
      %p84 = scmp.ne.s32.totalorder %s73, %s74
      %p85 = scmp.eq.s32.totalorder %s16, 0
      %p86 = por %p84, %p85
      %p87 = scmp.ne.s32.totalorder %s73, %s74
      %p88 = scmp.eq.s32.totalorder %s17, 1
      %p89 = por %p87, %p88
      %p91 = scmp.ne.s32.totalorder %s74, %s90
      %p92 = scmp.eq.s32.totalorder %s17, 0
      %p93 = por %p91, %p92
      %s94 = ssub.s32 %s18, %s37
      %s95 = ssub.s32 %s19, %s33
      %s96 = sor.u32 %s94, %s95
      %p97 = scmp.eq.s32.totalorder %s96, 0
      %s99 = sadd.s32 %s98, 1
      %s100 = scalar_select %p97, %s98, %s99
      %p103 = pneg %p97
      %p104 = scmp.eq.s32.totalorder %s11, 1
      %p105 = por %p103, %p104
      %p106 = scmp.ne.s32.totalorder %s98, %s101
      %p107 = scmp.eq.s32.totalorder %s11, 0
      %p108 = por %p106, %p107
      %p109 = scmp.ne.s32.totalorder %s98, %s101
      %p110 = scmp.eq.s32.totalorder %s16, 1
      %p111 = por %p109, %p110
      %p112 = scmp.ne.s32.totalorder %s101, %s102
      %p113 = scmp.eq.s32.totalorder %s16, 0
      %p114 = por %p112, %p113
      %p115 = scmp.ne.s32.totalorder %s101, %s102
      %p116 = scmp.eq.s32.totalorder %s17, 1
      %p117 = por %p115, %p116
      %p119 = scmp.ne.s32.totalorder %s102, %s118
      %p120 = scmp.eq.s32.totalorder %s17, 0
      %p121 = por %p119, %p120
      %s122 = ssub.s32 %s18, %s37
      %s123 = ssub.s32 %s19, %s33
      %s124 = sor.u32 %s122, %s123
      %p125 = scmp.eq.s32.totalorder %s124, 0
      %s127 = sadd.s32 %s126, 1
      %s128 = scalar_select %p125, %s126, %s127
      %p131 = pneg %p125
      %p132 = scmp.eq.s32.totalorder %s11, 1
      %p133 = por %p131, %p132
      %p134 = scmp.ne.s32.totalorder %s126, %s129
      %p135 = scmp.eq.s32.totalorder %s11, 0
      %p136 = por %p134, %p135
      %p137 = scmp.ne.s32.totalorder %s126, %s129
      %p138 = scmp.eq.s32.totalorder %s16, 1
      %p139 = por %p137, %p138
      %p140 = scmp.ne.s32.totalorder %s129, %s130
      %p141 = scmp.eq.s32.totalorder %s16, 0
      %p142 = por %p140, %p141
      %p143 = scmp.ne.s32.totalorder %s129, %s130
      %p144 = scmp.eq.s32.totalorder %s17, 1
      %p145 = por %p143, %p144
      %p147 = scmp.ne.s32.totalorder %s130, %s146
      %p148 = scmp.eq.s32.totalorder %s17, 0
      %p149 = por %p147, %p148
      %s150 = ssub.s32 %s18, %s37
      %s151 = ssub.s32 %s19, %s33
      %s152 = sor.u32 %s150, %s151
      %p153 = scmp.eq.s32.totalorder %s152, 0
      %s155 = sadd.s32 %s154, 1
      %s156 = scalar_select %p153, %s154, %s155
      %p159 = pneg %p153
      %p160 = scmp.eq.s32.totalorder %s11, 1
      %p161 = por %p159, %p160
      %p162 = scmp.ne.s32.totalorder %s154, %s157
      %p163 = scmp.eq.s32.totalorder %s11, 0
      %p164 = por %p162, %p163
      %p165 = scmp.ne.s32.totalorder %s154, %s157
      %p166 = scmp.eq.s32.totalorder %s16, 1
      %p167 = por %p165, %p166
      %p168 = scmp.ne.s32.totalorder %s157, %s158
      %p169 = scmp.eq.s32.totalorder %s16, 0
      %p170 = por %p168, %p169
      %p171 = scmp.ne.s32.totalorder %s157, %s158
      %p172 = scmp.eq.s32.totalorder %s17, 1
      %p173 = por %p171, %p172
      %p175 = scmp.ne.s32.totalorder %s158, %s174
      %p176 = scmp.eq.s32.totalorder %s17, 0
      %p177 = por %p175, %p176
      %p178 = scmp.le.s32.totalorder 1, %s11
      %p179 = scmp.lt.s32.totalorder %s11, 3
      %p180 = pnand %p178, %p179
      %p181 = pneg %p180
      // Predicated region
      $region9: #{style_transfer_forward.58} parent=5 // pred_check
        _
      $region10: #{style_transfer_forward.58} parent=5 // pred_check_branch
        %183 = sbr.rel (%p180) target = $region12
      $region11: #{style_transfer_forward.58} parent=5 // pred_region
        %s184 = ssub.s32 %s11, 1
        // Predicated region
        $region13: #{style_transfer_forward.58} parent=11 // pred_check
          %p185 = pneg %p58
        $region14: #{style_transfer_forward.58} parent=11 // pred_check_branch
          %187 = sbr.rel (%p185) target = $region16
        $region15: #{style_transfer_forward.58} parent=11 // pred_region
          %s188 = smul.u32 4, %s21
          %s189 = smul.u32 4, %s23
          %p190 = scmp.lt.s32.totalorder %s188, 3
          %s191 = scalar_select %p190, %s188, 3
          %p192 = scmp.lt.s32.totalorder %s189, 3
          %s193 = scalar_select %p192, %s189, 3
          %s194 = smul.addr %s191, 4
          %s195 = sadd.s32 %s193, %s194
          %s196 = smul.addr %s195, 4
          %s197 = scalar_lea.vmem %s0, %s196
          %s198 = smul.u32 4, %s21
          %s199 = smul.u32 4, %s23
        $region16: #{style_transfer_forward.58} parent=11 // pred_fallthru
          _
      $region12: #{style_transfer_forward.58} parent=5 // pred_fallthru
        _
      %p200 = scmp.lt.s32.totalorder %s11, 2
      // Predicated region
      $region17: #{style_transfer_forward.58} parent=5 // pred_check
        %p201 = pneg %p200
      $region18: #{style_transfer_forward.58} parent=5 // pred_check_branch
        %203 = sbr.rel (%p201) target = $region20
      $region19: #{style_transfer_forward.58} parent=5 // pred_region
        // Predicated region
        $region21: #{style_transfer_forward.58} parent=19 // pred_check
          %p204 = pneg %p80
        $region22: #{style_transfer_forward.58} parent=19 // pred_check_branch
          %206 = sbr.rel (%p204) target = $region24
        $region23: #{style_transfer_forward.58} parent=19 // pred_region
          %s207 = sand.u32 %s70, 1
          %s208 = sand.u32 %s70, 1
          %s209 = smul.addr %s208, 256
          %s210 = scalar_lea.vmem [#allocation3], %s209
          %s211 = smul.u32 64, %s20
          %s212 = smul.addr %s211, 2
          %s213 = sadd.s32 %s19, %s212
          %s214 = smul.addr %s213, 4
          %s215 = scalar_lea.vmem %s1, %s214
          // Predicated region
          $region25: #{style_transfer_forward.58} parent=23 // pred_check
            _
          $region26: #{style_transfer_forward.58} parent=23 // pred_check_branch
            %217 = sbr.rel (0) target = $region28
          $region27: #{style_transfer_forward.58} parent=23 // pred_region
            // Predicated region
            $region29: #{style_transfer_forward.58} parent=27 // pred_check
              _
            $region30: #{style_transfer_forward.58} parent=27 // pred_check_branch
              %219 = sbr.rel target = $region32
            $region31: #{style_transfer_forward.58} parent=27 // pred_region
              // Predicated region
              $region44: #{style_transfer_forward.58} parent=31 // pred_check
                _
              $region45: #{style_transfer_forward.58} parent=31 // pred_check_branch
                %360 = sbr.rel (0) target = $region47
              $region46: #{style_transfer_forward.58} parent=31 // pred_region
                loop: start=0, step=1, limit=1
                $region48: #{style_transfer_forward.58} parent=46 // loop_pre_header
                  _
                $region49: #{style_transfer_forward.58} parent=46 // loop_header
                  %s362 = sphi 0, %s366
                  %p363 = scmp.ge.s32.totalorder %s362, 1
                  %s367 = sphi %s215, %s215
                  %s368 = sphi %s210, %s210
                $region50: #{style_transfer_forward.58} parent=46 // loop_header_branch
                  %365 = sbr.rel (%p363) target = $region54
                $region51: #{style_transfer_forward.58} parent=46 // loop_body
                  _
                $region52: #{style_transfer_forward.58} parent=46 // loop_footer
                  %s366 = sadd.s32 1, %s362
                $region53: #{style_transfer_forward.58} parent=46 // loop_footer_branch
                  %361 = sbr.rel target = $region49
                $region54: #{style_transfer_forward.58} parent=46 // loop_exit
                  _
                loop: start=0, step=1, limit=1
                $region55: #{style_transfer_forward.58} parent=46 // loop_pre_header
                  _
                $region56: #{style_transfer_forward.58} parent=46 // loop_header
                  %s371 = sphi 0, %s375
                  %p372 = scmp.ge.s32.totalorder %s371, 1
                  %s376 = sphi %s215, %s215
                  %s377 = sphi %s210, %s210
                $region57: #{style_transfer_forward.58} parent=46 // loop_header_branch
                  %374 = sbr.rel (%p372) target = $region61
                $region58: #{style_transfer_forward.58} parent=46 // loop_body
                  %v378 = vld [vmem:[%s376] sm:$0xf]
                  %379 = vst [vmem:[%s377] sm:$0xf] %v378
                  %v380 = vld [vmem:[%s376 + $0x8] sm:$0xf]
                  %381 = vst [vmem:[%s377 + $0x4] sm:$0xf] %v380
                  %v382 = vld [vmem:[%s376 + $0x10] sm:$0xf]
                  %383 = vst [vmem:[%s377 + $0x8] sm:$0xf] %v382
                  %v384 = vld [vmem:[%s376 + $0x18] sm:$0xf]
                  %385 = vst [vmem:[%s377 + $0xc] sm:$0xf] %v384
                  %v386 = vld [vmem:[%s376 + $0x20] sm:$0xf]
                  %387 = vst [vmem:[%s377 + $0x10] sm:$0xf] %v386
                  %v388 = vld [vmem:[%s376 + $0x28] sm:$0xf]
                  %389 = vst [vmem:[%s377 + $0x14] sm:$0xf] %v388
                  %v390 = vld [vmem:[%s376 + $0x30] sm:$0xf]
                  %391 = vst [vmem:[%s377 + $0x18] sm:$0xf] %v390
                  %v392 = vld [vmem:[%s376 + $0x38] sm:$0xf]
                  %393 = vst [vmem:[%s377 + $0x1c] sm:$0xf] %v392
                  %v394 = vld [vmem:[%s376 + $0x40] sm:$0xf]
                  %395 = vst [vmem:[%s377 + $0x20] sm:$0xf] %v394
                  %v396 = vld [vmem:[%s376 + $0x48] sm:$0xf]
                  %397 = vst [vmem:[%s377 + $0x24] sm:$0xf] %v396
                  %v398 = vld [vmem:[%s376 + $0x50] sm:$0xf]
                  %399 = vst [vmem:[%s377 + $0x28] sm:$0xf] %v398
                  %v400 = vld [vmem:[%s376 + $0x58] sm:$0xf]
                  %401 = vst [vmem:[%s377 + $0x2c] sm:$0xf] %v400
                  %v402 = vld [vmem:[%s376 + $0x60] sm:$0xf]
                  %403 = vst [vmem:[%s377 + $0x30] sm:$0xf] %v402
                  %v404 = vld [vmem:[%s376 + $0x68] sm:$0xf]
                  %405 = vst [vmem:[%s377 + $0x34] sm:$0xf] %v404
                  %v406 = vld [vmem:[%s376 + $0x70] sm:$0xf]
                  %407 = vst [vmem:[%s377 + $0x38] sm:$0xf] %v406
                  %v408 = vld [vmem:[%s376 + $0x78] sm:$0xf]
                  %409 = vst [vmem:[%s377 + $0x3c] sm:$0xf] %v408
                  %v410 = vld [vmem:[%s376 + $0x80] sm:$0xf]
                  %411 = vst [vmem:[%s377 + $0x40] sm:$0xf] %v410
                  %v412 = vld [vmem:[%s376 + $0x88] sm:$0xf]
                  %413 = vst [vmem:[%s377 + $0x44] sm:$0xf] %v412
                  %v414 = vld [vmem:[%s376 + $0x90] sm:$0xf]
                  %415 = vst [vmem:[%s377 + $0x48] sm:$0xf] %v414
                  %v416 = vld [vmem:[%s376 + $0x98] sm:$0xf]
                  %417 = vst [vmem:[%s377 + $0x4c] sm:$0xf] %v416
                  %v418 = vld [vmem:[%s376 + $0xa0] sm:$0xf]
                  %419 = vst [vmem:[%s377 + $0x50] sm:$0xf] %v418
                  %v420 = vld [vmem:[%s376 + $0xa8] sm:$0xf]
                  %421 = vst [vmem:[%s377 + $0x54] sm:$0xf] %v420
                  %v422 = vld [vmem:[%s376 + $0xb0] sm:$0xf]
                  %423 = vst [vmem:[%s377 + $0x58] sm:$0xf] %v422
                  %v424 = vld [vmem:[%s376 + $0xb8] sm:$0xf]
                  %425 = vst [vmem:[%s377 + $0x5c] sm:$0xf] %v424
                  %v426 = vld [vmem:[%s376 + $0xc0] sm:$0xf]
                  %427 = vst [vmem:[%s377 + $0x60] sm:$0xf] %v426
                  %v428 = vld [vmem:[%s376 + $0xc8] sm:$0xf]
                  %429 = vst [vmem:[%s377 + $0x64] sm:$0xf] %v428
                  %v430 = vld [vmem:[%s376 + $0xd0] sm:$0xf]
                  %431 = vst [vmem:[%s377 + $0x68] sm:$0xf] %v430
                  %v432 = vld [vmem:[%s376 + $0xd8] sm:$0xf]
                  %433 = vst [vmem:[%s377 + $0x6c] sm:$0xf] %v432
                  %v434 = vld [vmem:[%s376 + $0xe0] sm:$0xf]
                  %435 = vst [vmem:[%s377 + $0x70] sm:$0xf] %v434
                  %v436 = vld [vmem:[%s376 + $0xe8] sm:$0xf]
                  %437 = vst [vmem:[%s377 + $0x74] sm:$0xf] %v436
                  %v438 = vld [vmem:[%s376 + $0xf0] sm:$0xf]
                  %439 = vst [vmem:[%s377 + $0x78] sm:$0xf] %v438
                  %v440 = vld [vmem:[%s376 + $0xf8] sm:$0xf]
                  %441 = vst [vmem:[%s377 + $0x7c] sm:$0xf] %v440
                  %v442 = vld [vmem:[%s376 + $0x100] sm:$0xf]
                  %443 = vst [vmem:[%s377 + $0x80] sm:$0xf] %v442
                  %v444 = vld [vmem:[%s376 + $0x108] sm:$0xf]
                  %445 = vst [vmem:[%s377 + $0x84] sm:$0xf] %v444
                  %v446 = vld [vmem:[%s376 + $0x110] sm:$0xf]
                  %447 = vst [vmem:[%s377 + $0x88] sm:$0xf] %v446
                  %v448 = vld [vmem:[%s376 + $0x118] sm:$0xf]
                  %449 = vst [vmem:[%s377 + $0x8c] sm:$0xf] %v448
                  %v450 = vld [vmem:[%s376 + $0x120] sm:$0xf]
                  %451 = vst [vmem:[%s377 + $0x90] sm:$0xf] %v450
                  %v452 = vld [vmem:[%s376 + $0x128] sm:$0xf]
                  %453 = vst [vmem:[%s377 + $0x94] sm:$0xf] %v452
                  %v454 = vld [vmem:[%s376 + $0x130] sm:$0xf]
                  %455 = vst [vmem:[%s377 + $0x98] sm:$0xf] %v454
                  %v456 = vld [vmem:[%s376 + $0x138] sm:$0xf]
                  %457 = vst [vmem:[%s377 + $0x9c] sm:$0xf] %v456
                  %v458 = vld [vmem:[%s376 + $0x140] sm:$0xf]
                  %459 = vst [vmem:[%s377 + $0xa0] sm:$0xf] %v458
                  %v460 = vld [vmem:[%s376 + $0x148] sm:$0xf]
                  %461 = vst [vmem:[%s377 + $0xa4] sm:$0xf] %v460
                  %v462 = vld [vmem:[%s376 + $0x150] sm:$0xf]
                  %463 = vst [vmem:[%s377 + $0xa8] sm:$0xf] %v462
                  %v464 = vld [vmem:[%s376 + $0x158] sm:$0xf]
                  %465 = vst [vmem:[%s377 + $0xac] sm:$0xf] %v464
                  %v466 = vld [vmem:[%s376 + $0x160] sm:$0xf]
                  %467 = vst [vmem:[%s377 + $0xb0] sm:$0xf] %v466
                  %v468 = vld [vmem:[%s376 + $0x168] sm:$0xf]
                  %469 = vst [vmem:[%s377 + $0xb4] sm:$0xf] %v468
                  %v470 = vld [vmem:[%s376 + $0x170] sm:$0xf]
                  %471 = vst [vmem:[%s377 + $0xb8] sm:$0xf] %v470
                  %v472 = vld [vmem:[%s376 + $0x178] sm:$0xf]
                  %473 = vst [vmem:[%s377 + $0xbc] sm:$0xf] %v472
                  %v474 = vld [vmem:[%s376 + $0x180] sm:$0xf]
                  %475 = vst [vmem:[%s377 + $0xc0] sm:$0xf] %v474
                  %v476 = vld [vmem:[%s376 + $0x188] sm:$0xf]
                  %477 = vst [vmem:[%s377 + $0xc4] sm:$0xf] %v476
                  %v478 = vld [vmem:[%s376 + $0x190] sm:$0xf]
                  %479 = vst [vmem:[%s377 + $0xc8] sm:$0xf] %v478
                  %v480 = vld [vmem:[%s376 + $0x198] sm:$0xf]
                  %481 = vst [vmem:[%s377 + $0xcc] sm:$0xf] %v480
                  %v482 = vld [vmem:[%s376 + $0x1a0] sm:$0xf]
                  %483 = vst [vmem:[%s377 + $0xd0] sm:$0xf] %v482
                  %v484 = vld [vmem:[%s376 + $0x1a8] sm:$0xf]
                  %485 = vst [vmem:[%s377 + $0xd4] sm:$0xf] %v484
                  %v486 = vld [vmem:[%s376 + $0x1b0] sm:$0xf]
                  %487 = vst [vmem:[%s377 + $0xd8] sm:$0xf] %v486
                  %v488 = vld [vmem:[%s376 + $0x1b8] sm:$0xf]
                  %489 = vst [vmem:[%s377 + $0xdc] sm:$0xf] %v488
                  %v490 = vld [vmem:[%s376 + $0x1c0] sm:$0xf]
                  %491 = vst [vmem:[%s377 + $0xe0] sm:$0xf] %v490
                  %v492 = vld [vmem:[%s376 + $0x1c8] sm:$0xf]
                  %493 = vst [vmem:[%s377 + $0xe4] sm:$0xf] %v492
                  %v494 = vld [vmem:[%s376 + $0x1d0] sm:$0xf]
                  %495 = vst [vmem:[%s377 + $0xe8] sm:$0xf] %v494
                  %v496 = vld [vmem:[%s376 + $0x1d8] sm:$0xf]
                  %497 = vst [vmem:[%s377 + $0xec] sm:$0xf] %v496
                  %v498 = vld [vmem:[%s376 + $0x1e0] sm:$0xf]
                  %499 = vst [vmem:[%s377 + $0xf0] sm:$0xf] %v498
                  %v500 = vld [vmem:[%s376 + $0x1e8] sm:$0xf]
                  %501 = vst [vmem:[%s377 + $0xf4] sm:$0xf] %v500
                  %v502 = vld [vmem:[%s376 + $0x1f0] sm:$0xf]
                  %503 = vst [vmem:[%s377 + $0xf8] sm:$0xf] %v502
                  %v504 = vld [vmem:[%s376 + $0x1f8] sm:$0xf]
                  %505 = vst [vmem:[%s377 + $0xfc] sm:$0xf] %v504
                $region59: #{style_transfer_forward.58} parent=46 // loop_footer
                  %s375 = sadd.s32 1, %s371
                $region60: #{style_transfer_forward.58} parent=46 // loop_footer_branch
                  %370 = sbr.rel target = $region56
                $region61: #{style_transfer_forward.58} parent=46 // loop_exit
                  _
              $region47: #{style_transfer_forward.58} parent=31 // pred_fallthru
                _
            $region32: #{style_transfer_forward.58} parent=27 // pred_fallthru
              _
            // Predicated region
            $region33: #{style_transfer_forward.58} parent=27 // pred_check
              _
            $region34: #{style_transfer_forward.58} parent=27 // pred_check_branch
              %221 = sbr.rel (0) target = $region36
            $region35: #{style_transfer_forward.58} parent=27 // pred_region
              loop: start=0, step=1, limit=1
              $region37: #{style_transfer_forward.58} parent=35 // loop_pre_header
                _
              $region38: #{style_transfer_forward.58} parent=35 // loop_header
                %s224 = sphi 0, %s228
                %p225 = scmp.ge.s32.totalorder %s224, 1
                %s229 = sphi %s215, %s215
                %s230 = sphi %s210, %s210
              $region39: #{style_transfer_forward.58} parent=35 // loop_header_branch
                %227 = sbr.rel (%p225) target = $region43
              $region40: #{style_transfer_forward.58} parent=35 // loop_body
                %v231 = vld [vmem:[%s229] sm:$0xf]
                %232 = vst [vmem:[%s230] sm:$0xf] %v231
                %v233 = vld [vmem:[%s229 + $0x8] sm:$0xf]
                %234 = vst [vmem:[%s230 + $0x4] sm:$0xf] %v233
                %v235 = vld [vmem:[%s229 + $0x10] sm:$0xf]
                %236 = vst [vmem:[%s230 + $0x8] sm:$0xf] %v235
                %v237 = vld [vmem:[%s229 + $0x18] sm:$0xf]
                %238 = vst [vmem:[%s230 + $0xc] sm:$0xf] %v237
                %v239 = vld [vmem:[%s229 + $0x20] sm:$0xf]
                %240 = vst [vmem:[%s230 + $0x10] sm:$0xf] %v239
                %v241 = vld [vmem:[%s229 + $0x28] sm:$0xf]
                %242 = vst [vmem:[%s230 + $0x14] sm:$0xf] %v241
                %v243 = vld [vmem:[%s229 + $0x30] sm:$0xf]
                %244 = vst [vmem:[%s230 + $0x18] sm:$0xf] %v243
                %v245 = vld [vmem:[%s229 + $0x38] sm:$0xf]
                %246 = vst [vmem:[%s230 + $0x1c] sm:$0xf] %v245
                %v247 = vld [vmem:[%s229 + $0x40] sm:$0xf]
                %248 = vst [vmem:[%s230 + $0x20] sm:$0xf] %v247
                %v249 = vld [vmem:[%s229 + $0x48] sm:$0xf]
                %250 = vst [vmem:[%s230 + $0x24] sm:$0xf] %v249
                %v251 = vld [vmem:[%s229 + $0x50] sm:$0xf]
                %252 = vst [vmem:[%s230 + $0x28] sm:$0xf] %v251
                %v253 = vld [vmem:[%s229 + $0x58] sm:$0xf]
                %254 = vst [vmem:[%s230 + $0x2c] sm:$0xf] %v253
                %v255 = vld [vmem:[%s229 + $0x60] sm:$0xf]
                %256 = vst [vmem:[%s230 + $0x30] sm:$0xf] %v255
                %v257 = vld [vmem:[%s229 + $0x68] sm:$0xf]
                %258 = vst [vmem:[%s230 + $0x34] sm:$0xf] %v257
                %v259 = vld [vmem:[%s229 + $0x70] sm:$0xf]
                %260 = vst [vmem:[%s230 + $0x38] sm:$0xf] %v259
                %v261 = vld [vmem:[%s229 + $0x78] sm:$0xf]
                %262 = vst [vmem:[%s230 + $0x3c] sm:$0xf] %v261
                %v263 = vld [vmem:[%s229 + $0x80] sm:$0xf]
                %264 = vst [vmem:[%s230 + $0x40] sm:$0xf] %v263
                %v265 = vld [vmem:[%s229 + $0x88] sm:$0xf]
                %266 = vst [vmem:[%s230 + $0x44] sm:$0xf] %v265
                %v267 = vld [vmem:[%s229 + $0x90] sm:$0xf]
                %268 = vst [vmem:[%s230 + $0x48] sm:$0xf] %v267
                %v269 = vld [vmem:[%s229 + $0x98] sm:$0xf]
                %270 = vst [vmem:[%s230 + $0x4c] sm:$0xf] %v269
                %v271 = vld [vmem:[%s229 + $0xa0] sm:$0xf]
                %272 = vst [vmem:[%s230 + $0x50] sm:$0xf] %v271
                %v273 = vld [vmem:[%s229 + $0xa8] sm:$0xf]
                %274 = vst [vmem:[%s230 + $0x54] sm:$0xf] %v273
                %v275 = vld [vmem:[%s229 + $0xb0] sm:$0xf]
                %276 = vst [vmem:[%s230 + $0x58] sm:$0xf] %v275
                %v277 = vld [vmem:[%s229 + $0xb8] sm:$0xf]
                %278 = vst [vmem:[%s230 + $0x5c] sm:$0xf] %v277
                %v279 = vld [vmem:[%s229 + $0xc0] sm:$0xf]
                %280 = vst [vmem:[%s230 + $0x60] sm:$0xf] %v279
                %v281 = vld [vmem:[%s229 + $0xc8] sm:$0xf]
                %282 = vst [vmem:[%s230 + $0x64] sm:$0xf] %v281
                %v283 = vld [vmem:[%s229 + $0xd0] sm:$0xf]
                %284 = vst [vmem:[%s230 + $0x68] sm:$0xf] %v283
                %v285 = vld [vmem:[%s229 + $0xd8] sm:$0xf]
                %286 = vst [vmem:[%s230 + $0x6c] sm:$0xf] %v285
                %v287 = vld [vmem:[%s229 + $0xe0] sm:$0xf]
                %288 = vst [vmem:[%s230 + $0x70] sm:$0xf] %v287
                %v289 = vld [vmem:[%s229 + $0xe8] sm:$0xf]
                %290 = vst [vmem:[%s230 + $0x74] sm:$0xf] %v289
                %v291 = vld [vmem:[%s229 + $0xf0] sm:$0xf]
                %292 = vst [vmem:[%s230 + $0x78] sm:$0xf] %v291
                %v293 = vld [vmem:[%s229 + $0xf8] sm:$0xf]
                %294 = vst [vmem:[%s230 + $0x7c] sm:$0xf] %v293
                %v295 = vld [vmem:[%s229 + $0x100] sm:$0xf]
                %296 = vst [vmem:[%s230 + $0x80] sm:$0xf] %v295
                %v297 = vld [vmem:[%s229 + $0x108] sm:$0xf]
                %298 = vst [vmem:[%s230 + $0x84] sm:$0xf] %v297
                %v299 = vld [vmem:[%s229 + $0x110] sm:$0xf]
                %300 = vst [vmem:[%s230 + $0x88] sm:$0xf] %v299
                %v301 = vld [vmem:[%s229 + $0x118] sm:$0xf]
                %302 = vst [vmem:[%s230 + $0x8c] sm:$0xf] %v301
                %v303 = vld [vmem:[%s229 + $0x120] sm:$0xf]
                %304 = vst [vmem:[%s230 + $0x90] sm:$0xf] %v303
                %v305 = vld [vmem:[%s229 + $0x128] sm:$0xf]
                %306 = vst [vmem:[%s230 + $0x94] sm:$0xf] %v305
                %v307 = vld [vmem:[%s229 + $0x130] sm:$0xf]
                %308 = vst [vmem:[%s230 + $0x98] sm:$0xf] %v307
                %v309 = vld [vmem:[%s229 + $0x138] sm:$0xf]
                %310 = vst [vmem:[%s230 + $0x9c] sm:$0xf] %v309
                %v311 = vld [vmem:[%s229 + $0x140] sm:$0xf]
                %312 = vst [vmem:[%s230 + $0xa0] sm:$0xf] %v311
                %v313 = vld [vmem:[%s229 + $0x148] sm:$0xf]
                %314 = vst [vmem:[%s230 + $0xa4] sm:$0xf] %v313
                %v315 = vld [vmem:[%s229 + $0x150] sm:$0xf]
                %316 = vst [vmem:[%s230 + $0xa8] sm:$0xf] %v315
                %v317 = vld [vmem:[%s229 + $0x158] sm:$0xf]
                %318 = vst [vmem:[%s230 + $0xac] sm:$0xf] %v317
                %v319 = vld [vmem:[%s229 + $0x160] sm:$0xf]
                %320 = vst [vmem:[%s230 + $0xb0] sm:$0xf] %v319
                %v321 = vld [vmem:[%s229 + $0x168] sm:$0xf]
                %322 = vst [vmem:[%s230 + $0xb4] sm:$0xf] %v321
                %v323 = vld [vmem:[%s229 + $0x170] sm:$0xf]
                %324 = vst [vmem:[%s230 + $0xb8] sm:$0xf] %v323
                %v325 = vld [vmem:[%s229 + $0x178] sm:$0xf]
                %326 = vst [vmem:[%s230 + $0xbc] sm:$0xf] %v325
                %v327 = vld [vmem:[%s229 + $0x180] sm:$0xf]
                %328 = vst [vmem:[%s230 + $0xc0] sm:$0xf] %v327
                %v329 = vld [vmem:[%s229 + $0x188] sm:$0xf]
                %330 = vst [vmem:[%s230 + $0xc4] sm:$0xf] %v329
                %v331 = vld [vmem:[%s229 + $0x190] sm:$0xf]
                %332 = vst [vmem:[%s230 + $0xc8] sm:$0xf] %v331
                %v333 = vld [vmem:[%s229 + $0x198] sm:$0xf]
                %334 = vst [vmem:[%s230 + $0xcc] sm:$0xf] %v333
                %v335 = vld [vmem:[%s229 + $0x1a0] sm:$0xf]
                %336 = vst [vmem:[%s230 + $0xd0] sm:$0xf] %v335
                %v337 = vld [vmem:[%s229 + $0x1a8] sm:$0xf]
                %338 = vst [vmem:[%s230 + $0xd4] sm:$0xf] %v337
                %v339 = vld [vmem:[%s229 + $0x1b0] sm:$0xf]
                %340 = vst [vmem:[%s230 + $0xd8] sm:$0xf] %v339
                %v341 = vld [vmem:[%s229 + $0x1b8] sm:$0xf]
                %342 = vst [vmem:[%s230 + $0xdc] sm:$0xf] %v341
                %v343 = vld [vmem:[%s229 + $0x1c0] sm:$0xf]
                %344 = vst [vmem:[%s230 + $0xe0] sm:$0xf] %v343
                %v345 = vld [vmem:[%s229 + $0x1c8] sm:$0xf]
                %346 = vst [vmem:[%s230 + $0xe4] sm:$0xf] %v345
                %v347 = vld [vmem:[%s229 + $0x1d0] sm:$0xf]
                %348 = vst [vmem:[%s230 + $0xe8] sm:$0xf] %v347
                %v349 = vld [vmem:[%s229 + $0x1d8] sm:$0xf]
                %350 = vst [vmem:[%s230 + $0xec] sm:$0xf] %v349
                %v351 = vld [vmem:[%s229 + $0x1e0] sm:$0xf]
                %352 = vst [vmem:[%s230 + $0xf0] sm:$0xf] %v351
                %v353 = vld [vmem:[%s229 + $0x1e8] sm:$0xf]
                %354 = vst [vmem:[%s230 + $0xf4] sm:$0xf] %v353
                %v355 = vld [vmem:[%s229 + $0x1f0] sm:$0xf]
                %356 = vst [vmem:[%s230 + $0xf8] sm:$0xf] %v355
                %v357 = vld [vmem:[%s229 + $0x1f8] sm:$0xf]
                %358 = vst [vmem:[%s230 + $0xfc] sm:$0xf] %v357
              $region41: #{style_transfer_forward.58} parent=35 // loop_footer
                %s228 = sadd.s32 1, %s224
              $region42: #{style_transfer_forward.58} parent=35 // loop_footer_branch
                %223 = sbr.rel target = $region38
              $region43: #{style_transfer_forward.58} parent=35 // loop_exit
                _
            $region36: #{style_transfer_forward.58} parent=27 // pred_fallthru
              _
          $region28: #{style_transfer_forward.58} parent=23 // pred_fallthru
            _
          %506 = vnop
        $region24: #{style_transfer_forward.58} parent=19 // pred_fallthru
          _
      $region20: #{style_transfer_forward.58} parent=5 // pred_fallthru
        _
      %p507 = scmp.le.s32.totalorder 1, %s11
      %p508 = scmp.lt.s32.totalorder %s11, 3
      %p509 = pnand %p507, %p508
      %p510 = pneg %p509
      // Predicated region
      $region62: #{style_transfer_forward.58} parent=5 // pred_check
        _
      $region63: #{style_transfer_forward.58} parent=5 // pred_check_branch
        %512 = sbr.rel (%p509) target = $region65
      $region64: #{style_transfer_forward.58} parent=5 // pred_region
        %s513 = ssub.s32 %s11, 1
        %s514 = sand.u32 %s73, 1
        %s515 = sand.u32 %s73, 1
        %s516 = smul.addr %s515, 256
        %s517 = scalar_lea.vmem [#allocation3], %s516
        // Predicated region
        $region66: #{style_transfer_forward.58} parent=64 // pred_check
          %p518 = pneg %p86
        $region67: #{style_transfer_forward.58} parent=64 // pred_check_branch
          %520 = sbr.rel (%p518) target = $region69
        $region68: #{style_transfer_forward.58} parent=64 // pred_region
          _
        $region69: #{style_transfer_forward.58} parent=64 // pred_fallthru
          _
        %s521 = smul.u32 4, %s21
        %s522 = smul.u32 4, %s23
        %p523 = scmp.lt.s32.totalorder %s521, 3
        %s524 = scalar_select %p523, %s521, 3
        %p525 = scmp.lt.s32.totalorder %s522, 3
        %s526 = scalar_select %p525, %s522, 3
        %s527 = smul.addr %s524, 4
        %s528 = sadd.s32 %s526, %s527
        %s529 = smul.addr %s528, 4
        %s530 = scalar_lea.vmem %s0, %s529
        %p531 = pneg %p58
        %p532 = pneg %p55
        %s533 = sand.u32 %s73, 1
        %s534 = sand.u32 %s73, 1
        %s535 = smul.addr %s534, 256
        %s536 = scalar_lea.vmem [#allocation3], %s535
        %p537 = pneg %p86
        %p538 = pneg %p83
        %p539 = pneg %p114
        %p540 = pneg %p111
        %s541 = sand.u32 %s101, 1
        %s542 = sand.u32 %s101, 1
        %s543 = smul.addr %s542, 16
        %s544 = scalar_lea.vmem [#allocation4], %s543
        %p545 = pneg %p142
        %p546 = pneg %p139
        %p547 = scmp.lt.s32.totalorder %s21, 0
        %s548 = scalar_select %p547, %s21, 0
        %p549 = scmp.lt.s32.totalorder %s22, 1
        %s550 = scalar_select %p549, %s22, 1
        %s551 = smul.addr %s548, 2
        %s552 = sadd.s32 %s550, %s551
        %s553 = scalar_lea.vmem %s3, %s552
        %p554 = pneg %p170
        %p555 = pneg %p167
        %p556 = scmp.lt.s32.totalorder %s21, 0
        %s557 = scalar_select %p556, %s21, 0
        %p558 = scmp.lt.s32.totalorder %s22, 1
        %s559 = scalar_select %p558, %s22, 1
        %s560 = smul.addr %s557, 2
        %s561 = sadd.s32 %s559, %s560
        %s562 = scalar_lea.vmem %s4, %s561
        %s563 = smul.u32 4, %s21
        %s564 = smul.u32 4, %s23
        %p565 = scmp.lt.s32.totalorder %s563, 3
        %s566 = scalar_select %p565, %s563, 3
        %p567 = scmp.lt.s32.totalorder %s564, 3
        %s568 = scalar_select %p567, %s564, 3
        %s569 = smul.addr %s566, 4
        %s570 = sadd.s32 %s568, %s569
        %s571 = smul.addr %s570, 4
        %s572 = scalar_lea.vmem %s0, %s571
        %s573 = smul.u32 4, %s21
        %s574 = smul.u32 4, %s23
        %s575 = smul.u32 64, %s23
        %s576 = smul.u32 4, %s21
        %p577 = scmp.lt.s32.totalorder %s21, 0
        %s578 = scalar_select %p577, %s21, 0
        %p579 = scmp.lt.s32.totalorder %s22, 1
        %s580 = scalar_select %p579, %s22, 1
        %s581 = smul.addr %s578, 2
        %s582 = sadd.s32 %s580, %s581
        %s583 = scalar_lea.vmem %s3, %s582
        %p584 = scmp.lt.s32.totalorder %s21, 0
        %s585 = scalar_select %p584, %s21, 0
        %p586 = scmp.lt.s32.totalorder %s22, 1
        %s587 = scalar_select %p586, %s22, 1
        %s588 = smul.addr %s585, 2
        %s589 = sadd.s32 %s587, %s588
        %s590 = scalar_lea.vmem %s4, %s589
        %p592 = scmp.eq.s32.totalorder %s23, 0
        // Predicated region
        $region70: #{style_transfer_forward.58} parent=64 // pred_check
          %p593 = pneg %p592
        $region71: #{style_transfer_forward.58} parent=64 // pred_check_branch
          %595 = sbr.rel (%p593) target = $region73
        $region72: #{style_transfer_forward.58} parent=64 // pred_region
          %596 = vst [vmem:[#allocation2] sm:$0xff] 0.0
          %597 = vst [vmem:[#allocation2 + $0x8] sm:$0xff] 0.0
          %598 = vst [vmem:[#allocation2 + $0x10] sm:$0xff] 0.0
          %599 = vst [vmem:[#allocation2 + $0x18] sm:$0xff] 0.0
        $region73: #{style_transfer_forward.58} parent=64 // pred_fallthru
          _
        %v600 = vld [vmem:[#allocation2] sm:$0xff]
        %v601 = vld [vmem:[#allocation2 + $0x8] sm:$0xff]
        %v602 = vld [vmem:[#allocation2 + $0x10] sm:$0xff]
        %v603 = vld [vmem:[#allocation2 + $0x18] sm:$0xff]
        %v604 = vld [vmem:[%s572] sm:$0xff]
        %v605 = vld [vmem:[%s572 + $0x8] sm:$0xff]
        %v606 = vld [vmem:[%s572 + $0x10] sm:$0xff]
        %v607 = vld [vmem:[%s572 + $0x18] sm:$0xff]
        %v608 = vld [vmem:[%s572 + $0x20] sm:$0xff]
        %v609 = vld [vmem:[%s572 + $0x28] sm:$0xff]
        %v610 = vld [vmem:[%s572 + $0x30] sm:$0xff]
        %v611 = vld [vmem:[%s572 + $0x38] sm:$0xff]
        %v612 = vld [vmem:[%s517] sm:$0xf]
        %v613 = vld [vmem:[%s517 + $0x4] sm:$0xf]
        %v614 = vld [vmem:[%s517 + $0x8] sm:$0xf]
        %v615 = vld [vmem:[%s517 + $0xc] sm:$0xf]
        %v616 = vld [vmem:[%s517 + $0x10] sm:$0xf]
        %v617 = vld [vmem:[%s517 + $0x14] sm:$0xf]
        %v618 = vld [vmem:[%s517 + $0x18] sm:$0xf]
        %v619 = vld [vmem:[%s517 + $0x1c] sm:$0xf]
        %v620 = vld [vmem:[%s517 + $0x20] sm:$0xf]
        %v621 = vld [vmem:[%s517 + $0x24] sm:$0xf]
        %v622 = vld [vmem:[%s517 + $0x28] sm:$0xf]
        %v623 = vld [vmem:[%s517 + $0x2c] sm:$0xf]
        %v624 = vld [vmem:[%s517 + $0x30] sm:$0xf]
        %v625 = vld [vmem:[%s517 + $0x34] sm:$0xf]
        %v626 = vld [vmem:[%s517 + $0x38] sm:$0xf]
        %v627 = vld [vmem:[%s517 + $0x3c] sm:$0xf]
        %v628 = vld [vmem:[%s517 + $0x40] sm:$0xf]
        %v629 = vld [vmem:[%s517 + $0x44] sm:$0xf]
        %v630 = vld [vmem:[%s517 + $0x48] sm:$0xf]
        %v631 = vld [vmem:[%s517 + $0x4c] sm:$0xf]
        %v632 = vld [vmem:[%s517 + $0x50] sm:$0xf]
        %v633 = vld [vmem:[%s517 + $0x54] sm:$0xf]
        %v634 = vld [vmem:[%s517 + $0x58] sm:$0xf]
        %v635 = vld [vmem:[%s517 + $0x5c] sm:$0xf]
        %v636 = vld [vmem:[%s517 + $0x60] sm:$0xf]
        %v637 = vld [vmem:[%s517 + $0x64] sm:$0xf]
        %v638 = vld [vmem:[%s517 + $0x68] sm:$0xf]
        %v639 = vld [vmem:[%s517 + $0x6c] sm:$0xf]
        %v640 = vld [vmem:[%s517 + $0x70] sm:$0xf]
        %v641 = vld [vmem:[%s517 + $0x74] sm:$0xf]
        %v642 = vld [vmem:[%s517 + $0x78] sm:$0xf]
        %v643 = vld [vmem:[%s517 + $0x7c] sm:$0xf]
        %v644 = vld [vmem:[%s517 + $0x80] sm:$0xf]
        %v645 = vld [vmem:[%s517 + $0x84] sm:$0xf]
        %v646 = vld [vmem:[%s517 + $0x88] sm:$0xf]
        %v647 = vld [vmem:[%s517 + $0x8c] sm:$0xf]
        %v648 = vld [vmem:[%s517 + $0x90] sm:$0xf]
        %v649 = vld [vmem:[%s517 + $0x94] sm:$0xf]
        %v650 = vld [vmem:[%s517 + $0x98] sm:$0xf]
        %v651 = vld [vmem:[%s517 + $0x9c] sm:$0xf]
        %v652 = vld [vmem:[%s517 + $0xa0] sm:$0xf]
        %v653 = vld [vmem:[%s517 + $0xa4] sm:$0xf]
        %v654 = vld [vmem:[%s517 + $0xa8] sm:$0xf]
        %v655 = vld [vmem:[%s517 + $0xac] sm:$0xf]
        %v656 = vld [vmem:[%s517 + $0xb0] sm:$0xf]
        %v657 = vld [vmem:[%s517 + $0xb4] sm:$0xf]
        %v658 = vld [vmem:[%s517 + $0xb8] sm:$0xf]
        %v659 = vld [vmem:[%s517 + $0xbc] sm:$0xf]
        %v660 = vld [vmem:[%s517 + $0xc0] sm:$0xf]
        %v661 = vld [vmem:[%s517 + $0xc4] sm:$0xf]
        %v662 = vld [vmem:[%s517 + $0xc8] sm:$0xf]
        %v663 = vld [vmem:[%s517 + $0xcc] sm:$0xf]
        %v664 = vld [vmem:[%s517 + $0xd0] sm:$0xf]
        %v665 = vld [vmem:[%s517 + $0xd4] sm:$0xf]
        %v666 = vld [vmem:[%s517 + $0xd8] sm:$0xf]
        %v667 = vld [vmem:[%s517 + $0xdc] sm:$0xf]
        %v668 = vld [vmem:[%s517 + $0xe0] sm:$0xf]
        %v669 = vld [vmem:[%s517 + $0xe4] sm:$0xf]
        %v670 = vld [vmem:[%s517 + $0xe8] sm:$0xf]
        %v671 = vld [vmem:[%s517 + $0xec] sm:$0xf]
        %v672 = vld [vmem:[%s517 + $0xf0] sm:$0xf]
        %v673 = vld [vmem:[%s517 + $0xf4] sm:$0xf]
        %v674 = vld [vmem:[%s517 + $0xf8] sm:$0xf]
        %v675 = vld [vmem:[%s517 + $0xfc] sm:$0xf]
        %v684 = vunpack.c.l.b16 %v604
        %v685 = vunpack.c.h.b16 %v604
        %v686 = vunpack.c.l.b16 %v605
        %v687 = vunpack.c.h.b16 %v605
        %v688 = vunpack.c.l.b16 %v606
        %v689 = vunpack.c.h.b16 %v606
        %v690 = vunpack.c.l.b16 %v607
        %v691 = vunpack.c.h.b16 %v607
        %v692 = vunpack.c.l.b16 %v608
        %v693 = vunpack.c.h.b16 %v608
        %v694 = vunpack.c.l.b16 %v609
        %v695 = vunpack.c.h.b16 %v609
        %v696 = vunpack.c.l.b16 %v610
        %v697 = vunpack.c.h.b16 %v610
        %v698 = vunpack.c.l.b16 %v611
        %v699 = vunpack.c.h.b16 %v611
        %v700 = vpack.c.b16 %v688, %v684
        %v701 = vpack.c.b16 %v689, %v685
        %v702 = vpack.c.b16 %v690, %v686
        %v703 = vpack.c.b16 %v691, %v687
        %v704 = vpack.c.b16 %v696, %v692
        %v705 = vpack.c.b16 %v697, %v693
        %v706 = vpack.c.b16 %v698, %v694
        %v707 = vpack.c.b16 %v699, %v695
        %v780 = vunpack.c.l.b16 %v612
        %v781 = vunpack.c.l.b16 %v613
        %v782 = vunpack.c.l.b16 %v614
        %v783 = vunpack.c.l.b16 %v615
        %v784 = vunpack.c.l.b16 %v616
        %v785 = vunpack.c.l.b16 %v617
        %v786 = vunpack.c.l.b16 %v618
        %v787 = vunpack.c.l.b16 %v619
        %v788 = vunpack.c.l.b16 %v620
        %v789 = vunpack.c.l.b16 %v621
        %v790 = vunpack.c.l.b16 %v622
        %v791 = vunpack.c.l.b16 %v623
        %v792 = vunpack.c.l.b16 %v624
        %v793 = vunpack.c.l.b16 %v625
        %v794 = vunpack.c.l.b16 %v626
        %v795 = vunpack.c.l.b16 %v627
        %v796 = vunpack.c.l.b16 %v628
        %v797 = vunpack.c.l.b16 %v629
        %v798 = vunpack.c.l.b16 %v630
        %v799 = vunpack.c.l.b16 %v631
        %v800 = vunpack.c.l.b16 %v632
        %v801 = vunpack.c.l.b16 %v633
        %v802 = vunpack.c.l.b16 %v634
        %v803 = vunpack.c.l.b16 %v635
        %v804 = vunpack.c.l.b16 %v636
        %v805 = vunpack.c.l.b16 %v637
        %v806 = vunpack.c.l.b16 %v638
        %v807 = vunpack.c.l.b16 %v639
        %v808 = vunpack.c.l.b16 %v640
        %v809 = vunpack.c.l.b16 %v641
        %v810 = vunpack.c.l.b16 %v642
        %v811 = vunpack.c.l.b16 %v643
        %v812 = vunpack.c.l.b16 %v644
        %v813 = vunpack.c.l.b16 %v645
        %v814 = vunpack.c.l.b16 %v646
        %v815 = vunpack.c.l.b16 %v647
        %v816 = vunpack.c.l.b16 %v648
        %v817 = vunpack.c.l.b16 %v649
        %v818 = vunpack.c.l.b16 %v650
        %v819 = vunpack.c.l.b16 %v651
        %v820 = vunpack.c.l.b16 %v652
        %v821 = vunpack.c.l.b16 %v653
        %v822 = vunpack.c.l.b16 %v654
        %v823 = vunpack.c.l.b16 %v655
        %v824 = vunpack.c.l.b16 %v656
        %v825 = vunpack.c.l.b16 %v657
        %v826 = vunpack.c.l.b16 %v658
        %v827 = vunpack.c.l.b16 %v659
        %v828 = vunpack.c.l.b16 %v660
        %v829 = vunpack.c.l.b16 %v661
        %v830 = vunpack.c.l.b16 %v662
        %v831 = vunpack.c.l.b16 %v663
        %v832 = vunpack.c.l.b16 %v664
        %v833 = vunpack.c.l.b16 %v665
        %v834 = vunpack.c.l.b16 %v666
        %v835 = vunpack.c.l.b16 %v667
        %v836 = vunpack.c.l.b16 %v668
        %v837 = vunpack.c.l.b16 %v669
        %v838 = vunpack.c.l.b16 %v670
        %v839 = vunpack.c.l.b16 %v671
        %v840 = vunpack.c.l.b16 %v672
        %v841 = vunpack.c.l.b16 %v673
        %v842 = vunpack.c.l.b16 %v674
        %v843 = vunpack.c.l.b16 %v675
        %v844 = vpack.c.b16 %v781, %v780
        %v845 = vpack.c.b16 %v783, %v782
        %v846 = vpack.c.b16 %v785, %v784
        %v847 = vpack.c.b16 %v787, %v786
        %v848 = vpack.c.b16 %v789, %v788
        %v849 = vpack.c.b16 %v791, %v790
        %v850 = vpack.c.b16 %v793, %v792
        %v851 = vpack.c.b16 %v795, %v794
        %v852 = vpack.c.b16 %v797, %v796
        %v853 = vpack.c.b16 %v799, %v798
        %v854 = vpack.c.b16 %v801, %v800
        %v855 = vpack.c.b16 %v803, %v802
        %v856 = vpack.c.b16 %v805, %v804
        %v857 = vpack.c.b16 %v807, %v806
        %v858 = vpack.c.b16 %v809, %v808
        %v859 = vpack.c.b16 %v811, %v810
        %v860 = vpack.c.b16 %v813, %v812
        %v861 = vpack.c.b16 %v815, %v814
        %v862 = vpack.c.b16 %v817, %v816
        %v863 = vpack.c.b16 %v819, %v818
        %v864 = vpack.c.b16 %v821, %v820
        %v865 = vpack.c.b16 %v823, %v822
        %v866 = vpack.c.b16 %v825, %v824
        %v867 = vpack.c.b16 %v827, %v826
        %v868 = vpack.c.b16 %v829, %v828
        %v869 = vpack.c.b16 %v831, %v830
        %v870 = vpack.c.b16 %v833, %v832
        %v871 = vpack.c.b16 %v835, %v834
        %v872 = vpack.c.b16 %v837, %v836
        %v873 = vpack.c.b16 %v839, %v838
        %v874 = vpack.c.b16 %v841, %v840
        %v875 = vpack.c.b16 %v843, %v842
        %908 = vmatprep.subr.bf16.mxu0 0
        %909 = vmatpush1.bf16.msra.mxu0 %v844
        %910 = vmatprep.subr.bf16.mxu0 0
        %911 = vmatpush1.bf16.msra.mxu0 %v845
        %912 = vmatprep.subr.bf16.mxu0 0
        %913 = vmatpush1.bf16.msra.mxu0 %v846
        %914 = vmatprep.subr.bf16.mxu0 0
        %915 = vmatpush1.bf16.msra.mxu0 %v847
        %916 = vmatprep.subr.bf16.mxu0 0
        %917 = vmatpush1.bf16.msra.mxu0 %v848
        %918 = vmatprep.subr.bf16.mxu0 0
        %919 = vmatpush1.bf16.msra.mxu0 %v849
        %920 = vmatprep.subr.bf16.mxu0 0
        %921 = vmatpush1.bf16.msra.mxu0 %v850
        %922 = vmatprep.subr.bf16.mxu0 0
        %923 = vmatpush1.bf16.msra.mxu0 %v851
        %924 = vmatprep.subr.bf16.mxu0 0
        %925 = vmatpush1.bf16.msra.mxu0 %v852
        %926 = vmatprep.subr.bf16.mxu0 0
        %927 = vmatpush1.bf16.msra.mxu0 %v853
        %928 = vmatprep.subr.bf16.mxu0 0
        %929 = vmatpush1.bf16.msra.mxu0 %v854
        %930 = vmatprep.subr.bf16.mxu0 0
        %931 = vmatpush1.bf16.msra.mxu0 %v855
        %932 = vmatprep.subr.bf16.mxu0 0
        %933 = vmatpush1.bf16.msra.mxu0 %v856
        %934 = vmatprep.subr.bf16.mxu0 0
        %935 = vmatpush1.bf16.msra.mxu0 %v857
        %936 = vmatprep.subr.bf16.mxu0 0
        %937 = vmatpush1.bf16.msra.mxu0 %v858
        %938 = vmatprep.subr.bf16.mxu0 0
        %939 = vmatpush1.bf16.msra.mxu0 %v859
        %940 = vmatprep.mubr.bf16.mxu0 %v701
        %941 = vmatmul.mubr.bf16.gmra.mrb[0].mxu0 %v700
        %v942 = vpop.f32.mrb[0].mxu0
        %v943 = vadd.f32 0.0, %v942
        %v944 = vpop.f32.mrb[0].mxu0
        %v945 = vpop.f32.mrb[0].mxu0
        %v946 = vadd.f32 0.0, %v945
        %v947 = vpop.f32.mrb[0].mxu0
        %948 = vmatprep.mubr.bf16.mxu0 %v705
        %949 = vmatmul.mubr.bf16.gmra.mrb[0].mxu0 %v704
        %v950 = vpop.f32.mrb[0].mxu0
        %v951 = vadd.f32 0.0, %v950
        %v952 = vpop.f32.mrb[0].mxu0
        %v953 = vpop.f32.mrb[0].mxu0
        %v954 = vadd.f32 0.0, %v953
        %v955 = vpop.f32.mrb[0].mxu0
        %956 = vdwg.mxu0
        %957 = vmatprep.subr.bf16.mxu0 0
        %958 = vmatpush1.bf16.msra.mxu0 %v860
        %959 = vmatprep.subr.bf16.mxu0 0
        %960 = vmatpush1.bf16.msra.mxu0 %v861
        %961 = vmatprep.subr.bf16.mxu0 0
        %962 = vmatpush1.bf16.msra.mxu0 %v862
        %963 = vmatprep.subr.bf16.mxu0 0
        %964 = vmatpush1.bf16.msra.mxu0 %v863
        %965 = vmatprep.subr.bf16.mxu0 0
        %966 = vmatpush1.bf16.msra.mxu0 %v864
        %967 = vmatprep.subr.bf16.mxu0 0
        %968 = vmatpush1.bf16.msra.mxu0 %v865
        %969 = vmatprep.subr.bf16.mxu0 0
        %970 = vmatpush1.bf16.msra.mxu0 %v866
        %971 = vmatprep.subr.bf16.mxu0 0
        %972 = vmatpush1.bf16.msra.mxu0 %v867
        %973 = vmatprep.subr.bf16.mxu0 0
        %974 = vmatpush1.bf16.msra.mxu0 %v868
        %975 = vmatprep.subr.bf16.mxu0 0
        %976 = vmatpush1.bf16.msra.mxu0 %v869
        %977 = vmatprep.subr.bf16.mxu0 0
        %978 = vmatpush1.bf16.msra.mxu0 %v870
        %979 = vmatprep.subr.bf16.mxu0 0
        %980 = vmatpush1.bf16.msra.mxu0 %v871
        %981 = vmatprep.subr.bf16.mxu0 0
        %982 = vmatpush1.bf16.msra.mxu0 %v872
        %983 = vmatprep.subr.bf16.mxu0 0
        %984 = vmatpush1.bf16.msra.mxu0 %v873
        %985 = vmatprep.subr.bf16.mxu0 0
        %986 = vmatpush1.bf16.msra.mxu0 %v874
        %987 = vmatprep.subr.bf16.mxu0 0
        %988 = vmatpush1.bf16.msra.mxu0 %v875
        %989 = vmatprep.mubr.bf16.mxu0 %v703
        %990 = vmatmul.mubr.bf16.gmra.mrb[0].mxu0 %v702
        %v991 = vpop.f32.mrb[0].mxu0
        %v992 = vadd.f32 %v943, %v991
        %v993 = vpop.f32.mrb[0].mxu0
        %v994 = vpop.f32.mrb[0].mxu0
        %v995 = vadd.f32 %v946, %v994
        %v996 = vpop.f32.mrb[0].mxu0
        %997 = vmatprep.mubr.bf16.mxu0 %v707
        %998 = vmatmul.mubr.bf16.gmra.mrb[0].mxu0 %v706
        %v999 = vpop.f32.mrb[0].mxu0
        %v1000 = vadd.f32 %v951, %v999
        %v1001 = vpop.f32.mrb[0].mxu0
        %v1002 = vpop.f32.mrb[0].mxu0
        %v1003 = vadd.f32 %v954, %v1002
        %v1004 = vpop.f32.mrb[0].mxu0
        %1005 = vdwg.mxu0
        %v1006 = vadd.f32 %v600, %v992
        %v1007 = vadd.f32 %v601, %v995
        %v1008 = vadd.f32 %v602, %v1000
        %v1009 = vadd.f32 %v603, %v1003
        %1010 = vst [vmem:[#allocation2] sm:$0xff] %v1006
        %1011 = vst [vmem:[#allocation2 + $0x8] sm:$0xff] %v1007
        %1012 = vst [vmem:[#allocation2 + $0x10] sm:$0xff] %v1008
        %1013 = vst [vmem:[#allocation2 + $0x18] sm:$0xff] %v1009
        // Predicated region
        $region74: #{style_transfer_forward.58} parent=64 // pred_check
          %p1014 = pneg %p592
        $region75: #{style_transfer_forward.58} parent=64 // pred_check_branch
          %1016 = sbr.rel (%p1014) target = $region77
        $region76: #{style_transfer_forward.58} parent=64 // pred_region
          %v1017 = vld [vmem:[#allocation2] sm:$0xff]
          %v1018 = vld [vmem:[#allocation2 + $0x8] sm:$0xff]
          %v1019 = vld [vmem:[#allocation2 + $0x10] sm:$0xff]
          %v1020 = vld [vmem:[#allocation2 + $0x18] sm:$0xff]
          %v1021 = vpack.c.bf16 %v1018, %v1017
          %v1022 = vpack.c.bf16 %v1020, %v1019
          %v1025 = vunpack.c.l.b16 %v1021
          %v1026 = vunpack.c.h.b16 %v1021
          %v1027 = vunpack.c.l.b16 %v1022
          %v1028 = vunpack.c.h.b16 %v1022
          %v1029 = vpack.c.b16 %v1025, %v1025
          %v1030 = vpack.c.b16 %v1026, %v1026
          %v1031 = vpack.c.b16 %v1027, %v1027
          %v1032 = vpack.c.b16 %v1028, %v1028
          %1037 = vst [vmem:[%s544] sm:$0xf] %v1029
          %1038 = vst [vmem:[%s544 + $0x4] sm:$0xf] %v1030
          %1039 = vst [vmem:[%s544 + $0x8] sm:$0xf] %v1031
          %1040 = vst [vmem:[%s544 + $0xc] sm:$0xf] %v1032
          %v1041 = vadd.f32 %v1017, %v1018
          %v1042 = vadd.f32 %v1041, %v1019
          %v1043 = vadd.f32 %v1042, %v1020
          %v1044 = vrot.slane %v1043, 4
          %v1045 = vadd.f32 %v1043, %v1044
          %v1046 = vrot.slane %v1045, 2
          %v1047 = vadd.f32 %v1045, %v1046
          %v1048 = vrot.slane %v1047, 1
          %v1049 = vadd.f32 %v1047, %v1048
          %1050 = vst [vmem:[%s583] sm:$0x1] %v1049
          %v1051 = vmul.f32 %v1017, %v1017
          %v1052 = vmul.f32 %v1018, %v1018
          %v1053 = vmul.f32 %v1019, %v1019
          %v1054 = vmul.f32 %v1020, %v1020
          %v1055 = vadd.f32 %v1051, %v1052
          %v1056 = vadd.f32 %v1055, %v1053
          %v1057 = vadd.f32 %v1056, %v1054
          %v1058 = vrot.slane %v1057, 4
          %v1059 = vadd.f32 %v1057, %v1058
          %v1060 = vrot.slane %v1059, 2
          %v1061 = vadd.f32 %v1059, %v1060
          %v1062 = vrot.slane %v1061, 1
          %v1063 = vadd.f32 %v1061, %v1062
          %1064 = vst [vmem:[%s590] sm:$0x1] %v1063
        $region77: #{style_transfer_forward.58} parent=64 // pred_fallthru
          _
        %s1065 = sand.u32 %s101, 1
        %s1066 = sand.u32 %s101, 1
        %s1067 = smul.addr %s1066, 16
        %s1068 = scalar_lea.vmem [#allocation4], %s1067
        %p1069 = scmp.lt.s32.totalorder %s21, 0
        %s1070 = scalar_select %p1069, %s21, 0
        %p1071 = scmp.lt.s32.totalorder %s22, 1
        %s1072 = scalar_select %p1071, %s22, 1
        %s1073 = smul.addr %s1070, 2
        %s1074 = sadd.s32 %s1072, %s1073
        %s1075 = scalar_lea.vmem %s3, %s1074
        %p1076 = scmp.lt.s32.totalorder %s21, 0
        %s1077 = scalar_select %p1076, %s21, 0
        %p1078 = scmp.lt.s32.totalorder %s22, 1
        %s1079 = scalar_select %p1078, %s22, 1
        %s1080 = smul.addr %s1077, 2
        %s1081 = sadd.s32 %s1079, %s1080
        %s1082 = scalar_lea.vmem %s4, %s1081
        // Predicated region
        $region78: #{style_transfer_forward.58} parent=64 // pred_check
          %p1083 = pneg %p111
        $region79: #{style_transfer_forward.58} parent=64 // pred_check_branch
          %1085 = sbr.rel (%p1083) target = $region81
        $region80: #{style_transfer_forward.58} parent=64 // pred_region
          %s1086 = smul.u32 4, %s21
          %s1087 = smul.addr %s1086, 2
          %s1088 = sadd.s32 %s22, %s1087
          %s1089 = smul.addr %s1088, 4
          %s1090 = scalar_lea.vmem %s2, %s1089
          // Predicated region
          $region82: #{style_transfer_forward.58} parent=80 // pred_check
            _
          $region83: #{style_transfer_forward.58} parent=80 // pred_check_branch
            %1092 = sbr.rel (0) target = $region85
          $region84: #{style_transfer_forward.58} parent=80 // pred_region
            // Predicated region
            $region86: #{style_transfer_forward.58} parent=84 // pred_check
              _
            $region87: #{style_transfer_forward.58} parent=84 // pred_check_branch
              %1094 = sbr.rel target = $region89
            $region88: #{style_transfer_forward.58} parent=84 // pred_region
              // Predicated region
              $region101: #{style_transfer_forward.58} parent=88 // pred_check
                _
              $region102: #{style_transfer_forward.58} parent=88 // pred_check_branch
                %1115 = sbr.rel (0) target = $region104
              $region103: #{style_transfer_forward.58} parent=88 // pred_region
                loop: start=0, step=1, limit=1
                $region105: #{style_transfer_forward.58} parent=103 // loop_pre_header
                  _
                $region106: #{style_transfer_forward.58} parent=103 // loop_header
                  %s1117 = sphi 0, %s1121
                  %p1118 = scmp.ge.s32.totalorder %s1117, 1
                  %s1122 = sphi %s1068, %s1068
                  %s1123 = sphi %s1090, %s1090
                $region107: #{style_transfer_forward.58} parent=103 // loop_header_branch
                  %1120 = sbr.rel (%p1118) target = $region111
                $region108: #{style_transfer_forward.58} parent=103 // loop_body
                  _
                $region109: #{style_transfer_forward.58} parent=103 // loop_footer
                  %s1121 = sadd.s32 1, %s1117
                $region110: #{style_transfer_forward.58} parent=103 // loop_footer_branch
                  %1116 = sbr.rel target = $region106
                $region111: #{style_transfer_forward.58} parent=103 // loop_exit
                  _
                loop: start=0, step=1, limit=1
                $region112: #{style_transfer_forward.58} parent=103 // loop_pre_header
                  _
                $region113: #{style_transfer_forward.58} parent=103 // loop_header
                  %s1126 = sphi 0, %s1130
                  %p1127 = scmp.ge.s32.totalorder %s1126, 1
                  %s1131 = sphi %s1068, %s1068
                  %s1132 = sphi %s1090, %s1090
                $region114: #{style_transfer_forward.58} parent=103 // loop_header_branch
                  %1129 = sbr.rel (%p1127) target = $region118
                $region115: #{style_transfer_forward.58} parent=103 // loop_body
                  %v1133 = vld [vmem:[%s1131] sm:$0xf]
                  %1134 = vst [vmem:[%s1132] sm:$0xf] %v1133
                  %v1135 = vld [vmem:[%s1131 + $0x4] sm:$0xf]
                  %1136 = vst [vmem:[%s1132 + $0x8] sm:$0xf] %v1135
                  %v1137 = vld [vmem:[%s1131 + $0x8] sm:$0xf]
                  %1138 = vst [vmem:[%s1132 + $0x10] sm:$0xf] %v1137
                  %v1139 = vld [vmem:[%s1131 + $0xc] sm:$0xf]
                  %1140 = vst [vmem:[%s1132 + $0x18] sm:$0xf] %v1139
                $region116: #{style_transfer_forward.58} parent=103 // loop_footer
                  %s1130 = sadd.s32 1, %s1126
                $region117: #{style_transfer_forward.58} parent=103 // loop_footer_branch
                  %1125 = sbr.rel target = $region113
                $region118: #{style_transfer_forward.58} parent=103 // loop_exit
                  _
              $region104: #{style_transfer_forward.58} parent=88 // pred_fallthru
                _
            $region89: #{style_transfer_forward.58} parent=84 // pred_fallthru
              _
            // Predicated region
            $region90: #{style_transfer_forward.58} parent=84 // pred_check
              _
            $region91: #{style_transfer_forward.58} parent=84 // pred_check_branch
              %1096 = sbr.rel (0) target = $region93
            $region92: #{style_transfer_forward.58} parent=84 // pred_region
              loop: start=0, step=1, limit=1
              $region94: #{style_transfer_forward.58} parent=92 // loop_pre_header
                _
              $region95: #{style_transfer_forward.58} parent=92 // loop_header
                %s1099 = sphi 0, %s1103
                %p1100 = scmp.ge.s32.totalorder %s1099, 1
                %s1104 = sphi %s1068, %s1068
                %s1105 = sphi %s1090, %s1090
              $region96: #{style_transfer_forward.58} parent=92 // loop_header_branch
                %1102 = sbr.rel (%p1100) target = $region100
              $region97: #{style_transfer_forward.58} parent=92 // loop_body
                %v1106 = vld [vmem:[%s1104] sm:$0xf]
                %1107 = vst [vmem:[%s1105] sm:$0xf] %v1106
                %v1108 = vld [vmem:[%s1104 + $0x4] sm:$0xf]
                %1109 = vst [vmem:[%s1105 + $0x8] sm:$0xf] %v1108
                %v1110 = vld [vmem:[%s1104 + $0x8] sm:$0xf]
                %1111 = vst [vmem:[%s1105 + $0x10] sm:$0xf] %v1110
                %v1112 = vld [vmem:[%s1104 + $0xc] sm:$0xf]
                %1113 = vst [vmem:[%s1105 + $0x18] sm:$0xf] %v1112
              $region98: #{style_transfer_forward.58} parent=92 // loop_footer
                %s1103 = sadd.s32 1, %s1099
              $region99: #{style_transfer_forward.58} parent=92 // loop_footer_branch
                %1098 = sbr.rel target = $region95
              $region100: #{style_transfer_forward.58} parent=92 // loop_exit
                _
            $region93: #{style_transfer_forward.58} parent=84 // pred_fallthru
              _
          $region85: #{style_transfer_forward.58} parent=80 // pred_fallthru
            _
          %1141 = vnop
        $region81: #{style_transfer_forward.58} parent=64 // pred_fallthru
          _
        // Predicated region
        $region119: #{style_transfer_forward.58} parent=64 // pred_check
          %p1142 = pneg %p139
        $region120: #{style_transfer_forward.58} parent=64 // pred_check_branch
          %1144 = sbr.rel (%p1142) target = $region122
        $region121: #{style_transfer_forward.58} parent=64 // pred_region
          _
        $region122: #{style_transfer_forward.58} parent=64 // pred_fallthru
          _
        // Predicated region
        $region123: #{style_transfer_forward.58} parent=64 // pred_check
          %p1145 = pneg %p167
        $region124: #{style_transfer_forward.58} parent=64 // pred_check_branch
          %1147 = sbr.rel (%p1145) target = $region126
        $region125: #{style_transfer_forward.58} parent=64 // pred_region
          _
        $region126: #{style_transfer_forward.58} parent=64 // pred_fallthru
          _
      $region65: #{style_transfer_forward.58} parent=5 // pred_fallthru
        _
      %p1148 = scmp.le.s32.totalorder 2, %s11
      // Predicated region
      $region127: #{style_transfer_forward.58} parent=5 // pred_check
        %p1149 = pneg %p1148
      $region128: #{style_transfer_forward.58} parent=5 // pred_check_branch
        %1151 = sbr.rel (%p1149) target = $region130
      $region129: #{style_transfer_forward.58} parent=5 // pred_region
        %s1152 = ssub.s32 %s11, 2
        // Predicated region
        $region131: #{style_transfer_forward.58} parent=129 // pred_check
          %p1153 = pneg %p117
        $region132: #{style_transfer_forward.58} parent=129 // pred_check_branch
          %1155 = sbr.rel (%p1153) target = $region134
        $region133: #{style_transfer_forward.58} parent=129 // pred_region
          %s1156 = sand.u32 %s102, 1
          %s1157 = sand.u32 %s102, 1
          %s1158 = smul.addr %s1157, 16
          %s1159 = scalar_lea.vmem [#allocation4], %s1158
        $region134: #{style_transfer_forward.58} parent=129 // pred_fallthru
          _
        // Predicated region
        $region135: #{style_transfer_forward.58} parent=129 // pred_check
          %p1160 = pneg %p145
        $region136: #{style_transfer_forward.58} parent=129 // pred_check_branch
          %1162 = sbr.rel (%p1160) target = $region138
        $region137: #{style_transfer_forward.58} parent=129 // pred_region
          %p1163 = scmp.lt.s32.totalorder %s24, 0
          %s1164 = scalar_select %p1163, %s24, 0
          %p1165 = scmp.lt.s32.totalorder %s25, 1
          %s1166 = scalar_select %p1165, %s25, 1
          %s1167 = smul.addr %s1164, 2
          %s1168 = sadd.s32 %s1166, %s1167
          %s1169 = scalar_lea.vmem %s3, %s1168
        $region138: #{style_transfer_forward.58} parent=129 // pred_fallthru
          _
        // Predicated region
        $region139: #{style_transfer_forward.58} parent=129 // pred_check
          %p1170 = pneg %p173
        $region140: #{style_transfer_forward.58} parent=129 // pred_check_branch
          %1172 = sbr.rel (%p1170) target = $region142
        $region141: #{style_transfer_forward.58} parent=129 // pred_region
          %p1173 = scmp.lt.s32.totalorder %s24, 0
          %s1174 = scalar_select %p1173, %s24, 0
          %p1175 = scmp.lt.s32.totalorder %s25, 1
          %s1176 = scalar_select %p1175, %s25, 1
          %s1177 = smul.addr %s1174, 2
          %s1178 = sadd.s32 %s1176, %s1177
          %s1179 = scalar_lea.vmem %s4, %s1178
        $region142: #{style_transfer_forward.58} parent=129 // pred_fallthru
          _
      $region130: #{style_transfer_forward.58} parent=5 // pred_fallthru
        _
    $region6: #{style_transfer_forward.58} parent=1 // loop_footer
      %s15 = sadd.s32 1, %s11
    $region7: #{style_transfer_forward.58} parent=1 // loop_footer_branch
      %10 = sbr.rel target = $region3
    $region8: #{style_transfer_forward.58} parent=1 // loop_exit
      _

// kernel: style_transfer_forward.59
$region0: #{style_transfer_forward.59}
  #allocation0 [shape = 'u32[]', space=smem, size = 0x4, offset = 0x4, fixed_abs, tag = 'smem constant byte address 0x4 - core index']
  #allocation1 [shape = 'u32[144,128]{1,0:T(1,128)}', space=vmem, size = 0x12000, scoped, tag = 'internal scratch']
  %s0 = inlined_call_operand.vmem [shape: bf16[32,256], index: 0, kind: input, shape index: {}]
  %s1 = inlined_call_operand.vmem [shape: f32[1,256], index: 1, kind: input, shape index: {}]
  %s2 = inlined_call_operand.vmem [shape: f32[1,256], index: 2, kind: input, shape index: {}]
  %s3 = inlined_call_operand.vmem [shape: bf16[32,256], index: 3, kind: output, shape index: {}]
  %s4 = sld [smem:[#allocation0]]
  $region123: #{style_transfer_forward.59} parent=0
    _
  %s6 = ssub.s32 1, %s4
  %s7 = scalar_select 0, %s6, %s4
  $region1: #{style_transfer_forward.59} parent=0
    #allocation2 [shape = 'u8[16384]{0}', space=vmem, size = 0x4000, scoped, tag = 'input window, operand 0']
    #allocation3 [shape = 'u8[16384]{0}', space=vmem, size = 0x4000, scoped, tag = 'output window, operand 0']
    loop: start=0, step=1, limit=4
    $region2: #{style_transfer_forward.59} parent=1 // loop_pre_header
      _
    $region3: #{style_transfer_forward.59} parent=1 // loop_header
      %s9 = sphi 0, %s13
      %p10 = scmp.ge.s32.totalorder %s9, 4
      %s16 = sphi 0, %s28
      %s17 = sphi 0, %s24
      %s18 = sphi 0, %s16
      %s19 = sphi 0, %s17
      %s20 = sphi 0, %s18
      %s21 = sphi 0, %s19
      %s33 = sphi 0, %s35
      %s36 = sphi 0, %s33
      %s37 = sphi 0, %s36
      %s53 = sphi 0, %s37
      %s59 = sphi 0, %s61
      %s62 = sphi 0, %s59
      %s63 = sphi 0, %s62
      %s79 = sphi 0, %s63
      %s85 = sphi 0, %s87
      %s88 = sphi 0, %s85
      %s89 = sphi 0, %s88
      %s105 = sphi 0, %s89
      %s113 = sphi 0, %s115
      %s116 = sphi 0, %s113
      %s117 = sphi 0, %s116
      %s133 = sphi 0, %s117
    $region4: #{style_transfer_forward.59} parent=1 // loop_header_branch
      %12 = sbr.rel (%p10) target = $region8
    $region5: #{style_transfer_forward.59} parent=1 // loop_body
      %s14 = ssub.s32 %s9, 1
      %s15 = ssub.s32 %s9, 2
      %s22 = sadd.s32 1, %s17
      %p23 = scmp.ge.s32.totalorder %s22, 2
      %s24 = scalar_select %p23, 0, %s22
      %s25 = sadd.s32 1, %s16
      %s26 = scalar_select %p23, %s25, %s16
      %p27 = scmp.ge.s32.totalorder %s26, 1
      %s28 = scalar_select %p27, 0, %s26
      %s29 = ssub.s32 %s16, %s28
      %s30 = ssub.s32 %s17, %s24
      %s31 = sor.u32 %s29, %s30
      %p32 = scmp.eq.s32.totalorder %s31, 0
      %s34 = sadd.s32 %s33, 1
      %s35 = scalar_select %p32, %s33, %s34
      %p38 = pneg %p32
      %p39 = scmp.eq.s32.totalorder %s9, 1
      %p40 = por %p38, %p39
      %p41 = scmp.ne.s32.totalorder %s33, %s36
      %p42 = scmp.eq.s32.totalorder %s9, 0
      %p43 = por %p41, %p42
      %p44 = scmp.ne.s32.totalorder %s33, %s36
      %p45 = scmp.eq.s32.totalorder %s14, 1
      %p46 = por %p44, %p45
      %p47 = scmp.ne.s32.totalorder %s36, %s37
      %p48 = scmp.eq.s32.totalorder %s14, 0
      %p49 = por %p47, %p48
      %p50 = scmp.ne.s32.totalorder %s36, %s37
      %p51 = scmp.eq.s32.totalorder %s15, 1
      %p52 = por %p50, %p51
      %p54 = scmp.ne.s32.totalorder %s37, %s53
      %p55 = scmp.eq.s32.totalorder %s15, 0
      %p56 = por %p54, %p55
      %s57 = ssub.s32 %s17, %s24
      %p58 = scmp.eq.s32.totalorder %s57, 0
      %s60 = sadd.s32 %s59, 1
      %s61 = scalar_select %p58, %s59, %s60
      %p64 = pneg %p58
      %p65 = scmp.eq.s32.totalorder %s9, 1
      %p66 = por %p64, %p65
      %p67 = scmp.ne.s32.totalorder %s59, %s62
      %p68 = scmp.eq.s32.totalorder %s9, 0
      %p69 = por %p67, %p68
      %p70 = scmp.ne.s32.totalorder %s59, %s62
      %p71 = scmp.eq.s32.totalorder %s14, 1
      %p72 = por %p70, %p71
      %p73 = scmp.ne.s32.totalorder %s62, %s63
      %p74 = scmp.eq.s32.totalorder %s14, 0
      %p75 = por %p73, %p74
      %p76 = scmp.ne.s32.totalorder %s62, %s63
      %p77 = scmp.eq.s32.totalorder %s15, 1
      %p78 = por %p76, %p77
      %p80 = scmp.ne.s32.totalorder %s63, %s79
      %p81 = scmp.eq.s32.totalorder %s15, 0
      %p82 = por %p80, %p81
      %s83 = ssub.s32 %s17, %s24
      %p84 = scmp.eq.s32.totalorder %s83, 0
      %s86 = sadd.s32 %s85, 1
      %s87 = scalar_select %p84, %s85, %s86
      %p90 = pneg %p84
      %p91 = scmp.eq.s32.totalorder %s9, 1
      %p92 = por %p90, %p91
      %p93 = scmp.ne.s32.totalorder %s85, %s88
      %p94 = scmp.eq.s32.totalorder %s9, 0
      %p95 = por %p93, %p94
      %p96 = scmp.ne.s32.totalorder %s85, %s88
      %p97 = scmp.eq.s32.totalorder %s14, 1
      %p98 = por %p96, %p97
      %p99 = scmp.ne.s32.totalorder %s88, %s89
      %p100 = scmp.eq.s32.totalorder %s14, 0
      %p101 = por %p99, %p100
      %p102 = scmp.ne.s32.totalorder %s88, %s89
      %p103 = scmp.eq.s32.totalorder %s15, 1
      %p104 = por %p102, %p103
      %p106 = scmp.ne.s32.totalorder %s89, %s105
      %p107 = scmp.eq.s32.totalorder %s15, 0
      %p108 = por %p106, %p107
      %s109 = ssub.s32 %s16, %s28
      %s110 = ssub.s32 %s17, %s24
      %s111 = sor.u32 %s109, %s110
      %p112 = scmp.eq.s32.totalorder %s111, 0
      %s114 = sadd.s32 %s113, 1
      %s115 = scalar_select %p112, %s113, %s114
      %p118 = pneg %p112
      %p119 = scmp.eq.s32.totalorder %s9, 1
      %p120 = por %p118, %p119
      %p121 = scmp.ne.s32.totalorder %s113, %s116
      %p122 = scmp.eq.s32.totalorder %s9, 0
      %p123 = por %p121, %p122
      %p124 = scmp.ne.s32.totalorder %s113, %s116
      %p125 = scmp.eq.s32.totalorder %s14, 1
      %p126 = por %p124, %p125
      %p127 = scmp.ne.s32.totalorder %s116, %s117
      %p128 = scmp.eq.s32.totalorder %s14, 0
      %p129 = por %p127, %p128
      %p130 = scmp.ne.s32.totalorder %s116, %s117
      %p131 = scmp.eq.s32.totalorder %s15, 1
      %p132 = por %p130, %p131
      %p134 = scmp.ne.s32.totalorder %s117, %s133
      %p135 = scmp.eq.s32.totalorder %s15, 0
      %p136 = por %p134, %p135
      %p137 = scmp.le.s32.totalorder 1, %s9
      %p138 = scmp.lt.s32.totalorder %s9, 3
      %p139 = pnand %p137, %p138
      %p140 = pneg %p139
      // Predicated region
      $region9: #{style_transfer_forward.59} parent=5 // pred_check
        _
      $region10: #{style_transfer_forward.59} parent=5 // pred_check_branch
        %142 = sbr.rel (%p139) target = $region12
      $region11: #{style_transfer_forward.59} parent=5 // pred_region
        %s143 = ssub.s32 %s9, 1
      $region12: #{style_transfer_forward.59} parent=5 // pred_fallthru
        _
      %p144 = scmp.lt.s32.totalorder %s9, 2
      // Predicated region
      $region13: #{style_transfer_forward.59} parent=5 // pred_check
        %p145 = pneg %p144
      $region14: #{style_transfer_forward.59} parent=5 // pred_check_branch
        %147 = sbr.rel (%p145) target = $region16
      $region15: #{style_transfer_forward.59} parent=5 // pred_region
        // Predicated region
        $region17: #{style_transfer_forward.59} parent=15 // pred_check
          %p148 = pneg %p43
        $region18: #{style_transfer_forward.59} parent=15 // pred_check_branch
          %150 = sbr.rel (%p148) target = $region20
        $region19: #{style_transfer_forward.59} parent=15 // pred_region
          %s151 = sand.u32 %s33, 1
          %s152 = sand.u32 %s33, 1
          %s153 = smul.addr %s152, 16
          %s154 = scalar_lea.vmem [#allocation2], %s153
          %s155 = smul.u32 4, %s16
          %s156 = smul.addr %s155, 2
          %s157 = sadd.s32 %s17, %s156
          %s158 = smul.addr %s157, 4
          %s159 = scalar_lea.vmem %s0, %s158
          // Predicated region
          $region21: #{style_transfer_forward.59} parent=19 // pred_check
            _
          $region22: #{style_transfer_forward.59} parent=19 // pred_check_branch
            %161 = sbr.rel (0) target = $region24
          $region23: #{style_transfer_forward.59} parent=19 // pred_region
            // Predicated region
            $region25: #{style_transfer_forward.59} parent=23 // pred_check
              _
            $region26: #{style_transfer_forward.59} parent=23 // pred_check_branch
              %163 = sbr.rel target = $region28
            $region27: #{style_transfer_forward.59} parent=23 // pred_region
              // Predicated region
              $region40: #{style_transfer_forward.59} parent=27 // pred_check
                _
              $region41: #{style_transfer_forward.59} parent=27 // pred_check_branch
                %184 = sbr.rel (0) target = $region43
              $region42: #{style_transfer_forward.59} parent=27 // pred_region
                loop: start=0, step=1, limit=1
                $region44: #{style_transfer_forward.59} parent=42 // loop_pre_header
                  _
                $region45: #{style_transfer_forward.59} parent=42 // loop_header
                  %s186 = sphi 0, %s190
                  %p187 = scmp.ge.s32.totalorder %s186, 1
                  %s191 = sphi %s159, %s159
                  %s192 = sphi %s154, %s154
                $region46: #{style_transfer_forward.59} parent=42 // loop_header_branch
                  %189 = sbr.rel (%p187) target = $region50
                $region47: #{style_transfer_forward.59} parent=42 // loop_body
                  _
                $region48: #{style_transfer_forward.59} parent=42 // loop_footer
                  %s190 = sadd.s32 1, %s186
                $region49: #{style_transfer_forward.59} parent=42 // loop_footer_branch
                  %185 = sbr.rel target = $region45
                $region50: #{style_transfer_forward.59} parent=42 // loop_exit
                  _
                loop: start=0, step=1, limit=1
                $region51: #{style_transfer_forward.59} parent=42 // loop_pre_header
                  _
                $region52: #{style_transfer_forward.59} parent=42 // loop_header
                  %s195 = sphi 0, %s199
                  %p196 = scmp.ge.s32.totalorder %s195, 1
                  %s200 = sphi %s159, %s159
                  %s201 = sphi %s154, %s154
                $region53: #{style_transfer_forward.59} parent=42 // loop_header_branch
                  %198 = sbr.rel (%p196) target = $region57
                $region54: #{style_transfer_forward.59} parent=42 // loop_body
                  %v202 = vld [vmem:[%s200] sm:$0xf]
                  %203 = vst [vmem:[%s201] sm:$0xf] %v202
                  %v204 = vld [vmem:[%s200 + $0x8] sm:$0xf]
                  %205 = vst [vmem:[%s201 + $0x4] sm:$0xf] %v204
                  %v206 = vld [vmem:[%s200 + $0x10] sm:$0xf]
                  %207 = vst [vmem:[%s201 + $0x8] sm:$0xf] %v206
                  %v208 = vld [vmem:[%s200 + $0x18] sm:$0xf]
                  %209 = vst [vmem:[%s201 + $0xc] sm:$0xf] %v208
                $region55: #{style_transfer_forward.59} parent=42 // loop_footer
                  %s199 = sadd.s32 1, %s195
                $region56: #{style_transfer_forward.59} parent=42 // loop_footer_branch
                  %194 = sbr.rel target = $region52
                $region57: #{style_transfer_forward.59} parent=42 // loop_exit
                  _
              $region43: #{style_transfer_forward.59} parent=27 // pred_fallthru
                _
            $region28: #{style_transfer_forward.59} parent=23 // pred_fallthru
              _
            // Predicated region
            $region29: #{style_transfer_forward.59} parent=23 // pred_check
              _
            $region30: #{style_transfer_forward.59} parent=23 // pred_check_branch
              %165 = sbr.rel (0) target = $region32
            $region31: #{style_transfer_forward.59} parent=23 // pred_region
              loop: start=0, step=1, limit=1
              $region33: #{style_transfer_forward.59} parent=31 // loop_pre_header
                _
              $region34: #{style_transfer_forward.59} parent=31 // loop_header
                %s168 = sphi 0, %s172
                %p169 = scmp.ge.s32.totalorder %s168, 1
                %s173 = sphi %s159, %s159
                %s174 = sphi %s154, %s154
              $region35: #{style_transfer_forward.59} parent=31 // loop_header_branch
                %171 = sbr.rel (%p169) target = $region39
              $region36: #{style_transfer_forward.59} parent=31 // loop_body
                %v175 = vld [vmem:[%s173] sm:$0xf]
                %176 = vst [vmem:[%s174] sm:$0xf] %v175
                %v177 = vld [vmem:[%s173 + $0x8] sm:$0xf]
                %178 = vst [vmem:[%s174 + $0x4] sm:$0xf] %v177
                %v179 = vld [vmem:[%s173 + $0x10] sm:$0xf]
                %180 = vst [vmem:[%s174 + $0x8] sm:$0xf] %v179
                %v181 = vld [vmem:[%s173 + $0x18] sm:$0xf]
                %182 = vst [vmem:[%s174 + $0xc] sm:$0xf] %v181
              $region37: #{style_transfer_forward.59} parent=31 // loop_footer
                %s172 = sadd.s32 1, %s168
              $region38: #{style_transfer_forward.59} parent=31 // loop_footer_branch
                %167 = sbr.rel target = $region34
              $region39: #{style_transfer_forward.59} parent=31 // loop_exit
                _
            $region32: #{style_transfer_forward.59} parent=23 // pred_fallthru
              _
          $region24: #{style_transfer_forward.59} parent=19 // pred_fallthru
            _
          %210 = vnop
        $region20: #{style_transfer_forward.59} parent=15 // pred_fallthru
          _
        // Predicated region
        $region58: #{style_transfer_forward.59} parent=15 // pred_check
          %p211 = pneg %p69
        $region59: #{style_transfer_forward.59} parent=15 // pred_check_branch
          %213 = sbr.rel (%p211) target = $region61
        $region60: #{style_transfer_forward.59} parent=15 // pred_region
          %p214 = scmp.lt.s32.totalorder %s17, 1
          %s215 = scalar_select %p214, %s17, 1
          %s216 = scalar_lea.vmem %s1, %s215
        $region61: #{style_transfer_forward.59} parent=15 // pred_fallthru
          _
        // Predicated region
        $region62: #{style_transfer_forward.59} parent=15 // pred_check
          %p217 = pneg %p95
        $region63: #{style_transfer_forward.59} parent=15 // pred_check_branch
          %219 = sbr.rel (%p217) target = $region65
        $region64: #{style_transfer_forward.59} parent=15 // pred_region
          %p220 = scmp.lt.s32.totalorder %s17, 1
          %s221 = scalar_select %p220, %s17, 1
          %s222 = scalar_lea.vmem %s2, %s221
        $region65: #{style_transfer_forward.59} parent=15 // pred_fallthru
          _
      $region16: #{style_transfer_forward.59} parent=5 // pred_fallthru
        _
      %p223 = scmp.le.s32.totalorder 1, %s9
      %p224 = scmp.lt.s32.totalorder %s9, 3
      %p225 = pnand %p223, %p224
      %p226 = pneg %p225
      // Predicated region
      $region66: #{style_transfer_forward.59} parent=5 // pred_check
        _
      $region67: #{style_transfer_forward.59} parent=5 // pred_check_branch
        %228 = sbr.rel (%p225) target = $region69
      $region68: #{style_transfer_forward.59} parent=5 // pred_region
        %s229 = ssub.s32 %s9, 1
        %s230 = sand.u32 %s36, 1
        %s231 = sand.u32 %s36, 1
        %s232 = smul.addr %s231, 16
        %s233 = scalar_lea.vmem [#allocation2], %s232
        // Predicated region
        $region70: #{style_transfer_forward.59} parent=68 // pred_check
          %p234 = pneg %p49
        $region71: #{style_transfer_forward.59} parent=68 // pred_check_branch
          %236 = sbr.rel (%p234) target = $region73
        $region72: #{style_transfer_forward.59} parent=68 // pred_region
          _
        $region73: #{style_transfer_forward.59} parent=68 // pred_fallthru
          _
        %s237 = sand.u32 %s36, 1
        %s238 = sand.u32 %s36, 1
        %s239 = smul.addr %s238, 16
        %s240 = scalar_lea.vmem [#allocation2], %s239
        %p241 = pneg %p49
        %p242 = pneg %p46
        %p243 = scmp.lt.s32.totalorder %s19, 1
        %s244 = scalar_select %p243, %s19, 1
        %s245 = scalar_lea.vmem %s1, %s244
        %p246 = pneg %p75
        %p247 = pneg %p72
        %p248 = scmp.lt.s32.totalorder %s19, 1
        %s249 = scalar_select %p248, %s19, 1
        %s250 = scalar_lea.vmem %s2, %s249
        %p251 = pneg %p101
        %p252 = pneg %p98
        %p253 = pneg %p129
        %p254 = pneg %p126
        %s255 = sand.u32 %s116, 1
        %s256 = sand.u32 %s116, 1
        %s257 = smul.addr %s256, 16
        %s258 = scalar_lea.vmem [#allocation3], %s257
        %s259 = smul.u32 4, %s18
        %p260 = scmp.lt.s32.totalorder %s19, 1
        %s261 = scalar_select %p260, %s19, 1
        %s262 = scalar_lea.vmem %s1, %s261
        %p263 = scmp.lt.s32.totalorder %s19, 1
        %s264 = scalar_select %p263, %s19, 1
        %s265 = scalar_lea.vmem %s2, %s264
        %s266 = smul.u32 4, %s18
        %v267 = vld [vmem:[%s233] sm:$0xf]
        %v268 = vld [vmem:[%s233 + $0x4] sm:$0xf]
        %v269 = vld [vmem:[%s233 + $0x8] sm:$0xf]
        %v270 = vld [vmem:[%s233 + $0xc] sm:$0xf]
        %v271 = vunpack.c.l.bf16 %v267
        %v272 = vunpack.c.l.bf16 %v268
        %v273 = vunpack.c.l.bf16 %v269
        %v274 = vunpack.c.l.bf16 %v270
        %v275 = vld [vmem:[%s262] sm:$0x1]
        %v277 = vlaneseq
        %v278 = vshrl.u32 %v277, 7
        %v279 = vsub.s32 0, %v278
        %v280 = vrot.slane %v275, %v279
        %v282 = vmul.f32 %v271, %v280
        %v283 = vmul.f32 %v272, %v280
        %v284 = vmul.f32 %v273, %v280
        %v285 = vmul.f32 %v274, %v280
        %v286 = vld [vmem:[%s265] sm:$0x1]
        %v288 = vlaneseq
        %v289 = vshrl.u32 %v288, 7
        %v290 = vsub.s32 0, %v289
        %v291 = vrot.slane %v286, %v290
        %v293 = vadd.f32 %v282, %v291
        %v294 = vadd.f32 %v283, %v291
        %v295 = vadd.f32 %v284, %v291
        %v296 = vadd.f32 %v285, %v291
        %v297 = vmax.f32 %v293, 0.0
        %v298 = vmax.f32 %v294, 0.0
        %v299 = vmax.f32 %v295, 0.0
        %v300 = vmax.f32 %v296, 0.0
        %v301 = vpack.c.bf16 %v298, %v297
        %v302 = vpack.c.bf16 %v300, %v299
        %v305 = vunpack.c.l.b16 %v301
        %v306 = vunpack.c.h.b16 %v301
        %v307 = vunpack.c.l.b16 %v302
        %v308 = vunpack.c.h.b16 %v302
        %v309 = vpack.c.b16 %v305, %v305
        %v310 = vpack.c.b16 %v306, %v306
        %v311 = vpack.c.b16 %v307, %v307
        %v312 = vpack.c.b16 %v308, %v308
        %317 = vst [vmem:[%s258] sm:$0xf] %v309
        %318 = vst [vmem:[%s258 + $0x4] sm:$0xf] %v310
        %319 = vst [vmem:[%s258 + $0x8] sm:$0xf] %v311
        %320 = vst [vmem:[%s258 + $0xc] sm:$0xf] %v312
        %s321 = sand.u32 %s116, 1
        %s322 = sand.u32 %s116, 1
        %s323 = smul.addr %s322, 16
        %s324 = scalar_lea.vmem [#allocation3], %s323
        // Predicated region
        $region74: #{style_transfer_forward.59} parent=68 // pred_check
          %p325 = pneg %p126
        $region75: #{style_transfer_forward.59} parent=68 // pred_check_branch
          %327 = sbr.rel (%p325) target = $region77
        $region76: #{style_transfer_forward.59} parent=68 // pred_region
          %s328 = smul.u32 4, %s18
          %s329 = smul.addr %s328, 2
          %s330 = sadd.s32 %s19, %s329
          %s331 = smul.addr %s330, 4
          %s332 = scalar_lea.vmem %s3, %s331
          // Predicated region
          $region78: #{style_transfer_forward.59} parent=76 // pred_check
            _
          $region79: #{style_transfer_forward.59} parent=76 // pred_check_branch
            %334 = sbr.rel (0) target = $region81
          $region80: #{style_transfer_forward.59} parent=76 // pred_region
            // Predicated region
            $region82: #{style_transfer_forward.59} parent=80 // pred_check
              _
            $region83: #{style_transfer_forward.59} parent=80 // pred_check_branch
              %336 = sbr.rel target = $region85
            $region84: #{style_transfer_forward.59} parent=80 // pred_region
              // Predicated region
              $region97: #{style_transfer_forward.59} parent=84 // pred_check
                _
              $region98: #{style_transfer_forward.59} parent=84 // pred_check_branch
                %357 = sbr.rel (0) target = $region100
              $region99: #{style_transfer_forward.59} parent=84 // pred_region
                loop: start=0, step=1, limit=1
                $region101: #{style_transfer_forward.59} parent=99 // loop_pre_header
                  _
                $region102: #{style_transfer_forward.59} parent=99 // loop_header
                  %s359 = sphi 0, %s363
                  %p360 = scmp.ge.s32.totalorder %s359, 1
                  %s364 = sphi %s324, %s324
                  %s365 = sphi %s332, %s332
                $region103: #{style_transfer_forward.59} parent=99 // loop_header_branch
                  %362 = sbr.rel (%p360) target = $region107
                $region104: #{style_transfer_forward.59} parent=99 // loop_body
                  _
                $region105: #{style_transfer_forward.59} parent=99 // loop_footer
                  %s363 = sadd.s32 1, %s359
                $region106: #{style_transfer_forward.59} parent=99 // loop_footer_branch
                  %358 = sbr.rel target = $region102
                $region107: #{style_transfer_forward.59} parent=99 // loop_exit
                  _
                loop: start=0, step=1, limit=1
                $region108: #{style_transfer_forward.59} parent=99 // loop_pre_header
                  _
                $region109: #{style_transfer_forward.59} parent=99 // loop_header
                  %s368 = sphi 0, %s372
                  %p369 = scmp.ge.s32.totalorder %s368, 1
                  %s373 = sphi %s324, %s324
                  %s374 = sphi %s332, %s332
                $region110: #{style_transfer_forward.59} parent=99 // loop_header_branch
                  %371 = sbr.rel (%p369) target = $region114
                $region111: #{style_transfer_forward.59} parent=99 // loop_body
                  %v375 = vld [vmem:[%s373] sm:$0xf]
                  %376 = vst [vmem:[%s374] sm:$0xf] %v375
                  %v377 = vld [vmem:[%s373 + $0x4] sm:$0xf]
                  %378 = vst [vmem:[%s374 + $0x8] sm:$0xf] %v377
                  %v379 = vld [vmem:[%s373 + $0x8] sm:$0xf]
                  %380 = vst [vmem:[%s374 + $0x10] sm:$0xf] %v379
                  %v381 = vld [vmem:[%s373 + $0xc] sm:$0xf]
                  %382 = vst [vmem:[%s374 + $0x18] sm:$0xf] %v381
                $region112: #{style_transfer_forward.59} parent=99 // loop_footer
                  %s372 = sadd.s32 1, %s368
                $region113: #{style_transfer_forward.59} parent=99 // loop_footer_branch
                  %367 = sbr.rel target = $region109
                $region114: #{style_transfer_forward.59} parent=99 // loop_exit
                  _
              $region100: #{style_transfer_forward.59} parent=84 // pred_fallthru
                _
            $region85: #{style_transfer_forward.59} parent=80 // pred_fallthru
              _
            // Predicated region
            $region86: #{style_transfer_forward.59} parent=80 // pred_check
              _
            $region87: #{style_transfer_forward.59} parent=80 // pred_check_branch
              %338 = sbr.rel (0) target = $region89
            $region88: #{style_transfer_forward.59} parent=80 // pred_region
              loop: start=0, step=1, limit=1
              $region90: #{style_transfer_forward.59} parent=88 // loop_pre_header
                _
              $region91: #{style_transfer_forward.59} parent=88 // loop_header
                %s341 = sphi 0, %s345
                %p342 = scmp.ge.s32.totalorder %s341, 1
                %s346 = sphi %s324, %s324
                %s347 = sphi %s332, %s332
              $region92: #{style_transfer_forward.59} parent=88 // loop_header_branch
                %344 = sbr.rel (%p342) target = $region96
              $region93: #{style_transfer_forward.59} parent=88 // loop_body
                %v348 = vld [vmem:[%s346] sm:$0xf]
                %349 = vst [vmem:[%s347] sm:$0xf] %v348
                %v350 = vld [vmem:[%s346 + $0x4] sm:$0xf]
                %351 = vst [vmem:[%s347 + $0x8] sm:$0xf] %v350
                %v352 = vld [vmem:[%s346 + $0x8] sm:$0xf]
                %353 = vst [vmem:[%s347 + $0x10] sm:$0xf] %v352
                %v354 = vld [vmem:[%s346 + $0xc] sm:$0xf]
                %355 = vst [vmem:[%s347 + $0x18] sm:$0xf] %v354
              $region94: #{style_transfer_forward.59} parent=88 // loop_footer
                %s345 = sadd.s32 1, %s341
              $region95: #{style_transfer_forward.59} parent=88 // loop_footer_branch
                %340 = sbr.rel target = $region91
              $region96: #{style_transfer_forward.59} parent=88 // loop_exit
                _
            $region89: #{style_transfer_forward.59} parent=80 // pred_fallthru
              _
          $region81: #{style_transfer_forward.59} parent=76 // pred_fallthru
            _
          %383 = vnop
        $region77: #{style_transfer_forward.59} parent=68 // pred_fallthru
          _
      $region69: #{style_transfer_forward.59} parent=5 // pred_fallthru
        _
      %p384 = scmp.le.s32.totalorder 2, %s9
      // Predicated region
      $region115: #{style_transfer_forward.59} parent=5 // pred_check
        %p385 = pneg %p384
      $region116: #{style_transfer_forward.59} parent=5 // pred_check_branch
        %387 = sbr.rel (%p385) target = $region118
      $region117: #{style_transfer_forward.59} parent=5 // pred_region
        %s388 = ssub.s32 %s9, 2
        // Predicated region
        $region119: #{style_transfer_forward.59} parent=117 // pred_check
          %p389 = pneg %p132
        $region120: #{style_transfer_forward.59} parent=117 // pred_check_branch
          %391 = sbr.rel (%p389) target = $region122
        $region121: #{style_transfer_forward.59} parent=117 // pred_region
          %s392 = sand.u32 %s117, 1
          %s393 = sand.u32 %s117, 1
          %s394 = smul.addr %s393, 16
          %s395 = scalar_lea.vmem [#allocation3], %s394
        $region122: #{style_transfer_forward.59} parent=117 // pred_fallthru
          _
      $region118: #{style_transfer_forward.59} parent=5 // pred_fallthru
        _
    $region6: #{style_transfer_forward.59} parent=1 // loop_footer
      %s13 = sadd.s32 1, %s9
    $region7: #{style_transfer_forward.59} parent=1 // loop_footer_branch
      %8 = sbr.rel target = $region3
    $region8: #{style_transfer_forward.59} parent=1 // loop_exit
      _

// kernel: tile.33
$region0: #{tile.33}
  #allocation0 [shape = 's32[1]{0}', space=sflag, size = 0x4, scoped, tag = 'scoped memory for tile.33']
  %s0 = inlined_call_operand.vmem [shape: f32[32], index: 0, kind: input, shape index: {}]
  %s1 = inlined_call_operand.vmem [shape: f32[4,32], index: 1, kind: output, shape index: {}]
  // Predicated region
  $region2: #{tile.33} parent=0 // pred_check
    _
  $region3: #{tile.33} parent=0 // pred_check_branch
    %3 = sbr.rel (0) target = $region5
  $region4: #{tile.33} parent=0 // pred_region
    _
  $region5: #{tile.33} parent=0 // pred_fallthru
    _
  %v4 = vld [vmem:[%s0] ss:$0 sm:$0xff]
  %5 = vst [vmem:[%s1] sm:$0xf] %v4

// kernel: tile.38
$region0: #{tile.38}
  %s0 = inlined_call_operand.vmem [shape: f32[4,32], index: 0, kind: input, shape index: {}]
  %s1 = inlined_call_operand.vmem [shape: f32[1,128], index: 1, kind: output, shape index: {}]
  $region1: #{tile.38} parent=0
    #allocation0 [shape = 'u8[4096]{0}', space=vmem, size = 0x1000, scoped, tag = 'scoped mem for output reshape']
    #allocation1 [shape = 'u8[4096]{0}', space=vmem, size = 0x1000, scoped, tag = 'scoped mem for input reshape']
    %s3 = sshllo.u32 0, 4
    %v4 = vld [vmem:[%s0] sm:%s3]
    %5 = vst [vmem:[#allocation1] sm:%s3] %v4
    %v6 = vld [vmem:[#allocation1] sm:$0x1]
    %vm7 = vcmask 261120
    %8 = vst.msk [vmem:[#allocation0] sm:$0x1] %vm7, %v6
    %s9 = scalar_lea.vmem [#allocation1], 3
    %v10 = vld [vmem:[%s9] sm:$0x1]
    %11 = vrot.lane.b32.xlu0 %v10, 96
    %v12 = vpop.permute.xlu0 %11
    %vm13 = vcmask 1048320
    %14 = vst.msk [vmem:[#allocation0] sm:$0x1] %vm13, %v12
    %s15 = scalar_lea.vmem [#allocation1], 2
    %v16 = vld [vmem:[%s15] sm:$0x1]
    %17 = vrot.lane.b32.xlu0 %v16, 64
    %v18 = vpop.permute.xlu0 %17
    %vm19 = vcmask 785920
    %20 = vst.msk [vmem:[#allocation0] sm:$0x1] %vm19, %v18
    %s21 = scalar_lea.vmem [#allocation1], 1
    %v22 = vld [vmem:[%s21] sm:$0x1]
    %23 = vrot.lane.b32.xlu0 %v22, 32
    %v24 = vpop.permute.xlu0 %23
    %vm25 = vcmask 523520
    %26 = vst.msk [vmem:[#allocation0] sm:$0x1] %vm25, %v24
    %s28 = sshllo.u32 0, 1
    %v30 = vld [vmem:[#allocation0] sm:%s28]
    %s31 = sshllo.u32 0, 1
    %32 = vst [vmem:[%s1] sm:%s31] %v30

// kernel: style_transfer_forward.60
$region0: #{style_transfer_forward.60}
  #allocation0 [shape = 'u32[]', space=smem, size = 0x4, offset = 0x4, fixed_abs, tag = 'smem constant byte address 0x4 - core index']
  #allocation1 [shape = 'u32[144,128]{1,0:T(1,128)}', space=vmem, size = 0x12000, scoped, tag = 'internal scratch']
  #allocation2 [shape = 'f32[128,128]{1,0:T(8,128)}', space=vmem, size = 0x10000, scoped, tag = 'scratch operand']
  %s0 = inlined_call_operand.vmem [shape: bf16[128,256], index: 0, kind: input, shape index: {}]
  %s1 = inlined_call_operand.vmem [shape: bf16[256,128], index: 1, kind: input, shape index: {}]
  %s2 = inlined_call_operand.vmem [shape: bf16[128,128], index: 2, kind: output, shape index: {0}]
  %s3 = inlined_call_operand.vmem [shape: f32[1,1,128], index: 3, kind: output, shape index: {1}]
  %s4 = inlined_call_operand.vmem [shape: f32[1,1,128], index: 4, kind: output, shape index: {2}]
  %5 = xla_tuple %s2, %s3, %s4
  %s6 = sld [smem:[#allocation0]]
  $region42: #{style_transfer_forward.60} parent=0
    _
  %s8 = ssub.s32 1, %s6
  %s9 = scalar_select 0, %s8, %s6
  // Predicated region
  $region2: #{style_transfer_forward.60} parent=0 // pred_check
    _
  $region3: #{style_transfer_forward.60} parent=0 // pred_check_branch
    %11 = sbr.rel (0) target = $region5
  $region4: #{style_transfer_forward.60} parent=0 // pred_region
    _
  $region5: #{style_transfer_forward.60} parent=0 // pred_fallthru
    _
  // Predicated region
  $region6: #{style_transfer_forward.60} parent=0 // pred_check
    _
  $region7: #{style_transfer_forward.60} parent=0 // pred_check_branch
    %13 = sbr.rel (0) target = $region9
  $region8: #{style_transfer_forward.60} parent=0 // pred_region
    _
  $region9: #{style_transfer_forward.60} parent=0 // pred_fallthru
    _
  %p15 = scmp.eq.s32.totalorder 0, 0
  // Predicated region
  $region10: #{style_transfer_forward.60} parent=0 // pred_check
    %p16 = pneg %p15
  $region11: #{style_transfer_forward.60} parent=0 // pred_check_branch
    %18 = sbr.rel (%p16) target = $region13
  $region12: #{style_transfer_forward.60} parent=0 // pred_region
    %19 = vst [vmem:[#allocation2] sm:$0xff] 0.0
    %20 = vst [vmem:[#allocation2 + $0x8] sm:$0xff] 0.0
    %21 = vst [vmem:[#allocation2 + $0x10] sm:$0xff] 0.0
    %22 = vst [vmem:[#allocation2 + $0x18] sm:$0xff] 0.0
    %23 = vst [vmem:[#allocation2 + $0x20] sm:$0xff] 0.0
    %24 = vst [vmem:[#allocation2 + $0x28] sm:$0xff] 0.0
    %25 = vst [vmem:[#allocation2 + $0x30] sm:$0xff] 0.0
    %26 = vst [vmem:[#allocation2 + $0x38] sm:$0xff] 0.0
    %27 = vst [vmem:[#allocation2 + $0x40] sm:$0xff] 0.0
    %28 = vst [vmem:[#allocation2 + $0x48] sm:$0xff] 0.0
    %29 = vst [vmem:[#allocation2 + $0x50] sm:$0xff] 0.0
    %30 = vst [vmem:[#allocation2 + $0x58] sm:$0xff] 0.0
    %31 = vst [vmem:[#allocation2 + $0x60] sm:$0xff] 0.0
    %32 = vst [vmem:[#allocation2 + $0x68] sm:$0xff] 0.0
    %33 = vst [vmem:[#allocation2 + $0x70] sm:$0xff] 0.0
    %34 = vst [vmem:[#allocation2 + $0x78] sm:$0xff] 0.0
  $region13: #{style_transfer_forward.60} parent=0 // pred_fallthru
    _
  %v35 = vld [vmem:[#allocation2] sm:$0xff]
  %v36 = vld [vmem:[#allocation2 + $0x8] sm:$0xff]
  %v37 = vld [vmem:[#allocation2 + $0x10] sm:$0xff]
  %v38 = vld [vmem:[#allocation2 + $0x18] sm:$0xff]
  %v39 = vld [vmem:[#allocation2 + $0x20] sm:$0xff]
  %v40 = vld [vmem:[#allocation2 + $0x28] sm:$0xff]
  %v41 = vld [vmem:[#allocation2 + $0x30] sm:$0xff]
  %v42 = vld [vmem:[#allocation2 + $0x38] sm:$0xff]
  %v43 = vld [vmem:[#allocation2 + $0x40] sm:$0xff]
  %v44 = vld [vmem:[#allocation2 + $0x48] sm:$0xff]
  %v45 = vld [vmem:[#allocation2 + $0x50] sm:$0xff]
  %v46 = vld [vmem:[#allocation2 + $0x58] sm:$0xff]
  %v47 = vld [vmem:[#allocation2 + $0x60] sm:$0xff]
  %v48 = vld [vmem:[#allocation2 + $0x68] sm:$0xff]
  %v49 = vld [vmem:[#allocation2 + $0x70] sm:$0xff]
  %v50 = vld [vmem:[#allocation2 + $0x78] sm:$0xff]
  %v51 = vld [vmem:[%s0] sm:$0xff]
  %v52 = vld [vmem:[%s0 + $0x8] sm:$0xff]
  %v53 = vld [vmem:[%s0 + $0x10] sm:$0xff]
  %v54 = vld [vmem:[%s0 + $0x18] sm:$0xff]
  %v55 = vld [vmem:[%s0 + $0x20] sm:$0xff]
  %v56 = vld [vmem:[%s0 + $0x28] sm:$0xff]
  %v57 = vld [vmem:[%s0 + $0x30] sm:$0xff]
  %v58 = vld [vmem:[%s0 + $0x38] sm:$0xff]
  %v59 = vld [vmem:[%s0 + $0x40] sm:$0xff]
  %v60 = vld [vmem:[%s0 + $0x48] sm:$0xff]
  %v61 = vld [vmem:[%s0 + $0x50] sm:$0xff]
  %v62 = vld [vmem:[%s0 + $0x58] sm:$0xff]
  %v63 = vld [vmem:[%s0 + $0x60] sm:$0xff]
  %v64 = vld [vmem:[%s0 + $0x68] sm:$0xff]
  %v65 = vld [vmem:[%s0 + $0x70] sm:$0xff]
  %v66 = vld [vmem:[%s0 + $0x78] sm:$0xff]
  %v67 = vld [vmem:[%s1] sm:$0xf]
  %v68 = vld [vmem:[%s1 + $0x4] sm:$0xf]
  %v69 = vld [vmem:[%s1 + $0x8] sm:$0xf]
  %v70 = vld [vmem:[%s1 + $0xc] sm:$0xf]
  %v71 = vld [vmem:[%s1 + $0x10] sm:$0xf]
  %v72 = vld [vmem:[%s1 + $0x14] sm:$0xf]
  %v73 = vld [vmem:[%s1 + $0x18] sm:$0xf]
  %v74 = vld [vmem:[%s1 + $0x1c] sm:$0xf]
  %v75 = vld [vmem:[%s1 + $0x20] sm:$0xf]
  %v76 = vld [vmem:[%s1 + $0x24] sm:$0xf]
  %v77 = vld [vmem:[%s1 + $0x28] sm:$0xf]
  %v78 = vld [vmem:[%s1 + $0x2c] sm:$0xf]
  %v79 = vld [vmem:[%s1 + $0x30] sm:$0xf]
  %v80 = vld [vmem:[%s1 + $0x34] sm:$0xf]
  %v81 = vld [vmem:[%s1 + $0x38] sm:$0xf]
  %v82 = vld [vmem:[%s1 + $0x3c] sm:$0xf]
  %v83 = vld [vmem:[%s1 + $0x40] sm:$0xf]
  %v84 = vld [vmem:[%s1 + $0x44] sm:$0xf]
  %v85 = vld [vmem:[%s1 + $0x48] sm:$0xf]
  %v86 = vld [vmem:[%s1 + $0x4c] sm:$0xf]
  %v87 = vld [vmem:[%s1 + $0x50] sm:$0xf]
  %v88 = vld [vmem:[%s1 + $0x54] sm:$0xf]
  %v89 = vld [vmem:[%s1 + $0x58] sm:$0xf]
  %v90 = vld [vmem:[%s1 + $0x5c] sm:$0xf]
  %v91 = vld [vmem:[%s1 + $0x60] sm:$0xf]
  %v92 = vld [vmem:[%s1 + $0x64] sm:$0xf]
  %v93 = vld [vmem:[%s1 + $0x68] sm:$0xf]
  %v94 = vld [vmem:[%s1 + $0x6c] sm:$0xf]
  %v95 = vld [vmem:[%s1 + $0x70] sm:$0xf]
  %v96 = vld [vmem:[%s1 + $0x74] sm:$0xf]
  %v97 = vld [vmem:[%s1 + $0x78] sm:$0xf]
  %v98 = vld [vmem:[%s1 + $0x7c] sm:$0xf]
  %v115 = vunpack.c.l.b16 %v51
  %v116 = vunpack.c.h.b16 %v51
  %v117 = vunpack.c.l.b16 %v52
  %v118 = vunpack.c.h.b16 %v52
  %v119 = vunpack.c.l.b16 %v53
  %v120 = vunpack.c.h.b16 %v53
  %v121 = vunpack.c.l.b16 %v54
  %v122 = vunpack.c.h.b16 %v54
  %v123 = vunpack.c.l.b16 %v55
  %v124 = vunpack.c.h.b16 %v55
  %v125 = vunpack.c.l.b16 %v56
  %v126 = vunpack.c.h.b16 %v56
  %v127 = vunpack.c.l.b16 %v57
  %v128 = vunpack.c.h.b16 %v57
  %v129 = vunpack.c.l.b16 %v58
  %v130 = vunpack.c.h.b16 %v58
  %v131 = vunpack.c.l.b16 %v59
  %v132 = vunpack.c.h.b16 %v59
  %v133 = vunpack.c.l.b16 %v60
  %v134 = vunpack.c.h.b16 %v60
  %v135 = vunpack.c.l.b16 %v61
  %v136 = vunpack.c.h.b16 %v61
  %v137 = vunpack.c.l.b16 %v62
  %v138 = vunpack.c.h.b16 %v62
  %v139 = vunpack.c.l.b16 %v63
  %v140 = vunpack.c.h.b16 %v63
  %v141 = vunpack.c.l.b16 %v64
  %v142 = vunpack.c.h.b16 %v64
  %v143 = vunpack.c.l.b16 %v65
  %v144 = vunpack.c.h.b16 %v65
  %v145 = vunpack.c.l.b16 %v66
  %v146 = vunpack.c.h.b16 %v66
  %v147 = vpack.c.b16 %v117, %v115
  %v148 = vpack.c.b16 %v118, %v116
  %v149 = vpack.c.b16 %v121, %v119
  %v150 = vpack.c.b16 %v122, %v120
  %v151 = vpack.c.b16 %v125, %v123
  %v152 = vpack.c.b16 %v126, %v124
  %v153 = vpack.c.b16 %v129, %v127
  %v154 = vpack.c.b16 %v130, %v128
  %v155 = vpack.c.b16 %v133, %v131
  %v156 = vpack.c.b16 %v134, %v132
  %v157 = vpack.c.b16 %v137, %v135
  %v158 = vpack.c.b16 %v138, %v136
  %v159 = vpack.c.b16 %v141, %v139
  %v160 = vpack.c.b16 %v142, %v140
  %v161 = vpack.c.b16 %v145, %v143
  %v162 = vpack.c.b16 %v146, %v144
  %v211 = vunpack.c.l.b16 %v67
  %v212 = vunpack.c.l.b16 %v68
  %v213 = vunpack.c.l.b16 %v69
  %v214 = vunpack.c.l.b16 %v70
  %v215 = vunpack.c.l.b16 %v71
  %v216 = vunpack.c.l.b16 %v72
  %v217 = vunpack.c.l.b16 %v73
  %v218 = vunpack.c.l.b16 %v74
  %v219 = vunpack.c.l.b16 %v75
  %v220 = vunpack.c.l.b16 %v76
  %v221 = vunpack.c.l.b16 %v77
  %v222 = vunpack.c.l.b16 %v78
  %v223 = vunpack.c.l.b16 %v79
  %v224 = vunpack.c.l.b16 %v80
  %v225 = vunpack.c.l.b16 %v81
  %v226 = vunpack.c.l.b16 %v82
  %v227 = vunpack.c.l.b16 %v83
  %v228 = vunpack.c.l.b16 %v84
  %v229 = vunpack.c.l.b16 %v85
  %v230 = vunpack.c.l.b16 %v86
  %v231 = vunpack.c.l.b16 %v87
  %v232 = vunpack.c.l.b16 %v88
  %v233 = vunpack.c.l.b16 %v89
  %v234 = vunpack.c.l.b16 %v90
  %v235 = vunpack.c.l.b16 %v91
  %v236 = vunpack.c.l.b16 %v92
  %v237 = vunpack.c.l.b16 %v93
  %v238 = vunpack.c.l.b16 %v94
  %v239 = vunpack.c.l.b16 %v95
  %v240 = vunpack.c.l.b16 %v96
  %v241 = vunpack.c.l.b16 %v97
  %v242 = vunpack.c.l.b16 %v98
  %v243 = vpack.c.b16 %v212, %v211
  %v244 = vpack.c.b16 %v214, %v213
  %v245 = vpack.c.b16 %v216, %v215
  %v246 = vpack.c.b16 %v218, %v217
  %v247 = vpack.c.b16 %v220, %v219
  %v248 = vpack.c.b16 %v222, %v221
  %v249 = vpack.c.b16 %v224, %v223
  %v250 = vpack.c.b16 %v226, %v225
  %v251 = vpack.c.b16 %v228, %v227
  %v252 = vpack.c.b16 %v230, %v229
  %v253 = vpack.c.b16 %v232, %v231
  %v254 = vpack.c.b16 %v234, %v233
  %v255 = vpack.c.b16 %v236, %v235
  %v256 = vpack.c.b16 %v238, %v237
  %v257 = vpack.c.b16 %v240, %v239
  %v258 = vpack.c.b16 %v242, %v241
  %275 = vmatprep.subr.bf16.mxu0 0
  %276 = vmatpush1.bf16.msra.mxu0 %v243
  %277 = vmatprep.subr.bf16.mxu0 0
  %278 = vmatpush1.bf16.msra.mxu0 %v244
  %279 = vmatprep.subr.bf16.mxu0 0
  %280 = vmatpush1.bf16.msra.mxu0 %v245
  %281 = vmatprep.subr.bf16.mxu0 0
  %282 = vmatpush1.bf16.msra.mxu0 %v246
  %283 = vmatprep.subr.bf16.mxu0 0
  %284 = vmatpush1.bf16.msra.mxu0 %v247
  %285 = vmatprep.subr.bf16.mxu0 0
  %286 = vmatpush1.bf16.msra.mxu0 %v248
  %287 = vmatprep.subr.bf16.mxu0 0
  %288 = vmatpush1.bf16.msra.mxu0 %v249
  %289 = vmatprep.subr.bf16.mxu0 0
  %290 = vmatpush1.bf16.msra.mxu0 %v250
  %291 = vmatprep.subr.bf16.mxu0 0
  %292 = vmatpush1.bf16.msra.mxu0 %v251
  %293 = vmatprep.subr.bf16.mxu0 0
  %294 = vmatpush1.bf16.msra.mxu0 %v252
  %295 = vmatprep.subr.bf16.mxu0 0
  %296 = vmatpush1.bf16.msra.mxu0 %v253
  %297 = vmatprep.subr.bf16.mxu0 0
  %298 = vmatpush1.bf16.msra.mxu0 %v254
  %299 = vmatprep.subr.bf16.mxu0 0
  %300 = vmatpush1.bf16.msra.mxu0 %v255
  %301 = vmatprep.subr.bf16.mxu0 0
  %302 = vmatpush1.bf16.msra.mxu0 %v256
  %303 = vmatprep.subr.bf16.mxu0 0
  %304 = vmatpush1.bf16.msra.mxu0 %v257
  %305 = vmatprep.subr.bf16.mxu0 0
  %306 = vmatpush1.bf16.msra.mxu0 %v258
  %307 = vmatprep.mubr.bf16.mxu0 %v148
  %308 = vmatmul.mubr.bf16.gmra.mrb[0].mxu0 %v147
  %v309 = vpop.f32.mrb[0].mxu0
  %v310 = vadd.f32 0.0, %v309
  %v311 = vpop.f32.mrb[0].mxu0
  %v312 = vpop.f32.mrb[0].mxu0
  %v313 = vadd.f32 0.0, %v312
  %v314 = vpop.f32.mrb[0].mxu0
  %315 = vmatprep.mubr.bf16.mxu0 %v150
  %316 = vmatmul.mubr.bf16.gmra.mrb[0].mxu0 %v149
  %v317 = vpop.f32.mrb[0].mxu0
  %v318 = vadd.f32 0.0, %v317
  %v319 = vpop.f32.mrb[0].mxu0
  %v320 = vpop.f32.mrb[0].mxu0
  %v321 = vadd.f32 0.0, %v320
  %v322 = vpop.f32.mrb[0].mxu0
  %323 = vmatprep.mubr.bf16.mxu0 %v152
  %324 = vmatmul.mubr.bf16.gmra.mrb[0].mxu0 %v151
  %v325 = vpop.f32.mrb[0].mxu0
  %v326 = vadd.f32 0.0, %v325
  %v327 = vpop.f32.mrb[0].mxu0
  %v328 = vpop.f32.mrb[0].mxu0
  %v329 = vadd.f32 0.0, %v328
  %v330 = vpop.f32.mrb[0].mxu0
  %331 = vmatprep.mubr.bf16.mxu0 %v154
  %332 = vmatmul.mubr.bf16.gmra.mrb[0].mxu0 %v153
  %v333 = vpop.f32.mrb[0].mxu0
  %v334 = vadd.f32 0.0, %v333
  %v335 = vpop.f32.mrb[0].mxu0
  %v336 = vpop.f32.mrb[0].mxu0
  %v337 = vadd.f32 0.0, %v336
  %v338 = vpop.f32.mrb[0].mxu0
  %339 = vmatprep.mubr.bf16.mxu0 %v156
  %340 = vmatmul.mubr.bf16.gmra.mrb[0].mxu0 %v155
  %v341 = vpop.f32.mrb[0].mxu0
  %v342 = vadd.f32 0.0, %v341
  %v343 = vpop.f32.mrb[0].mxu0
  %v344 = vpop.f32.mrb[0].mxu0
  %v345 = vadd.f32 0.0, %v344
  %v346 = vpop.f32.mrb[0].mxu0
  %347 = vmatprep.mubr.bf16.mxu0 %v158
  %348 = vmatmul.mubr.bf16.gmra.mrb[0].mxu0 %v157
  %v349 = vpop.f32.mrb[0].mxu0
  %v350 = vadd.f32 0.0, %v349
  %v351 = vpop.f32.mrb[0].mxu0
  %v352 = vpop.f32.mrb[0].mxu0
  %v353 = vadd.f32 0.0, %v352
  %v354 = vpop.f32.mrb[0].mxu0
  %355 = vmatprep.mubr.bf16.mxu0 %v160
  %356 = vmatmul.mubr.bf16.gmra.mrb[0].mxu0 %v159
  %v357 = vpop.f32.mrb[0].mxu0
  %v358 = vadd.f32 0.0, %v357
  %v359 = vpop.f32.mrb[0].mxu0
  %v360 = vpop.f32.mrb[0].mxu0
  %v361 = vadd.f32 0.0, %v360
  %v362 = vpop.f32.mrb[0].mxu0
  %363 = vmatprep.mubr.bf16.mxu0 %v162
  %364 = vmatmul.mubr.bf16.gmra.mrb[0].mxu0 %v161
  %v365 = vpop.f32.mrb[0].mxu0
  %v366 = vadd.f32 0.0, %v365
  %v367 = vpop.f32.mrb[0].mxu0
  %v368 = vpop.f32.mrb[0].mxu0
  %v369 = vadd.f32 0.0, %v368
  %v370 = vpop.f32.mrb[0].mxu0
  %371 = vdwg.mxu0
  %v372 = vadd.f32 %v35, %v310
  %v373 = vadd.f32 %v36, %v313
  %v374 = vadd.f32 %v37, %v318
  %v375 = vadd.f32 %v38, %v321
  %v376 = vadd.f32 %v39, %v326
  %v377 = vadd.f32 %v40, %v329
  %v378 = vadd.f32 %v41, %v334
  %v379 = vadd.f32 %v42, %v337
  %v380 = vadd.f32 %v43, %v342
  %v381 = vadd.f32 %v44, %v345
  %v382 = vadd.f32 %v45, %v350
  %v383 = vadd.f32 %v46, %v353
  %v384 = vadd.f32 %v47, %v358
  %v385 = vadd.f32 %v48, %v361
  %v386 = vadd.f32 %v49, %v366
  %v387 = vadd.f32 %v50, %v369
  %388 = vst [vmem:[#allocation2] sm:$0xff] %v372
  %389 = vst [vmem:[#allocation2 + $0x8] sm:$0xff] %v373
  %390 = vst [vmem:[#allocation2 + $0x10] sm:$0xff] %v374
  %391 = vst [vmem:[#allocation2 + $0x18] sm:$0xff] %v375
  %392 = vst [vmem:[#allocation2 + $0x20] sm:$0xff] %v376
  %393 = vst [vmem:[#allocation2 + $0x28] sm:$0xff] %v377
  %394 = vst [vmem:[#allocation2 + $0x30] sm:$0xff] %v378
  %395 = vst [vmem:[#allocation2 + $0x38] sm:$0xff] %v379
  %396 = vst [vmem:[#allocation2 + $0x40] sm:$0xff] %v380
  %397 = vst [vmem:[#allocation2 + $0x48] sm:$0xff] %v381
  %398 = vst [vmem:[#allocation2 + $0x50] sm:$0xff] %v382
  %399 = vst [vmem:[#allocation2 + $0x58] sm:$0xff] %v383
  %400 = vst [vmem:[#allocation2 + $0x60] sm:$0xff] %v384
  %401 = vst [vmem:[#allocation2 + $0x68] sm:$0xff] %v385
  %402 = vst [vmem:[#allocation2 + $0x70] sm:$0xff] %v386
  %403 = vst [vmem:[#allocation2 + $0x78] sm:$0xff] %v387
  // Predicated region
  $region14: #{style_transfer_forward.60} parent=0 // pred_check
    %p404 = pneg %p15
  $region15: #{style_transfer_forward.60} parent=0 // pred_check_branch
    %406 = sbr.rel (%p404) target = $region17
  $region16: #{style_transfer_forward.60} parent=0 // pred_region
    %v407 = vld [vmem:[#allocation2] sm:$0xff]
    %v408 = vld [vmem:[#allocation2 + $0x8] sm:$0xff]
    %v409 = vld [vmem:[#allocation2 + $0x10] sm:$0xff]
    %v410 = vld [vmem:[#allocation2 + $0x18] sm:$0xff]
    %v411 = vld [vmem:[#allocation2 + $0x20] sm:$0xff]
    %v412 = vld [vmem:[#allocation2 + $0x28] sm:$0xff]
    %v413 = vld [vmem:[#allocation2 + $0x30] sm:$0xff]
    %v414 = vld [vmem:[#allocation2 + $0x38] sm:$0xff]
    %v415 = vld [vmem:[#allocation2 + $0x40] sm:$0xff]
    %v416 = vld [vmem:[#allocation2 + $0x48] sm:$0xff]
    %v417 = vld [vmem:[#allocation2 + $0x50] sm:$0xff]
    %v418 = vld [vmem:[#allocation2 + $0x58] sm:$0xff]
    %v419 = vld [vmem:[#allocation2 + $0x60] sm:$0xff]
    %v420 = vld [vmem:[#allocation2 + $0x68] sm:$0xff]
    %v421 = vld [vmem:[#allocation2 + $0x70] sm:$0xff]
    %v422 = vld [vmem:[#allocation2 + $0x78] sm:$0xff]
    %v423 = vpack.c.bf16 %v408, %v407
    %v424 = vpack.c.bf16 %v410, %v409
    %v425 = vpack.c.bf16 %v412, %v411
    %v426 = vpack.c.bf16 %v414, %v413
    %v427 = vpack.c.bf16 %v416, %v415
    %v428 = vpack.c.bf16 %v418, %v417
    %v429 = vpack.c.bf16 %v420, %v419
    %v430 = vpack.c.bf16 %v422, %v421
    %v439 = vunpack.c.l.b16 %v423
    %v440 = vunpack.c.h.b16 %v423
    %v441 = vunpack.c.l.b16 %v424
    %v442 = vunpack.c.h.b16 %v424
    %v443 = vunpack.c.l.b16 %v425
    %v444 = vunpack.c.h.b16 %v425
    %v445 = vunpack.c.l.b16 %v426
    %v446 = vunpack.c.h.b16 %v426
    %v447 = vunpack.c.l.b16 %v427
    %v448 = vunpack.c.h.b16 %v427
    %v449 = vunpack.c.l.b16 %v428
    %v450 = vunpack.c.h.b16 %v428
    %v451 = vunpack.c.l.b16 %v429
    %v452 = vunpack.c.h.b16 %v429
    %v453 = vunpack.c.l.b16 %v430
    %v454 = vunpack.c.h.b16 %v430
    %v455 = vpack.c.b16 %v439, %v439
    %v456 = vpack.c.b16 %v440, %v440
    %v457 = vpack.c.b16 %v441, %v441
    %v458 = vpack.c.b16 %v442, %v442
    %v459 = vpack.c.b16 %v443, %v443
    %v460 = vpack.c.b16 %v444, %v444
    %v461 = vpack.c.b16 %v445, %v445
    %v462 = vpack.c.b16 %v446, %v446
    %v463 = vpack.c.b16 %v447, %v447
    %v464 = vpack.c.b16 %v448, %v448
    %v465 = vpack.c.b16 %v449, %v449
    %v466 = vpack.c.b16 %v450, %v450
    %v467 = vpack.c.b16 %v451, %v451
    %v468 = vpack.c.b16 %v452, %v452
    %v469 = vpack.c.b16 %v453, %v453
    %v470 = vpack.c.b16 %v454, %v454
    %487 = vst [vmem:[%s2] sm:$0xf] %v455
    %488 = vst [vmem:[%s2 + $0x4] sm:$0xf] %v456
    %489 = vst [vmem:[%s2 + $0x8] sm:$0xf] %v457
    %490 = vst [vmem:[%s2 + $0xc] sm:$0xf] %v458
    %491 = vst [vmem:[%s2 + $0x10] sm:$0xf] %v459
    %492 = vst [vmem:[%s2 + $0x14] sm:$0xf] %v460
    %493 = vst [vmem:[%s2 + $0x18] sm:$0xf] %v461
    %494 = vst [vmem:[%s2 + $0x1c] sm:$0xf] %v462
    %495 = vst [vmem:[%s2 + $0x20] sm:$0xf] %v463
    %496 = vst [vmem:[%s2 + $0x24] sm:$0xf] %v464
    %497 = vst [vmem:[%s2 + $0x28] sm:$0xf] %v465
    %498 = vst [vmem:[%s2 + $0x2c] sm:$0xf] %v466
    %499 = vst [vmem:[%s2 + $0x30] sm:$0xf] %v467
    %500 = vst [vmem:[%s2 + $0x34] sm:$0xf] %v468
    %501 = vst [vmem:[%s2 + $0x38] sm:$0xf] %v469
    %502 = vst [vmem:[%s2 + $0x3c] sm:$0xf] %v470
    %v503 = vadd.f32 %v407, %v408
    %v504 = vadd.f32 %v503, %v409
    %v505 = vadd.f32 %v504, %v410
    %v506 = vadd.f32 %v505, %v411
    %v507 = vadd.f32 %v506, %v412
    %v508 = vadd.f32 %v507, %v413
    %v509 = vadd.f32 %v508, %v414
    %v510 = vadd.f32 %v509, %v415
    %v511 = vadd.f32 %v510, %v416
    %v512 = vadd.f32 %v511, %v417
    %v513 = vadd.f32 %v512, %v418
    %v514 = vadd.f32 %v513, %v419
    %v515 = vadd.f32 %v514, %v420
    %v516 = vadd.f32 %v515, %v421
    %v517 = vadd.f32 %v516, %v422
    %v518 = vrot.slane %v517, 4
    %v519 = vadd.f32 %v517, %v518
    %v520 = vrot.slane %v519, 2
    %v521 = vadd.f32 %v519, %v520
    %v522 = vrot.slane %v521, 1
    %v523 = vadd.f32 %v521, %v522
    %524 = vst [vmem:[%s3] sm:$0x1] %v523
    %v525 = vmul.f32 %v407, %v407
    %v526 = vmul.f32 %v408, %v408
    %v527 = vmul.f32 %v409, %v409
    %v528 = vmul.f32 %v410, %v410
    %v529 = vmul.f32 %v411, %v411
    %v530 = vmul.f32 %v412, %v412
    %v531 = vmul.f32 %v413, %v413
    %v532 = vmul.f32 %v414, %v414
    %v533 = vmul.f32 %v415, %v415
    %v534 = vmul.f32 %v416, %v416
    %v535 = vmul.f32 %v417, %v417
    %v536 = vmul.f32 %v418, %v418
    %v537 = vmul.f32 %v419, %v419
    %v538 = vmul.f32 %v420, %v420
    %v539 = vmul.f32 %v421, %v421
    %v540 = vmul.f32 %v422, %v422
    %v541 = vadd.f32 %v525, %v526
    %v542 = vadd.f32 %v541, %v527
    %v543 = vadd.f32 %v542, %v528
    %v544 = vadd.f32 %v543, %v529
    %v545 = vadd.f32 %v544, %v530
    %v546 = vadd.f32 %v545, %v531
    %v547 = vadd.f32 %v546, %v532
    %v548 = vadd.f32 %v547, %v533
    %v549 = vadd.f32 %v548, %v534
    %v550 = vadd.f32 %v549, %v535
    %v551 = vadd.f32 %v550, %v536
    %v552 = vadd.f32 %v551, %v537
    %v553 = vadd.f32 %v552, %v538
    %v554 = vadd.f32 %v553, %v539
    %v555 = vadd.f32 %v554, %v540
    %v556 = vrot.slane %v555, 4
    %v557 = vadd.f32 %v555, %v556
    %v558 = vrot.slane %v557, 2
    %v559 = vadd.f32 %v557, %v558
    %v560 = vrot.slane %v559, 1
    %v561 = vadd.f32 %v559, %v560
    %562 = vst [vmem:[%s4] sm:$0x1] %v561
  $region17: #{style_transfer_forward.60} parent=0 // pred_fallthru
    _
  // Predicated region
  $region18: #{style_transfer_forward.60} parent=0 // pred_check
    _
  $region19: #{style_transfer_forward.60} parent=0 // pred_check_branch
    %564 = sbr.rel (0) target = $region21
  $region20: #{style_transfer_forward.60} parent=0 // pred_region
    _
  $region21: #{style_transfer_forward.60} parent=0 // pred_fallthru
    _
  // Predicated region
  $region22: #{style_transfer_forward.60} parent=0 // pred_check
    _
  $region23: #{style_transfer_forward.60} parent=0 // pred_check_branch
    %566 = sbr.rel (0) target = $region25
  $region24: #{style_transfer_forward.60} parent=0 // pred_region
    _
  $region25: #{style_transfer_forward.60} parent=0 // pred_fallthru
    _
  // Predicated region
  $region26: #{style_transfer_forward.60} parent=0 // pred_check
    _
  $region27: #{style_transfer_forward.60} parent=0 // pred_check_branch
    %568 = sbr.rel (0) target = $region29
  $region28: #{style_transfer_forward.60} parent=0 // pred_region
    _
  $region29: #{style_transfer_forward.60} parent=0 // pred_fallthru
    _
  // Predicated region
  $region30: #{style_transfer_forward.60} parent=0 // pred_check
    _
  $region31: #{style_transfer_forward.60} parent=0 // pred_check_branch
    %570 = sbr.rel (0) target = $region33
  $region32: #{style_transfer_forward.60} parent=0 // pred_region
    _
  $region33: #{style_transfer_forward.60} parent=0 // pred_fallthru
    _
  // Predicated region
  $region34: #{style_transfer_forward.60} parent=0 // pred_check
    _
  $region35: #{style_transfer_forward.60} parent=0 // pred_check_branch
    %572 = sbr.rel (0) target = $region37
  $region36: #{style_transfer_forward.60} parent=0 // pred_region
    _
  $region37: #{style_transfer_forward.60} parent=0 // pred_fallthru
    _
  // Predicated region
  $region38: #{style_transfer_forward.60} parent=0 // pred_check
    _
  $region39: #{style_transfer_forward.60} parent=0 // pred_check_branch
    %574 = sbr.rel (0) target = $region41
  $region40: #{style_transfer_forward.60} parent=0 // pred_region
    _
  $region41: #{style_transfer_forward.60} parent=0 // pred_fallthru
    _

// kernel: style_transfer_forward.62
$region0: #{style_transfer_forward.62}
  #allocation0 [shape = 'u32[]', space=smem, size = 0x4, offset = 0x4, fixed_abs, tag = 'smem constant byte address 0x4 - core index']
  #allocation1 [shape = 'u32[144,128]{1,0:T(1,128)}', space=vmem, size = 0x12000, scoped, tag = 'internal scratch']
  #allocation2 [shape = 'f32[256,128]{1,0:T(8,128)}', space=vmem, size = 0x20000, scoped, tag = 'scratch operand']
  %s0 = inlined_call_operand.vmem [shape: bf16[512,2688], index: 0, kind: input, shape index: {}]
  %s1 = inlined_call_operand.vmem [shape: bf16[2688,128], index: 1, kind: input, shape index: {}]
  %s2 = inlined_call_operand.vmem [shape: bf16[512,128], index: 2, kind: output, shape index: {0}]
  %s3 = inlined_call_operand.vmem [shape: f32[2,1,128], index: 3, kind: output, shape index: {1}]
  %s4 = inlined_call_operand.vmem [shape: f32[2,1,128], index: 4, kind: output, shape index: {2}]
  %5 = xla_tuple %s2, %s3, %s4
  %s6 = sld [smem:[#allocation0]]
  $region91: #{style_transfer_forward.62} parent=0
    _
  %s8 = ssub.s32 1, %s6
  %s9 = scalar_select 0, %s8, %s6
  $region1: #{style_transfer_forward.62} parent=0
    #allocation3 [shape = 'u8[393216]{0}', space=vmem, size = 0x60000, scoped, tag = 'input window, operand 0']
    loop: start=0, step=1, limit=16
    $region2: #{style_transfer_forward.62} parent=1 // loop_pre_header
      _
    $region3: #{style_transfer_forward.62} parent=1 // loop_header
      %s11 = sphi 0, %s15
      %p12 = scmp.ge.s32.totalorder %s11, 16
      %s18 = sphi 0, %s37
      %s19 = sphi 0, %s33
      %s20 = sphi 0, %s29
      %s21 = sphi 0, %s18
      %s22 = sphi 0, %s19
      %s23 = sphi 0, %s20
      %s24 = sphi 0, %s21
      %s25 = sphi 0, %s22
      %s26 = sphi 0, %s23
      %s42 = sphi 0, %s44
      %s45 = sphi 0, %s42
      %s46 = sphi 0, %s45
      %s62 = sphi 0, %s46
      %s70 = sphi 0, %s72
      %s73 = sphi 0, %s70
      %s74 = sphi 0, %s73
      %s90 = sphi 0, %s74
      %s98 = sphi 0, %s100
      %s101 = sphi 0, %s98
      %s102 = sphi 0, %s101
      %s118 = sphi 0, %s102
      %s126 = sphi 0, %s128
      %s129 = sphi 0, %s126
      %s130 = sphi 0, %s129
      %s146 = sphi 0, %s130
      %s154 = sphi 0, %s156
      %s157 = sphi 0, %s154
      %s158 = sphi 0, %s157
      %s174 = sphi 0, %s158
    $region4: #{style_transfer_forward.62} parent=1 // loop_header_branch
      %14 = sbr.rel (%p12) target = $region8
    $region5: #{style_transfer_forward.62} parent=1 // loop_body
      %s16 = ssub.s32 %s11, 1
      %s17 = ssub.s32 %s11, 2
      %s27 = sadd.s32 1, %s20
      %p28 = scmp.ge.s32.totalorder %s27, 7
      %s29 = scalar_select %p28, 0, %s27
      %s30 = sadd.s32 1, %s19
      %s31 = scalar_select %p28, %s30, %s19
      %p32 = scmp.ge.s32.totalorder %s31, 1
      %s33 = scalar_select %p32, 0, %s31
      %s34 = sadd.s32 1, %s18
      %s35 = scalar_select %p32, %s34, %s18
      %p36 = scmp.ge.s32.totalorder %s35, 2
      %s37 = scalar_select %p36, 0, %s35
      %s38 = ssub.s32 %s18, %s37
      %s39 = ssub.s32 %s20, %s29
      %s40 = sor.u32 %s38, %s39
      %p41 = scmp.eq.s32.totalorder %s40, 0
      %s43 = sadd.s32 %s42, 1
      %s44 = scalar_select %p41, %s42, %s43
      %p47 = pneg %p41
      %p48 = scmp.eq.s32.totalorder %s11, 13
      %p49 = por %p47, %p48
      %p50 = scmp.ne.s32.totalorder %s42, %s45
      %p51 = scmp.eq.s32.totalorder %s11, 0
      %p52 = por %p50, %p51
      %p53 = scmp.ne.s32.totalorder %s42, %s45
      %p54 = scmp.eq.s32.totalorder %s16, 13
      %p55 = por %p53, %p54
      %p56 = scmp.ne.s32.totalorder %s45, %s46
      %p57 = scmp.eq.s32.totalorder %s16, 0
      %p58 = por %p56, %p57
      %p59 = scmp.ne.s32.totalorder %s45, %s46
      %p60 = scmp.eq.s32.totalorder %s17, 13
      %p61 = por %p59, %p60
      %p63 = scmp.ne.s32.totalorder %s46, %s62
      %p64 = scmp.eq.s32.totalorder %s17, 0
      %p65 = por %p63, %p64
      %s66 = ssub.s32 %s20, %s29
      %s67 = ssub.s32 %s19, %s33
      %s68 = sor.u32 %s66, %s67
      %p69 = scmp.eq.s32.totalorder %s68, 0
      %s71 = sadd.s32 %s70, 1
      %s72 = scalar_select %p69, %s70, %s71
      %p75 = pneg %p69
      %p76 = scmp.eq.s32.totalorder %s11, 13
      %p77 = por %p75, %p76
      %p78 = scmp.ne.s32.totalorder %s70, %s73
      %p79 = scmp.eq.s32.totalorder %s11, 0
      %p80 = por %p78, %p79
      %p81 = scmp.ne.s32.totalorder %s70, %s73
      %p82 = scmp.eq.s32.totalorder %s16, 13
      %p83 = por %p81, %p82
      %p84 = scmp.ne.s32.totalorder %s73, %s74
      %p85 = scmp.eq.s32.totalorder %s16, 0
      %p86 = por %p84, %p85
      %p87 = scmp.ne.s32.totalorder %s73, %s74
      %p88 = scmp.eq.s32.totalorder %s17, 13
      %p89 = por %p87, %p88
      %p91 = scmp.ne.s32.totalorder %s74, %s90
      %p92 = scmp.eq.s32.totalorder %s17, 0
      %p93 = por %p91, %p92
      %s94 = ssub.s32 %s18, %s37
      %s95 = ssub.s32 %s19, %s33
      %s96 = sor.u32 %s94, %s95
      %p97 = scmp.eq.s32.totalorder %s96, 0
      %s99 = sadd.s32 %s98, 1
      %s100 = scalar_select %p97, %s98, %s99
      %p103 = pneg %p97
      %p104 = scmp.eq.s32.totalorder %s11, 13
      %p105 = por %p103, %p104
      %p106 = scmp.ne.s32.totalorder %s98, %s101
      %p107 = scmp.eq.s32.totalorder %s11, 0
      %p108 = por %p106, %p107
      %p109 = scmp.ne.s32.totalorder %s98, %s101
      %p110 = scmp.eq.s32.totalorder %s16, 13
      %p111 = por %p109, %p110
      %p112 = scmp.ne.s32.totalorder %s101, %s102
      %p113 = scmp.eq.s32.totalorder %s16, 0
      %p114 = por %p112, %p113
      %p115 = scmp.ne.s32.totalorder %s101, %s102
      %p116 = scmp.eq.s32.totalorder %s17, 13
      %p117 = por %p115, %p116
      %p119 = scmp.ne.s32.totalorder %s102, %s118
      %p120 = scmp.eq.s32.totalorder %s17, 0
      %p121 = por %p119, %p120
      %s122 = ssub.s32 %s18, %s37
      %s123 = ssub.s32 %s19, %s33
      %s124 = sor.u32 %s122, %s123
      %p125 = scmp.eq.s32.totalorder %s124, 0
      %s127 = sadd.s32 %s126, 1
      %s128 = scalar_select %p125, %s126, %s127
      %p131 = pneg %p125
      %p132 = scmp.eq.s32.totalorder %s11, 13
      %p133 = por %p131, %p132
      %p134 = scmp.ne.s32.totalorder %s126, %s129
      %p135 = scmp.eq.s32.totalorder %s11, 0
      %p136 = por %p134, %p135
      %p137 = scmp.ne.s32.totalorder %s126, %s129
      %p138 = scmp.eq.s32.totalorder %s16, 13
      %p139 = por %p137, %p138
      %p140 = scmp.ne.s32.totalorder %s129, %s130
      %p141 = scmp.eq.s32.totalorder %s16, 0
      %p142 = por %p140, %p141
      %p143 = scmp.ne.s32.totalorder %s129, %s130
      %p144 = scmp.eq.s32.totalorder %s17, 13
      %p145 = por %p143, %p144
      %p147 = scmp.ne.s32.totalorder %s130, %s146
      %p148 = scmp.eq.s32.totalorder %s17, 0
      %p149 = por %p147, %p148
      %s150 = ssub.s32 %s18, %s37
      %s151 = ssub.s32 %s19, %s33
      %s152 = sor.u32 %s150, %s151
      %p153 = scmp.eq.s32.totalorder %s152, 0
      %s155 = sadd.s32 %s154, 1
      %s156 = scalar_select %p153, %s154, %s155
      %p159 = pneg %p153
      %p160 = scmp.eq.s32.totalorder %s11, 13
      %p161 = por %p159, %p160
      %p162 = scmp.ne.s32.totalorder %s154, %s157
      %p163 = scmp.eq.s32.totalorder %s11, 0
      %p164 = por %p162, %p163
      %p165 = scmp.ne.s32.totalorder %s154, %s157
      %p166 = scmp.eq.s32.totalorder %s16, 13
      %p167 = por %p165, %p166
      %p168 = scmp.ne.s32.totalorder %s157, %s158
      %p169 = scmp.eq.s32.totalorder %s16, 0
      %p170 = por %p168, %p169
      %p171 = scmp.ne.s32.totalorder %s157, %s158
      %p172 = scmp.eq.s32.totalorder %s17, 13
      %p173 = por %p171, %p172
      %p175 = scmp.ne.s32.totalorder %s158, %s174
      %p176 = scmp.eq.s32.totalorder %s17, 0
      %p177 = por %p175, %p176
      %p178 = scmp.le.s32.totalorder 1, %s11
      %p179 = scmp.lt.s32.totalorder %s11, 15
      %p180 = pnand %p178, %p179
      %p181 = pneg %p180
      // Predicated region
      $region9: #{style_transfer_forward.62} parent=5 // pred_check
        _
      $region10: #{style_transfer_forward.62} parent=5 // pred_check_branch
        %183 = sbr.rel (%p180) target = $region12
      $region11: #{style_transfer_forward.62} parent=5 // pred_region
        %s184 = ssub.s32 %s11, 1
      $region12: #{style_transfer_forward.62} parent=5 // pred_fallthru
        _
      %p185 = scmp.lt.s32.totalorder %s11, 14
      // Predicated region
      $region13: #{style_transfer_forward.62} parent=5 // pred_check
        %p186 = pneg %p185
      $region14: #{style_transfer_forward.62} parent=5 // pred_check_branch
        %188 = sbr.rel (%p186) target = $region16
      $region15: #{style_transfer_forward.62} parent=5 // pred_region
        // Predicated region
        $region17: #{style_transfer_forward.62} parent=15 // pred_check
          %p189 = pneg %p52
        $region18: #{style_transfer_forward.62} parent=15 // pred_check_branch
          %191 = sbr.rel (%p189) target = $region20
        $region19: #{style_transfer_forward.62} parent=15 // pred_region
          %s192 = sand.u32 %s42, 1
          %s193 = sand.u32 %s42, 1
          %s194 = smul.addr %s193, 384
          %s195 = scalar_lea.vmem [#allocation3], %s194
          %s196 = smul.u32 32, %s18
          %s197 = smul.u32 3, %s20
          %s198 = smul.addr %s196, 21
          %s199 = sadd.s32 %s197, %s198
          %s200 = smul.addr %s199, 4
          %s201 = scalar_lea.vmem %s0, %s200
          // Predicated region
          $region21: #{style_transfer_forward.62} parent=19 // pred_check
            _
          $region22: #{style_transfer_forward.62} parent=19 // pred_check_branch
            %203 = sbr.rel (0) target = $region24
          $region23: #{style_transfer_forward.62} parent=19 // pred_region
            // Predicated region
            $region25: #{style_transfer_forward.62} parent=23 // pred_check
              _
            $region26: #{style_transfer_forward.62} parent=23 // pred_check_branch
              %205 = sbr.rel (0) target = $region28
            $region27: #{style_transfer_forward.62} parent=23 // pred_region
              %s206 = scalar_lea.vmem %s201, 8
              %s207 = scalar_lea.vmem %s195, 8 [#allocation3]
              loop: start=0, step=1, limit=1
              $region29: #{style_transfer_forward.62} parent=27 // loop_pre_header
                _
              $region30: #{style_transfer_forward.62} parent=27 // loop_header
                %s209 = sphi 0, %s213
                %p210 = scmp.ge.s32.totalorder %s209, 1
                %s214 = sphi %s201, %s201
                %s215 = sphi %s195, %s195
              $region31: #{style_transfer_forward.62} parent=27 // loop_header_branch
                %212 = sbr.rel (%p210) target = $region35
              $region32: #{style_transfer_forward.62} parent=27 // loop_body
                %v216 = vld [vmem:[%s214] sm:$0xff]
                %217 = vst [vmem:[%s215] sm:$0xff] %v216
                %v218 = vld [vmem:[%s214 + $0x54] sm:$0xff]
                %219 = vst [vmem:[%s215 + $0xc] sm:$0xff] %v218
                %v220 = vld [vmem:[%s214 + $0xa8] sm:$0xff]
                %221 = vst [vmem:[%s215 + $0x18] sm:$0xff] %v220
                %v222 = vld [vmem:[%s214 + $0xfc] sm:$0xff]
                %223 = vst [vmem:[%s215 + $0x24] sm:$0xff] %v222
                %v224 = vld [vmem:[%s214 + $0x150] sm:$0xff]
                %225 = vst [vmem:[%s215 + $0x30] sm:$0xff] %v224
                %v226 = vld [vmem:[%s214 + $0x1a4] sm:$0xff]
                %227 = vst [vmem:[%s215 + $0x3c] sm:$0xff] %v226
                %v228 = vld [vmem:[%s214 + $0x1f8] sm:$0xff]
                %229 = vst [vmem:[%s215 + $0x48] sm:$0xff] %v228
                %v230 = vld [vmem:[%s214 + $0x24c] sm:$0xff]
                %231 = vst [vmem:[%s215 + $0x54] sm:$0xff] %v230
                %v232 = vld [vmem:[%s214 + $0x2a0] sm:$0xff]
                %233 = vst [vmem:[%s215 + $0x60] sm:$0xff] %v232
                %v234 = vld [vmem:[%s214 + $0x2f4] sm:$0xff]
                %235 = vst [vmem:[%s215 + $0x6c] sm:$0xff] %v234
                %v236 = vld [vmem:[%s214 + $0x348] sm:$0xff]
                %237 = vst [vmem:[%s215 + $0x78] sm:$0xff] %v236
                %v238 = vld [vmem:[%s214 + $0x39c] sm:$0xff]
                %239 = vst [vmem:[%s215 + $0x84] sm:$0xff] %v238
                %v240 = vld [vmem:[%s214 + $0x3f0] sm:$0xff]
                %241 = vst [vmem:[%s215 + $0x90] sm:$0xff] %v240
                %v242 = vld [vmem:[%s214 + $0x444] sm:$0xff]
                %243 = vst [vmem:[%s215 + $0x9c] sm:$0xff] %v242
                %v244 = vld [vmem:[%s214 + $0x498] sm:$0xff]
                %245 = vst [vmem:[%s215 + $0xa8] sm:$0xff] %v244
                %v246 = vld [vmem:[%s214 + $0x4ec] sm:$0xff]
                %247 = vst [vmem:[%s215 + $0xb4] sm:$0xff] %v246
                %v248 = vld [vmem:[%s214 + $0x540] sm:$0xff]
                %249 = vst [vmem:[%s215 + $0xc0] sm:$0xff] %v248
                %v250 = vld [vmem:[%s214 + $0x594] sm:$0xff]
                %251 = vst [vmem:[%s215 + $0xcc] sm:$0xff] %v250
                %v252 = vld [vmem:[%s214 + $0x5e8] sm:$0xff]
                %253 = vst [vmem:[%s215 + $0xd8] sm:$0xff] %v252
                %v254 = vld [vmem:[%s214 + $0x63c] sm:$0xff]
                %255 = vst [vmem:[%s215 + $0xe4] sm:$0xff] %v254
                %v256 = vld [vmem:[%s214 + $0x690] sm:$0xff]
                %257 = vst [vmem:[%s215 + $0xf0] sm:$0xff] %v256
                %v258 = vld [vmem:[%s214 + $0x6e4] sm:$0xff]
                %259 = vst [vmem:[%s215 + $0xfc] sm:$0xff] %v258
                %v260 = vld [vmem:[%s214 + $0x738] sm:$0xff]
                %261 = vst [vmem:[%s215 + $0x108] sm:$0xff] %v260
                %v262 = vld [vmem:[%s214 + $0x78c] sm:$0xff]
                %263 = vst [vmem:[%s215 + $0x114] sm:$0xff] %v262
                %v264 = vld [vmem:[%s214 + $0x7e0] sm:$0xff]
                %265 = vst [vmem:[%s215 + $0x120] sm:$0xff] %v264
                %v266 = vld [vmem:[%s214 + $0x834] sm:$0xff]
                %267 = vst [vmem:[%s215 + $0x12c] sm:$0xff] %v266
                %v268 = vld [vmem:[%s214 + $0x888] sm:$0xff]
                %269 = vst [vmem:[%s215 + $0x138] sm:$0xff] %v268
                %v270 = vld [vmem:[%s214 + $0x8dc] sm:$0xff]
                %271 = vst [vmem:[%s215 + $0x144] sm:$0xff] %v270
                %v272 = vld [vmem:[%s214 + $0x930] sm:$0xff]
                %273 = vst [vmem:[%s215 + $0x150] sm:$0xff] %v272
                %v274 = vld [vmem:[%s214 + $0x984] sm:$0xff]
                %275 = vst [vmem:[%s215 + $0x15c] sm:$0xff] %v274
                %v276 = vld [vmem:[%s214 + $0x9d8] sm:$0xff]
                %277 = vst [vmem:[%s215 + $0x168] sm:$0xff] %v276
                %v278 = vld [vmem:[%s214 + $0xa2c] sm:$0xff]
                %279 = vst [vmem:[%s215 + $0x174] sm:$0xff] %v278
              $region33: #{style_transfer_forward.62} parent=27 // loop_footer
                %s213 = sadd.s32 1, %s209
              $region34: #{style_transfer_forward.62} parent=27 // loop_footer_branch
                %208 = sbr.rel target = $region30
              $region35: #{style_transfer_forward.62} parent=27 // loop_exit
                _
              loop: start=0, step=1, limit=1
              $region36: #{style_transfer_forward.62} parent=27 // loop_pre_header
                _
              $region37: #{style_transfer_forward.62} parent=27 // loop_header
                %s282 = sphi 0, %s286
                %p283 = scmp.ge.s32.totalorder %s282, 1
                %s287 = sphi %s206, %s206
                %s288 = sphi %s207, %s207
              $region38: #{style_transfer_forward.62} parent=27 // loop_header_branch
                %285 = sbr.rel (%p283) target = $region42
              $region39: #{style_transfer_forward.62} parent=27 // loop_body
                %v289 = vld [vmem:[%s287] sm:$0xf]
                %290 = vst [vmem:[%s288] sm:$0xf] %v289
                %v291 = vld [vmem:[%s287 + $0x54] sm:$0xf]
                %292 = vst [vmem:[%s288 + $0xc] sm:$0xf] %v291
                %v293 = vld [vmem:[%s287 + $0xa8] sm:$0xf]
                %294 = vst [vmem:[%s288 + $0x18] sm:$0xf] %v293
                %v295 = vld [vmem:[%s287 + $0xfc] sm:$0xf]
                %296 = vst [vmem:[%s288 + $0x24] sm:$0xf] %v295
                %v297 = vld [vmem:[%s287 + $0x150] sm:$0xf]
                %298 = vst [vmem:[%s288 + $0x30] sm:$0xf] %v297
                %v299 = vld [vmem:[%s287 + $0x1a4] sm:$0xf]
                %300 = vst [vmem:[%s288 + $0x3c] sm:$0xf] %v299
                %v301 = vld [vmem:[%s287 + $0x1f8] sm:$0xf]
                %302 = vst [vmem:[%s288 + $0x48] sm:$0xf] %v301
                %v303 = vld [vmem:[%s287 + $0x24c] sm:$0xf]
                %304 = vst [vmem:[%s288 + $0x54] sm:$0xf] %v303
                %v305 = vld [vmem:[%s287 + $0x2a0] sm:$0xf]
                %306 = vst [vmem:[%s288 + $0x60] sm:$0xf] %v305
                %v307 = vld [vmem:[%s287 + $0x2f4] sm:$0xf]
                %308 = vst [vmem:[%s288 + $0x6c] sm:$0xf] %v307
                %v309 = vld [vmem:[%s287 + $0x348] sm:$0xf]
                %310 = vst [vmem:[%s288 + $0x78] sm:$0xf] %v309
                %v311 = vld [vmem:[%s287 + $0x39c] sm:$0xf]
                %312 = vst [vmem:[%s288 + $0x84] sm:$0xf] %v311
                %v313 = vld [vmem:[%s287 + $0x3f0] sm:$0xf]
                %314 = vst [vmem:[%s288 + $0x90] sm:$0xf] %v313
                %v315 = vld [vmem:[%s287 + $0x444] sm:$0xf]
                %316 = vst [vmem:[%s288 + $0x9c] sm:$0xf] %v315
                %v317 = vld [vmem:[%s287 + $0x498] sm:$0xf]
                %318 = vst [vmem:[%s288 + $0xa8] sm:$0xf] %v317
                %v319 = vld [vmem:[%s287 + $0x4ec] sm:$0xf]
                %320 = vst [vmem:[%s288 + $0xb4] sm:$0xf] %v319
                %v321 = vld [vmem:[%s287 + $0x540] sm:$0xf]
                %322 = vst [vmem:[%s288 + $0xc0] sm:$0xf] %v321
                %v323 = vld [vmem:[%s287 + $0x594] sm:$0xf]
                %324 = vst [vmem:[%s288 + $0xcc] sm:$0xf] %v323
                %v325 = vld [vmem:[%s287 + $0x5e8] sm:$0xf]
                %326 = vst [vmem:[%s288 + $0xd8] sm:$0xf] %v325
                %v327 = vld [vmem:[%s287 + $0x63c] sm:$0xf]
                %328 = vst [vmem:[%s288 + $0xe4] sm:$0xf] %v327
                %v329 = vld [vmem:[%s287 + $0x690] sm:$0xf]
                %330 = vst [vmem:[%s288 + $0xf0] sm:$0xf] %v329
                %v331 = vld [vmem:[%s287 + $0x6e4] sm:$0xf]
                %332 = vst [vmem:[%s288 + $0xfc] sm:$0xf] %v331
                %v333 = vld [vmem:[%s287 + $0x738] sm:$0xf]
                %334 = vst [vmem:[%s288 + $0x108] sm:$0xf] %v333
                %v335 = vld [vmem:[%s287 + $0x78c] sm:$0xf]
                %336 = vst [vmem:[%s288 + $0x114] sm:$0xf] %v335
                %v337 = vld [vmem:[%s287 + $0x7e0] sm:$0xf]
                %338 = vst [vmem:[%s288 + $0x120] sm:$0xf] %v337
                %v339 = vld [vmem:[%s287 + $0x834] sm:$0xf]
                %340 = vst [vmem:[%s288 + $0x12c] sm:$0xf] %v339
                %v341 = vld [vmem:[%s287 + $0x888] sm:$0xf]
                %342 = vst [vmem:[%s288 + $0x138] sm:$0xf] %v341
                %v343 = vld [vmem:[%s287 + $0x8dc] sm:$0xf]
                %344 = vst [vmem:[%s288 + $0x144] sm:$0xf] %v343
                %v345 = vld [vmem:[%s287 + $0x930] sm:$0xf]
                %346 = vst [vmem:[%s288 + $0x150] sm:$0xf] %v345
                %v347 = vld [vmem:[%s287 + $0x984] sm:$0xf]
                %348 = vst [vmem:[%s288 + $0x15c] sm:$0xf] %v347
                %v349 = vld [vmem:[%s287 + $0x9d8] sm:$0xf]
                %350 = vst [vmem:[%s288 + $0x168] sm:$0xf] %v349
                %v351 = vld [vmem:[%s287 + $0xa2c] sm:$0xf]
                %352 = vst [vmem:[%s288 + $0x174] sm:$0xf] %v351
              $region40: #{style_transfer_forward.62} parent=27 // loop_footer
                %s286 = sadd.s32 1, %s282
              $region41: #{style_transfer_forward.62} parent=27 // loop_footer_branch
                %281 = sbr.rel target = $region37
              $region42: #{style_transfer_forward.62} parent=27 // loop_exit
                _
            $region28: #{style_transfer_forward.62} parent=23 // pred_fallthru
              _
          $region24: #{style_transfer_forward.62} parent=19 // pred_fallthru
            _
          %353 = vnop
        $region20: #{style_transfer_forward.62} parent=15 // pred_fallthru
          _
        // Predicated region
        $region43: #{style_transfer_forward.62} parent=15 // pred_check
          %p354 = pneg %p80
        $region44: #{style_transfer_forward.62} parent=15 // pred_check_branch
          %356 = sbr.rel (%p354) target = $region46
        $region45: #{style_transfer_forward.62} parent=15 // pred_region
          %s357 = smul.u32 48, %s20
          %p358 = scmp.lt.s32.totalorder %s357, 335
          %s359 = scalar_select %p358, %s357, 335
          %p360 = scmp.lt.s32.totalorder %s19, 0
          %s361 = scalar_select %p360, %s19, 0
          %s362 = sadd.s32 %s361, %s359
          %s363 = smul.addr %s362, 4
          %s364 = scalar_lea.vmem %s1, %s363
          %s365 = smul.u32 48, %s20
        $region46: #{style_transfer_forward.62} parent=15 // pred_fallthru
          _
      $region16: #{style_transfer_forward.62} parent=5 // pred_fallthru
        _
      %p366 = scmp.le.s32.totalorder 1, %s11
      %p367 = scmp.lt.s32.totalorder %s11, 15
      %p368 = pnand %p366, %p367
      %p369 = pneg %p368
      // Predicated region
      $region47: #{style_transfer_forward.62} parent=5 // pred_check
        _
      $region48: #{style_transfer_forward.62} parent=5 // pred_check_branch
        %371 = sbr.rel (%p368) target = $region50
      $region49: #{style_transfer_forward.62} parent=5 // pred_region
        %s372 = ssub.s32 %s11, 1
        %s373 = sand.u32 %s45, 1
        %s374 = sand.u32 %s45, 1
        %s375 = smul.addr %s374, 384
        %s376 = scalar_lea.vmem [#allocation3], %s375
        // Predicated region
        $region51: #{style_transfer_forward.62} parent=49 // pred_check
          %p377 = pneg %p58
        $region52: #{style_transfer_forward.62} parent=49 // pred_check_branch
          %379 = sbr.rel (%p377) target = $region54
        $region53: #{style_transfer_forward.62} parent=49 // pred_region
          _
        $region54: #{style_transfer_forward.62} parent=49 // pred_fallthru
          _
        %s380 = sand.u32 %s45, 1
        %s381 = sand.u32 %s45, 1
        %s382 = smul.addr %s381, 384
        %s383 = scalar_lea.vmem [#allocation3], %s382
        %p384 = pneg %p58
        %p385 = pneg %p55
        %s386 = smul.u32 48, %s23
        %p387 = scmp.lt.s32.totalorder %s386, 335
        %s388 = scalar_select %p387, %s386, 335
        %p389 = scmp.lt.s32.totalorder %s22, 0
        %s390 = scalar_select %p389, %s22, 0
        %s391 = sadd.s32 %s390, %s388
        %s392 = smul.addr %s391, 4
        %s393 = scalar_lea.vmem %s1, %s392
        %p394 = pneg %p86
        %p395 = pneg %p83
        %p396 = pneg %p114
        %p397 = pneg %p111
        %s398 = smul.u32 32, %s21
        %p399 = scmp.lt.s32.totalorder %s398, 63
        %s400 = scalar_select %p399, %s398, 63
        %p401 = scmp.lt.s32.totalorder %s22, 0
        %s402 = scalar_select %p401, %s22, 0
        %s403 = sadd.s32 %s402, %s400
        %s404 = smul.addr %s403, 4
        %s405 = scalar_lea.vmem %s2, %s404
        %p406 = pneg %p142
        %p407 = pneg %p139
        %p408 = scmp.lt.s32.totalorder %s21, 1
        %s409 = scalar_select %p408, %s21, 1
        %p410 = scmp.lt.s32.totalorder %s22, 0
        %s411 = scalar_select %p410, %s22, 0
        %s412 = sadd.s32 %s411, %s409
        %s413 = scalar_lea.vmem %s3, %s412
        %p414 = pneg %p170
        %p415 = pneg %p167
        %p416 = scmp.lt.s32.totalorder %s21, 1
        %s417 = scalar_select %p416, %s21, 1
        %p418 = scmp.lt.s32.totalorder %s22, 0
        %s419 = scalar_select %p418, %s22, 0
        %s420 = sadd.s32 %s419, %s417
        %s421 = scalar_lea.vmem %s4, %s420
        %s422 = smul.u32 32, %s21
        %s423 = smul.u32 3, %s23
        %s424 = smul.u32 48, %s23
        %p425 = scmp.lt.s32.totalorder %s424, 335
        %s426 = scalar_select %p425, %s424, 335
        %p427 = scmp.lt.s32.totalorder %s22, 0
        %s428 = scalar_select %p427, %s22, 0
        %s429 = sadd.s32 %s428, %s426
        %s430 = smul.addr %s429, 4
        %s431 = scalar_lea.vmem %s1, %s430
        %s432 = smul.u32 48, %s23
        %s433 = smul.u32 32, %s21
        %p434 = scmp.lt.s32.totalorder %s433, 63
        %s435 = scalar_select %p434, %s433, 63
        %p436 = scmp.lt.s32.totalorder %s22, 0
        %s437 = scalar_select %p436, %s22, 0
        %s438 = sadd.s32 %s437, %s435
        %s439 = smul.addr %s438, 4
        %s440 = scalar_lea.vmem %s2, %s439
        %s441 = smul.u32 32, %s21
        %p442 = scmp.lt.s32.totalorder %s21, 1
        %s443 = scalar_select %p442, %s21, 1
        %p444 = scmp.lt.s32.totalorder %s22, 0
        %s445 = scalar_select %p444, %s22, 0
        %s446 = sadd.s32 %s445, %s443
        %s447 = scalar_lea.vmem %s3, %s446
        %p448 = scmp.lt.s32.totalorder %s21, 1
        %s449 = scalar_select %p448, %s21, 1
        %p450 = scmp.lt.s32.totalorder %s22, 0
        %s451 = scalar_select %p450, %s22, 0
        %s452 = sadd.s32 %s451, %s449
        %s453 = scalar_lea.vmem %s4, %s452
        %p455 = scmp.eq.s32.totalorder %s23, 0
        // Predicated region
        $region55: #{style_transfer_forward.62} parent=49 // pred_check
          %p456 = pneg %p455
        $region56: #{style_transfer_forward.62} parent=49 // pred_check_branch
          %458 = sbr.rel (%p456) target = $region58
        $region57: #{style_transfer_forward.62} parent=49 // pred_region
          %459 = vst [vmem:[#allocation2] sm:$0xff] 0.0
          %460 = vst [vmem:[#allocation2 + $0x8] sm:$0xff] 0.0
          %461 = vst [vmem:[#allocation2 + $0x10] sm:$0xff] 0.0
          %462 = vst [vmem:[#allocation2 + $0x18] sm:$0xff] 0.0
          %463 = vst [vmem:[#allocation2 + $0x20] sm:$0xff] 0.0
          %464 = vst [vmem:[#allocation2 + $0x28] sm:$0xff] 0.0
          %465 = vst [vmem:[#allocation2 + $0x30] sm:$0xff] 0.0
          %466 = vst [vmem:[#allocation2 + $0x38] sm:$0xff] 0.0
          %467 = vst [vmem:[#allocation2 + $0x40] sm:$0xff] 0.0
          %468 = vst [vmem:[#allocation2 + $0x48] sm:$0xff] 0.0
          %469 = vst [vmem:[#allocation2 + $0x50] sm:$0xff] 0.0
          %470 = vst [vmem:[#allocation2 + $0x58] sm:$0xff] 0.0
          %471 = vst [vmem:[#allocation2 + $0x60] sm:$0xff] 0.0
          %472 = vst [vmem:[#allocation2 + $0x68] sm:$0xff] 0.0
          %473 = vst [vmem:[#allocation2 + $0x70] sm:$0xff] 0.0
          %474 = vst [vmem:[#allocation2 + $0x78] sm:$0xff] 0.0
          %475 = vst [vmem:[#allocation2 + $0x80] sm:$0xff] 0.0
          %476 = vst [vmem:[#allocation2 + $0x88] sm:$0xff] 0.0
          %477 = vst [vmem:[#allocation2 + $0x90] sm:$0xff] 0.0
          %478 = vst [vmem:[#allocation2 + $0x98] sm:$0xff] 0.0
          %479 = vst [vmem:[#allocation2 + $0xa0] sm:$0xff] 0.0
          %480 = vst [vmem:[#allocation2 + $0xa8] sm:$0xff] 0.0
          %481 = vst [vmem:[#allocation2 + $0xb0] sm:$0xff] 0.0
          %482 = vst [vmem:[#allocation2 + $0xb8] sm:$0xff] 0.0
          %483 = vst [vmem:[#allocation2 + $0xc0] sm:$0xff] 0.0
          %484 = vst [vmem:[#allocation2 + $0xc8] sm:$0xff] 0.0
          %485 = vst [vmem:[#allocation2 + $0xd0] sm:$0xff] 0.0
          %486 = vst [vmem:[#allocation2 + $0xd8] sm:$0xff] 0.0
          %487 = vst [vmem:[#allocation2 + $0xe0] sm:$0xff] 0.0
          %488 = vst [vmem:[#allocation2 + $0xe8] sm:$0xff] 0.0
          %489 = vst [vmem:[#allocation2 + $0xf0] sm:$0xff] 0.0
          %490 = vst [vmem:[#allocation2 + $0xf8] sm:$0xff] 0.0
        $region58: #{style_transfer_forward.62} parent=49 // pred_fallthru
          _
        %v491 = vld [vmem:[#allocation2] sm:$0xff]
        %v492 = vld [vmem:[#allocation2 + $0x8] sm:$0xff]
        %v493 = vld [vmem:[#allocation2 + $0x10] sm:$0xff]
        %v494 = vld [vmem:[#allocation2 + $0x18] sm:$0xff]
        %v495 = vld [vmem:[#allocation2 + $0x20] sm:$0xff]
        %v496 = vld [vmem:[#allocation2 + $0x28] sm:$0xff]
        %v497 = vld [vmem:[#allocation2 + $0x30] sm:$0xff]
        %v498 = vld [vmem:[#allocation2 + $0x38] sm:$0xff]
        %v499 = vld [vmem:[#allocation2 + $0x40] sm:$0xff]
        %v500 = vld [vmem:[#allocation2 + $0x48] sm:$0xff]
        %v501 = vld [vmem:[#allocation2 + $0x50] sm:$0xff]
        %v502 = vld [vmem:[#allocation2 + $0x58] sm:$0xff]
        %v503 = vld [vmem:[#allocation2 + $0x60] sm:$0xff]
        %v504 = vld [vmem:[#allocation2 + $0x68] sm:$0xff]
        %v505 = vld [vmem:[#allocation2 + $0x70] sm:$0xff]
        %v506 = vld [vmem:[#allocation2 + $0x78] sm:$0xff]
        %v507 = vld [vmem:[#allocation2 + $0x80] sm:$0xff]
        %v508 = vld [vmem:[#allocation2 + $0x88] sm:$0xff]
        %v509 = vld [vmem:[#allocation2 + $0x90] sm:$0xff]
        %v510 = vld [vmem:[#allocation2 + $0x98] sm:$0xff]
        %v511 = vld [vmem:[#allocation2 + $0xa0] sm:$0xff]
        %v512 = vld [vmem:[#allocation2 + $0xa8] sm:$0xff]
        %v513 = vld [vmem:[#allocation2 + $0xb0] sm:$0xff]
        %v514 = vld [vmem:[#allocation2 + $0xb8] sm:$0xff]
        %v515 = vld [vmem:[#allocation2 + $0xc0] sm:$0xff]
        %v516 = vld [vmem:[#allocation2 + $0xc8] sm:$0xff]
        %v517 = vld [vmem:[#allocation2 + $0xd0] sm:$0xff]
        %v518 = vld [vmem:[#allocation2 + $0xd8] sm:$0xff]
        %v519 = vld [vmem:[#allocation2 + $0xe0] sm:$0xff]
        %v520 = vld [vmem:[#allocation2 + $0xe8] sm:$0xff]
        %v521 = vld [vmem:[#allocation2 + $0xf0] sm:$0xff]
        %v522 = vld [vmem:[#allocation2 + $0xf8] sm:$0xff]
        %v523 = vld [vmem:[%s376] sm:$0xff]
        %v524 = vld [vmem:[%s376 + $0x8] sm:$0xf]
        %v525 = vld [vmem:[%s376 + $0xc] sm:$0xff]
        %v526 = vld [vmem:[%s376 + $0x14] sm:$0xf]
        %v527 = vld [vmem:[%s376 + $0x18] sm:$0xff]
        %v528 = vld [vmem:[%s376 + $0x20] sm:$0xf]
        %v529 = vld [vmem:[%s376 + $0x24] sm:$0xff]
        %v530 = vld [vmem:[%s376 + $0x2c] sm:$0xf]
        %v531 = vld [vmem:[%s376 + $0x30] sm:$0xff]
        %v532 = vld [vmem:[%s376 + $0x38] sm:$0xf]
        %v533 = vld [vmem:[%s376 + $0x3c] sm:$0xff]
        %v534 = vld [vmem:[%s376 + $0x44] sm:$0xf]
        %v535 = vld [vmem:[%s376 + $0x48] sm:$0xff]
        %v536 = vld [vmem:[%s376 + $0x50] sm:$0xf]
        %v537 = vld [vmem:[%s376 + $0x54] sm:$0xff]
        %v538 = vld [vmem:[%s376 + $0x5c] sm:$0xf]
        %v539 = vld [vmem:[%s376 + $0x60] sm:$0xff]
        %v540 = vld [vmem:[%s376 + $0x68] sm:$0xf]
        %v541 = vld [vmem:[%s376 + $0x6c] sm:$0xff]
        %v542 = vld [vmem:[%s376 + $0x74] sm:$0xf]
        %v543 = vld [vmem:[%s376 + $0x78] sm:$0xff]
        %v544 = vld [vmem:[%s376 + $0x80] sm:$0xf]
        %v545 = vld [vmem:[%s376 + $0x84] sm:$0xff]
        %v546 = vld [vmem:[%s376 + $0x8c] sm:$0xf]
        %v547 = vld [vmem:[%s376 + $0x90] sm:$0xff]
        %v548 = vld [vmem:[%s376 + $0x98] sm:$0xf]
        %v549 = vld [vmem:[%s376 + $0x9c] sm:$0xff]
        %v550 = vld [vmem:[%s376 + $0xa4] sm:$0xf]
        %v551 = vld [vmem:[%s376 + $0xa8] sm:$0xff]
        %v552 = vld [vmem:[%s376 + $0xb0] sm:$0xf]
        %v553 = vld [vmem:[%s376 + $0xb4] sm:$0xff]
        %v554 = vld [vmem:[%s376 + $0xbc] sm:$0xf]
        %v555 = vld [vmem:[%s376 + $0xc0] sm:$0xff]
        %v556 = vld [vmem:[%s376 + $0xc8] sm:$0xf]
        %v557 = vld [vmem:[%s376 + $0xcc] sm:$0xff]
        %v558 = vld [vmem:[%s376 + $0xd4] sm:$0xf]
        %v559 = vld [vmem:[%s376 + $0xd8] sm:$0xff]
        %v560 = vld [vmem:[%s376 + $0xe0] sm:$0xf]
        %v561 = vld [vmem:[%s376 + $0xe4] sm:$0xff]
        %v562 = vld [vmem:[%s376 + $0xec] sm:$0xf]
        %v563 = vld [vmem:[%s376 + $0xf0] sm:$0xff]
        %v564 = vld [vmem:[%s376 + $0xf8] sm:$0xf]
        %v565 = vld [vmem:[%s376 + $0xfc] sm:$0xff]
        %v566 = vld [vmem:[%s376 + $0x104] sm:$0xf]
        %v567 = vld [vmem:[%s376 + $0x108] sm:$0xff]
        %v568 = vld [vmem:[%s376 + $0x110] sm:$0xf]
        %v569 = vld [vmem:[%s376 + $0x114] sm:$0xff]
        %v570 = vld [vmem:[%s376 + $0x11c] sm:$0xf]
        %v571 = vld [vmem:[%s376 + $0x120] sm:$0xff]
        %v572 = vld [vmem:[%s376 + $0x128] sm:$0xf]
        %v573 = vld [vmem:[%s376 + $0x12c] sm:$0xff]
        %v574 = vld [vmem:[%s376 + $0x134] sm:$0xf]
        %v575 = vld [vmem:[%s376 + $0x138] sm:$0xff]
        %v576 = vld [vmem:[%s376 + $0x140] sm:$0xf]
        %v577 = vld [vmem:[%s376 + $0x144] sm:$0xff]
        %v578 = vld [vmem:[%s376 + $0x14c] sm:$0xf]
        %v579 = vld [vmem:[%s376 + $0x150] sm:$0xff]
        %v580 = vld [vmem:[%s376 + $0x158] sm:$0xf]
        %v581 = vld [vmem:[%s376 + $0x15c] sm:$0xff]
        %v582 = vld [vmem:[%s376 + $0x164] sm:$0xf]
        %v583 = vld [vmem:[%s376 + $0x168] sm:$0xff]
        %v584 = vld [vmem:[%s376 + $0x170] sm:$0xf]
        %v585 = vld [vmem:[%s376 + $0x174] sm:$0xff]
        %v586 = vld [vmem:[%s376 + $0x17c] sm:$0xf]
        %v587 = vld [vmem:[%s431] sm:$0xf]
        %v588 = vld [vmem:[%s431 + $0x4] sm:$0xf]
        %v589 = vld [vmem:[%s431 + $0x8] sm:$0xf]
        %v590 = vld [vmem:[%s431 + $0xc] sm:$0xf]
        %v591 = vld [vmem:[%s431 + $0x10] sm:$0xf]
        %v592 = vld [vmem:[%s431 + $0x14] sm:$0xf]
        %v593 = vld [vmem:[%s431 + $0x18] sm:$0xf]
        %v594 = vld [vmem:[%s431 + $0x1c] sm:$0xf]
        %v595 = vld [vmem:[%s431 + $0x20] sm:$0xf]
        %v596 = vld [vmem:[%s431 + $0x24] sm:$0xf]
        %v597 = vld [vmem:[%s431 + $0x28] sm:$0xf]
        %v598 = vld [vmem:[%s431 + $0x2c] sm:$0xf]
        %v599 = vld [vmem:[%s431 + $0x30] sm:$0xf]
        %v600 = vld [vmem:[%s431 + $0x34] sm:$0xf]
        %v601 = vld [vmem:[%s431 + $0x38] sm:$0xf]
        %v602 = vld [vmem:[%s431 + $0x3c] sm:$0xf]
        %v603 = vld [vmem:[%s431 + $0x40] sm:$0xf]
        %v604 = vld [vmem:[%s431 + $0x44] sm:$0xf]
        %v605 = vld [vmem:[%s431 + $0x48] sm:$0xf]
        %v606 = vld [vmem:[%s431 + $0x4c] sm:$0xf]
        %v607 = vld [vmem:[%s431 + $0x50] sm:$0xf]
        %v608 = vld [vmem:[%s431 + $0x54] sm:$0xf]
        %v609 = vld [vmem:[%s431 + $0x58] sm:$0xf]
        %v610 = vld [vmem:[%s431 + $0x5c] sm:$0xf]
        %v611 = vld [vmem:[%s431 + $0x60] sm:$0xf]
        %v612 = vld [vmem:[%s431 + $0x64] sm:$0xf]
        %v613 = vld [vmem:[%s431 + $0x68] sm:$0xf]
        %v614 = vld [vmem:[%s431 + $0x6c] sm:$0xf]
        %v615 = vld [vmem:[%s431 + $0x70] sm:$0xf]
        %v616 = vld [vmem:[%s431 + $0x74] sm:$0xf]
        %v617 = vld [vmem:[%s431 + $0x78] sm:$0xf]
        %v618 = vld [vmem:[%s431 + $0x7c] sm:$0xf]
        %v619 = vld [vmem:[%s431 + $0x80] sm:$0xf]
        %v620 = vld [vmem:[%s431 + $0x84] sm:$0xf]
        %v621 = vld [vmem:[%s431 + $0x88] sm:$0xf]
        %v622 = vld [vmem:[%s431 + $0x8c] sm:$0xf]
        %v623 = vld [vmem:[%s431 + $0x90] sm:$0xf]
        %v624 = vld [vmem:[%s431 + $0x94] sm:$0xf]
        %v625 = vld [vmem:[%s431 + $0x98] sm:$0xf]
        %v626 = vld [vmem:[%s431 + $0x9c] sm:$0xf]
        %v627 = vld [vmem:[%s431 + $0xa0] sm:$0xf]
        %v628 = vld [vmem:[%s431 + $0xa4] sm:$0xf]
        %v629 = vld [vmem:[%s431 + $0xa8] sm:$0xf]
        %v630 = vld [vmem:[%s431 + $0xac] sm:$0xf]
        %v631 = vld [vmem:[%s431 + $0xb0] sm:$0xf]
        %v632 = vld [vmem:[%s431 + $0xb4] sm:$0xf]
        %v633 = vld [vmem:[%s431 + $0xb8] sm:$0xf]
        %v634 = vld [vmem:[%s431 + $0xbc] sm:$0xf]
        %v699 = vunpack.c.l.b16 %v523
        %v700 = vunpack.c.h.b16 %v523
        %v701 = vunpack.c.l.b16 %v524
        %v702 = vunpack.c.l.b16 %v525
        %v703 = vunpack.c.h.b16 %v525
        %v704 = vunpack.c.l.b16 %v526
        %v705 = vunpack.c.l.b16 %v527
        %v706 = vunpack.c.h.b16 %v527
        %v707 = vunpack.c.l.b16 %v528
        %v708 = vunpack.c.l.b16 %v529
        %v709 = vunpack.c.h.b16 %v529
        %v710 = vunpack.c.l.b16 %v530
        %v711 = vunpack.c.l.b16 %v531
        %v712 = vunpack.c.h.b16 %v531
        %v713 = vunpack.c.l.b16 %v532
        %v714 = vunpack.c.l.b16 %v533
        %v715 = vunpack.c.h.b16 %v533
        %v716 = vunpack.c.l.b16 %v534
        %v717 = vunpack.c.l.b16 %v535
        %v718 = vunpack.c.h.b16 %v535
        %v719 = vunpack.c.l.b16 %v536
        %v720 = vunpack.c.l.b16 %v537
        %v721 = vunpack.c.h.b16 %v537
        %v722 = vunpack.c.l.b16 %v538
        %v723 = vunpack.c.l.b16 %v539
        %v724 = vunpack.c.h.b16 %v539
        %v725 = vunpack.c.l.b16 %v540
        %v726 = vunpack.c.l.b16 %v541
        %v727 = vunpack.c.h.b16 %v541
        %v728 = vunpack.c.l.b16 %v542
        %v729 = vunpack.c.l.b16 %v543
        %v730 = vunpack.c.h.b16 %v543
        %v731 = vunpack.c.l.b16 %v544
        %v732 = vunpack.c.l.b16 %v545
        %v733 = vunpack.c.h.b16 %v545
        %v734 = vunpack.c.l.b16 %v546
        %v735 = vunpack.c.l.b16 %v547
        %v736 = vunpack.c.h.b16 %v547
        %v737 = vunpack.c.l.b16 %v548
        %v738 = vunpack.c.l.b16 %v549
        %v739 = vunpack.c.h.b16 %v549
        %v740 = vunpack.c.l.b16 %v550
        %v741 = vunpack.c.l.b16 %v551
        %v742 = vunpack.c.h.b16 %v551
        %v743 = vunpack.c.l.b16 %v552
        %v744 = vunpack.c.l.b16 %v553
        %v745 = vunpack.c.h.b16 %v553
        %v746 = vunpack.c.l.b16 %v554
        %v747 = vunpack.c.l.b16 %v555
        %v748 = vunpack.c.h.b16 %v555
        %v749 = vunpack.c.l.b16 %v556
        %v750 = vunpack.c.l.b16 %v557
        %v751 = vunpack.c.h.b16 %v557
        %v752 = vunpack.c.l.b16 %v558
        %v753 = vunpack.c.l.b16 %v559
        %v754 = vunpack.c.h.b16 %v559
        %v755 = vunpack.c.l.b16 %v560
        %v756 = vunpack.c.l.b16 %v561
        %v757 = vunpack.c.h.b16 %v561
        %v758 = vunpack.c.l.b16 %v562
        %v759 = vunpack.c.l.b16 %v563
        %v760 = vunpack.c.h.b16 %v563
        %v761 = vunpack.c.l.b16 %v564
        %v762 = vunpack.c.l.b16 %v565
        %v763 = vunpack.c.h.b16 %v565
        %v764 = vunpack.c.l.b16 %v566
        %v765 = vunpack.c.l.b16 %v567
        %v766 = vunpack.c.h.b16 %v567
        %v767 = vunpack.c.l.b16 %v568
        %v768 = vunpack.c.l.b16 %v569
        %v769 = vunpack.c.h.b16 %v569
        %v770 = vunpack.c.l.b16 %v570
        %v771 = vunpack.c.l.b16 %v571
        %v772 = vunpack.c.h.b16 %v571
        %v773 = vunpack.c.l.b16 %v572
        %v774 = vunpack.c.l.b16 %v573
        %v775 = vunpack.c.h.b16 %v573
        %v776 = vunpack.c.l.b16 %v574
        %v777 = vunpack.c.l.b16 %v575
        %v778 = vunpack.c.h.b16 %v575
        %v779 = vunpack.c.l.b16 %v576
        %v780 = vunpack.c.l.b16 %v577
        %v781 = vunpack.c.h.b16 %v577
        %v782 = vunpack.c.l.b16 %v578
        %v783 = vunpack.c.l.b16 %v579
        %v784 = vunpack.c.h.b16 %v579
        %v785 = vunpack.c.l.b16 %v580
        %v786 = vunpack.c.l.b16 %v581
        %v787 = vunpack.c.h.b16 %v581
        %v788 = vunpack.c.l.b16 %v582
        %v789 = vunpack.c.l.b16 %v583
        %v790 = vunpack.c.h.b16 %v583
        %v791 = vunpack.c.l.b16 %v584
        %v792 = vunpack.c.l.b16 %v585
        %v793 = vunpack.c.h.b16 %v585
        %v794 = vunpack.c.l.b16 %v586
        %v795 = vpack.c.b16 %v702, %v699
        %v796 = vpack.c.b16 %v703, %v700
        %v797 = vpack.c.b16 %v704, %v701
        %v798 = vpack.c.b16 %v708, %v705
        %v799 = vpack.c.b16 %v709, %v706
        %v800 = vpack.c.b16 %v710, %v707
        %v801 = vpack.c.b16 %v714, %v711
        %v802 = vpack.c.b16 %v715, %v712
        %v803 = vpack.c.b16 %v716, %v713
        %v804 = vpack.c.b16 %v720, %v717
        %v805 = vpack.c.b16 %v721, %v718
        %v806 = vpack.c.b16 %v722, %v719
        %v807 = vpack.c.b16 %v726, %v723
        %v808 = vpack.c.b16 %v727, %v724
        %v809 = vpack.c.b16 %v728, %v725
        %v810 = vpack.c.b16 %v732, %v729
        %v811 = vpack.c.b16 %v733, %v730
        %v812 = vpack.c.b16 %v734, %v731
        %v813 = vpack.c.b16 %v738, %v735
        %v814 = vpack.c.b16 %v739, %v736
        %v815 = vpack.c.b16 %v740, %v737
        %v816 = vpack.c.b16 %v744, %v741
        %v817 = vpack.c.b16 %v745, %v742
        %v818 = vpack.c.b16 %v746, %v743
        %v819 = vpack.c.b16 %v750, %v747
        %v820 = vpack.c.b16 %v751, %v748
        %v821 = vpack.c.b16 %v752, %v749
        %v822 = vpack.c.b16 %v756, %v753
        %v823 = vpack.c.b16 %v757, %v754
        %v824 = vpack.c.b16 %v758, %v755
        %v825 = vpack.c.b16 %v762, %v759
        %v826 = vpack.c.b16 %v763, %v760
        %v827 = vpack.c.b16 %v764, %v761
        %v828 = vpack.c.b16 %v768, %v765
        %v829 = vpack.c.b16 %v769, %v766
        %v830 = vpack.c.b16 %v770, %v767
        %v831 = vpack.c.b16 %v774, %v771
        %v832 = vpack.c.b16 %v775, %v772
        %v833 = vpack.c.b16 %v776, %v773
        %v834 = vpack.c.b16 %v780, %v777
        %v835 = vpack.c.b16 %v781, %v778
        %v836 = vpack.c.b16 %v782, %v779
        %v837 = vpack.c.b16 %v786, %v783
        %v838 = vpack.c.b16 %v787, %v784
        %v839 = vpack.c.b16 %v788, %v785
        %v840 = vpack.c.b16 %v792, %v789
        %v841 = vpack.c.b16 %v793, %v790
        %v842 = vpack.c.b16 %v794, %v791
        %v939 = vunpack.c.l.b16 %v587
        %v940 = vunpack.c.l.b16 %v588
        %v941 = vunpack.c.l.b16 %v589
        %v942 = vunpack.c.l.b16 %v590
        %v943 = vunpack.c.l.b16 %v591
        %v944 = vunpack.c.l.b16 %v592
        %v945 = vunpack.c.l.b16 %v593
        %v946 = vunpack.c.l.b16 %v594
        %v947 = vunpack.c.l.b16 %v595
        %v948 = vunpack.c.l.b16 %v596
        %v949 = vunpack.c.l.b16 %v597
        %v950 = vunpack.c.l.b16 %v598
        %v951 = vunpack.c.l.b16 %v599
        %v952 = vunpack.c.l.b16 %v600
        %v953 = vunpack.c.l.b16 %v601
        %v954 = vunpack.c.l.b16 %v602
        %v955 = vunpack.c.l.b16 %v603
        %v956 = vunpack.c.l.b16 %v604
        %v957 = vunpack.c.l.b16 %v605
        %v958 = vunpack.c.l.b16 %v606
        %v959 = vunpack.c.l.b16 %v607
        %v960 = vunpack.c.l.b16 %v608
        %v961 = vunpack.c.l.b16 %v609
        %v962 = vunpack.c.l.b16 %v610
        %v963 = vunpack.c.l.b16 %v611
        %v964 = vunpack.c.l.b16 %v612
        %v965 = vunpack.c.l.b16 %v613
        %v966 = vunpack.c.l.b16 %v614
        %v967 = vunpack.c.l.b16 %v615
        %v968 = vunpack.c.l.b16 %v616
        %v969 = vunpack.c.l.b16 %v617
        %v970 = vunpack.c.l.b16 %v618
        %v971 = vunpack.c.l.b16 %v619
        %v972 = vunpack.c.l.b16 %v620
        %v973 = vunpack.c.l.b16 %v621
        %v974 = vunpack.c.l.b16 %v622
        %v975 = vunpack.c.l.b16 %v623
        %v976 = vunpack.c.l.b16 %v624
        %v977 = vunpack.c.l.b16 %v625
        %v978 = vunpack.c.l.b16 %v626
        %v979 = vunpack.c.l.b16 %v627
        %v980 = vunpack.c.l.b16 %v628
        %v981 = vunpack.c.l.b16 %v629
        %v982 = vunpack.c.l.b16 %v630
        %v983 = vunpack.c.l.b16 %v631
        %v984 = vunpack.c.l.b16 %v632
        %v985 = vunpack.c.l.b16 %v633
        %v986 = vunpack.c.l.b16 %v634
        %v987 = vpack.c.b16 %v940, %v939
        %v988 = vpack.c.b16 %v942, %v941
        %v989 = vpack.c.b16 %v944, %v943
        %v990 = vpack.c.b16 %v946, %v945
        %v991 = vpack.c.b16 %v948, %v947
        %v992 = vpack.c.b16 %v950, %v949
        %v993 = vpack.c.b16 %v952, %v951
        %v994 = vpack.c.b16 %v954, %v953
        %v995 = vpack.c.b16 %v956, %v955
        %v996 = vpack.c.b16 %v958, %v957
        %v997 = vpack.c.b16 %v960, %v959
        %v998 = vpack.c.b16 %v962, %v961
        %v999 = vpack.c.b16 %v964, %v963
        %v1000 = vpack.c.b16 %v966, %v965
        %v1001 = vpack.c.b16 %v968, %v967
        %v1002 = vpack.c.b16 %v970, %v969
        %v1003 = vpack.c.b16 %v972, %v971
        %v1004 = vpack.c.b16 %v974, %v973
        %v1005 = vpack.c.b16 %v976, %v975
        %v1006 = vpack.c.b16 %v978, %v977
        %v1007 = vpack.c.b16 %v980, %v979
        %v1008 = vpack.c.b16 %v982, %v981
        %v1009 = vpack.c.b16 %v984, %v983
        %v1010 = vpack.c.b16 %v986, %v985
        %1035 = vmatprep.subr.bf16.mxu0 0
        %1036 = vmatpush1.bf16.msra.mxu0 %v987
        %1037 = vmatprep.subr.bf16.mxu0 0
        %1038 = vmatpush1.bf16.msra.mxu0 %v988
        %1039 = vmatprep.subr.bf16.mxu0 0
        %1040 = vmatpush1.bf16.msra.mxu0 %v989
        %1041 = vmatprep.subr.bf16.mxu0 0
        %1042 = vmatpush1.bf16.msra.mxu0 %v990
        %1043 = vmatprep.subr.bf16.mxu0 0
        %1044 = vmatpush1.bf16.msra.mxu0 %v991
        %1045 = vmatprep.subr.bf16.mxu0 0
        %1046 = vmatpush1.bf16.msra.mxu0 %v992
        %1047 = vmatprep.subr.bf16.mxu0 0
        %1048 = vmatpush1.bf16.msra.mxu0 %v993
        %1049 = vmatprep.subr.bf16.mxu0 0
        %1050 = vmatpush1.bf16.msra.mxu0 %v994
        %1051 = vmatprep.subr.bf16.mxu0 0
        %1052 = vmatpush1.bf16.msra.mxu0 %v995
        %1053 = vmatprep.subr.bf16.mxu0 0
        %1054 = vmatpush1.bf16.msra.mxu0 %v996
        %1055 = vmatprep.subr.bf16.mxu0 0
        %1056 = vmatpush1.bf16.msra.mxu0 %v997
        %1057 = vmatprep.subr.bf16.mxu0 0
        %1058 = vmatpush1.bf16.msra.mxu0 %v998
        %1059 = vmatprep.subr.bf16.mxu0 0
        %1060 = vmatpush1.bf16.msra.mxu0 %v999
        %1061 = vmatprep.subr.bf16.mxu0 0
        %1062 = vmatpush1.bf16.msra.mxu0 %v1000
        %1063 = vmatprep.subr.bf16.mxu0 0
        %1064 = vmatpush1.bf16.msra.mxu0 %v1001
        %1065 = vmatprep.subr.bf16.mxu0 0
        %1066 = vmatpush1.bf16.msra.mxu0 %v1002
        %1067 = vmatprep.mubr.bf16.mxu0 %v796
        %1068 = vmatmul.mubr.bf16.gmra.mrb[0].mxu0 %v795
        %v1069 = vpop.f32.mrb[0].mxu0
        %v1070 = vadd.f32 0.0, %v1069
        %v1071 = vpop.f32.mrb[0].mxu0
        %v1072 = vpop.f32.mrb[0].mxu0
        %v1073 = vadd.f32 0.0, %v1072
        %v1074 = vpop.f32.mrb[0].mxu0
        %1075 = vmatprep.mubr.bf16.mxu0 %v799
        %1076 = vmatmul.mubr.bf16.gmra.mrb[0].mxu0 %v798
        %v1077 = vpop.f32.mrb[0].mxu0
        %v1078 = vadd.f32 0.0, %v1077
        %v1079 = vpop.f32.mrb[0].mxu0
        %v1080 = vpop.f32.mrb[0].mxu0
        %v1081 = vadd.f32 0.0, %v1080
        %v1082 = vpop.f32.mrb[0].mxu0
        %1083 = vmatprep.mubr.bf16.mxu0 %v802
        %1084 = vmatmul.mubr.bf16.gmra.mrb[0].mxu0 %v801
        %v1085 = vpop.f32.mrb[0].mxu0
        %v1086 = vadd.f32 0.0, %v1085
        %v1087 = vpop.f32.mrb[0].mxu0
        %v1088 = vpop.f32.mrb[0].mxu0
        %v1089 = vadd.f32 0.0, %v1088
        %v1090 = vpop.f32.mrb[0].mxu0
        %1091 = vmatprep.mubr.bf16.mxu0 %v805
        %1092 = vmatmul.mubr.bf16.gmra.mrb[0].mxu0 %v804
        %v1093 = vpop.f32.mrb[0].mxu0
        %v1094 = vadd.f32 0.0, %v1093
        %v1095 = vpop.f32.mrb[0].mxu0
        %v1096 = vpop.f32.mrb[0].mxu0
        %v1097 = vadd.f32 0.0, %v1096
        %v1098 = vpop.f32.mrb[0].mxu0
        %1099 = vmatprep.mubr.bf16.mxu0 %v808
        %1100 = vmatmul.mubr.bf16.gmra.mrb[0].mxu0 %v807
        %v1101 = vpop.f32.mrb[0].mxu0
        %v1102 = vadd.f32 0.0, %v1101
        %v1103 = vpop.f32.mrb[0].mxu0
        %v1104 = vpop.f32.mrb[0].mxu0
        %v1105 = vadd.f32 0.0, %v1104
        %v1106 = vpop.f32.mrb[0].mxu0
        %1107 = vmatprep.mubr.bf16.mxu0 %v811
        %1108 = vmatmul.mubr.bf16.gmra.mrb[0].mxu0 %v810
        %v1109 = vpop.f32.mrb[0].mxu0
        %v1110 = vadd.f32 0.0, %v1109
        %v1111 = vpop.f32.mrb[0].mxu0
        %v1112 = vpop.f32.mrb[0].mxu0
        %v1113 = vadd.f32 0.0, %v1112
        %v1114 = vpop.f32.mrb[0].mxu0
        %1115 = vmatprep.mubr.bf16.mxu0 %v814
        %1116 = vmatmul.mubr.bf16.gmra.mrb[0].mxu0 %v813
        %v1117 = vpop.f32.mrb[0].mxu0
        %v1118 = vadd.f32 0.0, %v1117
        %v1119 = vpop.f32.mrb[0].mxu0
        %v1120 = vpop.f32.mrb[0].mxu0
        %v1121 = vadd.f32 0.0, %v1120
        %v1122 = vpop.f32.mrb[0].mxu0
        %1123 = vmatprep.mubr.bf16.mxu0 %v817
        %1124 = vmatmul.mubr.bf16.gmra.mrb[0].mxu0 %v816
        %v1125 = vpop.f32.mrb[0].mxu0
        %v1126 = vadd.f32 0.0, %v1125
        %v1127 = vpop.f32.mrb[0].mxu0
        %v1128 = vpop.f32.mrb[0].mxu0
        %v1129 = vadd.f32 0.0, %v1128
        %v1130 = vpop.f32.mrb[0].mxu0
        %1131 = vmatprep.mubr.bf16.mxu0 %v820
        %1132 = vmatmul.mubr.bf16.gmra.mrb[0].mxu0 %v819
        %v1133 = vpop.f32.mrb[0].mxu0
        %v1134 = vadd.f32 0.0, %v1133
        %v1135 = vpop.f32.mrb[0].mxu0
        %v1136 = vpop.f32.mrb[0].mxu0
        %v1137 = vadd.f32 0.0, %v1136
        %v1138 = vpop.f32.mrb[0].mxu0
        %1139 = vmatprep.mubr.bf16.mxu0 %v823
        %1140 = vmatmul.mubr.bf16.gmra.mrb[0].mxu0 %v822
        %v1141 = vpop.f32.mrb[0].mxu0
        %v1142 = vadd.f32 0.0, %v1141
        %v1143 = vpop.f32.mrb[0].mxu0
        %v1144 = vpop.f32.mrb[0].mxu0
        %v1145 = vadd.f32 0.0, %v1144
        %v1146 = vpop.f32.mrb[0].mxu0
        %1147 = vmatprep.mubr.bf16.mxu0 %v826
        %1148 = vmatmul.mubr.bf16.gmra.mrb[0].mxu0 %v825
        %v1149 = vpop.f32.mrb[0].mxu0
        %v1150 = vadd.f32 0.0, %v1149
        %v1151 = vpop.f32.mrb[0].mxu0
        %v1152 = vpop.f32.mrb[0].mxu0
        %v1153 = vadd.f32 0.0, %v1152
        %v1154 = vpop.f32.mrb[0].mxu0
        %1155 = vmatprep.mubr.bf16.mxu0 %v829
        %1156 = vmatmul.mubr.bf16.gmra.mrb[0].mxu0 %v828
        %v1157 = vpop.f32.mrb[0].mxu0
        %v1158 = vadd.f32 0.0, %v1157
        %v1159 = vpop.f32.mrb[0].mxu0
        %v1160 = vpop.f32.mrb[0].mxu0
        %v1161 = vadd.f32 0.0, %v1160
        %v1162 = vpop.f32.mrb[0].mxu0
        %1163 = vmatprep.mubr.bf16.mxu0 %v832
        %1164 = vmatmul.mubr.bf16.gmra.mrb[0].mxu0 %v831
        %v1165 = vpop.f32.mrb[0].mxu0
        %v1166 = vadd.f32 0.0, %v1165
        %v1167 = vpop.f32.mrb[0].mxu0
        %v1168 = vpop.f32.mrb[0].mxu0
        %v1169 = vadd.f32 0.0, %v1168
        %v1170 = vpop.f32.mrb[0].mxu0
        %1171 = vmatprep.mubr.bf16.mxu0 %v835
        %1172 = vmatmul.mubr.bf16.gmra.mrb[0].mxu0 %v834
        %v1173 = vpop.f32.mrb[0].mxu0
        %v1174 = vadd.f32 0.0, %v1173
        %v1175 = vpop.f32.mrb[0].mxu0
        %v1176 = vpop.f32.mrb[0].mxu0
        %v1177 = vadd.f32 0.0, %v1176
        %v1178 = vpop.f32.mrb[0].mxu0
        %1179 = vmatprep.mubr.bf16.mxu0 %v838
        %1180 = vmatmul.mubr.bf16.gmra.mrb[0].mxu0 %v837
        %v1181 = vpop.f32.mrb[0].mxu0
        %v1182 = vadd.f32 0.0, %v1181
        %v1183 = vpop.f32.mrb[0].mxu0
        %v1184 = vpop.f32.mrb[0].mxu0
        %v1185 = vadd.f32 0.0, %v1184
        %v1186 = vpop.f32.mrb[0].mxu0
        %1187 = vmatprep.mubr.bf16.mxu0 %v841
        %1188 = vmatmul.mubr.bf16.gmra.mrb[0].mxu0 %v840
        %v1189 = vpop.f32.mrb[0].mxu0
        %v1190 = vadd.f32 0.0, %v1189
        %v1191 = vpop.f32.mrb[0].mxu0
        %v1192 = vpop.f32.mrb[0].mxu0
        %v1193 = vadd.f32 0.0, %v1192
        %v1194 = vpop.f32.mrb[0].mxu0
        %1195 = vdwg.mxu0
        %1196 = vmatprep.subr.bf16.mxu0 0
        %1197 = vmatpush1.bf16.msra.mxu0 %v1003
        %1198 = vmatprep.subr.bf16.mxu0 0
        %1199 = vmatpush1.bf16.msra.mxu0 %v1004
        %1200 = vmatprep.subr.bf16.mxu0 0
        %1201 = vmatpush1.bf16.msra.mxu0 %v1005
        %1202 = vmatprep.subr.bf16.mxu0 0
        %1203 = vmatpush1.bf16.msra.mxu0 %v1006
        %1204 = vmatprep.subr.bf16.mxu0 0
        %1205 = vmatpush1.bf16.msra.mxu0 %v1007
        %1206 = vmatprep.subr.bf16.mxu0 0
        %1207 = vmatpush1.bf16.msra.mxu0 %v1008
        %1208 = vmatprep.subr.bf16.mxu0 0
        %1209 = vmatpush1.bf16.msra.mxu0 %v1009
        %1210 = vmatprep.subr.bf16.mxu0 0
        %1211 = vmatpush1.bf16.msra.mxu0 %v1010
        %1212 = vmatprep.subr.bf16.mxu0 0
        %1213 = vmatpush1.bf16.msra.mxu0 0
        %1214 = vmatprep.subr.bf16.mxu0 0
        %1215 = vmatpush1.bf16.msra.mxu0 0
        %1216 = vmatprep.subr.bf16.mxu0 0
        %1217 = vmatpush1.bf16.msra.mxu0 0
        %1218 = vmatprep.subr.bf16.mxu0 0
        %1219 = vmatpush1.bf16.msra.mxu0 0
        %1220 = vmatprep.subr.bf16.mxu0 0
        %1221 = vmatpush1.bf16.msra.mxu0 0
        %1222 = vmatprep.subr.bf16.mxu0 0
        %1223 = vmatpush1.bf16.msra.mxu0 0
        %1224 = vmatprep.subr.bf16.mxu0 0
        %1225 = vmatpush1.bf16.msra.mxu0 0
        %1226 = vmatprep.subr.bf16.mxu0 0
        %1227 = vmatpush1.bf16.msra.mxu0 0
        %1228 = vmatprep.mubr.bf16.mxu0 0
        %1229 = vmatmul.mubr.bf16.gmra.mrb[0].mxu0 %v797
        %v1230 = vpop.f32.mrb[0].mxu0
        %v1231 = vadd.f32 %v1070, %v1230
        %v1232 = vpop.f32.mrb[0].mxu0
        %v1233 = vpop.f32.mrb[0].mxu0
        %v1234 = vadd.f32 %v1073, %v1233
        %v1235 = vpop.f32.mrb[0].mxu0
        %1236 = vmatprep.mubr.bf16.mxu0 0
        %1237 = vmatmul.mubr.bf16.gmra.mrb[0].mxu0 %v800
        %v1238 = vpop.f32.mrb[0].mxu0
        %v1239 = vadd.f32 %v1078, %v1238
        %v1240 = vpop.f32.mrb[0].mxu0
        %v1241 = vpop.f32.mrb[0].mxu0
        %v1242 = vadd.f32 %v1081, %v1241
        %v1243 = vpop.f32.mrb[0].mxu0
        %1244 = vmatprep.mubr.bf16.mxu0 0
        %1245 = vmatmul.mubr.bf16.gmra.mrb[0].mxu0 %v803
        %v1246 = vpop.f32.mrb[0].mxu0
        %v1247 = vadd.f32 %v1086, %v1246
        %v1248 = vpop.f32.mrb[0].mxu0
        %v1249 = vpop.f32.mrb[0].mxu0
        %v1250 = vadd.f32 %v1089, %v1249
        %v1251 = vpop.f32.mrb[0].mxu0
        %1252 = vmatprep.mubr.bf16.mxu0 0
        %1253 = vmatmul.mubr.bf16.gmra.mrb[0].mxu0 %v806
        %v1254 = vpop.f32.mrb[0].mxu0
        %v1255 = vadd.f32 %v1094, %v1254
        %v1256 = vpop.f32.mrb[0].mxu0
        %v1257 = vpop.f32.mrb[0].mxu0
        %v1258 = vadd.f32 %v1097, %v1257
        %v1259 = vpop.f32.mrb[0].mxu0
        %1260 = vmatprep.mubr.bf16.mxu0 0
        %1261 = vmatmul.mubr.bf16.gmra.mrb[0].mxu0 %v809
        %v1262 = vpop.f32.mrb[0].mxu0
        %v1263 = vadd.f32 %v1102, %v1262
        %v1264 = vpop.f32.mrb[0].mxu0
        %v1265 = vpop.f32.mrb[0].mxu0
        %v1266 = vadd.f32 %v1105, %v1265
        %v1267 = vpop.f32.mrb[0].mxu0
        %1268 = vmatprep.mubr.bf16.mxu0 0
        %1269 = vmatmul.mubr.bf16.gmra.mrb[0].mxu0 %v812
        %v1270 = vpop.f32.mrb[0].mxu0
        %v1271 = vadd.f32 %v1110, %v1270
        %v1272 = vpop.f32.mrb[0].mxu0
        %v1273 = vpop.f32.mrb[0].mxu0
        %v1274 = vadd.f32 %v1113, %v1273
        %v1275 = vpop.f32.mrb[0].mxu0
        %1276 = vmatprep.mubr.bf16.mxu0 0
        %1277 = vmatmul.mubr.bf16.gmra.mrb[0].mxu0 %v815
        %v1278 = vpop.f32.mrb[0].mxu0
        %v1279 = vadd.f32 %v1118, %v1278
        %v1280 = vpop.f32.mrb[0].mxu0
        %v1281 = vpop.f32.mrb[0].mxu0
        %v1282 = vadd.f32 %v1121, %v1281
        %v1283 = vpop.f32.mrb[0].mxu0
        %1284 = vmatprep.mubr.bf16.mxu0 0
        %1285 = vmatmul.mubr.bf16.gmra.mrb[0].mxu0 %v818
        %v1286 = vpop.f32.mrb[0].mxu0
        %v1287 = vadd.f32 %v1126, %v1286
        %v1288 = vpop.f32.mrb[0].mxu0
        %v1289 = vpop.f32.mrb[0].mxu0
        %v1290 = vadd.f32 %v1129, %v1289
        %v1291 = vpop.f32.mrb[0].mxu0
        %1292 = vmatprep.mubr.bf16.mxu0 0
        %1293 = vmatmul.mubr.bf16.gmra.mrb[0].mxu0 %v821
        %v1294 = vpop.f32.mrb[0].mxu0
        %v1295 = vadd.f32 %v1134, %v1294
        %v1296 = vpop.f32.mrb[0].mxu0
        %v1297 = vpop.f32.mrb[0].mxu0
        %v1298 = vadd.f32 %v1137, %v1297
        %v1299 = vpop.f32.mrb[0].mxu0
        %1300 = vmatprep.mubr.bf16.mxu0 0
        %1301 = vmatmul.mubr.bf16.gmra.mrb[0].mxu0 %v824
        %v1302 = vpop.f32.mrb[0].mxu0
        %v1303 = vadd.f32 %v1142, %v1302
        %v1304 = vpop.f32.mrb[0].mxu0
        %v1305 = vpop.f32.mrb[0].mxu0
        %v1306 = vadd.f32 %v1145, %v1305
        %v1307 = vpop.f32.mrb[0].mxu0
        %1308 = vmatprep.mubr.bf16.mxu0 0
        %1309 = vmatmul.mubr.bf16.gmra.mrb[0].mxu0 %v827
        %v1310 = vpop.f32.mrb[0].mxu0
        %v1311 = vadd.f32 %v1150, %v1310
        %v1312 = vpop.f32.mrb[0].mxu0
        %v1313 = vpop.f32.mrb[0].mxu0
        %v1314 = vadd.f32 %v1153, %v1313
        %v1315 = vpop.f32.mrb[0].mxu0
        %1316 = vmatprep.mubr.bf16.mxu0 0
        %1317 = vmatmul.mubr.bf16.gmra.mrb[0].mxu0 %v830
        %v1318 = vpop.f32.mrb[0].mxu0
        %v1319 = vadd.f32 %v1158, %v1318
        %v1320 = vpop.f32.mrb[0].mxu0
        %v1321 = vpop.f32.mrb[0].mxu0
        %v1322 = vadd.f32 %v1161, %v1321
        %v1323 = vpop.f32.mrb[0].mxu0
        %1324 = vmatprep.mubr.bf16.mxu0 0
        %1325 = vmatmul.mubr.bf16.gmra.mrb[0].mxu0 %v833
        %v1326 = vpop.f32.mrb[0].mxu0
        %v1327 = vadd.f32 %v1166, %v1326
        %v1328 = vpop.f32.mrb[0].mxu0
        %v1329 = vpop.f32.mrb[0].mxu0
        %v1330 = vadd.f32 %v1169, %v1329
        %v1331 = vpop.f32.mrb[0].mxu0
        %1332 = vmatprep.mubr.bf16.mxu0 0
        %1333 = vmatmul.mubr.bf16.gmra.mrb[0].mxu0 %v836
        %v1334 = vpop.f32.mrb[0].mxu0
        %v1335 = vadd.f32 %v1174, %v1334
        %v1336 = vpop.f32.mrb[0].mxu0
        %v1337 = vpop.f32.mrb[0].mxu0
        %v1338 = vadd.f32 %v1177, %v1337
        %v1339 = vpop.f32.mrb[0].mxu0
        %1340 = vmatprep.mubr.bf16.mxu0 0
        %1341 = vmatmul.mubr.bf16.gmra.mrb[0].mxu0 %v839
        %v1342 = vpop.f32.mrb[0].mxu0
        %v1343 = vadd.f32 %v1182, %v1342
        %v1344 = vpop.f32.mrb[0].mxu0
        %v1345 = vpop.f32.mrb[0].mxu0
        %v1346 = vadd.f32 %v1185, %v1345
        %v1347 = vpop.f32.mrb[0].mxu0
        %1348 = vmatprep.mubr.bf16.mxu0 0
        %1349 = vmatmul.mubr.bf16.gmra.mrb[0].mxu0 %v842
        %v1350 = vpop.f32.mrb[0].mxu0
        %v1351 = vadd.f32 %v1190, %v1350
        %v1352 = vpop.f32.mrb[0].mxu0
        %v1353 = vpop.f32.mrb[0].mxu0
        %v1354 = vadd.f32 %v1193, %v1353
        %v1355 = vpop.f32.mrb[0].mxu0
        %1356 = vdwg.mxu0
        %v1357 = vadd.f32 %v491, %v1231
        %v1358 = vadd.f32 %v492, %v1234
        %v1359 = vadd.f32 %v493, %v1239
        %v1360 = vadd.f32 %v494, %v1242
        %v1361 = vadd.f32 %v495, %v1247
        %v1362 = vadd.f32 %v496, %v1250
        %v1363 = vadd.f32 %v497, %v1255
        %v1364 = vadd.f32 %v498, %v1258
        %v1365 = vadd.f32 %v499, %v1263
        %v1366 = vadd.f32 %v500, %v1266
        %v1367 = vadd.f32 %v501, %v1271
        %v1368 = vadd.f32 %v502, %v1274
        %v1369 = vadd.f32 %v503, %v1279
        %v1370 = vadd.f32 %v504, %v1282
        %v1371 = vadd.f32 %v505, %v1287
        %v1372 = vadd.f32 %v506, %v1290
        %v1373 = vadd.f32 %v507, %v1295
        %v1374 = vadd.f32 %v508, %v1298
        %v1375 = vadd.f32 %v509, %v1303
        %v1376 = vadd.f32 %v510, %v1306
        %v1377 = vadd.f32 %v511, %v1311
        %v1378 = vadd.f32 %v512, %v1314
        %v1379 = vadd.f32 %v513, %v1319
        %v1380 = vadd.f32 %v514, %v1322
        %v1381 = vadd.f32 %v515, %v1327
        %v1382 = vadd.f32 %v516, %v1330
        %v1383 = vadd.f32 %v517, %v1335
        %v1384 = vadd.f32 %v518, %v1338
        %v1385 = vadd.f32 %v519, %v1343
        %v1386 = vadd.f32 %v520, %v1346
        %v1387 = vadd.f32 %v521, %v1351
        %v1388 = vadd.f32 %v522, %v1354
        %1389 = vst [vmem:[#allocation2] sm:$0xff] %v1357
        %1390 = vst [vmem:[#allocation2 + $0x8] sm:$0xff] %v1358
        %1391 = vst [vmem:[#allocation2 + $0x10] sm:$0xff] %v1359
        %1392 = vst [vmem:[#allocation2 + $0x18] sm:$0xff] %v1360
        %1393 = vst [vmem:[#allocation2 + $0x20] sm:$0xff] %v1361
        %1394 = vst [vmem:[#allocation2 + $0x28] sm:$0xff] %v1362
        %1395 = vst [vmem:[#allocation2 + $0x30] sm:$0xff] %v1363
        %1396 = vst [vmem:[#allocation2 + $0x38] sm:$0xff] %v1364
        %1397 = vst [vmem:[#allocation2 + $0x40] sm:$0xff] %v1365
        %1398 = vst [vmem:[#allocation2 + $0x48] sm:$0xff] %v1366
        %1399 = vst [vmem:[#allocation2 + $0x50] sm:$0xff] %v1367
        %1400 = vst [vmem:[#allocation2 + $0x58] sm:$0xff] %v1368
        %1401 = vst [vmem:[#allocation2 + $0x60] sm:$0xff] %v1369
        %1402 = vst [vmem:[#allocation2 + $0x68] sm:$0xff] %v1370
        %1403 = vst [vmem:[#allocation2 + $0x70] sm:$0xff] %v1371
        %1404 = vst [vmem:[#allocation2 + $0x78] sm:$0xff] %v1372
        %1405 = vst [vmem:[#allocation2 + $0x80] sm:$0xff] %v1373
        %1406 = vst [vmem:[#allocation2 + $0x88] sm:$0xff] %v1374
        %1407 = vst [vmem:[#allocation2 + $0x90] sm:$0xff] %v1375
        %1408 = vst [vmem:[#allocation2 + $0x98] sm:$0xff] %v1376
        %1409 = vst [vmem:[#allocation2 + $0xa0] sm:$0xff] %v1377
        %1410 = vst [vmem:[#allocation2 + $0xa8] sm:$0xff] %v1378
        %1411 = vst [vmem:[#allocation2 + $0xb0] sm:$0xff] %v1379
        %1412 = vst [vmem:[#allocation2 + $0xb8] sm:$0xff] %v1380
        %1413 = vst [vmem:[#allocation2 + $0xc0] sm:$0xff] %v1381
        %1414 = vst [vmem:[#allocation2 + $0xc8] sm:$0xff] %v1382
        %1415 = vst [vmem:[#allocation2 + $0xd0] sm:$0xff] %v1383
        %1416 = vst [vmem:[#allocation2 + $0xd8] sm:$0xff] %v1384
        %1417 = vst [vmem:[#allocation2 + $0xe0] sm:$0xff] %v1385
        %1418 = vst [vmem:[#allocation2 + $0xe8] sm:$0xff] %v1386
        %1419 = vst [vmem:[#allocation2 + $0xf0] sm:$0xff] %v1387
        %1420 = vst [vmem:[#allocation2 + $0xf8] sm:$0xff] %v1388
        %p1421 = scmp.eq.s32.totalorder %s23, 6
        // Predicated region
        $region59: #{style_transfer_forward.62} parent=49 // pred_check
          %p1422 = pneg %p1421
        $region60: #{style_transfer_forward.62} parent=49 // pred_check_branch
          %1424 = sbr.rel (%p1422) target = $region62
        $region61: #{style_transfer_forward.62} parent=49 // pred_region
          %v1425 = vld [vmem:[#allocation2] sm:$0xff]
          %v1426 = vld [vmem:[#allocation2 + $0x8] sm:$0xff]
          %v1427 = vld [vmem:[#allocation2 + $0x10] sm:$0xff]
          %v1428 = vld [vmem:[#allocation2 + $0x18] sm:$0xff]
          %v1429 = vld [vmem:[#allocation2 + $0x20] sm:$0xff]
          %v1430 = vld [vmem:[#allocation2 + $0x28] sm:$0xff]
          %v1431 = vld [vmem:[#allocation2 + $0x30] sm:$0xff]
          %v1432 = vld [vmem:[#allocation2 + $0x38] sm:$0xff]
          %v1433 = vld [vmem:[#allocation2 + $0x40] sm:$0xff]
          %v1434 = vld [vmem:[#allocation2 + $0x48] sm:$0xff]
          %v1435 = vld [vmem:[#allocation2 + $0x50] sm:$0xff]
          %v1436 = vld [vmem:[#allocation2 + $0x58] sm:$0xff]
          %v1437 = vld [vmem:[#allocation2 + $0x60] sm:$0xff]
          %v1438 = vld [vmem:[#allocation2 + $0x68] sm:$0xff]
          %v1439 = vld [vmem:[#allocation2 + $0x70] sm:$0xff]
          %v1440 = vld [vmem:[#allocation2 + $0x78] sm:$0xff]
          %v1441 = vld [vmem:[#allocation2 + $0x80] sm:$0xff]
          %v1442 = vld [vmem:[#allocation2 + $0x88] sm:$0xff]
          %v1443 = vld [vmem:[#allocation2 + $0x90] sm:$0xff]
          %v1444 = vld [vmem:[#allocation2 + $0x98] sm:$0xff]
          %v1445 = vld [vmem:[#allocation2 + $0xa0] sm:$0xff]
          %v1446 = vld [vmem:[#allocation2 + $0xa8] sm:$0xff]
          %v1447 = vld [vmem:[#allocation2 + $0xb0] sm:$0xff]
          %v1448 = vld [vmem:[#allocation2 + $0xb8] sm:$0xff]
          %v1449 = vld [vmem:[#allocation2 + $0xc0] sm:$0xff]
          %v1450 = vld [vmem:[#allocation2 + $0xc8] sm:$0xff]
          %v1451 = vld [vmem:[#allocation2 + $0xd0] sm:$0xff]
          %v1452 = vld [vmem:[#allocation2 + $0xd8] sm:$0xff]
          %v1453 = vld [vmem:[#allocation2 + $0xe0] sm:$0xff]
          %v1454 = vld [vmem:[#allocation2 + $0xe8] sm:$0xff]
          %v1455 = vld [vmem:[#allocation2 + $0xf0] sm:$0xff]
          %v1456 = vld [vmem:[#allocation2 + $0xf8] sm:$0xff]
          %v1457 = vpack.c.bf16 %v1426, %v1425
          %v1458 = vpack.c.bf16 %v1428, %v1427
          %v1459 = vpack.c.bf16 %v1430, %v1429
          %v1460 = vpack.c.bf16 %v1432, %v1431
          %v1461 = vpack.c.bf16 %v1434, %v1433
          %v1462 = vpack.c.bf16 %v1436, %v1435
          %v1463 = vpack.c.bf16 %v1438, %v1437
          %v1464 = vpack.c.bf16 %v1440, %v1439
          %v1465 = vpack.c.bf16 %v1442, %v1441
          %v1466 = vpack.c.bf16 %v1444, %v1443
          %v1467 = vpack.c.bf16 %v1446, %v1445
          %v1468 = vpack.c.bf16 %v1448, %v1447
          %v1469 = vpack.c.bf16 %v1450, %v1449
          %v1470 = vpack.c.bf16 %v1452, %v1451
          %v1471 = vpack.c.bf16 %v1454, %v1453
          %v1472 = vpack.c.bf16 %v1456, %v1455
          %v1489 = vunpack.c.l.b16 %v1457
          %v1490 = vunpack.c.h.b16 %v1457
          %v1491 = vunpack.c.l.b16 %v1458
          %v1492 = vunpack.c.h.b16 %v1458
          %v1493 = vunpack.c.l.b16 %v1459
          %v1494 = vunpack.c.h.b16 %v1459
          %v1495 = vunpack.c.l.b16 %v1460
          %v1496 = vunpack.c.h.b16 %v1460
          %v1497 = vunpack.c.l.b16 %v1461
          %v1498 = vunpack.c.h.b16 %v1461
          %v1499 = vunpack.c.l.b16 %v1462
          %v1500 = vunpack.c.h.b16 %v1462
          %v1501 = vunpack.c.l.b16 %v1463
          %v1502 = vunpack.c.h.b16 %v1463
          %v1503 = vunpack.c.l.b16 %v1464
          %v1504 = vunpack.c.h.b16 %v1464
          %v1505 = vunpack.c.l.b16 %v1465
          %v1506 = vunpack.c.h.b16 %v1465
          %v1507 = vunpack.c.l.b16 %v1466
          %v1508 = vunpack.c.h.b16 %v1466
          %v1509 = vunpack.c.l.b16 %v1467
          %v1510 = vunpack.c.h.b16 %v1467
          %v1511 = vunpack.c.l.b16 %v1468
          %v1512 = vunpack.c.h.b16 %v1468
          %v1513 = vunpack.c.l.b16 %v1469
          %v1514 = vunpack.c.h.b16 %v1469
          %v1515 = vunpack.c.l.b16 %v1470
          %v1516 = vunpack.c.h.b16 %v1470
          %v1517 = vunpack.c.l.b16 %v1471
          %v1518 = vunpack.c.h.b16 %v1471
          %v1519 = vunpack.c.l.b16 %v1472
          %v1520 = vunpack.c.h.b16 %v1472
          %v1521 = vpack.c.b16 %v1489, %v1489
          %v1522 = vpack.c.b16 %v1490, %v1490
          %v1523 = vpack.c.b16 %v1491, %v1491
          %v1524 = vpack.c.b16 %v1492, %v1492
          %v1525 = vpack.c.b16 %v1493, %v1493
          %v1526 = vpack.c.b16 %v1494, %v1494
          %v1527 = vpack.c.b16 %v1495, %v1495
          %v1528 = vpack.c.b16 %v1496, %v1496
          %v1529 = vpack.c.b16 %v1497, %v1497
          %v1530 = vpack.c.b16 %v1498, %v1498
          %v1531 = vpack.c.b16 %v1499, %v1499
          %v1532 = vpack.c.b16 %v1500, %v1500
          %v1533 = vpack.c.b16 %v1501, %v1501
          %v1534 = vpack.c.b16 %v1502, %v1502
          %v1535 = vpack.c.b16 %v1503, %v1503
          %v1536 = vpack.c.b16 %v1504, %v1504
          %v1537 = vpack.c.b16 %v1505, %v1505
          %v1538 = vpack.c.b16 %v1506, %v1506
          %v1539 = vpack.c.b16 %v1507, %v1507
          %v1540 = vpack.c.b16 %v1508, %v1508
          %v1541 = vpack.c.b16 %v1509, %v1509
          %v1542 = vpack.c.b16 %v1510, %v1510
          %v1543 = vpack.c.b16 %v1511, %v1511
          %v1544 = vpack.c.b16 %v1512, %v1512
          %v1545 = vpack.c.b16 %v1513, %v1513
          %v1546 = vpack.c.b16 %v1514, %v1514
          %v1547 = vpack.c.b16 %v1515, %v1515
          %v1548 = vpack.c.b16 %v1516, %v1516
          %v1549 = vpack.c.b16 %v1517, %v1517
          %v1550 = vpack.c.b16 %v1518, %v1518
          %v1551 = vpack.c.b16 %v1519, %v1519
          %v1552 = vpack.c.b16 %v1520, %v1520
          %1585 = vst [vmem:[%s440] sm:$0xf] %v1521
          %1586 = vst [vmem:[%s440 + $0x4] sm:$0xf] %v1522
          %1587 = vst [vmem:[%s440 + $0x8] sm:$0xf] %v1523
          %1588 = vst [vmem:[%s440 + $0xc] sm:$0xf] %v1524
          %1589 = vst [vmem:[%s440 + $0x10] sm:$0xf] %v1525
          %1590 = vst [vmem:[%s440 + $0x14] sm:$0xf] %v1526
          %1591 = vst [vmem:[%s440 + $0x18] sm:$0xf] %v1527
          %1592 = vst [vmem:[%s440 + $0x1c] sm:$0xf] %v1528
          %1593 = vst [vmem:[%s440 + $0x20] sm:$0xf] %v1529
          %1594 = vst [vmem:[%s440 + $0x24] sm:$0xf] %v1530
          %1595 = vst [vmem:[%s440 + $0x28] sm:$0xf] %v1531
          %1596 = vst [vmem:[%s440 + $0x2c] sm:$0xf] %v1532
          %1597 = vst [vmem:[%s440 + $0x30] sm:$0xf] %v1533
          %1598 = vst [vmem:[%s440 + $0x34] sm:$0xf] %v1534
          %1599 = vst [vmem:[%s440 + $0x38] sm:$0xf] %v1535
          %1600 = vst [vmem:[%s440 + $0x3c] sm:$0xf] %v1536
          %1601 = vst [vmem:[%s440 + $0x40] sm:$0xf] %v1537
          %1602 = vst [vmem:[%s440 + $0x44] sm:$0xf] %v1538
          %1603 = vst [vmem:[%s440 + $0x48] sm:$0xf] %v1539
          %1604 = vst [vmem:[%s440 + $0x4c] sm:$0xf] %v1540
          %1605 = vst [vmem:[%s440 + $0x50] sm:$0xf] %v1541
          %1606 = vst [vmem:[%s440 + $0x54] sm:$0xf] %v1542
          %1607 = vst [vmem:[%s440 + $0x58] sm:$0xf] %v1543
          %1608 = vst [vmem:[%s440 + $0x5c] sm:$0xf] %v1544
          %1609 = vst [vmem:[%s440 + $0x60] sm:$0xf] %v1545
          %1610 = vst [vmem:[%s440 + $0x64] sm:$0xf] %v1546
          %1611 = vst [vmem:[%s440 + $0x68] sm:$0xf] %v1547
          %1612 = vst [vmem:[%s440 + $0x6c] sm:$0xf] %v1548
          %1613 = vst [vmem:[%s440 + $0x70] sm:$0xf] %v1549
          %1614 = vst [vmem:[%s440 + $0x74] sm:$0xf] %v1550
          %1615 = vst [vmem:[%s440 + $0x78] sm:$0xf] %v1551
          %1616 = vst [vmem:[%s440 + $0x7c] sm:$0xf] %v1552
          %v1617 = vadd.f32 %v1425, %v1426
          %v1618 = vadd.f32 %v1617, %v1427
          %v1619 = vadd.f32 %v1618, %v1428
          %v1620 = vadd.f32 %v1619, %v1429
          %v1621 = vadd.f32 %v1620, %v1430
          %v1622 = vadd.f32 %v1621, %v1431
          %v1623 = vadd.f32 %v1622, %v1432
          %v1624 = vadd.f32 %v1623, %v1433
          %v1625 = vadd.f32 %v1624, %v1434
          %v1626 = vadd.f32 %v1625, %v1435
          %v1627 = vadd.f32 %v1626, %v1436
          %v1628 = vadd.f32 %v1627, %v1437
          %v1629 = vadd.f32 %v1628, %v1438
          %v1630 = vadd.f32 %v1629, %v1439
          %v1631 = vadd.f32 %v1630, %v1440
          %v1632 = vadd.f32 %v1631, %v1441
          %v1633 = vadd.f32 %v1632, %v1442
          %v1634 = vadd.f32 %v1633, %v1443
          %v1635 = vadd.f32 %v1634, %v1444
          %v1636 = vadd.f32 %v1635, %v1445
          %v1637 = vadd.f32 %v1636, %v1446
          %v1638 = vadd.f32 %v1637, %v1447
          %v1639 = vadd.f32 %v1638, %v1448
          %v1640 = vadd.f32 %v1639, %v1449
          %v1641 = vadd.f32 %v1640, %v1450
          %v1642 = vadd.f32 %v1641, %v1451
          %v1643 = vadd.f32 %v1642, %v1452
          %v1644 = vadd.f32 %v1643, %v1453
          %v1645 = vadd.f32 %v1644, %v1454
          %v1646 = vadd.f32 %v1645, %v1455
          %v1647 = vadd.f32 %v1646, %v1456
          %v1648 = vrot.slane %v1647, 4
          %v1649 = vadd.f32 %v1647, %v1648
          %v1650 = vrot.slane %v1649, 2
          %v1651 = vadd.f32 %v1649, %v1650
          %v1652 = vrot.slane %v1651, 1
          %v1653 = vadd.f32 %v1651, %v1652
          %1654 = vst [vmem:[%s447] sm:$0x1] %v1653
          %v1655 = vmul.f32 %v1425, %v1425
          %v1656 = vmul.f32 %v1426, %v1426
          %v1657 = vmul.f32 %v1427, %v1427
          %v1658 = vmul.f32 %v1428, %v1428
          %v1659 = vmul.f32 %v1429, %v1429
          %v1660 = vmul.f32 %v1430, %v1430
          %v1661 = vmul.f32 %v1431, %v1431
          %v1662 = vmul.f32 %v1432, %v1432
          %v1663 = vmul.f32 %v1433, %v1433
          %v1664 = vmul.f32 %v1434, %v1434
          %v1665 = vmul.f32 %v1435, %v1435
          %v1666 = vmul.f32 %v1436, %v1436
          %v1667 = vmul.f32 %v1437, %v1437
          %v1668 = vmul.f32 %v1438, %v1438
          %v1669 = vmul.f32 %v1439, %v1439
          %v1670 = vmul.f32 %v1440, %v1440
          %v1671 = vmul.f32 %v1441, %v1441
          %v1672 = vmul.f32 %v1442, %v1442
          %v1673 = vmul.f32 %v1443, %v1443
          %v1674 = vmul.f32 %v1444, %v1444
          %v1675 = vmul.f32 %v1445, %v1445
          %v1676 = vmul.f32 %v1446, %v1446
          %v1677 = vmul.f32 %v1447, %v1447
          %v1678 = vmul.f32 %v1448, %v1448
          %v1679 = vmul.f32 %v1449, %v1449
          %v1680 = vmul.f32 %v1450, %v1450
          %v1681 = vmul.f32 %v1451, %v1451
          %v1682 = vmul.f32 %v1452, %v1452
          %v1683 = vmul.f32 %v1453, %v1453
          %v1684 = vmul.f32 %v1454, %v1454
          %v1685 = vmul.f32 %v1455, %v1455
          %v1686 = vmul.f32 %v1456, %v1456
          %v1687 = vadd.f32 %v1655, %v1656
          %v1688 = vadd.f32 %v1687, %v1657
          %v1689 = vadd.f32 %v1688, %v1658
          %v1690 = vadd.f32 %v1689, %v1659
          %v1691 = vadd.f32 %v1690, %v1660
          %v1692 = vadd.f32 %v1691, %v1661
          %v1693 = vadd.f32 %v1692, %v1662
          %v1694 = vadd.f32 %v1693, %v1663
          %v1695 = vadd.f32 %v1694, %v1664
          %v1696 = vadd.f32 %v1695, %v1665
          %v1697 = vadd.f32 %v1696, %v1666
          %v1698 = vadd.f32 %v1697, %v1667
          %v1699 = vadd.f32 %v1698, %v1668
          %v1700 = vadd.f32 %v1699, %v1669
          %v1701 = vadd.f32 %v1700, %v1670
          %v1702 = vadd.f32 %v1701, %v1671
          %v1703 = vadd.f32 %v1702, %v1672
          %v1704 = vadd.f32 %v1703, %v1673
          %v1705 = vadd.f32 %v1704, %v1674
          %v1706 = vadd.f32 %v1705, %v1675
          %v1707 = vadd.f32 %v1706, %v1676
          %v1708 = vadd.f32 %v1707, %v1677
          %v1709 = vadd.f32 %v1708, %v1678
          %v1710 = vadd.f32 %v1709, %v1679
          %v1711 = vadd.f32 %v1710, %v1680
          %v1712 = vadd.f32 %v1711, %v1681
          %v1713 = vadd.f32 %v1712, %v1682
          %v1714 = vadd.f32 %v1713, %v1683
          %v1715 = vadd.f32 %v1714, %v1684
          %v1716 = vadd.f32 %v1715, %v1685
          %v1717 = vadd.f32 %v1716, %v1686
          %v1718 = vrot.slane %v1717, 4
          %v1719 = vadd.f32 %v1717, %v1718
          %v1720 = vrot.slane %v1719, 2
          %v1721 = vadd.f32 %v1719, %v1720
          %v1722 = vrot.slane %v1721, 1
          %v1723 = vadd.f32 %v1721, %v1722
          %1724 = vst [vmem:[%s453] sm:$0x1] %v1723
        $region62: #{style_transfer_forward.62} parent=49 // pred_fallthru
          _
        %s1725 = smul.u32 32, %s21
        %p1726 = scmp.lt.s32.totalorder %s1725, 63
        %s1727 = scalar_select %p1726, %s1725, 63
        %p1728 = scmp.lt.s32.totalorder %s22, 0
        %s1729 = scalar_select %p1728, %s22, 0
        %s1730 = sadd.s32 %s1729, %s1727
        %s1731 = smul.addr %s1730, 4
        %s1732 = scalar_lea.vmem %s2, %s1731
        %p1733 = scmp.lt.s32.totalorder %s21, 1
        %s1734 = scalar_select %p1733, %s21, 1
        %p1735 = scmp.lt.s32.totalorder %s22, 0
        %s1736 = scalar_select %p1735, %s22, 0
        %s1737 = sadd.s32 %s1736, %s1734
        %s1738 = scalar_lea.vmem %s3, %s1737
        %p1739 = scmp.lt.s32.totalorder %s21, 1
        %s1740 = scalar_select %p1739, %s21, 1
        %p1741 = scmp.lt.s32.totalorder %s22, 0
        %s1742 = scalar_select %p1741, %s22, 0
        %s1743 = sadd.s32 %s1742, %s1740
        %s1744 = scalar_lea.vmem %s4, %s1743
        // Predicated region
        $region63: #{style_transfer_forward.62} parent=49 // pred_check
          %p1745 = pneg %p111
        $region64: #{style_transfer_forward.62} parent=49 // pred_check_branch
          %1747 = sbr.rel (%p1745) target = $region66
        $region65: #{style_transfer_forward.62} parent=49 // pred_region
          %s1748 = smul.u32 32, %s21
        $region66: #{style_transfer_forward.62} parent=49 // pred_fallthru
          _
        // Predicated region
        $region67: #{style_transfer_forward.62} parent=49 // pred_check
          %p1749 = pneg %p139
        $region68: #{style_transfer_forward.62} parent=49 // pred_check_branch
          %1751 = sbr.rel (%p1749) target = $region70
        $region69: #{style_transfer_forward.62} parent=49 // pred_region
          _
        $region70: #{style_transfer_forward.62} parent=49 // pred_fallthru
          _
        // Predicated region
        $region71: #{style_transfer_forward.62} parent=49 // pred_check
          %p1752 = pneg %p167
        $region72: #{style_transfer_forward.62} parent=49 // pred_check_branch
          %1754 = sbr.rel (%p1752) target = $region74
        $region73: #{style_transfer_forward.62} parent=49 // pred_region
          _
        $region74: #{style_transfer_forward.62} parent=49 // pred_fallthru
          _
      $region50: #{style_transfer_forward.62} parent=5 // pred_fallthru
        _
      %p1755 = scmp.le.s32.totalorder 2, %s11
      // Predicated region
      $region75: #{style_transfer_forward.62} parent=5 // pred_check
        %p1756 = pneg %p1755
      $region76: #{style_transfer_forward.62} parent=5 // pred_check_branch
        %1758 = sbr.rel (%p1756) target = $region78
      $region77: #{style_transfer_forward.62} parent=5 // pred_region
        %s1759 = ssub.s32 %s11, 2
        // Predicated region
        $region79: #{style_transfer_forward.62} parent=77 // pred_check
          %p1760 = pneg %p117
        $region80: #{style_transfer_forward.62} parent=77 // pred_check_branch
          %1762 = sbr.rel (%p1760) target = $region82
        $region81: #{style_transfer_forward.62} parent=77 // pred_region
          %s1763 = smul.u32 32, %s24
          %p1764 = scmp.lt.s32.totalorder %s1763, 63
          %s1765 = scalar_select %p1764, %s1763, 63
          %p1766 = scmp.lt.s32.totalorder %s25, 0
          %s1767 = scalar_select %p1766, %s25, 0
          %s1768 = sadd.s32 %s1767, %s1765
          %s1769 = smul.addr %s1768, 4
          %s1770 = scalar_lea.vmem %s2, %s1769
        $region82: #{style_transfer_forward.62} parent=77 // pred_fallthru
          _
        // Predicated region
        $region83: #{style_transfer_forward.62} parent=77 // pred_check
          %p1771 = pneg %p145
        $region84: #{style_transfer_forward.62} parent=77 // pred_check_branch
          %1773 = sbr.rel (%p1771) target = $region86
        $region85: #{style_transfer_forward.62} parent=77 // pred_region
          %p1774 = scmp.lt.s32.totalorder %s24, 1
          %s1775 = scalar_select %p1774, %s24, 1
          %p1776 = scmp.lt.s32.totalorder %s25, 0
          %s1777 = scalar_select %p1776, %s25, 0
          %s1778 = sadd.s32 %s1777, %s1775
          %s1779 = scalar_lea.vmem %s3, %s1778
        $region86: #{style_transfer_forward.62} parent=77 // pred_fallthru
          _
        // Predicated region
        $region87: #{style_transfer_forward.62} parent=77 // pred_check
          %p1780 = pneg %p173
        $region88: #{style_transfer_forward.62} parent=77 // pred_check_branch
          %1782 = sbr.rel (%p1780) target = $region90
        $region89: #{style_transfer_forward.62} parent=77 // pred_region
          %p1783 = scmp.lt.s32.totalorder %s24, 1
          %s1784 = scalar_select %p1783, %s24, 1
          %p1785 = scmp.lt.s32.totalorder %s25, 0
          %s1786 = scalar_select %p1785, %s25, 0
          %s1787 = sadd.s32 %s1786, %s1784
          %s1788 = scalar_lea.vmem %s4, %s1787
        $region90: #{style_transfer_forward.62} parent=77 // pred_fallthru
          _
      $region78: #{style_transfer_forward.62} parent=5 // pred_fallthru
        _
    $region6: #{style_transfer_forward.62} parent=1 // loop_footer
      %s15 = sadd.s32 1, %s11
    $region7: #{style_transfer_forward.62} parent=1 // loop_footer_branch
      %10 = sbr.rel target = $region3
    $region8: #{style_transfer_forward.62} parent=1 // loop_exit
      _

</llo_original>
